<compile_context>
chip_gen: v7x
topology: tpu7x:2x2x1
jax: 0.10.0
libtpu: 0.0.40
codegen_flags: <defaults>
</compile_context>

<pallas_src>
from functools import partial

import jax
import jax.numpy as jnp
from jax.experimental import pallas as pl
from jax.experimental.pallas import tpu as pltpu


def _log_sigmoid(x):
    # Numerically stable log(sigmoid(x)) = min(x, 0) - log1p(exp(-|x|)).
    return jnp.minimum(x, 0.0) - jnp.log1p(jnp.exp(-jnp.abs(x)))


def _score_chunk(cand_h, cand_t, w_head, w_tail):
    """(B, C, D) candidate rows -> (B, C) log sigmoid(-(s_head + s_tail))."""
    ch = cand_h.astype(jnp.float32)          # per-chunk widen: bounded temporaries
    ct = cand_t.astype(jnp.float32)
    s = (jnp.sum(ch * w_head, axis=-1)
         + jnp.sum(ct * w_tail, axis=-1))    # (B, C)
    return _log_sigmoid(-s)


# -----------------------------------------------------------------------------
# Fast path: entity table resident in VMEM, gather = per-row dynamic VMEM loads.
# -----------------------------------------------------------------------------
def _make_vmem_kernel(B, tn, n_pad, chunk, unroll):
    n_chunks = tn // chunk

    def kernel(hidx_ref, tidx_ref,       # SMEM scalar prefetch, flat (B * n_pad,)
               h_ref, r_ref, t_ref,      # (B, D) f32 VMEM-resident blocks
               e_ref,                    # (e_num, D) f32, whole table in VMEM
               out_ref,                  # (B, tn) f32 output tile
               hbuf, tbuf):              # (B, chunk, D) f32 gather scratch
        j = pl.program_id(0)
        col0 = j * tn

        h = h_ref[...]
        r = r_ref[...]
        t = t_ref[...]
        w_head = (r * t)[:, None, :]      # hoisted broadcasts (no CSE in-loop)
        w_tail = (h * r)[:, None, :]

        for c in range(n_chunks):         # static chunk loop: static out offsets
            base = c * chunk

            @pl.loop(0, chunk // unroll)
            def _(blk):
                for u in range(unroll):   # manual unroll: scalar math co-issues
                    i = blk * unroll + u
                    for b in range(B):    # B is small & static -> unrolled
                        flat = b * n_pad + col0 + base + i
                        hi = hidx_ref[flat]
                        ti = tidx_ref[flat]
                        # No DMA descriptors: direct dynamic VMEM row loads/stores.
                        hbuf[b, pl.ds(i, 1), :] = e_ref[pl.ds(hi, 1), :]
                        tbuf[b, pl.ds(i, 1), :] = e_ref[pl.ds(ti, 1), :]

            lo = c * chunk
            out_ref[:, lo:lo + chunk] = _score_chunk(
                hbuf[...], tbuf[...], w_head, w_tail)

    return kernel


# -----------------------------------------------------------------------------
# HBM path: table too large for VMEM -> manual row-gather DMAs (bounded window).
# -----------------------------------------------------------------------------
def _make_hbm_kernel(B, tn, n_pad, window, n_sem_slots, chunk, unroll):
    n_chunks = tn // chunk

    def kernel(hidx_ref, tidx_ref,       # SMEM scalar prefetch, flat (B * n_pad,)
               h_ref, r_ref, t_ref,      # (B, D) f32 VMEM-resident blocks
               e_hbm,                    # (e_num, D) bf16 raw HBM ref (pl.ANY)
               out_ref,                  # (B, tn) f32 output tile
               hbuf, tbuf, sem):         # (B, tn, D) bf16 scratch x2 + DMA sems
        j = pl.program_id(0)
        col0 = j * tn

        def issue(i, his, tis):
            slot = i % n_sem_slots
            for b in range(B):
                pltpu.make_async_copy(e_hbm.at[pl.ds(his[b], 1), :],
                                      hbuf.at[b, pl.ds(i, 1), :],
                                      sem.at[0, slot]).start()
                pltpu.make_async_copy(e_hbm.at[pl.ds(tis[b], 1), :],
                                      tbuf.at[b, pl.ds(i, 1), :],
                                      sem.at[1, slot]).start()

        def retire(i):
            # Wait descriptor: same (1, D) shape as the issued copies (paged-attn
            # pattern).  Semaphores are grouped by slot = i % n_sem_slots; within a
            # slot attribution is by byte-count, which is sufficient because compute
            # only starts after the full drain below (total waits == total issues).
            slot = i % n_sem_slots
            for b in range(B):
                pltpu.make_async_copy(e_hbm.at[pl.ds(0, 1), :],
                                      hbuf.at[b, pl.ds(i, 1), :],
                                      sem.at[0, slot]).wait()
                pltpu.make_async_copy(e_hbm.at[pl.ds(0, 1), :],
                                      tbuf.at[b, pl.ds(i, 1), :],
                                      sem.at[1, slot]).wait()

        # Bounded sliding window of outstanding copies; retire-before-issue; the
        # SMEM index reads are hoisted above the .wait() (sst->sld forwarding).
        @pl.loop(0, tn // unroll)
        def _(blk):
            for u in range(unroll):
                i = blk * unroll + u
                his = [hidx_ref[b * n_pad + col0 + i] for b in range(B)]
                tis = [tidx_ref[b * n_pad + col0 + i] for b in range(B)]

                @pl.when(i >= window)
                def _():
                    retire(i - window)

                issue(i, his, tis)

        @pl.loop(tn - window, tn)
        def _(i):
            retire(i)

        h = h_ref[...]
        r = r_ref[...]
        t = t_ref[...]
        w_head = (r * t)[:, None, :]
        w_tail = (h * r)[:, None, :]
        # TODO(synk): overlap this compute with the gather of the next sub-chunk
        # (double-buffered hbuf/tbuf per chunk) for tables that must stay in HBM.
        for c in range(n_chunks):
            lo = c * chunk
            out_ref[:, lo:lo + chunk] = _score_chunk(
                hbuf[:, lo:lo + chunk, :], tbuf[:, lo:lo + chunk, :],
                w_head, w_tail)

    return kernel


# -----------------------------------------------------------------------------
# Wrapper:
#   out[b, n] = log sigmoid(-( <E[hidx[b,n]], r[b]*t[b]> + <E[tidx[b,n]], h[b]*r[b]> ))
# -----------------------------------------------------------------------------
def neg_logsig_score(E_bf16, h, r, t, neg_head_idx, neg_tail_idx, *,
                     tn=512, window=64, n_sem_slots=8, chunk=128, unroll=4,
                     force_hbm=False):
    B, N = neg_head_idx.shape
    e_num, D = E_bf16.shape
    assert D % 128 == 0, "embedding dim must be a multiple of 128 lanes"

    # Fast path: whole f32 table (double-buffer counted) must fit the VMEM budget
    # with room to spare on 64 MiB (v7x) parts.
    table_f32_bytes = e_num * D * 4
    fast = (not force_hbm) and (table_f32_bytes <= 8 * 1024 * 1024)

    vmem_budget = 24 * 1024 * 1024          # conservative working-set budget (v7x)
    tn = max(128, min((tn // 128) * 128, pl.cdiv(N, 128) * 128))
    chunk = min(chunk, tn)

    def usage(tn_):
        out = 2 * B * tn_ * 4                       # double-buffered out tile
        resident = 2 * 3 * B * D * 4                # h, r, t blocks (x2 buffers)
        temps = 4 * B * chunk * D * 4               # per-chunk f32 compute temps
        if fast:
            return (2 * table_f32_bytes             # table (x2 pipeline buffers)
                    + 2 * 2 * B * chunk * D * 4     # f32 gather scratch
                    + out + resident + temps)
        return (2 * 2 * B * tn_ * D * 2             # bf16 gather scratch
                + out + resident + temps)

    while tn > 128 and usage(tn) > vmem_budget:
        tn -= 128
    # v7x has two TensorCores: prefer >= 2 "parallel" grid steps when N allows.
    while tn > 128 and pl.cdiv(N, tn) < 2:
        tn -= 128

    n_pad = pl.cdiv(N, tn) * tn
    chunk = min(chunk, tn)
    window = max(1, min(window, tn))

    pad = n_pad - N
    # TODO(synk): for production-sized B*N, switch the flattened scalar-prefetch
    # index arrays to per-tile SMEM blocks to keep SMEM footprint O(B*tn).
    hidx = jnp.pad(neg_head_idx.astype(jnp.int32), ((0, 0), (0, pad))).reshape(-1)
    tidx = jnp.pad(neg_tail_idx.astype(jnp.int32), ((0, 0), (0, pad))).reshape(-1)

    common_in_specs = [
        pl.BlockSpec((B, D), lambda j, hr, tr: (0, 0)),   # h
        pl.BlockSpec((B, D), lambda j, hr, tr: (0, 0)),   # r
        pl.BlockSpec((B, D), lambda j, hr, tr: (0, 0)),   # t
    ]
    out_spec = pl.BlockSpec((B, tn), lambda j, hr, tr: (0, j))

    if fast:
        kernel = _make_vmem_kernel(B, tn, n_pad, chunk, unroll)
        in_specs = common_in_specs + [
            pl.BlockSpec((e_num, D), lambda j, hr, tr: (0, 0))]   # E in VMEM
        scratch = [pltpu.VMEM((B, chunk, D), jnp.float32),
                   pltpu.VMEM((B, chunk, D), jnp.float32)]
        e_arg = E_bf16.astype(jnp.float32)   # small table: widen once, not per row
    else:
        kernel = _make_hbm_kernel(B, tn, n_pad, window, n_sem_slots, chunk, unroll)
        in_specs = common_in_specs + [pl.BlockSpec(memory_space=pl.ANY)]  # E in HBM
        scratch = [pltpu.VMEM((B, tn, D), jnp.bfloat16),
                   pltpu.VMEM((B, tn, D), jnp.bfloat16),
                   pltpu.SemaphoreType.DMA((2, n_sem_slots))]
        e_arg = E_bf16

    grid_spec = pltpu.PrefetchScalarGridSpec(
        num_scalar_prefetch=2,
        grid=(n_pad // tn,),
        in_specs=in_specs,
        out_specs=out_spec,
        scratch_shapes=scratch,
    )
    out = pl.pallas_call(
        kernel,
        out_shape=jax.ShapeDtypeStruct((B, n_pad), jnp.float32),
        grid_spec=grid_spec,
        compiler_params=pltpu.CompilerParams(
            dimension_semantics=("parallel",),
            vmem_limit_bytes=32 * 1024 * 1024,
        ),
    )(hidx, tidx, h, r, t, e_arg)
    return out[:, :N]


# -----------------------------------------------------------------------------
# Parameter init (mirrors nn.init.xavier_uniform_ on zeros-shaped tables).
# -----------------------------------------------------------------------------
def init_params(key, e_num, r_num, e_dim, r_dim):
    ke, kr = jax.random.split(key)
    e_bound = (6.0 / (e_num + e_dim)) ** 0.5
    r_bound = (6.0 / (r_num + r_dim)) ** 0.5
    E = jax.random.uniform(ke, (e_num, e_dim), jnp.float32, -e_bound, e_bound)
    R = jax.random.uniform(kr, (r_num, r_dim), jnp.float32, -r_bound, r_bound)
    # TODO(synk): torch keeps f32 parameters; a real trainer holds f32 master
    # weights and streams a bf16 copy of the entity table.
    return {"E_emb": E.astype(jnp.bfloat16), "R_emb": R}


# -----------------------------------------------------------------------------
# Forward pass (training branch of KGEBaseModel.forward, ns='uniform').
# -----------------------------------------------------------------------------
@partial(jax.jit, static_argnames=("force_hbm",))
def kge_forward(params, positive_sample, neg_head_idx, neg_tail_idx,
                force_hbm=False):
    E, R = params["E_emb"], params["R_emb"]

    h = E[positive_sample[:, 0]].astype(jnp.float32)   # (B, D) tiny gathers
    r = R[positive_sample[:, 1]].astype(jnp.float32)
    t = E[positive_sample[:, 2]].astype(jnp.float32)

    # Fused: gather + head/tail DistMult + logsigmoid in one pallas_call.
    neg_ls = neg_logsig_score(E, h, r, t, neg_head_idx, neg_tail_idx,
                              force_hbm=force_hbm)     # (B, N)
    neg_score = neg_ls.mean(axis=1)

    # Positive score in plain JAX (a (B,)-sized reduction).
    pos_score = _log_sigmoid(jnp.sum(h * r * t, axis=-1))

    # use_subsampling_weight=False, use_regularization=None
    pos_sample_loss = -pos_score.mean()
    neg_sample_loss = -neg_score.mean()
    loss = (pos_sample_loss + neg_sample_loss) / 2.0
    return {"loss": loss}


# -----------------------------------------------------------------------------
# Pure-JAX reference (same math, no Pallas).
# -----------------------------------------------------------------------------
def kge_forward_ref(params, positive_sample, neg_head_idx, neg_tail_idx):
    E, R = params["E_emb"], params["R_emb"]
    h = E[positive_sample[:, 0]].astype(jnp.float32)
    r = R[positive_sample[:, 1]].astype(jnp.float32)
    t = E[positive_sample[:, 2]].astype(jnp.float32)
    ch = E[neg_head_idx].astype(jnp.float32)
    ct = E[neg_tail_idx].astype(jnp.float32)
    sh = jnp.sum(ch * (r * t)[:, None, :], axis=-1)
    st = jnp.sum(ct * (h * r)[:, None, :], axis=-1)
    neg = _log_sigmoid(-(sh + st)).mean(axis=1)
    pos = _log_sigmoid(jnp.sum(h * r * t, axis=-1))
    return {"loss": (-pos.mean() - neg.mean()) / 2.0}


if __name__ == "__main__":
    e_num, r_num = 2048, 16
    e_dim = r_dim = 128
    B = 2

    key = jax.random.PRNGKey(0)
    kp, k1, k2, k3, k4 = jax.random.split(key, 5)
    params = init_params(kp, e_num, r_num, e_dim, r_dim)

    positive_sample = jnp.stack(
        [
            jax.random.randint(k1, (B,), 0, e_num),   # head
            jax.random.randint(k2, (B,), 0, r_num),   # relation
            jax.random.randint(k3, (B,), 0, e_num),   # tail
        ],
        axis=1,
    ).astype(jnp.int32)

    # N=1024 exercises a multi-step parallel grid; N=200 exercises ragged N.
    # force_hbm=True exercises the manual-DMA path used for large entity tables.
    for n_neg in (1024, 200):
        kh, kt = jax.random.split(jax.random.fold_in(k4, n_neg))
        neg_head_idx = jax.random.randint(kh, (B, n_neg), 0, e_num, jnp.int32)
        neg_tail_idx = jax.random.randint(kt, (B, n_neg), 0, e_num, jnp.int32)

        ref = kge_forward_ref(params, positive_sample, neg_head_idx, neg_tail_idx)

        for force_hbm in (False, True):
            out = kge_forward(params, positive_sample, neg_head_idx,
                              neg_tail_idx, force_hbm=force_hbm)
            jax.block_until_ready(out)
            assert jnp.allclose(out["loss"], ref["loss"], rtol=1e-3, atol=1e-3), (
                n_neg, force_hbm, out["loss"], ref["loss"])

    print("KERNEL_OK")
</pallas_src>

<mosaic_0001>
module attributes {stable_mosaic.version = 11 : i64} {
  func.func @kernel(%arg0: i32, %arg1: memref<2048xi32, #tpu.memory_space<smem>>, %arg2: memref<2048xi32, #tpu.memory_space<smem>>, %arg3: memref<2x128xf32, #tpu.memory_space<vmem>>, %arg4: memref<2x128xf32, #tpu.memory_space<vmem>>, %arg5: memref<2x128xf32, #tpu.memory_space<vmem>>, %arg6: memref<2048x128xf32, #tpu.memory_space<vmem>>, %arg7: memref<2x512xf32, #tpu.memory_space<vmem>>, %arg8: memref<2x128x128xf32, #tpu.memory_space<vmem>>, %arg9: memref<2x128x128xf32, #tpu.memory_space<vmem>>) attributes {dimension_semantics = [#tpu.dimension_semantics<parallel>], iteration_bounds = array<i64: 2>, scalar_prefetch = 2 : i64, scratch_operands = 2 : i64, tpu.core_type = #tpu.core_type<tc>, window_params = [{pipeline_mode = #tpu.pipeline_mode<synchronous>, transform_indices = @transform_0, window_bounds = array<i64: 2, 128>}, {pipeline_mode = #tpu.pipeline_mode<synchronous>, transform_indices = @transform_1, window_bounds = array<i64: 2, 128>}, {pipeline_mode = #tpu.pipeline_mode<synchronous>, transform_indices = @transform_2, window_bounds = array<i64: 2, 128>}, {pipeline_mode = #tpu.pipeline_mode<synchronous>, transform_indices = @transform_3, window_bounds = array<i64: 2048, 128>}, {transform_indices = @transform_4, window_bounds = array<i64: 2, 512>}]} {
    %c512_i32 = arith.constant 512 : i32
    %0 = arith.muli %arg0, %c512_i32 : i32
    %c0 = arith.constant 0 : index
    %c0_0 = arith.constant 0 : index
    %1 = vector.load %arg3[%c0, %c0_0] : memref<2x128xf32, #tpu.memory_space<vmem>>, vector<2x128xf32>
    %c0_1 = arith.constant 0 : index
    %c0_2 = arith.constant 0 : index
    %2 = vector.load %arg4[%c0_1, %c0_2] : memref<2x128xf32, #tpu.memory_space<vmem>>, vector<2x128xf32>
    %c0_3 = arith.constant 0 : index
    %c0_4 = arith.constant 0 : index
    %3 = vector.load %arg5[%c0_3, %c0_4] : memref<2x128xf32, #tpu.memory_space<vmem>>, vector<2x128xf32>
    %4 = arith.mulf %2, %3 : vector<2x128xf32>
    %5 = vector.shape_cast %4 : vector<2x128xf32> to vector<2x1x128xf32>
    %6 = arith.mulf %1, %2 : vector<2x128xf32>
    %7 = vector.shape_cast %6 : vector<2x128xf32> to vector<2x1x128xf32>
    %c0_i32 = arith.constant 0 : i32
    %c32_i32 = arith.constant 32 : i32
    %8 = arith.addi %c0_i32, %c32_i32 : i32
    %c1_i32 = arith.constant 1 : i32
    scf.for %arg10 = %c0_i32 to %8 step %c1_i32  : i32 {
      %c1_i32_66 = arith.constant 1 : i32
      %92 = arith.muli %arg10, %c1_i32_66 : i32
      %c0_i32_67 = arith.constant 0 : i32
      %93 = arith.addi %c0_i32_67, %92 : i32
      %c4_i32 = arith.constant 4 : i32
      %94 = arith.muli %93, %c4_i32 : i32
      %c0_i32_68 = arith.constant 0 : i32
      %95 = arith.addi %94, %c0_i32_68 : i32
      %c0_i32_69 = arith.constant 0 : i32
      %96 = arith.addi %c0_i32_69, %0 : i32
      %c0_i32_70 = arith.constant 0 : i32
      %97 = arith.addi %96, %c0_i32_70 : i32
      %98 = arith.addi %97, %95 : i32
      %99 = arith.index_cast %98 : i32 to index
      %100 = memref.load %arg1[%99] : memref<2048xi32, #tpu.memory_space<smem>>
      %101 = arith.index_cast %98 : i32 to index
      %102 = memref.load %arg2[%101] : memref<2048xi32, #tpu.memory_space<smem>>
      %103 = arith.index_cast %100 : i32 to index
      %c0_71 = arith.constant 0 : index
      %104 = vector.load %arg6[%103, %c0_71] : memref<2048x128xf32, #tpu.memory_space<vmem>>, vector<1x128xf32>
      %c0_72 = arith.constant 0 : index
      %105 = arith.index_cast %95 : i32 to index
      %c0_73 = arith.constant 0 : index
      %106 = vector.load %arg8[%c0_72, %105, %c0_73] : memref<2x128x128xf32, #tpu.memory_space<vmem>>, vector<1x1x128xf32>
      %107 = vector.shape_cast %106 : vector<1x1x128xf32> to vector<1x128xf32>
      %108 = vector.shape_cast %104 : vector<1x128xf32> to vector<1x1x128xf32>
      tpu.vector_store %arg8[%c0_72, %105, %c0_73], %108 {strides = array<i32>} : memref<2x128x128xf32, #tpu.memory_space<vmem>>, vector<1x1x128xf32>,
      %109 = arith.index_cast %102 : i32 to index
      %c0_74 = arith.constant 0 : index
      %110 = vector.load %arg6[%109, %c0_74] : memref<2048x128xf32, #tpu.memory_space<vmem>>, vector<1x128xf32>
      %c0_75 = arith.constant 0 : index
      %111 = arith.index_cast %95 : i32 to index
      %c0_76 = arith.constant 0 : index
      %112 = vector.load %arg9[%c0_75, %111, %c0_76] : memref<2x128x128xf32, #tpu.memory_space<vmem>>, vector<1x1x128xf32>
      %113 = vector.shape_cast %112 : vector<1x1x128xf32> to vector<1x128xf32>
      %114 = vector.shape_cast %110 : vector<1x128xf32> to vector<1x1x128xf32>
      tpu.vector_store %arg9[%c0_75, %111, %c0_76], %114 {strides = array<i32>} : memref<2x128x128xf32, #tpu.memory_space<vmem>>, vector<1x1x128xf32>,
      %c1024_i32 = arith.constant 1024 : i32
      %115 = arith.addi %c1024_i32, %0 : i32
      %c0_i32_77 = arith.constant 0 : i32
      %116 = arith.addi %115, %c0_i32_77 : i32
      %117 = arith.addi %116, %95 : i32
      %118 = arith.index_cast %117 : i32 to index
      %119 = memref.load %arg1[%118] : memref<2048xi32, #tpu.memory_space<smem>>
      %120 = arith.index_cast %117 : i32 to index
      %121 = memref.load %arg2[%120] : memref<2048xi32, #tpu.memory_space<smem>>
      %122 = arith.index_cast %119 : i32 to index
      %c0_78 = arith.constant 0 : index
      %123 = vector.load %arg6[%122, %c0_78] : memref<2048x128xf32, #tpu.memory_space<vmem>>, vector<1x128xf32>
      %c1 = arith.constant 1 : index
      %124 = arith.index_cast %95 : i32 to index
      %c0_79 = arith.constant 0 : index
      %125 = vector.load %arg8[%c1, %124, %c0_79] : memref<2x128x128xf32, #tpu.memory_space<vmem>>, vector<1x1x128xf32>
      %126 = vector.shape_cast %125 : vector<1x1x128xf32> to vector<1x128xf32>
      %127 = vector.shape_cast %123 : vector<1x128xf32> to vector<1x1x128xf32>
      tpu.vector_store %arg8[%c1, %124, %c0_79], %127 {strides = array<i32>} : memref<2x128x128xf32, #tpu.memory_space<vmem>>, vector<1x1x128xf32>,
      %128 = arith.index_cast %121 : i32 to index
      %c0_80 = arith.constant 0 : index
      %129 = vector.load %arg6[%128, %c0_80] : memref<2048x128xf32, #tpu.memory_space<vmem>>, vector<1x128xf32>
      %c1_81 = arith.constant 1 : index
      %130 = arith.index_cast %95 : i32 to index
      %c0_82 = arith.constant 0 : index
      %131 = vector.load %arg9[%c1_81, %130, %c0_82] : memref<2x128x128xf32, #tpu.memory_space<vmem>>, vector<1x1x128xf32>
      %132 = vector.shape_cast %131 : vector<1x1x128xf32> to vector<1x128xf32>
      %133 = vector.shape_cast %129 : vector<1x128xf32> to vector<1x1x128xf32>
      tpu.vector_store %arg9[%c1_81, %130, %c0_82], %133 {strides = array<i32>} : memref<2x128x128xf32, #tpu.memory_space<vmem>>, vector<1x1x128xf32>,
      %c4_i32_83 = arith.constant 4 : i32
      %134 = arith.muli %93, %c4_i32_83 : i32
      %c1_i32_84 = arith.constant 1 : i32
      %135 = arith.addi %134, %c1_i32_84 : i32
      %c0_i32_85 = arith.constant 0 : i32
      %136 = arith.addi %c0_i32_85, %0 : i32
      %c0_i32_86 = arith.constant 0 : i32
      %137 = arith.addi %136, %c0_i32_86 : i32
      %138 = arith.addi %137, %135 : i32
      %139 = arith.index_cast %138 : i32 to index
      %140 = memref.load %arg1[%139] : memref<2048xi32, #tpu.memory_space<smem>>
      %141 = arith.index_cast %138 : i32 to index
      %142 = memref.load %arg2[%141] : memref<2048xi32, #tpu.memory_space<smem>>
      %143 = arith.index_cast %140 : i32 to index
      %c0_87 = arith.constant 0 : index
      %144 = vector.load %arg6[%143, %c0_87] : memref<2048x128xf32, #tpu.memory_space<vmem>>, vector<1x128xf32>
      %c0_88 = arith.constant 0 : index
      %145 = arith.index_cast %135 : i32 to index
      %c0_89 = arith.constant 0 : index
      %146 = vector.load %arg8[%c0_88, %145, %c0_89] : memref<2x128x128xf32, #tpu.memory_space<vmem>>, vector<1x1x128xf32>
      %147 = vector.shape_cast %146 : vector<1x1x128xf32> to vector<1x128xf32>
      %148 = vector.shape_cast %144 : vector<1x128xf32> to vector<1x1x128xf32>
      tpu.vector_store %arg8[%c0_88, %145, %c0_89], %148 {strides = array<i32>} : memref<2x128x128xf32, #tpu.memory_space<vmem>>, vector<1x1x128xf32>,
      %149 = arith.index_cast %142 : i32 to index
      %c0_90 = arith.constant 0 : index
      %150 = vector.load %arg6[%149, %c0_90] : memref<2048x128xf32, #tpu.memory_space<vmem>>, vector<1x128xf32>
      %c0_91 = arith.constant 0 : index
      %151 = arith.index_cast %135 : i32 to index
      %c0_92 = arith.constant 0 : index
      %152 = vector.load %arg9[%c0_91, %151, %c0_92] : memref<2x128x128xf32, #tpu.memory_space<vmem>>, vector<1x1x128xf32>
      %153 = vector.shape_cast %152 : vector<1x1x128xf32> to vector<1x128xf32>
      %154 = vector.shape_cast %150 : vector<1x128xf32> to vector<1x1x128xf32>
      tpu.vector_store %arg9[%c0_91, %151, %c0_92], %154 {strides = array<i32>} : memref<2x128x128xf32, #tpu.memory_space<vmem>>, vector<1x1x128xf32>,
      %c1024_i32_93 = arith.constant 1024 : i32
      %155 = arith.addi %c1024_i32_93, %0 : i32
      %c0_i32_94 = arith.constant 0 : i32
      %156 = arith.addi %155, %c0_i32_94 : i32
      %157 = arith.addi %156, %135 : i32
      %158 = arith.index_cast %157 : i32 to index
      %159 = memref.load %arg1[%158] : memref<2048xi32, #tpu.memory_space<smem>>
      %160 = arith.index_cast %157 : i32 to index
      %161 = memref.load %arg2[%160] : memref<2048xi32, #tpu.memory_space<smem>>
      %162 = arith.index_cast %159 : i32 to index
      %c0_95 = arith.constant 0 : index
      %163 = vector.load %arg6[%162, %c0_95] : memref<2048x128xf32, #tpu.memory_space<vmem>>, vector<1x128xf32>
      %c1_96 = arith.constant 1 : index
      %164 = arith.index_cast %135 : i32 to index
      %c0_97 = arith.constant 0 : index
      %165 = vector.load %arg8[%c1_96, %164, %c0_97] : memref<2x128x128xf32, #tpu.memory_space<vmem>>, vector<1x1x128xf32>
      %166 = vector.shape_cast %165 : vector<1x1x128xf32> to vector<1x128xf32>
      %167 = vector.shape_cast %163 : vector<1x128xf32> to vector<1x1x128xf32>
      tpu.vector_store %arg8[%c1_96, %164, %c0_97], %167 {strides = array<i32>} : memref<2x128x128xf32, #tpu.memory_space<vmem>>, vector<1x1x128xf32>,
      %168 = arith.index_cast %161 : i32 to index
      %c0_98 = arith.constant 0 : index
      %169 = vector.load %arg6[%168, %c0_98] : memref<2048x128xf32, #tpu.memory_space<vmem>>, vector<1x128xf32>
      %c1_99 = arith.constant 1 : index
      %170 = arith.index_cast %135 : i32 to index
      %c0_100 = arith.constant 0 : index
      %171 = vector.load %arg9[%c1_99, %170, %c0_100] : memref<2x128x128xf32, #tpu.memory_space<vmem>>, vector<1x1x128xf32>
      %172 = vector.shape_cast %171 : vector<1x1x128xf32> to vector<1x128xf32>
      %173 = vector.shape_cast %169 : vector<1x128xf32> to vector<1x1x128xf32>
      tpu.vector_store %arg9[%c1_99, %170, %c0_100], %173 {strides = array<i32>} : memref<2x128x128xf32, #tpu.memory_space<vmem>>, vector<1x1x128xf32>,
      %c4_i32_101 = arith.constant 4 : i32
      %174 = arith.muli %93, %c4_i32_101 : i32
      %c2_i32 = arith.constant 2 : i32
      %175 = arith.addi %174, %c2_i32 : i32
      %c0_i32_102 = arith.constant 0 : i32
      %176 = arith.addi %c0_i32_102, %0 : i32
      %c0_i32_103 = arith.constant 0 : i32
      %177 = arith.addi %176, %c0_i32_103 : i32
      %178 = arith.addi %177, %175 : i32
      %179 = arith.index_cast %178 : i32 to index
      %180 = memref.load %arg1[%179] : memref<2048xi32, #tpu.memory_space<smem>>
      %181 = arith.index_cast %178 : i32 to index
      %182 = memref.load %arg2[%181] : memref<2048xi32, #tpu.memory_space<smem>>
      %183 = arith.index_cast %180 : i32 to index
      %c0_104 = arith.constant 0 : index
      %184 = vector.load %arg6[%183, %c0_104] : memref<2048x128xf32, #tpu.memory_space<vmem>>, vector<1x128xf32>
      %c0_105 = arith.constant 0 : index
      %185 = arith.index_cast %175 : i32 to index
      %c0_106 = arith.constant 0 : index
      %186 = vector.load %arg8[%c0_105, %185, %c0_106] : memref<2x128x128xf32, #tpu.memory_space<vmem>>, vector<1x1x128xf32>
      %187 = vector.shape_cast %186 : vector<1x1x128xf32> to vector<1x128xf32>
      %188 = vector.shape_cast %184 : vector<1x128xf32> to vector<1x1x128xf32>
      tpu.vector_store %arg8[%c0_105, %185, %c0_106], %188 {strides = array<i32>} : memref<2x128x128xf32, #tpu.memory_space<vmem>>, vector<1x1x128xf32>,
      %189 = arith.index_cast %182 : i32 to index
      %c0_107 = arith.constant 0 : index
      %190 = vector.load %arg6[%189, %c0_107] : memref<2048x128xf32, #tpu.memory_space<vmem>>, vector<1x128xf32>
      %c0_108 = arith.constant 0 : index
      %191 = arith.index_cast %175 : i32 to index
      %c0_109 = arith.constant 0 : index
      %192 = vector.load %arg9[%c0_108, %191, %c0_109] : memref<2x128x128xf32, #tpu.memory_space<vmem>>, vector<1x1x128xf32>
      %193 = vector.shape_cast %192 : vector<1x1x128xf32> to vector<1x128xf32>
      %194 = vector.shape_cast %190 : vector<1x128xf32> to vector<1x1x128xf32>
      tpu.vector_store %arg9[%c0_108, %191, %c0_109], %194 {strides = array<i32>} : memref<2x128x128xf32, #tpu.memory_space<vmem>>, vector<1x1x128xf32>,
      %c1024_i32_110 = arith.constant 1024 : i32
      %195 = arith.addi %c1024_i32_110, %0 : i32
      %c0_i32_111 = arith.constant 0 : i32
      %196 = arith.addi %195, %c0_i32_111 : i32
      %197 = arith.addi %196, %175 : i32
      %198 = arith.index_cast %197 : i32 to index
      %199 = memref.load %arg1[%198] : memref<2048xi32, #tpu.memory_space<smem>>
      %200 = arith.index_cast %197 : i32 to index
      %201 = memref.load %arg2[%200] : memref<2048xi32, #tpu.memory_space<smem>>
      %202 = arith.index_cast %199 : i32 to index
      %c0_112 = arith.constant 0 : index
      %203 = vector.load %arg6[%202, %c0_112] : memref<2048x128xf32, #tpu.memory_space<vmem>>, vector<1x128xf32>
      %c1_113 = arith.constant 1 : index
      %204 = arith.index_cast %175 : i32 to index
      %c0_114 = arith.constant 0 : index
      %205 = vector.load %arg8[%c1_113, %204, %c0_114] : memref<2x128x128xf32, #tpu.memory_space<vmem>>, vector<1x1x128xf32>
      %206 = vector.shape_cast %205 : vector<1x1x128xf32> to vector<1x128xf32>
      %207 = vector.shape_cast %203 : vector<1x128xf32> to vector<1x1x128xf32>
      tpu.vector_store %arg8[%c1_113, %204, %c0_114], %207 {strides = array<i32>} : memref<2x128x128xf32, #tpu.memory_space<vmem>>, vector<1x1x128xf32>,
      %208 = arith.index_cast %201 : i32 to index
      %c0_115 = arith.constant 0 : index
      %209 = vector.load %arg6[%208, %c0_115] : memref<2048x128xf32, #tpu.memory_space<vmem>>, vector<1x128xf32>
      %c1_116 = arith.constant 1 : index
      %210 = arith.index_cast %175 : i32 to index
      %c0_117 = arith.constant 0 : index
      %211 = vector.load %arg9[%c1_116, %210, %c0_117] : memref<2x128x128xf32, #tpu.memory_space<vmem>>, vector<1x1x128xf32>
      %212 = vector.shape_cast %211 : vector<1x1x128xf32> to vector<1x128xf32>
      %213 = vector.shape_cast %209 : vector<1x128xf32> to vector<1x1x128xf32>
      tpu.vector_store %arg9[%c1_116, %210, %c0_117], %213 {strides = array<i32>} : memref<2x128x128xf32, #tpu.memory_space<vmem>>, vector<1x1x128xf32>,
      %c4_i32_118 = arith.constant 4 : i32
      %214 = arith.muli %93, %c4_i32_118 : i32
      %c3_i32 = arith.constant 3 : i32
      %215 = arith.addi %214, %c3_i32 : i32
      %c0_i32_119 = arith.constant 0 : i32
      %216 = arith.addi %c0_i32_119, %0 : i32
      %c0_i32_120 = arith.constant 0 : i32
      %217 = arith.addi %216, %c0_i32_120 : i32
      %218 = arith.addi %217, %215 : i32
      %219 = arith.index_cast %218 : i32 to index
      %220 = memref.load %arg1[%219] : memref<2048xi32, #tpu.memory_space<smem>>
      %221 = arith.index_cast %218 : i32 to index
      %222 = memref.load %arg2[%221] : memref<2048xi32, #tpu.memory_space<smem>>
      %223 = arith.index_cast %220 : i32 to index
      %c0_121 = arith.constant 0 : index
      %224 = vector.load %arg6[%223, %c0_121] : memref<2048x128xf32, #tpu.memory_space<vmem>>, vector<1x128xf32>
      %c0_122 = arith.constant 0 : index
      %225 = arith.index_cast %215 : i32 to index
      %c0_123 = arith.constant 0 : index
      %226 = vector.load %arg8[%c0_122, %225, %c0_123] : memref<2x128x128xf32, #tpu.memory_space<vmem>>, vector<1x1x128xf32>
      %227 = vector.shape_cast %226 : vector<1x1x128xf32> to vector<1x128xf32>
      %228 = vector.shape_cast %224 : vector<1x128xf32> to vector<1x1x128xf32>
      tpu.vector_store %arg8[%c0_122, %225, %c0_123], %228 {strides = array<i32>} : memref<2x128x128xf32, #tpu.memory_space<vmem>>, vector<1x1x128xf32>,
      %229 = arith.index_cast %222 : i32 to index
      %c0_124 = arith.constant 0 : index
      %230 = vector.load %arg6[%229, %c0_124] : memref<2048x128xf32, #tpu.memory_space<vmem>>, vector<1x128xf32>
      %c0_125 = arith.constant 0 : index
      %231 = arith.index_cast %215 : i32 to index
      %c0_126 = arith.constant 0 : index
      %232 = vector.load %arg9[%c0_125, %231, %c0_126] : memref<2x128x128xf32, #tpu.memory_space<vmem>>, vector<1x1x128xf32>
      %233 = vector.shape_cast %232 : vector<1x1x128xf32> to vector<1x128xf32>
      %234 = vector.shape_cast %230 : vector<1x128xf32> to vector<1x1x128xf32>
      tpu.vector_store %arg9[%c0_125, %231, %c0_126], %234 {strides = array<i32>} : memref<2x128x128xf32, #tpu.memory_space<vmem>>, vector<1x1x128xf32>,
      %c1024_i32_127 = arith.constant 1024 : i32
      %235 = arith.addi %c1024_i32_127, %0 : i32
      %c0_i32_128 = arith.constant 0 : i32
      %236 = arith.addi %235, %c0_i32_128 : i32
      %237 = arith.addi %236, %215 : i32
      %238 = arith.index_cast %237 : i32 to index
      %239 = memref.load %arg1[%238] : memref<2048xi32, #tpu.memory_space<smem>>
      %240 = arith.index_cast %237 : i32 to index
      %241 = memref.load %arg2[%240] : memref<2048xi32, #tpu.memory_space<smem>>
      %242 = arith.index_cast %239 : i32 to index
      %c0_129 = arith.constant 0 : index
      %243 = vector.load %arg6[%242, %c0_129] : memref<2048x128xf32, #tpu.memory_space<vmem>>, vector<1x128xf32>
      %c1_130 = arith.constant 1 : index
      %244 = arith.index_cast %215 : i32 to index
      %c0_131 = arith.constant 0 : index
      %245 = vector.load %arg8[%c1_130, %244, %c0_131] : memref<2x128x128xf32, #tpu.memory_space<vmem>>, vector<1x1x128xf32>
      %246 = vector.shape_cast %245 : vector<1x1x128xf32> to vector<1x128xf32>
      %247 = vector.shape_cast %243 : vector<1x128xf32> to vector<1x1x128xf32>
      tpu.vector_store %arg8[%c1_130, %244, %c0_131], %247 {strides = array<i32>} : memref<2x128x128xf32, #tpu.memory_space<vmem>>, vector<1x1x128xf32>,
      %248 = arith.index_cast %241 : i32 to index
      %c0_132 = arith.constant 0 : index
      %249 = vector.load %arg6[%248, %c0_132] : memref<2048x128xf32, #tpu.memory_space<vmem>>, vector<1x128xf32>
      %c1_133 = arith.constant 1 : index
      %250 = arith.index_cast %215 : i32 to index
      %c0_134 = arith.constant 0 : index
      %251 = vector.load %arg9[%c1_133, %250, %c0_134] : memref<2x128x128xf32, #tpu.memory_space<vmem>>, vector<1x1x128xf32>
      %252 = vector.shape_cast %251 : vector<1x1x128xf32> to vector<1x128xf32>
      %253 = vector.shape_cast %249 : vector<1x128xf32> to vector<1x1x128xf32>
      tpu.vector_store %arg9[%c1_133, %250, %c0_134], %253 {strides = array<i32>} : memref<2x128x128xf32, #tpu.memory_space<vmem>>, vector<1x1x128xf32>,
    }
    %c32_i32_5 = arith.constant 32 : i32
    %c0_6 = arith.constant 0 : index
    %c0_7 = arith.constant 0 : index
    %c0_8 = arith.constant 0 : index
    %9 = vector.load %arg8[%c0_6, %c0_7, %c0_8] : memref<2x128x128xf32, #tpu.memory_space<vmem>>, vector<2x128x128xf32>
    %c0_9 = arith.constant 0 : index
    %c0_10 = arith.constant 0 : index
    %c0_11 = arith.constant 0 : index
    %10 = vector.load %arg9[%c0_9, %c0_10, %c0_11] : memref<2x128x128xf32, #tpu.memory_space<vmem>>, vector<2x128x128xf32>
    %11 = vector.broadcast %5 : vector<2x1x128xf32> to vector<2x128x128xf32>
    %12 = arith.mulf %9, %11 : vector<2x128x128xf32>
    %cst = arith.constant dense<0.000000e+00> : vector<2x128xf32>
    %13 = vector.multi_reduction <add>, %12, %cst [2] : vector<2x128x128xf32> to vector<2x128xf32>
    %14 = vector.broadcast %7 : vector<2x1x128xf32> to vector<2x128x128xf32>
    %15 = arith.mulf %10, %14 : vector<2x128x128xf32>
    %cst_12 = arith.constant dense<0.000000e+00> : vector<2x128xf32>
    %16 = vector.multi_reduction <add>, %15, %cst_12 [2] : vector<2x128x128xf32> to vector<2x128xf32>
    %17 = arith.addf %13, %16 : vector<2x128xf32>
    %cst_13 = arith.constant 0.000000e+00 : f32
    %18 = vector.broadcast %cst_13 : f32 to vector<2x128xf32>
    %19 = arith.subf %18, %17 : vector<2x128xf32>
    %cst_14 = arith.constant 0.000000e+00 : f32
    %20 = vector.broadcast %cst_14 : f32 to vector<2x128xf32>
    %21 = arith.minimumf %19, %20 : vector<2x128xf32>
    %22 = math.absf %19 : vector<2x128xf32>
    %cst_15 = arith.constant 0.000000e+00 : f32
    %23 = vector.broadcast %cst_15 : f32 to vector<2x128xf32>
    %24 = arith.subf %23, %22 : vector<2x128xf32>
    %25 = math.exp %24 : vector<2x128xf32>
    %26 = math.log1p %25 : vector<2x128xf32>
    %27 = arith.subf %21, %26 : vector<2x128xf32>
    %c0_16 = arith.constant 0 : index
    %c0_17 = arith.constant 0 : index
    %28 = vector.load %arg7[%c0_16, %c0_17] : memref<2x512xf32, #tpu.memory_space<vmem>>, vector<2x128xf32>
    tpu.vector_store %arg7[%c0_16, %c0_17], %27 {strides = array<i32>} : memref<2x512xf32, #tpu.memory_space<vmem>>, vector<2x128xf32>,
    %c0_i32_18 = arith.constant 0 : i32
    %c32_i32_19 = arith.constant 32 : i32
    %29 = arith.addi %c0_i32_18, %c32_i32_19 : i32
    %c1_i32_20 = arith.constant 1 : i32
    scf.for %arg10 = %c0_i32_18 to %29 step %c1_i32_20  : i32 {
      %c1_i32_66 = arith.constant 1 : i32
      %92 = arith.muli %arg10, %c1_i32_66 : i32
      %c0_i32_67 = arith.constant 0 : i32
      %93 = arith.addi %c0_i32_67, %92 : i32
      %c4_i32 = arith.constant 4 : i32
      %94 = arith.muli %93, %c4_i32 : i32
      %c0_i32_68 = arith.constant 0 : i32
      %95 = arith.addi %94, %c0_i32_68 : i32
      %c0_i32_69 = arith.constant 0 : i32
      %96 = arith.addi %c0_i32_69, %0 : i32
      %c128_i32 = arith.constant 128 : i32
      %97 = arith.addi %96, %c128_i32 : i32
      %98 = arith.addi %97, %95 : i32
      %99 = arith.index_cast %98 : i32 to index
      %100 = memref.load %arg1[%99] : memref<2048xi32, #tpu.memory_space<smem>>
      %101 = arith.index_cast %98 : i32 to index
      %102 = memref.load %arg2[%101] : memref<2048xi32, #tpu.memory_space<smem>>
      %103 = arith.index_cast %100 : i32 to index
      %c0_70 = arith.constant 0 : index
      %104 = vector.load %arg6[%103, %c0_70] : memref<2048x128xf32, #tpu.memory_space<vmem>>, vector<1x128xf32>
      %c0_71 = arith.constant 0 : index
      %105 = arith.index_cast %95 : i32 to index
      %c0_72 = arith.constant 0 : index
      %106 = vector.load %arg8[%c0_71, %105, %c0_72] : memref<2x128x128xf32, #tpu.memory_space<vmem>>, vector<1x1x128xf32>
      %107 = vector.shape_cast %106 : vector<1x1x128xf32> to vector<1x128xf32>
      %108 = vector.shape_cast %104 : vector<1x128xf32> to vector<1x1x128xf32>
      tpu.vector_store %arg8[%c0_71, %105, %c0_72], %108 {strides = array<i32>} : memref<2x128x128xf32, #tpu.memory_space<vmem>>, vector<1x1x128xf32>,
      %109 = arith.index_cast %102 : i32 to index
      %c0_73 = arith.constant 0 : index
      %110 = vector.load %arg6[%109, %c0_73] : memref<2048x128xf32, #tpu.memory_space<vmem>>, vector<1x128xf32>
      %c0_74 = arith.constant 0 : index
      %111 = arith.index_cast %95 : i32 to index
      %c0_75 = arith.constant 0 : index
      %112 = vector.load %arg9[%c0_74, %111, %c0_75] : memref<2x128x128xf32, #tpu.memory_space<vmem>>, vector<1x1x128xf32>
      %113 = vector.shape_cast %112 : vector<1x1x128xf32> to vector<1x128xf32>
      %114 = vector.shape_cast %110 : vector<1x128xf32> to vector<1x1x128xf32>
      tpu.vector_store %arg9[%c0_74, %111, %c0_75], %114 {strides = array<i32>} : memref<2x128x128xf32, #tpu.memory_space<vmem>>, vector<1x1x128xf32>,
      %c1024_i32 = arith.constant 1024 : i32
      %115 = arith.addi %c1024_i32, %0 : i32
      %c128_i32_76 = arith.constant 128 : i32
      %116 = arith.addi %115, %c128_i32_76 : i32
      %117 = arith.addi %116, %95 : i32
      %118 = arith.index_cast %117 : i32 to index
      %119 = memref.load %arg1[%118] : memref<2048xi32, #tpu.memory_space<smem>>
      %120 = arith.index_cast %117 : i32 to index
      %121 = memref.load %arg2[%120] : memref<2048xi32, #tpu.memory_space<smem>>
      %122 = arith.index_cast %119 : i32 to index
      %c0_77 = arith.constant 0 : index
      %123 = vector.load %arg6[%122, %c0_77] : memref<2048x128xf32, #tpu.memory_space<vmem>>, vector<1x128xf32>
      %c1 = arith.constant 1 : index
      %124 = arith.index_cast %95 : i32 to index
      %c0_78 = arith.constant 0 : index
      %125 = vector.load %arg8[%c1, %124, %c0_78] : memref<2x128x128xf32, #tpu.memory_space<vmem>>, vector<1x1x128xf32>
      %126 = vector.shape_cast %125 : vector<1x1x128xf32> to vector<1x128xf32>
      %127 = vector.shape_cast %123 : vector<1x128xf32> to vector<1x1x128xf32>
      tpu.vector_store %arg8[%c1, %124, %c0_78], %127 {strides = array<i32>} : memref<2x128x128xf32, #tpu.memory_space<vmem>>, vector<1x1x128xf32>,
      %128 = arith.index_cast %121 : i32 to index
      %c0_79 = arith.constant 0 : index
      %129 = vector.load %arg6[%128, %c0_79] : memref<2048x128xf32, #tpu.memory_space<vmem>>, vector<1x128xf32>
      %c1_80 = arith.constant 1 : index
      %130 = arith.index_cast %95 : i32 to index
      %c0_81 = arith.constant 0 : index
      %131 = vector.load %arg9[%c1_80, %130, %c0_81] : memref<2x128x128xf32, #tpu.memory_space<vmem>>, vector<1x1x128xf32>
      %132 = vector.shape_cast %131 : vector<1x1x128xf32> to vector<1x128xf32>
      %133 = vector.shape_cast %129 : vector<1x128xf32> to vector<1x1x128xf32>
      tpu.vector_store %arg9[%c1_80, %130, %c0_81], %133 {strides = array<i32>} : memref<2x128x128xf32, #tpu.memory_space<vmem>>, vector<1x1x128xf32>,
      %c4_i32_82 = arith.constant 4 : i32
      %134 = arith.muli %93, %c4_i32_82 : i32
      %c1_i32_83 = arith.constant 1 : i32
      %135 = arith.addi %134, %c1_i32_83 : i32
      %c0_i32_84 = arith.constant 0 : i32
      %136 = arith.addi %c0_i32_84, %0 : i32
      %c128_i32_85 = arith.constant 128 : i32
      %137 = arith.addi %136, %c128_i32_85 : i32
      %138 = arith.addi %137, %135 : i32
      %139 = arith.index_cast %138 : i32 to index
      %140 = memref.load %arg1[%139] : memref<2048xi32, #tpu.memory_space<smem>>
      %141 = arith.index_cast %138 : i32 to index
      %142 = memref.load %arg2[%141] : memref<2048xi32, #tpu.memory_space<smem>>
      %143 = arith.index_cast %140 : i32 to index
      %c0_86 = arith.constant 0 : index
      %144 = vector.load %arg6[%143, %c0_86] : memref<2048x128xf32, #tpu.memory_space<vmem>>, vector<1x128xf32>
      %c0_87 = arith.constant 0 : index
      %145 = arith.index_cast %135 : i32 to index
      %c0_88 = arith.constant 0 : index
      %146 = vector.load %arg8[%c0_87, %145, %c0_88] : memref<2x128x128xf32, #tpu.memory_space<vmem>>, vector<1x1x128xf32>
      %147 = vector.shape_cast %146 : vector<1x1x128xf32> to vector<1x128xf32>
      %148 = vector.shape_cast %144 : vector<1x128xf32> to vector<1x1x128xf32>
      tpu.vector_store %arg8[%c0_87, %145, %c0_88], %148 {strides = array<i32>} : memref<2x128x128xf32, #tpu.memory_space<vmem>>, vector<1x1x128xf32>,
      %149 = arith.index_cast %142 : i32 to index
      %c0_89 = arith.constant 0 : index
      %150 = vector.load %arg6[%149, %c0_89] : memref<2048x128xf32, #tpu.memory_space<vmem>>, vector<1x128xf32>
      %c0_90 = arith.constant 0 : index
      %151 = arith.index_cast %135 : i32 to index
      %c0_91 = arith.constant 0 : index
      %152 = vector.load %arg9[%c0_90, %151, %c0_91] : memref<2x128x128xf32, #tpu.memory_space<vmem>>, vector<1x1x128xf32>
      %153 = vector.shape_cast %152 : vector<1x1x128xf32> to vector<1x128xf32>
      %154 = vector.shape_cast %150 : vector<1x128xf32> to vector<1x1x128xf32>
      tpu.vector_store %arg9[%c0_90, %151, %c0_91], %154 {strides = array<i32>} : memref<2x128x128xf32, #tpu.memory_space<vmem>>, vector<1x1x128xf32>,
      %c1024_i32_92 = arith.constant 1024 : i32
      %155 = arith.addi %c1024_i32_92, %0 : i32
      %c128_i32_93 = arith.constant 128 : i32
      %156 = arith.addi %155, %c128_i32_93 : i32
      %157 = arith.addi %156, %135 : i32
      %158 = arith.index_cast %157 : i32 to index
      %159 = memref.load %arg1[%158] : memref<2048xi32, #tpu.memory_space<smem>>
      %160 = arith.index_cast %157 : i32 to index
      %161 = memref.load %arg2[%160] : memref<2048xi32, #tpu.memory_space<smem>>
      %162 = arith.index_cast %159 : i32 to index
      %c0_94 = arith.constant 0 : index
      %163 = vector.load %arg6[%162, %c0_94] : memref<2048x128xf32, #tpu.memory_space<vmem>>, vector<1x128xf32>
      %c1_95 = arith.constant 1 : index
      %164 = arith.index_cast %135 : i32 to index
      %c0_96 = arith.constant 0 : index
      %165 = vector.load %arg8[%c1_95, %164, %c0_96] : memref<2x128x128xf32, #tpu.memory_space<vmem>>, vector<1x1x128xf32>
      %166 = vector.shape_cast %165 : vector<1x1x128xf32> to vector<1x128xf32>
      %167 = vector.shape_cast %163 : vector<1x128xf32> to vector<1x1x128xf32>
      tpu.vector_store %arg8[%c1_95, %164, %c0_96], %167 {strides = array<i32>} : memref<2x128x128xf32, #tpu.memory_space<vmem>>, vector<1x1x128xf32>,
      %168 = arith.index_cast %161 : i32 to index
      %c0_97 = arith.constant 0 : index
      %169 = vector.load %arg6[%168, %c0_97] : memref<2048x128xf32, #tpu.memory_space<vmem>>, vector<1x128xf32>
      %c1_98 = arith.constant 1 : index
      %170 = arith.index_cast %135 : i32 to index
      %c0_99 = arith.constant 0 : index
      %171 = vector.load %arg9[%c1_98, %170, %c0_99] : memref<2x128x128xf32, #tpu.memory_space<vmem>>, vector<1x1x128xf32>
      %172 = vector.shape_cast %171 : vector<1x1x128xf32> to vector<1x128xf32>
      %173 = vector.shape_cast %169 : vector<1x128xf32> to vector<1x1x128xf32>
      tpu.vector_store %arg9[%c1_98, %170, %c0_99], %173 {strides = array<i32>} : memref<2x128x128xf32, #tpu.memory_space<vmem>>, vector<1x1x128xf32>,
      %c4_i32_100 = arith.constant 4 : i32
      %174 = arith.muli %93, %c4_i32_100 : i32
      %c2_i32 = arith.constant 2 : i32
      %175 = arith.addi %174, %c2_i32 : i32
      %c0_i32_101 = arith.constant 0 : i32
      %176 = arith.addi %c0_i32_101, %0 : i32
      %c128_i32_102 = arith.constant 128 : i32
      %177 = arith.addi %176, %c128_i32_102 : i32
      %178 = arith.addi %177, %175 : i32
      %179 = arith.index_cast %178 : i32 to index
      %180 = memref.load %arg1[%179] : memref<2048xi32, #tpu.memory_space<smem>>
      %181 = arith.index_cast %178 : i32 to index
      %182 = memref.load %arg2[%181] : memref<2048xi32, #tpu.memory_space<smem>>
      %183 = arith.index_cast %180 : i32 to index
      %c0_103 = arith.constant 0 : index
      %184 = vector.load %arg6[%183, %c0_103] : memref<2048x128xf32, #tpu.memory_space<vmem>>, vector<1x128xf32>
      %c0_104 = arith.constant 0 : index
      %185 = arith.index_cast %175 : i32 to index
      %c0_105 = arith.constant 0 : index
      %186 = vector.load %arg8[%c0_104, %185, %c0_105] : memref<2x128x128xf32, #tpu.memory_space<vmem>>, vector<1x1x128xf32>
      %187 = vector.shape_cast %186 : vector<1x1x128xf32> to vector<1x128xf32>
      %188 = vector.shape_cast %184 : vector<1x128xf32> to vector<1x1x128xf32>
      tpu.vector_store %arg8[%c0_104, %185, %c0_105], %188 {strides = array<i32>} : memref<2x128x128xf32, #tpu.memory_space<vmem>>, vector<1x1x128xf32>,
      %189 = arith.index_cast %182 : i32 to index
      %c0_106 = arith.constant 0 : index
      %190 = vector.load %arg6[%189, %c0_106] : memref<2048x128xf32, #tpu.memory_space<vmem>>, vector<1x128xf32>
      %c0_107 = arith.constant 0 : index
      %191 = arith.index_cast %175 : i32 to index
      %c0_108 = arith.constant 0 : index
      %192 = vector.load %arg9[%c0_107, %191, %c0_108] : memref<2x128x128xf32, #tpu.memory_space<vmem>>, vector<1x1x128xf32>
      %193 = vector.shape_cast %192 : vector<1x1x128xf32> to vector<1x128xf32>
      %194 = vector.shape_cast %190 : vector<1x128xf32> to vector<1x1x128xf32>
      tpu.vector_store %arg9[%c0_107, %191, %c0_108], %194 {strides = array<i32>} : memref<2x128x128xf32, #tpu.memory_space<vmem>>, vector<1x1x128xf32>,
      %c1024_i32_109 = arith.constant 1024 : i32
      %195 = arith.addi %c1024_i32_109, %0 : i32
      %c128_i32_110 = arith.constant 128 : i32
      %196 = arith.addi %195, %c128_i32_110 : i32
      %197 = arith.addi %196, %175 : i32
      %198 = arith.index_cast %197 : i32 to index
      %199 = memref.load %arg1[%198] : memref<2048xi32, #tpu.memory_space<smem>>
      %200 = arith.index_cast %197 : i32 to index
      %201 = memref.load %arg2[%200] : memref<2048xi32, #tpu.memory_space<smem>>
      %202 = arith.index_cast %199 : i32 to index
      %c0_111 = arith.constant 0 : index
      %203 = vector.load %arg6[%202, %c0_111] : memref<2048x128xf32, #tpu.memory_space<vmem>>, vector<1x128xf32>
      %c1_112 = arith.constant 1 : index
      %204 = arith.index_cast %175 : i32 to index
      %c0_113 = arith.constant 0 : index
      %205 = vector.load %arg8[%c1_112, %204, %c0_113] : memref<2x128x128xf32, #tpu.memory_space<vmem>>, vector<1x1x128xf32>
      %206 = vector.shape_cast %205 : vector<1x1x128xf32> to vector<1x128xf32>
      %207 = vector.shape_cast %203 : vector<1x128xf32> to vector<1x1x128xf32>
      tpu.vector_store %arg8[%c1_112, %204, %c0_113], %207 {strides = array<i32>} : memref<2x128x128xf32, #tpu.memory_space<vmem>>, vector<1x1x128xf32>,
      %208 = arith.index_cast %201 : i32 to index
      %c0_114 = arith.constant 0 : index
      %209 = vector.load %arg6[%208, %c0_114] : memref<2048x128xf32, #tpu.memory_space<vmem>>, vector<1x128xf32>
      %c1_115 = arith.constant 1 : index
      %210 = arith.index_cast %175 : i32 to index
      %c0_116 = arith.constant 0 : index
      %211 = vector.load %arg9[%c1_115, %210, %c0_116] : memref<2x128x128xf32, #tpu.memory_space<vmem>>, vector<1x1x128xf32>
      %212 = vector.shape_cast %211 : vector<1x1x128xf32> to vector<1x128xf32>
      %213 = vector.shape_cast %209 : vector<1x128xf32> to vector<1x1x128xf32>
      tpu.vector_store %arg9[%c1_115, %210, %c0_116], %213 {strides = array<i32>} : memref<2x128x128xf32, #tpu.memory_space<vmem>>, vector<1x1x128xf32>,
      %c4_i32_117 = arith.constant 4 : i32
      %214 = arith.muli %93, %c4_i32_117 : i32
      %c3_i32 = arith.constant 3 : i32
      %215 = arith.addi %214, %c3_i32 : i32
      %c0_i32_118 = arith.constant 0 : i32
      %216 = arith.addi %c0_i32_118, %0 : i32
      %c128_i32_119 = arith.constant 128 : i32
      %217 = arith.addi %216, %c128_i32_119 : i32
      %218 = arith.addi %217, %215 : i32
      %219 = arith.index_cast %218 : i32 to index
      %220 = memref.load %arg1[%219] : memref<2048xi32, #tpu.memory_space<smem>>
      %221 = arith.index_cast %218 : i32 to index
      %222 = memref.load %arg2[%221] : memref<2048xi32, #tpu.memory_space<smem>>
      %223 = arith.index_cast %220 : i32 to index
      %c0_120 = arith.constant 0 : index
      %224 = vector.load %arg6[%223, %c0_120] : memref<2048x128xf32, #tpu.memory_space<vmem>>, vector<1x128xf32>
      %c0_121 = arith.constant 0 : index
      %225 = arith.index_cast %215 : i32 to index
      %c0_122 = arith.constant 0 : index
      %226 = vector.load %arg8[%c0_121, %225, %c0_122] : memref<2x128x128xf32, #tpu.memory_space<vmem>>, vector<1x1x128xf32>
      %227 = vector.shape_cast %226 : vector<1x1x128xf32> to vector<1x128xf32>
      %228 = vector.shape_cast %224 : vector<1x128xf32> to vector<1x1x128xf32>
      tpu.vector_store %arg8[%c0_121, %225, %c0_122], %228 {strides = array<i32>} : memref<2x128x128xf32, #tpu.memory_space<vmem>>, vector<1x1x128xf32>,
      %229 = arith.index_cast %222 : i32 to index
      %c0_123 = arith.constant 0 : index
      %230 = vector.load %arg6[%229, %c0_123] : memref<2048x128xf32, #tpu.memory_space<vmem>>, vector<1x128xf32>
      %c0_124 = arith.constant 0 : index
      %231 = arith.index_cast %215 : i32 to index
      %c0_125 = arith.constant 0 : index
      %232 = vector.load %arg9[%c0_124, %231, %c0_125] : memref<2x128x128xf32, #tpu.memory_space<vmem>>, vector<1x1x128xf32>
      %233 = vector.shape_cast %232 : vector<1x1x128xf32> to vector<1x128xf32>
      %234 = vector.shape_cast %230 : vector<1x128xf32> to vector<1x1x128xf32>
      tpu.vector_store %arg9[%c0_124, %231, %c0_125], %234 {strides = array<i32>} : memref<2x128x128xf32, #tpu.memory_space<vmem>>, vector<1x1x128xf32>,
      %c1024_i32_126 = arith.constant 1024 : i32
      %235 = arith.addi %c1024_i32_126, %0 : i32
      %c128_i32_127 = arith.constant 128 : i32
      %236 = arith.addi %235, %c128_i32_127 : i32
      %237 = arith.addi %236, %215 : i32
      %238 = arith.index_cast %237 : i32 to index
      %239 = memref.load %arg1[%238] : memref<2048xi32, #tpu.memory_space<smem>>
      %240 = arith.index_cast %237 : i32 to index
      %241 = memref.load %arg2[%240] : memref<2048xi32, #tpu.memory_space<smem>>
      %242 = arith.index_cast %239 : i32 to index
      %c0_128 = arith.constant 0 : index
      %243 = vector.load %arg6[%242, %c0_128] : memref<2048x128xf32, #tpu.memory_space<vmem>>, vector<1x128xf32>
      %c1_129 = arith.constant 1 : index
      %244 = arith.index_cast %215 : i32 to index
      %c0_130 = arith.constant 0 : index
      %245 = vector.load %arg8[%c1_129, %244, %c0_130] : memref<2x128x128xf32, #tpu.memory_space<vmem>>, vector<1x1x128xf32>
      %246 = vector.shape_cast %245 : vector<1x1x128xf32> to vector<1x128xf32>
      %247 = vector.shape_cast %243 : vector<1x128xf32> to vector<1x1x128xf32>
      tpu.vector_store %arg8[%c1_129, %244, %c0_130], %247 {strides = array<i32>} : memref<2x128x128xf32, #tpu.memory_space<vmem>>, vector<1x1x128xf32>,
      %248 = arith.index_cast %241 : i32 to index
      %c0_131 = arith.constant 0 : index
      %249 = vector.load %arg6[%248, %c0_131] : memref<2048x128xf32, #tpu.memory_space<vmem>>, vector<1x128xf32>
      %c1_132 = arith.constant 1 : index
      %250 = arith.index_cast %215 : i32 to index
      %c0_133 = arith.constant 0 : index
      %251 = vector.load %arg9[%c1_132, %250, %c0_133] : memref<2x128x128xf32, #tpu.memory_space<vmem>>, vector<1x1x128xf32>
      %252 = vector.shape_cast %251 : vector<1x1x128xf32> to vector<1x128xf32>
      %253 = vector.shape_cast %249 : vector<1x128xf32> to vector<1x1x128xf32>
      tpu.vector_store %arg9[%c1_132, %250, %c0_133], %253 {strides = array<i32>} : memref<2x128x128xf32, #tpu.memory_space<vmem>>, vector<1x1x128xf32>,
    }
    %c32_i32_21 = arith.constant 32 : i32
    %c0_22 = arith.constant 0 : index
    %c0_23 = arith.constant 0 : index
    %c0_24 = arith.constant 0 : index
    %30 = vector.load %arg8[%c0_22, %c0_23, %c0_24] : memref<2x128x128xf32, #tpu.memory_space<vmem>>, vector<2x128x128xf32>
    %c0_25 = arith.constant 0 : index
    %c0_26 = arith.constant 0 : index
    %c0_27 = arith.constant 0 : index
    %31 = vector.load %arg9[%c0_25, %c0_26, %c0_27] : memref<2x128x128xf32, #tpu.memory_space<vmem>>, vector<2x128x128xf32>
    %32 = vector.broadcast %5 : vector<2x1x128xf32> to vector<2x128x128xf32>
    %33 = arith.mulf %30, %32 : vector<2x128x128xf32>
    %cst_28 = arith.constant dense<0.000000e+00> : vector<2x128xf32>
    %34 = vector.multi_reduction <add>, %33, %cst_28 [2] : vector<2x128x128xf32> to vector<2x128xf32>
    %35 = vector.broadcast %7 : vector<2x1x128xf32> to vector<2x128x128xf32>
    %36 = arith.mulf %31, %35 : vector<2x128x128xf32>
    %cst_29 = arith.constant dense<0.000000e+00> : vector<2x128xf32>
    %37 = vector.multi_reduction <add>, %36, %cst_29 [2] : vector<2x128x128xf32> to vector<2x128xf32>
    %38 = arith.addf %34, %37 : vector<2x128xf32>
    %cst_30 = arith.constant 0.000000e+00 : f32
    %39 = vector.broadcast %cst_30 : f32 to vector<2x128xf32>
    %40 = arith.subf %39, %38 : vector<2x128xf32>
    %cst_31 = arith.constant 0.000000e+00 : f32
    %41 = vector.broadcast %cst_31 : f32 to vector<2x128xf32>
    %42 = arith.minimumf %40, %41 : vector<2x128xf32>
    %43 = math.absf %40 : vector<2x128xf32>
    %cst_32 = arith.constant 0.000000e+00 : f32
    %44 = vector.broadcast %cst_32 : f32 to vector<2x128xf32>
    %45 = arith.subf %44, %43 : vector<2x128xf32>
    %46 = math.exp %45 : vector<2x128xf32>
    %47 = math.log1p %46 : vector<2x128xf32>
    %48 = arith.subf %42, %47 : vector<2x128xf32>
    %c0_33 = arith.constant 0 : index
    %c128 = arith.constant 128 : index
    %49 = vector.load %arg7[%c0_33, %c128] : memref<2x512xf32, #tpu.memory_space<vmem>>, vector<2x128xf32>
    tpu.vector_store %arg7[%c0_33, %c128], %48 {strides = array<i32>} : memref<2x512xf32, #tpu.memory_space<vmem>>, vector<2x128xf32>,
    %c0_i32_34 = arith.constant 0 : i32
    %c32_i32_35 = arith.constant 32 : i32
    %50 = arith.addi %c0_i32_34, %c32_i32_35 : i32
    %c1_i32_36 = arith.constant 1 : i32
    scf.for %arg10 = %c0_i32_34 to %50 step %c1_i32_36  : i32 {
      %c1_i32_66 = arith.constant 1 : i32
      %92 = arith.muli %arg10, %c1_i32_66 : i32
      %c0_i32_67 = arith.constant 0 : i32
      %93 = arith.addi %c0_i32_67, %92 : i32
      %c4_i32 = arith.constant 4 : i32
      %94 = arith.muli %93, %c4_i32 : i32
      %c0_i32_68 = arith.constant 0 : i32
      %95 = arith.addi %94, %c0_i32_68 : i32
      %c0_i32_69 = arith.constant 0 : i32
      %96 = arith.addi %c0_i32_69, %0 : i32
      %c256_i32 = arith.constant 256 : i32
      %97 = arith.addi %96, %c256_i32 : i32
      %98 = arith.addi %97, %95 : i32
      %99 = arith.index_cast %98 : i32 to index
      %100 = memref.load %arg1[%99] : memref<2048xi32, #tpu.memory_space<smem>>
      %101 = arith.index_cast %98 : i32 to index
      %102 = memref.load %arg2[%101] : memref<2048xi32, #tpu.memory_space<smem>>
      %103 = arith.index_cast %100 : i32 to index
      %c0_70 = arith.constant 0 : index
      %104 = vector.load %arg6[%103, %c0_70] : memref<2048x128xf32, #tpu.memory_space<vmem>>, vector<1x128xf32>
      %c0_71 = arith.constant 0 : index
      %105 = arith.index_cast %95 : i32 to index
      %c0_72 = arith.constant 0 : index
      %106 = vector.load %arg8[%c0_71, %105, %c0_72] : memref<2x128x128xf32, #tpu.memory_space<vmem>>, vector<1x1x128xf32>
      %107 = vector.shape_cast %106 : vector<1x1x128xf32> to vector<1x128xf32>
      %108 = vector.shape_cast %104 : vector<1x128xf32> to vector<1x1x128xf32>
      tpu.vector_store %arg8[%c0_71, %105, %c0_72], %108 {strides = array<i32>} : memref<2x128x128xf32, #tpu.memory_space<vmem>>, vector<1x1x128xf32>,
      %109 = arith.index_cast %102 : i32 to index
      %c0_73 = arith.constant 0 : index
      %110 = vector.load %arg6[%109, %c0_73] : memref<2048x128xf32, #tpu.memory_space<vmem>>, vector<1x128xf32>
      %c0_74 = arith.constant 0 : index
      %111 = arith.index_cast %95 : i32 to index
      %c0_75 = arith.constant 0 : index
      %112 = vector.load %arg9[%c0_74, %111, %c0_75] : memref<2x128x128xf32, #tpu.memory_space<vmem>>, vector<1x1x128xf32>
      %113 = vector.shape_cast %112 : vector<1x1x128xf32> to vector<1x128xf32>
      %114 = vector.shape_cast %110 : vector<1x128xf32> to vector<1x1x128xf32>
      tpu.vector_store %arg9[%c0_74, %111, %c0_75], %114 {strides = array<i32>} : memref<2x128x128xf32, #tpu.memory_space<vmem>>, vector<1x1x128xf32>,
      %c1024_i32 = arith.constant 1024 : i32
      %115 = arith.addi %c1024_i32, %0 : i32
      %c256_i32_76 = arith.constant 256 : i32
      %116 = arith.addi %115, %c256_i32_76 : i32
      %117 = arith.addi %116, %95 : i32
      %118 = arith.index_cast %117 : i32 to index
      %119 = memref.load %arg1[%118] : memref<2048xi32, #tpu.memory_space<smem>>
      %120 = arith.index_cast %117 : i32 to index
      %121 = memref.load %arg2[%120] : memref<2048xi32, #tpu.memory_space<smem>>
      %122 = arith.index_cast %119 : i32 to index
      %c0_77 = arith.constant 0 : index
      %123 = vector.load %arg6[%122, %c0_77] : memref<2048x128xf32, #tpu.memory_space<vmem>>, vector<1x128xf32>
      %c1 = arith.constant 1 : index
      %124 = arith.index_cast %95 : i32 to index
      %c0_78 = arith.constant 0 : index
      %125 = vector.load %arg8[%c1, %124, %c0_78] : memref<2x128x128xf32, #tpu.memory_space<vmem>>, vector<1x1x128xf32>
      %126 = vector.shape_cast %125 : vector<1x1x128xf32> to vector<1x128xf32>
      %127 = vector.shape_cast %123 : vector<1x128xf32> to vector<1x1x128xf32>
      tpu.vector_store %arg8[%c1, %124, %c0_78], %127 {strides = array<i32>} : memref<2x128x128xf32, #tpu.memory_space<vmem>>, vector<1x1x128xf32>,
      %128 = arith.index_cast %121 : i32 to index
      %c0_79 = arith.constant 0 : index
      %129 = vector.load %arg6[%128, %c0_79] : memref<2048x128xf32, #tpu.memory_space<vmem>>, vector<1x128xf32>
      %c1_80 = arith.constant 1 : index
      %130 = arith.index_cast %95 : i32 to index
      %c0_81 = arith.constant 0 : index
      %131 = vector.load %arg9[%c1_80, %130, %c0_81] : memref<2x128x128xf32, #tpu.memory_space<vmem>>, vector<1x1x128xf32>
      %132 = vector.shape_cast %131 : vector<1x1x128xf32> to vector<1x128xf32>
      %133 = vector.shape_cast %129 : vector<1x128xf32> to vector<1x1x128xf32>
      tpu.vector_store %arg9[%c1_80, %130, %c0_81], %133 {strides = array<i32>} : memref<2x128x128xf32, #tpu.memory_space<vmem>>, vector<1x1x128xf32>,
      %c4_i32_82 = arith.constant 4 : i32
      %134 = arith.muli %93, %c4_i32_82 : i32
      %c1_i32_83 = arith.constant 1 : i32
      %135 = arith.addi %134, %c1_i32_83 : i32
      %c0_i32_84 = arith.constant 0 : i32
      %136 = arith.addi %c0_i32_84, %0 : i32
      %c256_i32_85 = arith.constant 256 : i32
      %137 = arith.addi %136, %c256_i32_85 : i32
      %138 = arith.addi %137, %135 : i32
      %139 = arith.index_cast %138 : i32 to index
      %140 = memref.load %arg1[%139] : memref<2048xi32, #tpu.memory_space<smem>>
      %141 = arith.index_cast %138 : i32 to index
      %142 = memref.load %arg2[%141] : memref<2048xi32, #tpu.memory_space<smem>>
      %143 = arith.index_cast %140 : i32 to index
      %c0_86 = arith.constant 0 : index
      %144 = vector.load %arg6[%143, %c0_86] : memref<2048x128xf32, #tpu.memory_space<vmem>>, vector<1x128xf32>
      %c0_87 = arith.constant 0 : index
      %145 = arith.index_cast %135 : i32 to index
      %c0_88 = arith.constant 0 : index
      %146 = vector.load %arg8[%c0_87, %145, %c0_88] : memref<2x128x128xf32, #tpu.memory_space<vmem>>, vector<1x1x128xf32>
      %147 = vector.shape_cast %146 : vector<1x1x128xf32> to vector<1x128xf32>
      %148 = vector.shape_cast %144 : vector<1x128xf32> to vector<1x1x128xf32>
      tpu.vector_store %arg8[%c0_87, %145, %c0_88], %148 {strides = array<i32>} : memref<2x128x128xf32, #tpu.memory_space<vmem>>, vector<1x1x128xf32>,
      %149 = arith.index_cast %142 : i32 to index
      %c0_89 = arith.constant 0 : index
      %150 = vector.load %arg6[%149, %c0_89] : memref<2048x128xf32, #tpu.memory_space<vmem>>, vector<1x128xf32>
      %c0_90 = arith.constant 0 : index
      %151 = arith.index_cast %135 : i32 to index
      %c0_91 = arith.constant 0 : index
      %152 = vector.load %arg9[%c0_90, %151, %c0_91] : memref<2x128x128xf32, #tpu.memory_space<vmem>>, vector<1x1x128xf32>
      %153 = vector.shape_cast %152 : vector<1x1x128xf32> to vector<1x128xf32>
      %154 = vector.shape_cast %150 : vector<1x128xf32> to vector<1x1x128xf32>
      tpu.vector_store %arg9[%c0_90, %151, %c0_91], %154 {strides = array<i32>} : memref<2x128x128xf32, #tpu.memory_space<vmem>>, vector<1x1x128xf32>,
      %c1024_i32_92 = arith.constant 1024 : i32
      %155 = arith.addi %c1024_i32_92, %0 : i32
      %c256_i32_93 = arith.constant 256 : i32
      %156 = arith.addi %155, %c256_i32_93 : i32
      %157 = arith.addi %156, %135 : i32
      %158 = arith.index_cast %157 : i32 to index
      %159 = memref.load %arg1[%158] : memref<2048xi32, #tpu.memory_space<smem>>
      %160 = arith.index_cast %157 : i32 to index
      %161 = memref.load %arg2[%160] : memref<2048xi32, #tpu.memory_space<smem>>
      %162 = arith.index_cast %159 : i32 to index
      %c0_94 = arith.constant 0 : index
      %163 = vector.load %arg6[%162, %c0_94] : memref<2048x128xf32, #tpu.memory_space<vmem>>, vector<1x128xf32>
      %c1_95 = arith.constant 1 : index
      %164 = arith.index_cast %135 : i32 to index
      %c0_96 = arith.constant 0 : index
      %165 = vector.load %arg8[%c1_95, %164, %c0_96] : memref<2x128x128xf32, #tpu.memory_space<vmem>>, vector<1x1x128xf32>
      %166 = vector.shape_cast %165 : vector<1x1x128xf32> to vector<1x128xf32>
      %167 = vector.shape_cast %163 : vector<1x128xf32> to vector<1x1x128xf32>
      tpu.vector_store %arg8[%c1_95, %164, %c0_96], %167 {strides = array<i32>} : memref<2x128x128xf32, #tpu.memory_space<vmem>>, vector<1x1x128xf32>,
      %168 = arith.index_cast %161 : i32 to index
      %c0_97 = arith.constant 0 : index
      %169 = vector.load %arg6[%168, %c0_97] : memref<2048x128xf32, #tpu.memory_space<vmem>>, vector<1x128xf32>
      %c1_98 = arith.constant 1 : index
      %170 = arith.index_cast %135 : i32 to index
      %c0_99 = arith.constant 0 : index
      %171 = vector.load %arg9[%c1_98, %170, %c0_99] : memref<2x128x128xf32, #tpu.memory_space<vmem>>, vector<1x1x128xf32>
      %172 = vector.shape_cast %171 : vector<1x1x128xf32> to vector<1x128xf32>
      %173 = vector.shape_cast %169 : vector<1x128xf32> to vector<1x1x128xf32>
      tpu.vector_store %arg9[%c1_98, %170, %c0_99], %173 {strides = array<i32>} : memref<2x128x128xf32, #tpu.memory_space<vmem>>, vector<1x1x128xf32>,
      %c4_i32_100 = arith.constant 4 : i32
      %174 = arith.muli %93, %c4_i32_100 : i32
      %c2_i32 = arith.constant 2 : i32
      %175 = arith.addi %174, %c2_i32 : i32
      %c0_i32_101 = arith.constant 0 : i32
      %176 = arith.addi %c0_i32_101, %0 : i32
      %c256_i32_102 = arith.constant 256 : i32
      %177 = arith.addi %176, %c256_i32_102 : i32
      %178 = arith.addi %177, %175 : i32
      %179 = arith.index_cast %178 : i32 to index
      %180 = memref.load %arg1[%179] : memref<2048xi32, #tpu.memory_space<smem>>
      %181 = arith.index_cast %178 : i32 to index
      %182 = memref.load %arg2[%181] : memref<2048xi32, #tpu.memory_space<smem>>
      %183 = arith.index_cast %180 : i32 to index
      %c0_103 = arith.constant 0 : index
      %184 = vector.load %arg6[%183, %c0_103] : memref<2048x128xf32, #tpu.memory_space<vmem>>, vector<1x128xf32>
      %c0_104 = arith.constant 0 : index
      %185 = arith.index_cast %175 : i32 to index
      %c0_105 = arith.constant 0 : index
      %186 = vector.load %arg8[%c0_104, %185, %c0_105] : memref<2x128x128xf32, #tpu.memory_space<vmem>>, vector<1x1x128xf32>
      %187 = vector.shape_cast %186 : vector<1x1x128xf32> to vector<1x128xf32>
      %188 = vector.shape_cast %184 : vector<1x128xf32> to vector<1x1x128xf32>
      tpu.vector_store %arg8[%c0_104, %185, %c0_105], %188 {strides = array<i32>} : memref<2x128x128xf32, #tpu.memory_space<vmem>>, vector<1x1x128xf32>,
      %189 = arith.index_cast %182 : i32 to index
      %c0_106 = arith.constant 0 : index
      %190 = vector.load %arg6[%189, %c0_106] : memref<2048x128xf32, #tpu.memory_space<vmem>>, vector<1x128xf32>
      %c0_107 = arith.constant 0 : index
      %191 = arith.index_cast %175 : i32 to index
      %c0_108 = arith.constant 0 : index
      %192 = vector.load %arg9[%c0_107, %191, %c0_108] : memref<2x128x128xf32, #tpu.memory_space<vmem>>, vector<1x1x128xf32>
      %193 = vector.shape_cast %192 : vector<1x1x128xf32> to vector<1x128xf32>
      %194 = vector.shape_cast %190 : vector<1x128xf32> to vector<1x1x128xf32>
      tpu.vector_store %arg9[%c0_107, %191, %c0_108], %194 {strides = array<i32>} : memref<2x128x128xf32, #tpu.memory_space<vmem>>, vector<1x1x128xf32>,
      %c1024_i32_109 = arith.constant 1024 : i32
      %195 = arith.addi %c1024_i32_109, %0 : i32
      %c256_i32_110 = arith.constant 256 : i32
      %196 = arith.addi %195, %c256_i32_110 : i32
      %197 = arith.addi %196, %175 : i32
      %198 = arith.index_cast %197 : i32 to index
      %199 = memref.load %arg1[%198] : memref<2048xi32, #tpu.memory_space<smem>>
      %200 = arith.index_cast %197 : i32 to index
      %201 = memref.load %arg2[%200] : memref<2048xi32, #tpu.memory_space<smem>>
      %202 = arith.index_cast %199 : i32 to index
      %c0_111 = arith.constant 0 : index
      %203 = vector.load %arg6[%202, %c0_111] : memref<2048x128xf32, #tpu.memory_space<vmem>>, vector<1x128xf32>
      %c1_112 = arith.constant 1 : index
      %204 = arith.index_cast %175 : i32 to index
      %c0_113 = arith.constant 0 : index
      %205 = vector.load %arg8[%c1_112, %204, %c0_113] : memref<2x128x128xf32, #tpu.memory_space<vmem>>, vector<1x1x128xf32>
      %206 = vector.shape_cast %205 : vector<1x1x128xf32> to vector<1x128xf32>
      %207 = vector.shape_cast %203 : vector<1x128xf32> to vector<1x1x128xf32>
      tpu.vector_store %arg8[%c1_112, %204, %c0_113], %207 {strides = array<i32>} : memref<2x128x128xf32, #tpu.memory_space<vmem>>, vector<1x1x128xf32>,
      %208 = arith.index_cast %201 : i32 to index
      %c0_114 = arith.constant 0 : index
      %209 = vector.load %arg6[%208, %c0_114] : memref<2048x128xf32, #tpu.memory_space<vmem>>, vector<1x128xf32>
      %c1_115 = arith.constant 1 : index
      %210 = arith.index_cast %175 : i32 to index
      %c0_116 = arith.constant 0 : index
      %211 = vector.load %arg9[%c1_115, %210, %c0_116] : memref<2x128x128xf32, #tpu.memory_space<vmem>>, vector<1x1x128xf32>
      %212 = vector.shape_cast %211 : vector<1x1x128xf32> to vector<1x128xf32>
      %213 = vector.shape_cast %209 : vector<1x128xf32> to vector<1x1x128xf32>
      tpu.vector_store %arg9[%c1_115, %210, %c0_116], %213 {strides = array<i32>} : memref<2x128x128xf32, #tpu.memory_space<vmem>>, vector<1x1x128xf32>,
      %c4_i32_117 = arith.constant 4 : i32
      %214 = arith.muli %93, %c4_i32_117 : i32
      %c3_i32 = arith.constant 3 : i32
      %215 = arith.addi %214, %c3_i32 : i32
      %c0_i32_118 = arith.constant 0 : i32
      %216 = arith.addi %c0_i32_118, %0 : i32
      %c256_i32_119 = arith.constant 256 : i32
      %217 = arith.addi %216, %c256_i32_119 : i32
      %218 = arith.addi %217, %215 : i32
      %219 = arith.index_cast %218 : i32 to index
      %220 = memref.load %arg1[%219] : memref<2048xi32, #tpu.memory_space<smem>>
      %221 = arith.index_cast %218 : i32 to index
      %222 = memref.load %arg2[%221] : memref<2048xi32, #tpu.memory_space<smem>>
      %223 = arith.index_cast %220 : i32 to index
      %c0_120 = arith.constant 0 : index
      %224 = vector.load %arg6[%223, %c0_120] : memref<2048x128xf32, #tpu.memory_space<vmem>>, vector<1x128xf32>
      %c0_121 = arith.constant 0 : index
      %225 = arith.index_cast %215 : i32 to index
      %c0_122 = arith.constant 0 : index
      %226 = vector.load %arg8[%c0_121, %225, %c0_122] : memref<2x128x128xf32, #tpu.memory_space<vmem>>, vector<1x1x128xf32>
      %227 = vector.shape_cast %226 : vector<1x1x128xf32> to vector<1x128xf32>
      %228 = vector.shape_cast %224 : vector<1x128xf32> to vector<1x1x128xf32>
      tpu.vector_store %arg8[%c0_121, %225, %c0_122], %228 {strides = array<i32>} : memref<2x128x128xf32, #tpu.memory_space<vmem>>, vector<1x1x128xf32>,
      %229 = arith.index_cast %222 : i32 to index
      %c0_123 = arith.constant 0 : index
      %230 = vector.load %arg6[%229, %c0_123] : memref<2048x128xf32, #tpu.memory_space<vmem>>, vector<1x128xf32>
      %c0_124 = arith.constant 0 : index
      %231 = arith.index_cast %215 : i32 to index
      %c0_125 = arith.constant 0 : index
      %232 = vector.load %arg9[%c0_124, %231, %c0_125] : memref<2x128x128xf32, #tpu.memory_space<vmem>>, vector<1x1x128xf32>
      %233 = vector.shape_cast %232 : vector<1x1x128xf32> to vector<1x128xf32>
      %234 = vector.shape_cast %230 : vector<1x128xf32> to vector<1x1x128xf32>
      tpu.vector_store %arg9[%c0_124, %231, %c0_125], %234 {strides = array<i32>} : memref<2x128x128xf32, #tpu.memory_space<vmem>>, vector<1x1x128xf32>,
      %c1024_i32_126 = arith.constant 1024 : i32
      %235 = arith.addi %c1024_i32_126, %0 : i32
      %c256_i32_127 = arith.constant 256 : i32
      %236 = arith.addi %235, %c256_i32_127 : i32
      %237 = arith.addi %236, %215 : i32
      %238 = arith.index_cast %237 : i32 to index
      %239 = memref.load %arg1[%238] : memref<2048xi32, #tpu.memory_space<smem>>
      %240 = arith.index_cast %237 : i32 to index
      %241 = memref.load %arg2[%240] : memref<2048xi32, #tpu.memory_space<smem>>
      %242 = arith.index_cast %239 : i32 to index
      %c0_128 = arith.constant 0 : index
      %243 = vector.load %arg6[%242, %c0_128] : memref<2048x128xf32, #tpu.memory_space<vmem>>, vector<1x128xf32>
      %c1_129 = arith.constant 1 : index
      %244 = arith.index_cast %215 : i32 to index
      %c0_130 = arith.constant 0 : index
      %245 = vector.load %arg8[%c1_129, %244, %c0_130] : memref<2x128x128xf32, #tpu.memory_space<vmem>>, vector<1x1x128xf32>
      %246 = vector.shape_cast %245 : vector<1x1x128xf32> to vector<1x128xf32>
      %247 = vector.shape_cast %243 : vector<1x128xf32> to vector<1x1x128xf32>
      tpu.vector_store %arg8[%c1_129, %244, %c0_130], %247 {strides = array<i32>} : memref<2x128x128xf32, #tpu.memory_space<vmem>>, vector<1x1x128xf32>,
      %248 = arith.index_cast %241 : i32 to index
      %c0_131 = arith.constant 0 : index
      %249 = vector.load %arg6[%248, %c0_131] : memref<2048x128xf32, #tpu.memory_space<vmem>>, vector<1x128xf32>
      %c1_132 = arith.constant 1 : index
      %250 = arith.index_cast %215 : i32 to index
      %c0_133 = arith.constant 0 : index
      %251 = vector.load %arg9[%c1_132, %250, %c0_133] : memref<2x128x128xf32, #tpu.memory_space<vmem>>, vector<1x1x128xf32>
      %252 = vector.shape_cast %251 : vector<1x1x128xf32> to vector<1x128xf32>
      %253 = vector.shape_cast %249 : vector<1x128xf32> to vector<1x1x128xf32>
      tpu.vector_store %arg9[%c1_132, %250, %c0_133], %253 {strides = array<i32>} : memref<2x128x128xf32, #tpu.memory_space<vmem>>, vector<1x1x128xf32>,
    }
    %c32_i32_37 = arith.constant 32 : i32
    %c0_38 = arith.constant 0 : index
    %c0_39 = arith.constant 0 : index
    %c0_40 = arith.constant 0 : index
    %51 = vector.load %arg8[%c0_38, %c0_39, %c0_40] : memref<2x128x128xf32, #tpu.memory_space<vmem>>, vector<2x128x128xf32>
    %c0_41 = arith.constant 0 : index
    %c0_42 = arith.constant 0 : index
    %c0_43 = arith.constant 0 : index
    %52 = vector.load %arg9[%c0_41, %c0_42, %c0_43] : memref<2x128x128xf32, #tpu.memory_space<vmem>>, vector<2x128x128xf32>
    %53 = vector.broadcast %5 : vector<2x1x128xf32> to vector<2x128x128xf32>
    %54 = arith.mulf %51, %53 : vector<2x128x128xf32>
    %cst_44 = arith.constant dense<0.000000e+00> : vector<2x128xf32>
    %55 = vector.multi_reduction <add>, %54, %cst_44 [2] : vector<2x128x128xf32> to vector<2x128xf32>
    %56 = vector.broadcast %7 : vector<2x1x128xf32> to vector<2x128x128xf32>
    %57 = arith.mulf %52, %56 : vector<2x128x128xf32>
    %cst_45 = arith.constant dense<0.000000e+00> : vector<2x128xf32>
    %58 = vector.multi_reduction <add>, %57, %cst_45 [2] : vector<2x128x128xf32> to vector<2x128xf32>
    %59 = arith.addf %55, %58 : vector<2x128xf32>
    %cst_46 = arith.constant 0.000000e+00 : f32
    %60 = vector.broadcast %cst_46 : f32 to vector<2x128xf32>
    %61 = arith.subf %60, %59 : vector<2x128xf32>
    %cst_47 = arith.constant 0.000000e+00 : f32
    %62 = vector.broadcast %cst_47 : f32 to vector<2x128xf32>
    %63 = arith.minimumf %61, %62 : vector<2x128xf32>
    %64 = math.absf %61 : vector<2x128xf32>
    %cst_48 = arith.constant 0.000000e+00 : f32
    %65 = vector.broadcast %cst_48 : f32 to vector<2x128xf32>
    %66 = arith.subf %65, %64 : vector<2x128xf32>
    %67 = math.exp %66 : vector<2x128xf32>
    %68 = math.log1p %67 : vector<2x128xf32>
    %69 = arith.subf %63, %68 : vector<2x128xf32>
    %c0_49 = arith.constant 0 : index
    %c256 = arith.constant 256 : index
    %70 = vector.load %arg7[%c0_49, %c256] : memref<2x512xf32, #tpu.memory_space<vmem>>, vector<2x128xf32>
    tpu.vector_store %arg7[%c0_49, %c256], %69 {strides = array<i32>} : memref<2x512xf32, #tpu.memory_space<vmem>>, vector<2x128xf32>,
    %c0_i32_50 = arith.constant 0 : i32
    %c32_i32_51 = arith.constant 32 : i32
    %71 = arith.addi %c0_i32_50, %c32_i32_51 : i32
    %c1_i32_52 = arith.constant 1 : i32
    scf.for %arg10 = %c0_i32_50 to %71 step %c1_i32_52  : i32 {
      %c1_i32_66 = arith.constant 1 : i32
      %92 = arith.muli %arg10, %c1_i32_66 : i32
      %c0_i32_67 = arith.constant 0 : i32
      %93 = arith.addi %c0_i32_67, %92 : i32
      %c4_i32 = arith.constant 4 : i32
      %94 = arith.muli %93, %c4_i32 : i32
      %c0_i32_68 = arith.constant 0 : i32
      %95 = arith.addi %94, %c0_i32_68 : i32
      %c0_i32_69 = arith.constant 0 : i32
      %96 = arith.addi %c0_i32_69, %0 : i32
      %c384_i32 = arith.constant 384 : i32
      %97 = arith.addi %96, %c384_i32 : i32
      %98 = arith.addi %97, %95 : i32
      %99 = arith.index_cast %98 : i32 to index
      %100 = memref.load %arg1[%99] : memref<2048xi32, #tpu.memory_space<smem>>
      %101 = arith.index_cast %98 : i32 to index
      %102 = memref.load %arg2[%101] : memref<2048xi32, #tpu.memory_space<smem>>
      %103 = arith.index_cast %100 : i32 to index
      %c0_70 = arith.constant 0 : index
      %104 = vector.load %arg6[%103, %c0_70] : memref<2048x128xf32, #tpu.memory_space<vmem>>, vector<1x128xf32>
      %c0_71 = arith.constant 0 : index
      %105 = arith.index_cast %95 : i32 to index
      %c0_72 = arith.constant 0 : index
      %106 = vector.load %arg8[%c0_71, %105, %c0_72] : memref<2x128x128xf32, #tpu.memory_space<vmem>>, vector<1x1x128xf32>
      %107 = vector.shape_cast %106 : vector<1x1x128xf32> to vector<1x128xf32>
      %108 = vector.shape_cast %104 : vector<1x128xf32> to vector<1x1x128xf32>
      tpu.vector_store %arg8[%c0_71, %105, %c0_72], %108 {strides = array<i32>} : memref<2x128x128xf32, #tpu.memory_space<vmem>>, vector<1x1x128xf32>,
      %109 = arith.index_cast %102 : i32 to index
      %c0_73 = arith.constant 0 : index
      %110 = vector.load %arg6[%109, %c0_73] : memref<2048x128xf32, #tpu.memory_space<vmem>>, vector<1x128xf32>
      %c0_74 = arith.constant 0 : index
      %111 = arith.index_cast %95 : i32 to index
      %c0_75 = arith.constant 0 : index
      %112 = vector.load %arg9[%c0_74, %111, %c0_75] : memref<2x128x128xf32, #tpu.memory_space<vmem>>, vector<1x1x128xf32>
      %113 = vector.shape_cast %112 : vector<1x1x128xf32> to vector<1x128xf32>
      %114 = vector.shape_cast %110 : vector<1x128xf32> to vector<1x1x128xf32>
      tpu.vector_store %arg9[%c0_74, %111, %c0_75], %114 {strides = array<i32>} : memref<2x128x128xf32, #tpu.memory_space<vmem>>, vector<1x1x128xf32>,
      %c1024_i32 = arith.constant 1024 : i32
      %115 = arith.addi %c1024_i32, %0 : i32
      %c384_i32_76 = arith.constant 384 : i32
      %116 = arith.addi %115, %c384_i32_76 : i32
      %117 = arith.addi %116, %95 : i32
      %118 = arith.index_cast %117 : i32 to index
      %119 = memref.load %arg1[%118] : memref<2048xi32, #tpu.memory_space<smem>>
      %120 = arith.index_cast %117 : i32 to index
      %121 = memref.load %arg2[%120] : memref<2048xi32, #tpu.memory_space<smem>>
      %122 = arith.index_cast %119 : i32 to index
      %c0_77 = arith.constant 0 : index
      %123 = vector.load %arg6[%122, %c0_77] : memref<2048x128xf32, #tpu.memory_space<vmem>>, vector<1x128xf32>
      %c1 = arith.constant 1 : index
      %124 = arith.index_cast %95 : i32 to index
      %c0_78 = arith.constant 0 : index
      %125 = vector.load %arg8[%c1, %124, %c0_78] : memref<2x128x128xf32, #tpu.memory_space<vmem>>, vector<1x1x128xf32>
      %126 = vector.shape_cast %125 : vector<1x1x128xf32> to vector<1x128xf32>
      %127 = vector.shape_cast %123 : vector<1x128xf32> to vector<1x1x128xf32>
      tpu.vector_store %arg8[%c1, %124, %c0_78], %127 {strides = array<i32>} : memref<2x128x128xf32, #tpu.memory_space<vmem>>, vector<1x1x128xf32>,
      %128 = arith.index_cast %121 : i32 to index
      %c0_79 = arith.constant 0 : index
      %129 = vector.load %arg6[%128, %c0_79] : memref<2048x128xf32, #tpu.memory_space<vmem>>, vector<1x128xf32>
      %c1_80 = arith.constant 1 : index
      %130 = arith.index_cast %95 : i32 to index
      %c0_81 = arith.constant 0 : index
      %131 = vector.load %arg9[%c1_80, %130, %c0_81] : memref<2x128x128xf32, #tpu.memory_space<vmem>>, vector<1x1x128xf32>
      %132 = vector.shape_cast %131 : vector<1x1x128xf32> to vector<1x128xf32>
      %133 = vector.shape_cast %129 : vector<1x128xf32> to vector<1x1x128xf32>
      tpu.vector_store %arg9[%c1_80, %130, %c0_81], %133 {strides = array<i32>} : memref<2x128x128xf32, #tpu.memory_space<vmem>>, vector<1x1x128xf32>,
      %c4_i32_82 = arith.constant 4 : i32
      %134 = arith.muli %93, %c4_i32_82 : i32
      %c1_i32_83 = arith.constant 1 : i32
      %135 = arith.addi %134, %c1_i32_83 : i32
      %c0_i32_84 = arith.constant 0 : i32
      %136 = arith.addi %c0_i32_84, %0 : i32
      %c384_i32_85 = arith.constant 384 : i32
      %137 = arith.addi %136, %c384_i32_85 : i32
      %138 = arith.addi %137, %135 : i32
      %139 = arith.index_cast %138 : i32 to index
      %140 = memref.load %arg1[%139] : memref<2048xi32, #tpu.memory_space<smem>>
      %141 = arith.index_cast %138 : i32 to index
      %142 = memref.load %arg2[%141] : memref<2048xi32, #tpu.memory_space<smem>>
      %143 = arith.index_cast %140 : i32 to index
      %c0_86 = arith.constant 0 : index
      %144 = vector.load %arg6[%143, %c0_86] : memref<2048x128xf32, #tpu.memory_space<vmem>>, vector<1x128xf32>
      %c0_87 = arith.constant 0 : index
      %145 = arith.index_cast %135 : i32 to index
      %c0_88 = arith.constant 0 : index
      %146 = vector.load %arg8[%c0_87, %145, %c0_88] : memref<2x128x128xf32, #tpu.memory_space<vmem>>, vector<1x1x128xf32>
      %147 = vector.shape_cast %146 : vector<1x1x128xf32> to vector<1x128xf32>
      %148 = vector.shape_cast %144 : vector<1x128xf32> to vector<1x1x128xf32>
      tpu.vector_store %arg8[%c0_87, %145, %c0_88], %148 {strides = array<i32>} : memref<2x128x128xf32, #tpu.memory_space<vmem>>, vector<1x1x128xf32>,
      %149 = arith.index_cast %142 : i32 to index
      %c0_89 = arith.constant 0 : index
      %150 = vector.load %arg6[%149, %c0_89] : memref<2048x128xf32, #tpu.memory_space<vmem>>, vector<1x128xf32>
      %c0_90 = arith.constant 0 : index
      %151 = arith.index_cast %135 : i32 to index
      %c0_91 = arith.constant 0 : index
      %152 = vector.load %arg9[%c0_90, %151, %c0_91] : memref<2x128x128xf32, #tpu.memory_space<vmem>>, vector<1x1x128xf32>
      %153 = vector.shape_cast %152 : vector<1x1x128xf32> to vector<1x128xf32>
      %154 = vector.shape_cast %150 : vector<1x128xf32> to vector<1x1x128xf32>
      tpu.vector_store %arg9[%c0_90, %151, %c0_91], %154 {strides = array<i32>} : memref<2x128x128xf32, #tpu.memory_space<vmem>>, vector<1x1x128xf32>,
      %c1024_i32_92 = arith.constant 1024 : i32
      %155 = arith.addi %c1024_i32_92, %0 : i32
      %c384_i32_93 = arith.constant 384 : i32
      %156 = arith.addi %155, %c384_i32_93 : i32
      %157 = arith.addi %156, %135 : i32
      %158 = arith.index_cast %157 : i32 to index
      %159 = memref.load %arg1[%158] : memref<2048xi32, #tpu.memory_space<smem>>
      %160 = arith.index_cast %157 : i32 to index
      %161 = memref.load %arg2[%160] : memref<2048xi32, #tpu.memory_space<smem>>
      %162 = arith.index_cast %159 : i32 to index
      %c0_94 = arith.constant 0 : index
      %163 = vector.load %arg6[%162, %c0_94] : memref<2048x128xf32, #tpu.memory_space<vmem>>, vector<1x128xf32>
      %c1_95 = arith.constant 1 : index
      %164 = arith.index_cast %135 : i32 to index
      %c0_96 = arith.constant 0 : index
      %165 = vector.load %arg8[%c1_95, %164, %c0_96] : memref<2x128x128xf32, #tpu.memory_space<vmem>>, vector<1x1x128xf32>
      %166 = vector.shape_cast %165 : vector<1x1x128xf32> to vector<1x128xf32>
      %167 = vector.shape_cast %163 : vector<1x128xf32> to vector<1x1x128xf32>
      tpu.vector_store %arg8[%c1_95, %164, %c0_96], %167 {strides = array<i32>} : memref<2x128x128xf32, #tpu.memory_space<vmem>>, vector<1x1x128xf32>,
      %168 = arith.index_cast %161 : i32 to index
      %c0_97 = arith.constant 0 : index
      %169 = vector.load %arg6[%168, %c0_97] : memref<2048x128xf32, #tpu.memory_space<vmem>>, vector<1x128xf32>
      %c1_98 = arith.constant 1 : index
      %170 = arith.index_cast %135 : i32 to index
      %c0_99 = arith.constant 0 : index
      %171 = vector.load %arg9[%c1_98, %170, %c0_99] : memref<2x128x128xf32, #tpu.memory_space<vmem>>, vector<1x1x128xf32>
      %172 = vector.shape_cast %171 : vector<1x1x128xf32> to vector<1x128xf32>
      %173 = vector.shape_cast %169 : vector<1x128xf32> to vector<1x1x128xf32>
      tpu.vector_store %arg9[%c1_98, %170, %c0_99], %173 {strides = array<i32>} : memref<2x128x128xf32, #tpu.memory_space<vmem>>, vector<1x1x128xf32>,
      %c4_i32_100 = arith.constant 4 : i32
      %174 = arith.muli %93, %c4_i32_100 : i32
      %c2_i32 = arith.constant 2 : i32
      %175 = arith.addi %174, %c2_i32 : i32
      %c0_i32_101 = arith.constant 0 : i32
      %176 = arith.addi %c0_i32_101, %0 : i32
      %c384_i32_102 = arith.constant 384 : i32
      %177 = arith.addi %176, %c384_i32_102 : i32
      %178 = arith.addi %177, %175 : i32
      %179 = arith.index_cast %178 : i32 to index
      %180 = memref.load %arg1[%179] : memref<2048xi32, #tpu.memory_space<smem>>
      %181 = arith.index_cast %178 : i32 to index
      %182 = memref.load %arg2[%181] : memref<2048xi32, #tpu.memory_space<smem>>
      %183 = arith.index_cast %180 : i32 to index
      %c0_103 = arith.constant 0 : index
      %184 = vector.load %arg6[%183, %c0_103] : memref<2048x128xf32, #tpu.memory_space<vmem>>, vector<1x128xf32>
      %c0_104 = arith.constant 0 : index
      %185 = arith.index_cast %175 : i32 to index
      %c0_105 = arith.constant 0 : index
      %186 = vector.load %arg8[%c0_104, %185, %c0_105] : memref<2x128x128xf32, #tpu.memory_space<vmem>>, vector<1x1x128xf32>
      %187 = vector.shape_cast %186 : vector<1x1x128xf32> to vector<1x128xf32>
      %188 = vector.shape_cast %184 : vector<1x128xf32> to vector<1x1x128xf32>
      tpu.vector_store %arg8[%c0_104, %185, %c0_105], %188 {strides = array<i32>} : memref<2x128x128xf32, #tpu.memory_space<vmem>>, vector<1x1x128xf32>,
      %189 = arith.index_cast %182 : i32 to index
      %c0_106 = arith.constant 0 : index
      %190 = vector.load %arg6[%189, %c0_106] : memref<2048x128xf32, #tpu.memory_space<vmem>>, vector<1x128xf32>
      %c0_107 = arith.constant 0 : index
      %191 = arith.index_cast %175 : i32 to index
      %c0_108 = arith.constant 0 : index
      %192 = vector.load %arg9[%c0_107, %191, %c0_108] : memref<2x128x128xf32, #tpu.memory_space<vmem>>, vector<1x1x128xf32>
      %193 = vector.shape_cast %192 : vector<1x1x128xf32> to vector<1x128xf32>
      %194 = vector.shape_cast %190 : vector<1x128xf32> to vector<1x1x128xf32>
      tpu.vector_store %arg9[%c0_107, %191, %c0_108], %194 {strides = array<i32>} : memref<2x128x128xf32, #tpu.memory_space<vmem>>, vector<1x1x128xf32>,
      %c1024_i32_109 = arith.constant 1024 : i32
      %195 = arith.addi %c1024_i32_109, %0 : i32
      %c384_i32_110 = arith.constant 384 : i32
      %196 = arith.addi %195, %c384_i32_110 : i32
      %197 = arith.addi %196, %175 : i32
      %198 = arith.index_cast %197 : i32 to index
      %199 = memref.load %arg1[%198] : memref<2048xi32, #tpu.memory_space<smem>>
      %200 = arith.index_cast %197 : i32 to index
      %201 = memref.load %arg2[%200] : memref<2048xi32, #tpu.memory_space<smem>>
      %202 = arith.index_cast %199 : i32 to index
      %c0_111 = arith.constant 0 : index
      %203 = vector.load %arg6[%202, %c0_111] : memref<2048x128xf32, #tpu.memory_space<vmem>>, vector<1x128xf32>
      %c1_112 = arith.constant 1 : index
      %204 = arith.index_cast %175 : i32 to index
      %c0_113 = arith.constant 0 : index
      %205 = vector.load %arg8[%c1_112, %204, %c0_113] : memref<2x128x128xf32, #tpu.memory_space<vmem>>, vector<1x1x128xf32>
      %206 = vector.shape_cast %205 : vector<1x1x128xf32> to vector<1x128xf32>
      %207 = vector.shape_cast %203 : vector<1x128xf32> to vector<1x1x128xf32>
      tpu.vector_store %arg8[%c1_112, %204, %c0_113], %207 {strides = array<i32>} : memref<2x128x128xf32, #tpu.memory_space<vmem>>, vector<1x1x128xf32>,
      %208 = arith.index_cast %201 : i32 to index
      %c0_114 = arith.constant 0 : index
      %209 = vector.load %arg6[%208, %c0_114] : memref<2048x128xf32, #tpu.memory_space<vmem>>, vector<1x128xf32>
      %c1_115 = arith.constant 1 : index
      %210 = arith.index_cast %175 : i32 to index
      %c0_116 = arith.constant 0 : index
      %211 = vector.load %arg9[%c1_115, %210, %c0_116] : memref<2x128x128xf32, #tpu.memory_space<vmem>>, vector<1x1x128xf32>
      %212 = vector.shape_cast %211 : vector<1x1x128xf32> to vector<1x128xf32>
      %213 = vector.shape_cast %209 : vector<1x128xf32> to vector<1x1x128xf32>
      tpu.vector_store %arg9[%c1_115, %210, %c0_116], %213 {strides = array<i32>} : memref<2x128x128xf32, #tpu.memory_space<vmem>>, vector<1x1x128xf32>,
      %c4_i32_117 = arith.constant 4 : i32
      %214 = arith.muli %93, %c4_i32_117 : i32
      %c3_i32 = arith.constant 3 : i32
      %215 = arith.addi %214, %c3_i32 : i32
      %c0_i32_118 = arith.constant 0 : i32
      %216 = arith.addi %c0_i32_118, %0 : i32
      %c384_i32_119 = arith.constant 384 : i32
      %217 = arith.addi %216, %c384_i32_119 : i32
      %218 = arith.addi %217, %215 : i32
      %219 = arith.index_cast %218 : i32 to index
      %220 = memref.load %arg1[%219] : memref<2048xi32, #tpu.memory_space<smem>>
      %221 = arith.index_cast %218 : i32 to index
      %222 = memref.load %arg2[%221] : memref<2048xi32, #tpu.memory_space<smem>>
      %223 = arith.index_cast %220 : i32 to index
      %c0_120 = arith.constant 0 : index
      %224 = vector.load %arg6[%223, %c0_120] : memref<2048x128xf32, #tpu.memory_space<vmem>>, vector<1x128xf32>
      %c0_121 = arith.constant 0 : index
      %225 = arith.index_cast %215 : i32 to index
      %c0_122 = arith.constant 0 : index
      %226 = vector.load %arg8[%c0_121, %225, %c0_122] : memref<2x128x128xf32, #tpu.memory_space<vmem>>, vector<1x1x128xf32>
      %227 = vector.shape_cast %226 : vector<1x1x128xf32> to vector<1x128xf32>
      %228 = vector.shape_cast %224 : vector<1x128xf32> to vector<1x1x128xf32>
      tpu.vector_store %arg8[%c0_121, %225, %c0_122], %228 {strides = array<i32>} : memref<2x128x128xf32, #tpu.memory_space<vmem>>, vector<1x1x128xf32>,
      %229 = arith.index_cast %222 : i32 to index
      %c0_123 = arith.constant 0 : index
      %230 = vector.load %arg6[%229, %c0_123] : memref<2048x128xf32, #tpu.memory_space<vmem>>, vector<1x128xf32>
      %c0_124 = arith.constant 0 : index
      %231 = arith.index_cast %215 : i32 to index
      %c0_125 = arith.constant 0 : index
      %232 = vector.load %arg9[%c0_124, %231, %c0_125] : memref<2x128x128xf32, #tpu.memory_space<vmem>>, vector<1x1x128xf32>
      %233 = vector.shape_cast %232 : vector<1x1x128xf32> to vector<1x128xf32>
      %234 = vector.shape_cast %230 : vector<1x128xf32> to vector<1x1x128xf32>
      tpu.vector_store %arg9[%c0_124, %231, %c0_125], %234 {strides = array<i32>} : memref<2x128x128xf32, #tpu.memory_space<vmem>>, vector<1x1x128xf32>,
      %c1024_i32_126 = arith.constant 1024 : i32
      %235 = arith.addi %c1024_i32_126, %0 : i32
      %c384_i32_127 = arith.constant 384 : i32
      %236 = arith.addi %235, %c384_i32_127 : i32
      %237 = arith.addi %236, %215 : i32
      %238 = arith.index_cast %237 : i32 to index
      %239 = memref.load %arg1[%238] : memref<2048xi32, #tpu.memory_space<smem>>
      %240 = arith.index_cast %237 : i32 to index
      %241 = memref.load %arg2[%240] : memref<2048xi32, #tpu.memory_space<smem>>
      %242 = arith.index_cast %239 : i32 to index
      %c0_128 = arith.constant 0 : index
      %243 = vector.load %arg6[%242, %c0_128] : memref<2048x128xf32, #tpu.memory_space<vmem>>, vector<1x128xf32>
      %c1_129 = arith.constant 1 : index
      %244 = arith.index_cast %215 : i32 to index
      %c0_130 = arith.constant 0 : index
      %245 = vector.load %arg8[%c1_129, %244, %c0_130] : memref<2x128x128xf32, #tpu.memory_space<vmem>>, vector<1x1x128xf32>
      %246 = vector.shape_cast %245 : vector<1x1x128xf32> to vector<1x128xf32>
      %247 = vector.shape_cast %243 : vector<1x128xf32> to vector<1x1x128xf32>
      tpu.vector_store %arg8[%c1_129, %244, %c0_130], %247 {strides = array<i32>} : memref<2x128x128xf32, #tpu.memory_space<vmem>>, vector<1x1x128xf32>,
      %248 = arith.index_cast %241 : i32 to index
      %c0_131 = arith.constant 0 : index
      %249 = vector.load %arg6[%248, %c0_131] : memref<2048x128xf32, #tpu.memory_space<vmem>>, vector<1x128xf32>
      %c1_132 = arith.constant 1 : index
      %250 = arith.index_cast %215 : i32 to index
      %c0_133 = arith.constant 0 : index
      %251 = vector.load %arg9[%c1_132, %250, %c0_133] : memref<2x128x128xf32, #tpu.memory_space<vmem>>, vector<1x1x128xf32>
      %252 = vector.shape_cast %251 : vector<1x1x128xf32> to vector<1x128xf32>
      %253 = vector.shape_cast %249 : vector<1x128xf32> to vector<1x1x128xf32>
      tpu.vector_store %arg9[%c1_132, %250, %c0_133], %253 {strides = array<i32>} : memref<2x128x128xf32, #tpu.memory_space<vmem>>, vector<1x1x128xf32>,
    }
    %c32_i32_53 = arith.constant 32 : i32
    %c0_54 = arith.constant 0 : index
    %c0_55 = arith.constant 0 : index
    %c0_56 = arith.constant 0 : index
    %72 = vector.load %arg8[%c0_54, %c0_55, %c0_56] : memref<2x128x128xf32, #tpu.memory_space<vmem>>, vector<2x128x128xf32>
    %c0_57 = arith.constant 0 : index
    %c0_58 = arith.constant 0 : index
    %c0_59 = arith.constant 0 : index
    %73 = vector.load %arg9[%c0_57, %c0_58, %c0_59] : memref<2x128x128xf32, #tpu.memory_space<vmem>>, vector<2x128x128xf32>
    %74 = vector.broadcast %5 : vector<2x1x128xf32> to vector<2x128x128xf32>
    %75 = arith.mulf %72, %74 : vector<2x128x128xf32>
    %cst_60 = arith.constant dense<0.000000e+00> : vector<2x128xf32>
    %76 = vector.multi_reduction <add>, %75, %cst_60 [2] : vector<2x128x128xf32> to vector<2x128xf32>
    %77 = vector.broadcast %7 : vector<2x1x128xf32> to vector<2x128x128xf32>
    %78 = arith.mulf %73, %77 : vector<2x128x128xf32>
    %cst_61 = arith.constant dense<0.000000e+00> : vector<2x128xf32>
    %79 = vector.multi_reduction <add>, %78, %cst_61 [2] : vector<2x128x128xf32> to vector<2x128xf32>
    %80 = arith.addf %76, %79 : vector<2x128xf32>
    %cst_62 = arith.constant 0.000000e+00 : f32
    %81 = vector.broadcast %cst_62 : f32 to vector<2x128xf32>
    %82 = arith.subf %81, %80 : vector<2x128xf32>
    %cst_63 = arith.constant 0.000000e+00 : f32
    %83 = vector.broadcast %cst_63 : f32 to vector<2x128xf32>
    %84 = arith.minimumf %82, %83 : vector<2x128xf32>
    %85 = math.absf %82 : vector<2x128xf32>
    %cst_64 = arith.constant 0.000000e+00 : f32
    %86 = vector.broadcast %cst_64 : f32 to vector<2x128xf32>
    %87 = arith.subf %86, %85 : vector<2x128xf32>
    %88 = math.exp %87 : vector<2x128xf32>
    %89 = math.log1p %88 : vector<2x128xf32>
    %90 = arith.subf %84, %89 : vector<2x128xf32>
    %c0_65 = arith.constant 0 : index
    %c384 = arith.constant 384 : index
    %91 = vector.load %arg7[%c0_65, %c384] : memref<2x512xf32, #tpu.memory_space<vmem>>, vector<2x128xf32>
    tpu.vector_store %arg7[%c0_65, %c384], %90 {strides = array<i32>} : memref<2x512xf32, #tpu.memory_space<vmem>>, vector<2x128xf32>,
    return
  }
  func.func @transform_0(%arg0: i32, %arg1: memref<2048xi32, #tpu.memory_space<smem>>, %arg2: memref<2048xi32, #tpu.memory_space<smem>>) -> (i32, i32) {
    %c0_i32 = arith.constant 0 : i32
    %c0_i32_0 = arith.constant 0 : i32
    %c0_i32_1 = arith.constant 0 : i32
    return %c0_i32, %c0_i32_0 : i32, i32
  }
  func.func @transform_1(%arg0: i32, %arg1: memref<2048xi32, #tpu.memory_space<smem>>, %arg2: memref<2048xi32, #tpu.memory_space<smem>>) -> (i32, i32) {
    %c0_i32 = arith.constant 0 : i32
    %c0_i32_0 = arith.constant 0 : i32
    %c0_i32_1 = arith.constant 0 : i32
    return %c0_i32, %c0_i32_0 : i32, i32
  }
  func.func @transform_2(%arg0: i32, %arg1: memref<2048xi32, #tpu.memory_space<smem>>, %arg2: memref<2048xi32, #tpu.memory_space<smem>>) -> (i32, i32) {
    %c0_i32 = arith.constant 0 : i32
    %c0_i32_0 = arith.constant 0 : i32
    %c0_i32_1 = arith.constant 0 : i32
    return %c0_i32, %c0_i32_0 : i32, i32
  }
  func.func @transform_3(%arg0: i32, %arg1: memref<2048xi32, #tpu.memory_space<smem>>, %arg2: memref<2048xi32, #tpu.memory_space<smem>>) -> (i32, i32) {
    %c0_i32 = arith.constant 0 : i32
    %c0_i32_0 = arith.constant 0 : i32
    %c0_i32_1 = arith.constant 0 : i32
    return %c0_i32, %c0_i32_0 : i32, i32
  }
  func.func @transform_4(%arg0: i32, %arg1: memref<2048xi32, #tpu.memory_space<smem>>, %arg2: memref<2048xi32, #tpu.memory_space<smem>>) -> (i32, i32) {
    %c0_i32 = arith.constant 0 : i32
    %c0_i32_0 = arith.constant 0 : i32
    return %c0_i32, %arg0 : i32, i32
  }
}

</mosaic_0001>

<llo_original>
// kernel: kge_forward.1
$region0: #{kge_forward.1}
  #allocation0 [shape = 'u32[]', space=smem, size = 0x4, offset = 0x4, fixed_abs, tag = 'smem constant byte address 0x4 - core index']
  #allocation1 [shape = 'u32[144,128]{1,0:T(1,128)}', space=vmem, size = 0x12000, scoped, tag = 'internal scratch']
  #allocation2 [shape = 'f32[2,128,128]{2,1,0:T(8,128)}', space=vmem, size = 0x20000, scoped, tag = 'scratch operand']
  #allocation3 [shape = 'f32[2,128,128]{2,1,0:T(8,128)}', space=vmem, size = 0x20000, scoped, tag = 'scratch operand']
  #allocation4 [shape = 's32[1]{0}', space=sflag, size = 0x4, scoped, tag = 'scoped memory for kge_forward.1']
  #allocation5 [shape = 'u8[8192]{0}', space=smem, size = 0x2000, scoped, tag = 'prefetched SMEM operand 0']
  #allocation6 [shape = 'u8[8192]{0}', space=smem, size = 0x2000, scoped, tag = 'prefetched SMEM operand 1']
  %s0 = inlined_call_operand.vmem [shape: s32[2048], index: 0, kind: input, shape index: {}]
  %s1 = inlined_call_operand.vmem [shape: s32[2048], index: 1, kind: input, shape index: {}]
  %s2 = inlined_call_operand.vmem [shape: f32[2,128], index: 2, kind: input, shape index: {}]
  %s3 = inlined_call_operand.vmem [shape: f32[2,128], index: 3, kind: input, shape index: {}]
  %s4 = inlined_call_operand.vmem [shape: f32[2,128], index: 4, kind: input, shape index: {}]
  %s5 = inlined_call_operand.vmem [shape: f32[2048,128], index: 5, kind: input, shape index: {}]
  %s6 = inlined_call_operand.vmem [shape: f32[2,1024], index: 6, kind: output, shape index: {}]
  %s7 = sld [smem:[#allocation0]]
  $region77: #{kge_forward.1} parent=0
    _
  %s9 = ssub.s32 1, %s7
  %s10 = scalar_select 0, %s9, %s7
  %s11 = sshll.u32 %s0, 4
  %s12 = int_to_ptr.vmem [resolvable:$true] %s11
  %14 = dma.vmem_to_smem %s12, 256, [#allocation5], [#allocation4]
  %s15 = sshll.u32 %s1, 4
  %s16 = int_to_ptr.vmem [resolvable:$true] %s15
  %18 = dma.vmem_to_smem %s16, 256, [#allocation6], [#allocation4]
  %19 = dma.done [#allocation4], 512
  %20 = sfence
  loop: start=0, step=1, limit=4
  $region2: #{kge_forward.1} parent=0 // loop_pre_header
    _
  $region3: #{kge_forward.1} parent=0 // loop_header
    %s22 = sphi 0, %s26
    %p23 = scmp.ge.s32.totalorder %s22, 4
    %s30 = sphi 0, %s30
    %s32 = sphi 0, %s30
    %s33 = sphi 0, %s32
    %s47 = sphi 0, %s33
    %s51 = sphi 0, %s51
    %s53 = sphi 0, %s51
    %s54 = sphi 0, %s53
    %s68 = sphi 0, %s54
    %s72 = sphi 0, %s72
    %s74 = sphi 0, %s72
    %s75 = sphi 0, %s74
    %s89 = sphi 0, %s75
    %s93 = sphi 0, %s93
    %s95 = sphi 0, %s93
    %s96 = sphi 0, %s95
    %s110 = sphi 0, %s96
    %s116 = sphi 0, %s118
    %s119 = sphi 0, %s116
    %s120 = sphi 0, %s119
    %s136 = sphi 0, %s120
  $region4: #{kge_forward.1} parent=0 // loop_header_branch
    %25 = sbr.rel (%p23) target = $region8
  $region5: #{kge_forward.1} parent=0 // loop_body
    %s27 = ssub.s32 %s22, 1
    %s28 = ssub.s32 %s22, 2
    %s29 = sadd.s32 %s22, 1
    %s31 = sadd.s32 %s30, 1
    %p34 = scmp.eq.s32.totalorder %s22, 1
    %p35 = scmp.ne.s32.totalorder %s30, %s32
    %p36 = scmp.eq.s32.totalorder %s22, 0
    %p37 = por %p35, %p36
    %p38 = scmp.ne.s32.totalorder %s30, %s32
    %p39 = scmp.eq.s32.totalorder %s27, 1
    %p40 = por %p38, %p39
    %p41 = scmp.ne.s32.totalorder %s32, %s33
    %p42 = scmp.eq.s32.totalorder %s27, 0
    %p43 = por %p41, %p42
    %p44 = scmp.ne.s32.totalorder %s32, %s33
    %p45 = scmp.eq.s32.totalorder %s28, 1
    %p46 = por %p44, %p45
    %p48 = scmp.ne.s32.totalorder %s33, %s47
    %p49 = scmp.eq.s32.totalorder %s28, 0
    %p50 = por %p48, %p49
    %s52 = sadd.s32 %s51, 1
    %p55 = scmp.eq.s32.totalorder %s22, 1
    %p56 = scmp.ne.s32.totalorder %s51, %s53
    %p57 = scmp.eq.s32.totalorder %s22, 0
    %p58 = por %p56, %p57
    %p59 = scmp.ne.s32.totalorder %s51, %s53
    %p60 = scmp.eq.s32.totalorder %s27, 1
    %p61 = por %p59, %p60
    %p62 = scmp.ne.s32.totalorder %s53, %s54
    %p63 = scmp.eq.s32.totalorder %s27, 0
    %p64 = por %p62, %p63
    %p65 = scmp.ne.s32.totalorder %s53, %s54
    %p66 = scmp.eq.s32.totalorder %s28, 1
    %p67 = por %p65, %p66
    %p69 = scmp.ne.s32.totalorder %s54, %s68
    %p70 = scmp.eq.s32.totalorder %s28, 0
    %p71 = por %p69, %p70
    %s73 = sadd.s32 %s72, 1
    %p76 = scmp.eq.s32.totalorder %s22, 1
    %p77 = scmp.ne.s32.totalorder %s72, %s74
    %p78 = scmp.eq.s32.totalorder %s22, 0
    %p79 = por %p77, %p78
    %p80 = scmp.ne.s32.totalorder %s72, %s74
    %p81 = scmp.eq.s32.totalorder %s27, 1
    %p82 = por %p80, %p81
    %p83 = scmp.ne.s32.totalorder %s74, %s75
    %p84 = scmp.eq.s32.totalorder %s27, 0
    %p85 = por %p83, %p84
    %p86 = scmp.ne.s32.totalorder %s74, %s75
    %p87 = scmp.eq.s32.totalorder %s28, 1
    %p88 = por %p86, %p87
    %p90 = scmp.ne.s32.totalorder %s75, %s89
    %p91 = scmp.eq.s32.totalorder %s28, 0
    %p92 = por %p90, %p91
    %s94 = sadd.s32 %s93, 1
    %p97 = scmp.eq.s32.totalorder %s22, 1
    %p98 = scmp.ne.s32.totalorder %s93, %s95
    %p99 = scmp.eq.s32.totalorder %s22, 0
    %p100 = por %p98, %p99
    %p101 = scmp.ne.s32.totalorder %s93, %s95
    %p102 = scmp.eq.s32.totalorder %s27, 1
    %p103 = por %p101, %p102
    %p104 = scmp.ne.s32.totalorder %s95, %s96
    %p105 = scmp.eq.s32.totalorder %s27, 0
    %p106 = por %p104, %p105
    %p107 = scmp.ne.s32.totalorder %s95, %s96
    %p108 = scmp.eq.s32.totalorder %s28, 1
    %p109 = por %p107, %p108
    %p111 = scmp.ne.s32.totalorder %s96, %s110
    %p112 = scmp.eq.s32.totalorder %s28, 0
    %p113 = por %p111, %p112
    %s114 = ssub.s32 %s22, %s29
    %p115 = scmp.eq.s32.totalorder %s114, 0
    %s117 = sadd.s32 %s116, 1
    %s118 = scalar_select %p115, %s116, %s117
    %p121 = pneg %p115
    %p122 = scmp.eq.s32.totalorder %s22, 1
    %p123 = por %p121, %p122
    %p124 = scmp.ne.s32.totalorder %s116, %s119
    %p125 = scmp.eq.s32.totalorder %s22, 0
    %p126 = por %p124, %p125
    %p127 = scmp.ne.s32.totalorder %s116, %s119
    %p128 = scmp.eq.s32.totalorder %s27, 1
    %p129 = por %p127, %p128
    %p130 = scmp.ne.s32.totalorder %s119, %s120
    %p131 = scmp.eq.s32.totalorder %s27, 0
    %p132 = por %p130, %p131
    %p133 = scmp.ne.s32.totalorder %s119, %s120
    %p134 = scmp.eq.s32.totalorder %s28, 1
    %p135 = por %p133, %p134
    %p137 = scmp.ne.s32.totalorder %s120, %s136
    %p138 = scmp.eq.s32.totalorder %s28, 0
    %p139 = por %p137, %p138
    %p140 = scmp.le.s32.totalorder 1, %s22
    %p141 = scmp.lt.s32.totalorder %s22, 3
    %p142 = pnand %p140, %p141
    %p143 = pneg %p142
    // Predicated region
    $region9: #{kge_forward.1} parent=5 // pred_check
      _
    $region10: #{kge_forward.1} parent=5 // pred_check_branch
      %145 = sbr.rel (%p142) target = $region12
    $region11: #{kge_forward.1} parent=5 // pred_region
      %s146 = ssub.s32 %s22, 1
      // Predicated region
      $region13: #{kge_forward.1} parent=11 // pred_check
        %p147 = pneg %p43
      $region14: #{kge_forward.1} parent=11 // pred_check_branch
        %149 = sbr.rel (%p147) target = $region16
      $region15: #{kge_forward.1} parent=11 // pred_region
        _
      $region16: #{kge_forward.1} parent=11 // pred_fallthru
        _
      // Predicated region
      $region17: #{kge_forward.1} parent=11 // pred_check
        %p150 = pneg %p64
      $region18: #{kge_forward.1} parent=11 // pred_check_branch
        %152 = sbr.rel (%p150) target = $region20
      $region19: #{kge_forward.1} parent=11 // pred_region
        _
      $region20: #{kge_forward.1} parent=11 // pred_fallthru
        _
      // Predicated region
      $region21: #{kge_forward.1} parent=11 // pred_check
        %p153 = pneg %p85
      $region22: #{kge_forward.1} parent=11 // pred_check_branch
        %155 = sbr.rel (%p153) target = $region24
      $region23: #{kge_forward.1} parent=11 // pred_region
        _
      $region24: #{kge_forward.1} parent=11 // pred_fallthru
        _
      // Predicated region
      $region25: #{kge_forward.1} parent=11 // pred_check
        %p156 = pneg %p106
      $region26: #{kge_forward.1} parent=11 // pred_check_branch
        %158 = sbr.rel (%p156) target = $region28
      $region27: #{kge_forward.1} parent=11 // pred_region
        _
      $region28: #{kge_forward.1} parent=11 // pred_fallthru
        _
    $region12: #{kge_forward.1} parent=5 // pred_fallthru
      _
    %p159 = scmp.lt.s32.totalorder %s22, 2
    // Predicated region
    $region29: #{kge_forward.1} parent=5 // pred_check
      %p160 = pneg %p159
    $region30: #{kge_forward.1} parent=5 // pred_check_branch
      %162 = sbr.rel (%p160) target = $region32
    $region31: #{kge_forward.1} parent=5 // pred_region
      _
    $region32: #{kge_forward.1} parent=5 // pred_fallthru
      _
    %p163 = scmp.le.s32.totalorder 1, %s22
    %p164 = scmp.lt.s32.totalorder %s22, 3
    %p165 = pnand %p163, %p164
    %p166 = pneg %p165
    // Predicated region
    $region33: #{kge_forward.1} parent=5 // pred_check
      _
    $region34: #{kge_forward.1} parent=5 // pred_check_branch
      %168 = sbr.rel (%p165) target = $region36
    $region35: #{kge_forward.1} parent=5 // pred_region
      %s169 = ssub.s32 %s22, 1
      %p170 = pneg %p43
      %p171 = pneg %p40
      %p172 = pneg %p64
      %p173 = pneg %p61
      %p174 = pneg %p85
      %p175 = pneg %p82
      %p176 = pneg %p106
      %p177 = pneg %p103
      %p178 = pneg %p132
      %p179 = pneg %p129
      %s180 = smul.u32 4, %s27
      %p181 = scmp.lt.s32.totalorder %s180, 7
      %s182 = scalar_select %p181, %s180, 7
      %s183 = smul.addr %s182, 2
      %s184 = scalar_lea.vmem %s6, %s183
      %s185 = smul.u32 4, %s27
      %p186 = scmp.lt.s32.totalorder %s185, 7
      %s187 = scalar_select %p186, %s185, 7
      %s188 = smul.addr %s187, 2
      %s189 = scalar_lea.vmem %s6, %s188
      %s190 = smul.u32 4, %s27
      %s191 = smul.u32 %s27, 512
      %v192 = vld [vmem:[%s2] sm:$0x3]
      %v193 = vld [vmem:[%s3] sm:$0x3]
      %v194 = vld [vmem:[%s4] sm:$0x3]
      %v195 = vmul.f32 %v193, %v194
      %v198 = vunpack.c.l.s4 1966171168
      %v199 = vunpack.c.0.s8 %v198
      %v200 = vlaneseq
      %v201 = vshrl.u32 %v200, 7
      %v202 = vsub.s32 %v199, %v201
      %v203 = vrot.slane %v195, %v202
      %v204 = vcombine.high %v203, %v203
      %v206 = vunpack.c.l.s4 1966171168
      %v207 = vunpack.c.0.s8 %v206
      %v208 = vlaneseq
      %v209 = vshrl.u32 %v208, 7
      %v210 = vsub.s32 %v207, %v209
      %v211 = vrot.slane %v203, %v210
      %v213 = vunpack.c.l.s4 1966171168
      %v214 = vunpack.c.0.s8 %v213
      %v215 = vlaneseq
      %v216 = vshrl.u32 %v215, 7
      %v217 = vsub.s32 %v214, %v216
      %v218 = vrot.slane %v204, %v217
      %v219 = vmul.f32 %v192, %v193
      %v222 = vunpack.c.l.s4 1966171168
      %v223 = vunpack.c.0.s8 %v222
      %v224 = vlaneseq
      %v225 = vshrl.u32 %v224, 7
      %v226 = vsub.s32 %v223, %v225
      %v227 = vrot.slane %v219, %v226
      %v228 = vcombine.high %v227, %v227
      %v230 = vunpack.c.l.s4 1966171168
      %v231 = vunpack.c.0.s8 %v230
      %v232 = vlaneseq
      %v233 = vshrl.u32 %v232, 7
      %v234 = vsub.s32 %v231, %v233
      %v235 = vrot.slane %v227, %v234
      %v237 = vunpack.c.l.s4 1966171168
      %v238 = vunpack.c.0.s8 %v237
      %v239 = vlaneseq
      %v240 = vshrl.u32 %v239, 7
      %v241 = vsub.s32 %v238, %v240
      %v242 = vrot.slane %v228, %v241
      loop: start=0, step=1, limit=32
      $region37: #{kge_forward.1} parent=35 // loop_pre_header
        _
      $region38: #{kge_forward.1} parent=35 // loop_header
        %s244 = sphi 0, %s248
        %p245 = scmp.ge.s32.totalorder %s244, 32
      $region39: #{kge_forward.1} parent=35 // loop_header_branch
        %247 = sbr.rel (%p245) target = $region43
      $region40: #{kge_forward.1} parent=35 // loop_body
        %s249 = smul.u32 %s244, 4
        %s250 = sadd.s32 %s191, %s249
        %s251 = sld [smem:[#allocation5 + %s250]]
        %s252 = sld [smem:[#allocation6 + %s250]]
        %s253 = scalar_lea.vmem %s5, %s251
        %v254 = vld [vmem:[%s253] sm:$0x1]
        %s255 = scalar_lea.vmem [#allocation2], %s249
        %256 = vst [vmem:[%s255] sm:$0x1] %v254
        %s257 = scalar_lea.vmem %s5, %s252
        %v258 = vld [vmem:[%s257] sm:$0x1]
        %s259 = scalar_lea.vmem [#allocation3], %s249
        %260 = vst [vmem:[%s259] sm:$0x1] %v258
        %s261 = sadd.s32 %s191, 1024
        %s262 = sadd.s32 %s261, %s249
        %s263 = sld [smem:[#allocation5 + %s262]]
        %s264 = sld [smem:[#allocation6 + %s262]]
        %s265 = scalar_lea.vmem %s5, %s263
        %v266 = vld [vmem:[%s265] sm:$0x1]
        %s267 = sadd.s32 %s249, 128
        %s268 = scalar_lea.vmem [#allocation2], %s267
        %269 = vst [vmem:[%s268] sm:$0x1] %v266
        %s270 = scalar_lea.vmem %s5, %s264
        %v271 = vld [vmem:[%s270] sm:$0x1]
        %s272 = scalar_lea.vmem [#allocation3], %s267
        %273 = vst [vmem:[%s272] sm:$0x1] %v271
        %s274 = sadd.s32 %s249, 1
        %s275 = sadd.s32 %s191, %s274
        %s276 = sld [smem:[#allocation5 + %s275]]
        %s277 = sld [smem:[#allocation6 + %s275]]
        %s278 = scalar_lea.vmem %s5, %s276
        %v279 = vld [vmem:[%s278] sm:$0x1]
        %s280 = scalar_lea.vmem [#allocation2], %s274
        %281 = vst [vmem:[%s280] sm:$0x1] %v279
        %s282 = scalar_lea.vmem %s5, %s277
        %v283 = vld [vmem:[%s282] sm:$0x1]
        %s284 = scalar_lea.vmem [#allocation3], %s274
        %285 = vst [vmem:[%s284] sm:$0x1] %v283
        %s286 = sadd.s32 %s261, %s274
        %s287 = sld [smem:[#allocation5 + %s286]]
        %s288 = sld [smem:[#allocation6 + %s286]]
        %s289 = scalar_lea.vmem %s5, %s287
        %v290 = vld [vmem:[%s289] sm:$0x1]
        %s291 = sadd.s32 %s274, 128
        %s292 = scalar_lea.vmem [#allocation2], %s291
        %293 = vst [vmem:[%s292] sm:$0x1] %v290
        %s294 = scalar_lea.vmem %s5, %s288
        %v295 = vld [vmem:[%s294] sm:$0x1]
        %s296 = scalar_lea.vmem [#allocation3], %s291
        %297 = vst [vmem:[%s296] sm:$0x1] %v295
        %s298 = sadd.s32 %s249, 2
        %s299 = sadd.s32 %s191, %s298
        %s300 = sld [smem:[#allocation5 + %s299]]
        %s301 = sld [smem:[#allocation6 + %s299]]
        %s302 = scalar_lea.vmem %s5, %s300
        %v303 = vld [vmem:[%s302] sm:$0x1]
        %s304 = scalar_lea.vmem [#allocation2], %s298
        %305 = vst [vmem:[%s304] sm:$0x1] %v303
        %s306 = scalar_lea.vmem %s5, %s301
        %v307 = vld [vmem:[%s306] sm:$0x1]
        %s308 = scalar_lea.vmem [#allocation3], %s298
        %309 = vst [vmem:[%s308] sm:$0x1] %v307
        %s310 = sadd.s32 %s261, %s298
        %s311 = sld [smem:[#allocation5 + %s310]]
        %s312 = sld [smem:[#allocation6 + %s310]]
        %s313 = scalar_lea.vmem %s5, %s311
        %v314 = vld [vmem:[%s313] sm:$0x1]
        %s315 = sadd.s32 %s298, 128
        %s316 = scalar_lea.vmem [#allocation2], %s315
        %317 = vst [vmem:[%s316] sm:$0x1] %v314
        %s318 = scalar_lea.vmem %s5, %s312
        %v319 = vld [vmem:[%s318] sm:$0x1]
        %s320 = scalar_lea.vmem [#allocation3], %s315
        %321 = vst [vmem:[%s320] sm:$0x1] %v319
        %s322 = sadd.s32 %s249, 3
        %s323 = sadd.s32 %s191, %s322
        %s324 = sld [smem:[#allocation5 + %s323]]
        %s325 = sld [smem:[#allocation6 + %s323]]
        %s326 = scalar_lea.vmem %s5, %s324
        %v327 = vld [vmem:[%s326] sm:$0x1]
        %s328 = scalar_lea.vmem [#allocation2], %s322
        %329 = vst [vmem:[%s328] sm:$0x1] %v327
        %s330 = scalar_lea.vmem %s5, %s325
        %v331 = vld [vmem:[%s330] sm:$0x1]
        %s332 = scalar_lea.vmem [#allocation3], %s322
        %333 = vst [vmem:[%s332] sm:$0x1] %v331
        %s334 = sadd.s32 %s261, %s322
        %s335 = sld [smem:[#allocation5 + %s334]]
        %s336 = sld [smem:[#allocation6 + %s334]]
        %s337 = scalar_lea.vmem %s5, %s335
        %v338 = vld [vmem:[%s337] sm:$0x1]
        %s339 = sadd.s32 %s322, 128
        %s340 = scalar_lea.vmem [#allocation2], %s339
        %341 = vst [vmem:[%s340] sm:$0x1] %v338
        %s342 = scalar_lea.vmem %s5, %s336
        %v343 = vld [vmem:[%s342] sm:$0x1]
        %s344 = scalar_lea.vmem [#allocation3], %s339
        %345 = vst [vmem:[%s344] sm:$0x1] %v343
      $region41: #{kge_forward.1} parent=35 // loop_footer
        %s248 = sadd.s32 1, %s244
      $region42: #{kge_forward.1} parent=35 // loop_footer_branch
        %243 = sbr.rel target = $region38
      $region43: #{kge_forward.1} parent=35 // loop_exit
        _
      %v346 = vld [vmem:[#allocation2] sm:$0xff]
      %v347 = vld [vmem:[#allocation2 + $0x8] sm:$0xff]
      %v348 = vld [vmem:[#allocation2 + $0x10] sm:$0xff]
      %v349 = vld [vmem:[#allocation2 + $0x18] sm:$0xff]
      %v350 = vld [vmem:[#allocation2 + $0x20] sm:$0xff]
      %v351 = vld [vmem:[#allocation2 + $0x28] sm:$0xff]
      %v352 = vld [vmem:[#allocation2 + $0x30] sm:$0xff]
      %v353 = vld [vmem:[#allocation2 + $0x38] sm:$0xff]
      %v354 = vld [vmem:[#allocation2 + $0x40] sm:$0xff]
      %v355 = vld [vmem:[#allocation2 + $0x48] sm:$0xff]
      %v356 = vld [vmem:[#allocation2 + $0x50] sm:$0xff]
      %v357 = vld [vmem:[#allocation2 + $0x58] sm:$0xff]
      %v358 = vld [vmem:[#allocation2 + $0x60] sm:$0xff]
      %v359 = vld [vmem:[#allocation2 + $0x68] sm:$0xff]
      %v360 = vld [vmem:[#allocation2 + $0x70] sm:$0xff]
      %v361 = vld [vmem:[#allocation2 + $0x78] sm:$0xff]
      %v362 = vld [vmem:[#allocation2 + $0x80] sm:$0xff]
      %v363 = vld [vmem:[#allocation2 + $0x88] sm:$0xff]
      %v364 = vld [vmem:[#allocation2 + $0x90] sm:$0xff]
      %v365 = vld [vmem:[#allocation2 + $0x98] sm:$0xff]
      %v366 = vld [vmem:[#allocation2 + $0xa0] sm:$0xff]
      %v367 = vld [vmem:[#allocation2 + $0xa8] sm:$0xff]
      %v368 = vld [vmem:[#allocation2 + $0xb0] sm:$0xff]
      %v369 = vld [vmem:[#allocation2 + $0xb8] sm:$0xff]
      %v370 = vld [vmem:[#allocation2 + $0xc0] sm:$0xff]
      %v371 = vld [vmem:[#allocation2 + $0xc8] sm:$0xff]
      %v372 = vld [vmem:[#allocation2 + $0xd0] sm:$0xff]
      %v373 = vld [vmem:[#allocation2 + $0xd8] sm:$0xff]
      %v374 = vld [vmem:[#allocation2 + $0xe0] sm:$0xff]
      %v375 = vld [vmem:[#allocation2 + $0xe8] sm:$0xff]
      %v376 = vld [vmem:[#allocation2 + $0xf0] sm:$0xff]
      %v377 = vld [vmem:[#allocation2 + $0xf8] sm:$0xff]
      %v378 = vld [vmem:[#allocation3] sm:$0xff]
      %v379 = vld [vmem:[#allocation3 + $0x8] sm:$0xff]
      %v380 = vld [vmem:[#allocation3 + $0x10] sm:$0xff]
      %v381 = vld [vmem:[#allocation3 + $0x18] sm:$0xff]
      %v382 = vld [vmem:[#allocation3 + $0x20] sm:$0xff]
      %v383 = vld [vmem:[#allocation3 + $0x28] sm:$0xff]
      %v384 = vld [vmem:[#allocation3 + $0x30] sm:$0xff]
      %v385 = vld [vmem:[#allocation3 + $0x38] sm:$0xff]
      %v386 = vld [vmem:[#allocation3 + $0x40] sm:$0xff]
      %v387 = vld [vmem:[#allocation3 + $0x48] sm:$0xff]
      %v388 = vld [vmem:[#allocation3 + $0x50] sm:$0xff]
      %v389 = vld [vmem:[#allocation3 + $0x58] sm:$0xff]
      %v390 = vld [vmem:[#allocation3 + $0x60] sm:$0xff]
      %v391 = vld [vmem:[#allocation3 + $0x68] sm:$0xff]
      %v392 = vld [vmem:[#allocation3 + $0x70] sm:$0xff]
      %v393 = vld [vmem:[#allocation3 + $0x78] sm:$0xff]
      %v394 = vld [vmem:[#allocation3 + $0x80] sm:$0xff]
      %v395 = vld [vmem:[#allocation3 + $0x88] sm:$0xff]
      %v396 = vld [vmem:[#allocation3 + $0x90] sm:$0xff]
      %v397 = vld [vmem:[#allocation3 + $0x98] sm:$0xff]
      %v398 = vld [vmem:[#allocation3 + $0xa0] sm:$0xff]
      %v399 = vld [vmem:[#allocation3 + $0xa8] sm:$0xff]
      %v400 = vld [vmem:[#allocation3 + $0xb0] sm:$0xff]
      %v401 = vld [vmem:[#allocation3 + $0xb8] sm:$0xff]
      %v402 = vld [vmem:[#allocation3 + $0xc0] sm:$0xff]
      %v403 = vld [vmem:[#allocation3 + $0xc8] sm:$0xff]
      %v404 = vld [vmem:[#allocation3 + $0xd0] sm:$0xff]
      %v405 = vld [vmem:[#allocation3 + $0xd8] sm:$0xff]
      %v406 = vld [vmem:[#allocation3 + $0xe0] sm:$0xff]
      %v407 = vld [vmem:[#allocation3 + $0xe8] sm:$0xff]
      %v408 = vld [vmem:[#allocation3 + $0xf0] sm:$0xff]
      %v409 = vld [vmem:[#allocation3 + $0xf8] sm:$0xff]
      %v410 = vlaneseq
      %v411 = vshrl.u32 %v410, 7
      %v412 = vsub.s32 0, %v411
      %v413 = vrot.slane %v211, %v412
      %v414 = vlaneseq
      %v415 = vshrl.u32 %v414, 7
      %v416 = vsub.s32 0, %v415
      %v417 = vrot.slane %v218, %v416
      %v420 = vmul.f32 %v346, %v413
      %v421 = vmul.f32 %v347, %v413
      %v422 = vmul.f32 %v348, %v413
      %v423 = vmul.f32 %v349, %v413
      %v424 = vmul.f32 %v350, %v413
      %v425 = vmul.f32 %v351, %v413
      %v426 = vmul.f32 %v352, %v413
      %v427 = vmul.f32 %v353, %v413
      %v428 = vmul.f32 %v354, %v413
      %v429 = vmul.f32 %v355, %v413
      %v430 = vmul.f32 %v356, %v413
      %v431 = vmul.f32 %v357, %v413
      %v432 = vmul.f32 %v358, %v413
      %v433 = vmul.f32 %v359, %v413
      %v434 = vmul.f32 %v360, %v413
      %v435 = vmul.f32 %v361, %v413
      %v436 = vmul.f32 %v362, %v417
      %v437 = vmul.f32 %v363, %v417
      %v438 = vmul.f32 %v364, %v417
      %v439 = vmul.f32 %v365, %v417
      %v440 = vmul.f32 %v366, %v417
      %v441 = vmul.f32 %v367, %v417
      %v442 = vmul.f32 %v368, %v417
      %v443 = vmul.f32 %v369, %v417
      %v444 = vmul.f32 %v370, %v417
      %v445 = vmul.f32 %v371, %v417
      %v446 = vmul.f32 %v372, %v417
      %v447 = vmul.f32 %v373, %v417
      %v448 = vmul.f32 %v374, %v417
      %v449 = vmul.f32 %v375, %v417
      %v450 = vmul.f32 %v376, %v417
      %v451 = vmul.f32 %v377, %v417
      %452 = vadd.xlane.f32.xlu0 %v420
      %v453 = vpop.xlane.xlu0 %452
      %454 = vadd.xlane.f32.xlu0 %v421
      %v455 = vpop.xlane.xlu0 %454
      %456 = vadd.xlane.f32.xlu0 %v422
      %v457 = vpop.xlane.xlu0 %456
      %458 = vadd.xlane.f32.xlu0 %v423
      %v459 = vpop.xlane.xlu0 %458
      %460 = vadd.xlane.f32.xlu0 %v424
      %v461 = vpop.xlane.xlu0 %460
      %462 = vadd.xlane.f32.xlu0 %v425
      %v463 = vpop.xlane.xlu0 %462
      %464 = vadd.xlane.f32.xlu0 %v426
      %v465 = vpop.xlane.xlu0 %464
      %466 = vadd.xlane.f32.xlu0 %v427
      %v467 = vpop.xlane.xlu0 %466
      %468 = vadd.xlane.f32.xlu0 %v428
      %v469 = vpop.xlane.xlu0 %468
      %470 = vadd.xlane.f32.xlu0 %v429
      %v471 = vpop.xlane.xlu0 %470
      %472 = vadd.xlane.f32.xlu0 %v430
      %v473 = vpop.xlane.xlu0 %472
      %474 = vadd.xlane.f32.xlu0 %v431
      %v475 = vpop.xlane.xlu0 %474
      %476 = vadd.xlane.f32.xlu0 %v432
      %v477 = vpop.xlane.xlu0 %476
      %478 = vadd.xlane.f32.xlu0 %v433
      %v479 = vpop.xlane.xlu0 %478
      %480 = vadd.xlane.f32.xlu0 %v434
      %v481 = vpop.xlane.xlu0 %480
      %482 = vadd.xlane.f32.xlu0 %v435
      %v483 = vpop.xlane.xlu0 %482
      %484 = vadd.xlane.f32.xlu0 %v436
      %v485 = vpop.xlane.xlu0 %484
      %486 = vadd.xlane.f32.xlu0 %v437
      %v487 = vpop.xlane.xlu0 %486
      %488 = vadd.xlane.f32.xlu0 %v438
      %v489 = vpop.xlane.xlu0 %488
      %490 = vadd.xlane.f32.xlu0 %v439
      %v491 = vpop.xlane.xlu0 %490
      %492 = vadd.xlane.f32.xlu0 %v440
      %v493 = vpop.xlane.xlu0 %492
      %494 = vadd.xlane.f32.xlu0 %v441
      %v495 = vpop.xlane.xlu0 %494
      %496 = vadd.xlane.f32.xlu0 %v442
      %v497 = vpop.xlane.xlu0 %496
      %498 = vadd.xlane.f32.xlu0 %v443
      %v499 = vpop.xlane.xlu0 %498
      %500 = vadd.xlane.f32.xlu0 %v444
      %v501 = vpop.xlane.xlu0 %500
      %502 = vadd.xlane.f32.xlu0 %v445
      %v503 = vpop.xlane.xlu0 %502
      %504 = vadd.xlane.f32.xlu0 %v446
      %v505 = vpop.xlane.xlu0 %504
      %506 = vadd.xlane.f32.xlu0 %v447
      %v507 = vpop.xlane.xlu0 %506
      %508 = vadd.xlane.f32.xlu0 %v448
      %v509 = vpop.xlane.xlu0 %508
      %510 = vadd.xlane.f32.xlu0 %v449
      %v511 = vpop.xlane.xlu0 %510
      %512 = vadd.xlane.f32.xlu0 %v450
      %v513 = vpop.xlane.xlu0 %512
      %514 = vadd.xlane.f32.xlu0 %v451
      %v515 = vpop.xlane.xlu0 %514
      %v516 = vlaneseq
      %v517 = vshrl.u32 %v516, 7
      %v518 = vsub.s32 0, %v517
      %v519 = vrot.slane %v235, %v518
      %v520 = vlaneseq
      %v521 = vshrl.u32 %v520, 7
      %v522 = vsub.s32 0, %v521
      %v523 = vrot.slane %v242, %v522
      %v526 = vmul.f32 %v378, %v519
      %v527 = vmul.f32 %v379, %v519
      %v528 = vmul.f32 %v380, %v519
      %v529 = vmul.f32 %v381, %v519
      %v530 = vmul.f32 %v382, %v519
      %v531 = vmul.f32 %v383, %v519
      %v532 = vmul.f32 %v384, %v519
      %v533 = vmul.f32 %v385, %v519
      %v534 = vmul.f32 %v386, %v519
      %v535 = vmul.f32 %v387, %v519
      %v536 = vmul.f32 %v388, %v519
      %v537 = vmul.f32 %v389, %v519
      %v538 = vmul.f32 %v390, %v519
      %v539 = vmul.f32 %v391, %v519
      %v540 = vmul.f32 %v392, %v519
      %v541 = vmul.f32 %v393, %v519
      %v542 = vmul.f32 %v394, %v523
      %v543 = vmul.f32 %v395, %v523
      %v544 = vmul.f32 %v396, %v523
      %v545 = vmul.f32 %v397, %v523
      %v546 = vmul.f32 %v398, %v523
      %v547 = vmul.f32 %v399, %v523
      %v548 = vmul.f32 %v400, %v523
      %v549 = vmul.f32 %v401, %v523
      %v550 = vmul.f32 %v402, %v523
      %v551 = vmul.f32 %v403, %v523
      %v552 = vmul.f32 %v404, %v523
      %v553 = vmul.f32 %v405, %v523
      %v554 = vmul.f32 %v406, %v523
      %v555 = vmul.f32 %v407, %v523
      %v556 = vmul.f32 %v408, %v523
      %v557 = vmul.f32 %v409, %v523
      %558 = vadd.xlane.f32.xlu0 %v526
      %v559 = vpop.xlane.xlu0 %558
      %560 = vadd.xlane.f32.xlu0 %v527
      %v561 = vpop.xlane.xlu0 %560
      %562 = vadd.xlane.f32.xlu0 %v528
      %v563 = vpop.xlane.xlu0 %562
      %564 = vadd.xlane.f32.xlu0 %v529
      %v565 = vpop.xlane.xlu0 %564
      %566 = vadd.xlane.f32.xlu0 %v530
      %v567 = vpop.xlane.xlu0 %566
      %568 = vadd.xlane.f32.xlu0 %v531
      %v569 = vpop.xlane.xlu0 %568
      %570 = vadd.xlane.f32.xlu0 %v532
      %v571 = vpop.xlane.xlu0 %570
      %572 = vadd.xlane.f32.xlu0 %v533
      %v573 = vpop.xlane.xlu0 %572
      %574 = vadd.xlane.f32.xlu0 %v534
      %v575 = vpop.xlane.xlu0 %574
      %576 = vadd.xlane.f32.xlu0 %v535
      %v577 = vpop.xlane.xlu0 %576
      %578 = vadd.xlane.f32.xlu0 %v536
      %v579 = vpop.xlane.xlu0 %578
      %580 = vadd.xlane.f32.xlu0 %v537
      %v581 = vpop.xlane.xlu0 %580
      %582 = vadd.xlane.f32.xlu0 %v538
      %v583 = vpop.xlane.xlu0 %582
      %584 = vadd.xlane.f32.xlu0 %v539
      %v585 = vpop.xlane.xlu0 %584
      %586 = vadd.xlane.f32.xlu0 %v540
      %v587 = vpop.xlane.xlu0 %586
      %588 = vadd.xlane.f32.xlu0 %v541
      %v589 = vpop.xlane.xlu0 %588
      %590 = vadd.xlane.f32.xlu0 %v542
      %v591 = vpop.xlane.xlu0 %590
      %592 = vadd.xlane.f32.xlu0 %v543
      %v593 = vpop.xlane.xlu0 %592
      %594 = vadd.xlane.f32.xlu0 %v544
      %v595 = vpop.xlane.xlu0 %594
      %596 = vadd.xlane.f32.xlu0 %v545
      %v597 = vpop.xlane.xlu0 %596
      %598 = vadd.xlane.f32.xlu0 %v546
      %v599 = vpop.xlane.xlu0 %598
      %600 = vadd.xlane.f32.xlu0 %v547
      %v601 = vpop.xlane.xlu0 %600
      %602 = vadd.xlane.f32.xlu0 %v548
      %v603 = vpop.xlane.xlu0 %602
      %604 = vadd.xlane.f32.xlu0 %v549
      %v605 = vpop.xlane.xlu0 %604
      %606 = vadd.xlane.f32.xlu0 %v550
      %v607 = vpop.xlane.xlu0 %606
      %608 = vadd.xlane.f32.xlu0 %v551
      %v609 = vpop.xlane.xlu0 %608
      %610 = vadd.xlane.f32.xlu0 %v552
      %v611 = vpop.xlane.xlu0 %610
      %612 = vadd.xlane.f32.xlu0 %v553
      %v613 = vpop.xlane.xlu0 %612
      %614 = vadd.xlane.f32.xlu0 %v554
      %v615 = vpop.xlane.xlu0 %614
      %616 = vadd.xlane.f32.xlu0 %v555
      %v617 = vpop.xlane.xlu0 %616
      %618 = vadd.xlane.f32.xlu0 %v556
      %v619 = vpop.xlane.xlu0 %618
      %620 = vadd.xlane.f32.xlu0 %v557
      %v621 = vpop.xlane.xlu0 %620
      %v622 = vadd.f32 %v453, %v559
      %v623 = vadd.f32 %v455, %v561
      %v624 = vadd.f32 %v457, %v563
      %v625 = vadd.f32 %v459, %v565
      %v626 = vadd.f32 %v461, %v567
      %v627 = vadd.f32 %v463, %v569
      %v628 = vadd.f32 %v465, %v571
      %v629 = vadd.f32 %v467, %v573
      %v630 = vadd.f32 %v469, %v575
      %v631 = vadd.f32 %v471, %v577
      %v632 = vadd.f32 %v473, %v579
      %v633 = vadd.f32 %v475, %v581
      %v634 = vadd.f32 %v477, %v583
      %v635 = vadd.f32 %v479, %v585
      %v636 = vadd.f32 %v481, %v587
      %v637 = vadd.f32 %v483, %v589
      %v638 = vadd.f32 %v485, %v591
      %v639 = vadd.f32 %v487, %v593
      %v640 = vadd.f32 %v489, %v595
      %v641 = vadd.f32 %v491, %v597
      %v642 = vadd.f32 %v493, %v599
      %v643 = vadd.f32 %v495, %v601
      %v644 = vadd.f32 %v497, %v603
      %v645 = vadd.f32 %v499, %v605
      %v646 = vadd.f32 %v501, %v607
      %v647 = vadd.f32 %v503, %v609
      %v648 = vadd.f32 %v505, %v611
      %v649 = vadd.f32 %v507, %v613
      %v650 = vadd.f32 %v509, %v615
      %v651 = vadd.f32 %v511, %v617
      %v652 = vadd.f32 %v513, %v619
      %v653 = vadd.f32 %v515, %v621
      %v654 = vsub.f32 0.0, %v622
      %v655 = vsub.f32 0.0, %v623
      %v656 = vsub.f32 0.0, %v624
      %v657 = vsub.f32 0.0, %v625
      %v658 = vsub.f32 0.0, %v626
      %v659 = vsub.f32 0.0, %v627
      %v660 = vsub.f32 0.0, %v628
      %v661 = vsub.f32 0.0, %v629
      %v662 = vsub.f32 0.0, %v630
      %v663 = vsub.f32 0.0, %v631
      %v664 = vsub.f32 0.0, %v632
      %v665 = vsub.f32 0.0, %v633
      %v666 = vsub.f32 0.0, %v634
      %v667 = vsub.f32 0.0, %v635
      %v668 = vsub.f32 0.0, %v636
      %v669 = vsub.f32 0.0, %v637
      %v670 = vsub.f32 0.0, %v638
      %v671 = vsub.f32 0.0, %v639
      %v672 = vsub.f32 0.0, %v640
      %v673 = vsub.f32 0.0, %v641
      %v674 = vsub.f32 0.0, %v642
      %v675 = vsub.f32 0.0, %v643
      %v676 = vsub.f32 0.0, %v644
      %v677 = vsub.f32 0.0, %v645
      %v678 = vsub.f32 0.0, %v646
      %v679 = vsub.f32 0.0, %v647
      %v680 = vsub.f32 0.0, %v648
      %v681 = vsub.f32 0.0, %v649
      %v682 = vsub.f32 0.0, %v650
      %v683 = vsub.f32 0.0, %v651
      %v684 = vsub.f32 0.0, %v652
      %v685 = vsub.f32 0.0, %v653
      %v686 = vmin.f32 %v654, 0.0
      %v687 = vmin.f32 %v655, 0.0
      %v688 = vmin.f32 %v656, 0.0
      %v689 = vmin.f32 %v657, 0.0
      %v690 = vmin.f32 %v658, 0.0
      %v691 = vmin.f32 %v659, 0.0
      %v692 = vmin.f32 %v660, 0.0
      %v693 = vmin.f32 %v661, 0.0
      %v694 = vmin.f32 %v662, 0.0
      %v695 = vmin.f32 %v663, 0.0
      %v696 = vmin.f32 %v664, 0.0
      %v697 = vmin.f32 %v665, 0.0
      %v698 = vmin.f32 %v666, 0.0
      %v699 = vmin.f32 %v667, 0.0
      %v700 = vmin.f32 %v668, 0.0
      %v701 = vmin.f32 %v669, 0.0
      %v702 = vmin.f32 %v670, 0.0
      %v703 = vmin.f32 %v671, 0.0
      %v704 = vmin.f32 %v672, 0.0
      %v705 = vmin.f32 %v673, 0.0
      %v706 = vmin.f32 %v674, 0.0
      %v707 = vmin.f32 %v675, 0.0
      %v708 = vmin.f32 %v676, 0.0
      %v709 = vmin.f32 %v677, 0.0
      %v710 = vmin.f32 %v678, 0.0
      %v711 = vmin.f32 %v679, 0.0
      %v712 = vmin.f32 %v680, 0.0
      %v713 = vmin.f32 %v681, 0.0
      %v714 = vmin.f32 %v682, 0.0
      %v715 = vmin.f32 %v683, 0.0
      %v716 = vmin.f32 %v684, 0.0
      %v717 = vmin.f32 %v685, 0.0
      %v718 = vand.u32 2147483647, %v654
      %v719 = vand.u32 2147483647, %v655
      %v720 = vand.u32 2147483647, %v656
      %v721 = vand.u32 2147483647, %v657
      %v722 = vand.u32 2147483647, %v658
      %v723 = vand.u32 2147483647, %v659
      %v724 = vand.u32 2147483647, %v660
      %v725 = vand.u32 2147483647, %v661
      %v726 = vand.u32 2147483647, %v662
      %v727 = vand.u32 2147483647, %v663
      %v728 = vand.u32 2147483647, %v664
      %v729 = vand.u32 2147483647, %v665
      %v730 = vand.u32 2147483647, %v666
      %v731 = vand.u32 2147483647, %v667
      %v732 = vand.u32 2147483647, %v668
      %v733 = vand.u32 2147483647, %v669
      %v734 = vand.u32 2147483647, %v670
      %v735 = vand.u32 2147483647, %v671
      %v736 = vand.u32 2147483647, %v672
      %v737 = vand.u32 2147483647, %v673
      %v738 = vand.u32 2147483647, %v674
      %v739 = vand.u32 2147483647, %v675
      %v740 = vand.u32 2147483647, %v676
      %v741 = vand.u32 2147483647, %v677
      %v742 = vand.u32 2147483647, %v678
      %v743 = vand.u32 2147483647, %v679
      %v744 = vand.u32 2147483647, %v680
      %v745 = vand.u32 2147483647, %v681
      %v746 = vand.u32 2147483647, %v682
      %v747 = vand.u32 2147483647, %v683
      %v748 = vand.u32 2147483647, %v684
      %v749 = vand.u32 2147483647, %v685
      %v750 = vsub.f32 0.0, %v718
      %v751 = vsub.f32 0.0, %v719
      %v752 = vsub.f32 0.0, %v720
      %v753 = vsub.f32 0.0, %v721
      %v754 = vsub.f32 0.0, %v722
      %v755 = vsub.f32 0.0, %v723
      %v756 = vsub.f32 0.0, %v724
      %v757 = vsub.f32 0.0, %v725
      %v758 = vsub.f32 0.0, %v726
      %v759 = vsub.f32 0.0, %v727
      %v760 = vsub.f32 0.0, %v728
      %v761 = vsub.f32 0.0, %v729
      %v762 = vsub.f32 0.0, %v730
      %v763 = vsub.f32 0.0, %v731
      %v764 = vsub.f32 0.0, %v732
      %v765 = vsub.f32 0.0, %v733
      %v766 = vsub.f32 0.0, %v734
      %v767 = vsub.f32 0.0, %v735
      %v768 = vsub.f32 0.0, %v736
      %v769 = vsub.f32 0.0, %v737
      %v770 = vsub.f32 0.0, %v738
      %v771 = vsub.f32 0.0, %v739
      %v772 = vsub.f32 0.0, %v740
      %v773 = vsub.f32 0.0, %v741
      %v774 = vsub.f32 0.0, %v742
      %v775 = vsub.f32 0.0, %v743
      %v776 = vsub.f32 0.0, %v744
      %v777 = vsub.f32 0.0, %v745
      %v778 = vsub.f32 0.0, %v746
      %v779 = vsub.f32 0.0, %v747
      %v780 = vsub.f32 0.0, %v748
      %v781 = vsub.f32 0.0, %v749
      %v782 = vmul.f32 %v750, 1.442695
      %v783 = vpow.pop %v782
      %v784 = vmul.f32 %v751, 1.442695
      %v785 = vpow.pop %v784
      %v786 = vmul.f32 %v752, 1.442695
      %v787 = vpow.pop %v786
      %v788 = vmul.f32 %v753, 1.442695
      %v789 = vpow.pop %v788
      %v790 = vmul.f32 %v754, 1.442695
      %v791 = vpow.pop %v790
      %v792 = vmul.f32 %v755, 1.442695
      %v793 = vpow.pop %v792
      %v794 = vmul.f32 %v756, 1.442695
      %v795 = vpow.pop %v794
      %v796 = vmul.f32 %v757, 1.442695
      %v797 = vpow.pop %v796
      %v798 = vmul.f32 %v758, 1.442695
      %v799 = vpow.pop %v798
      %v800 = vmul.f32 %v759, 1.442695
      %v801 = vpow.pop %v800
      %v802 = vmul.f32 %v760, 1.442695
      %v803 = vpow.pop %v802
      %v804 = vmul.f32 %v761, 1.442695
      %v805 = vpow.pop %v804
      %v806 = vmul.f32 %v762, 1.442695
      %v807 = vpow.pop %v806
      %v808 = vmul.f32 %v763, 1.442695
      %v809 = vpow.pop %v808
      %v810 = vmul.f32 %v764, 1.442695
      %v811 = vpow.pop %v810
      %v812 = vmul.f32 %v765, 1.442695
      %v813 = vpow.pop %v812
      %v814 = vmul.f32 %v766, 1.442695
      %v815 = vpow.pop %v814
      %v816 = vmul.f32 %v767, 1.442695
      %v817 = vpow.pop %v816
      %v818 = vmul.f32 %v768, 1.442695
      %v819 = vpow.pop %v818
      %v820 = vmul.f32 %v769, 1.442695
      %v821 = vpow.pop %v820
      %v822 = vmul.f32 %v770, 1.442695
      %v823 = vpow.pop %v822
      %v824 = vmul.f32 %v771, 1.442695
      %v825 = vpow.pop %v824
      %v826 = vmul.f32 %v772, 1.442695
      %v827 = vpow.pop %v826
      %v828 = vmul.f32 %v773, 1.442695
      %v829 = vpow.pop %v828
      %v830 = vmul.f32 %v774, 1.442695
      %v831 = vpow.pop %v830
      %v832 = vmul.f32 %v775, 1.442695
      %v833 = vpow.pop %v832
      %v834 = vmul.f32 %v776, 1.442695
      %v835 = vpow.pop %v834
      %v836 = vmul.f32 %v777, 1.442695
      %v837 = vpow.pop %v836
      %v838 = vmul.f32 %v778, 1.442695
      %v839 = vpow.pop %v838
      %v840 = vmul.f32 %v779, 1.442695
      %v841 = vpow.pop %v840
      %v842 = vmul.f32 %v780, 1.442695
      %v843 = vpow.pop %v842
      %v844 = vmul.f32 %v781, 1.442695
      %v845 = vpow.pop %v844
      %v846 = vadd.f32 %v783, 1.0
      %v847 = vlog2.pop %v846
      %v848 = vmul.f32 %v847, 0.6931472
      %v849 = vmul.f32 -0.5, %v783
      %v850 = vadd.f32 %v849, 1.0
      %v851 = vmul.f32 %v850, %v783
      %v852 = vand.u32 2147483647, %v783
      %vm853 = vcmp.lt.f32.partialorder %v852, 0.0004427343
      %v854 = vsel %vm853, %v851, %v848
      %v855 = vadd.f32 %v785, 1.0
      %v856 = vlog2.pop %v855
      %v857 = vmul.f32 %v856, 0.6931472
      %v858 = vmul.f32 -0.5, %v785
      %v859 = vadd.f32 %v858, 1.0
      %v860 = vmul.f32 %v859, %v785
      %v861 = vand.u32 2147483647, %v785
      %vm862 = vcmp.lt.f32.partialorder %v861, 0.0004427343
      %v863 = vsel %vm862, %v860, %v857
      %v864 = vadd.f32 %v787, 1.0
      %v865 = vlog2.pop %v864
      %v866 = vmul.f32 %v865, 0.6931472
      %v867 = vmul.f32 -0.5, %v787
      %v868 = vadd.f32 %v867, 1.0
      %v869 = vmul.f32 %v868, %v787
      %v870 = vand.u32 2147483647, %v787
      %vm871 = vcmp.lt.f32.partialorder %v870, 0.0004427343
      %v872 = vsel %vm871, %v869, %v866
      %v873 = vadd.f32 %v789, 1.0
      %v874 = vlog2.pop %v873
      %v875 = vmul.f32 %v874, 0.6931472
      %v876 = vmul.f32 -0.5, %v789
      %v877 = vadd.f32 %v876, 1.0
      %v878 = vmul.f32 %v877, %v789
      %v879 = vand.u32 2147483647, %v789
      %vm880 = vcmp.lt.f32.partialorder %v879, 0.0004427343
      %v881 = vsel %vm880, %v878, %v875
      %v882 = vadd.f32 %v791, 1.0
      %v883 = vlog2.pop %v882
      %v884 = vmul.f32 %v883, 0.6931472
      %v885 = vmul.f32 -0.5, %v791
      %v886 = vadd.f32 %v885, 1.0
      %v887 = vmul.f32 %v886, %v791
      %v888 = vand.u32 2147483647, %v791
      %vm889 = vcmp.lt.f32.partialorder %v888, 0.0004427343
      %v890 = vsel %vm889, %v887, %v884
      %v891 = vadd.f32 %v793, 1.0
      %v892 = vlog2.pop %v891
      %v893 = vmul.f32 %v892, 0.6931472
      %v894 = vmul.f32 -0.5, %v793
      %v895 = vadd.f32 %v894, 1.0
      %v896 = vmul.f32 %v895, %v793
      %v897 = vand.u32 2147483647, %v793
      %vm898 = vcmp.lt.f32.partialorder %v897, 0.0004427343
      %v899 = vsel %vm898, %v896, %v893
      %v900 = vadd.f32 %v795, 1.0
      %v901 = vlog2.pop %v900
      %v902 = vmul.f32 %v901, 0.6931472
      %v903 = vmul.f32 -0.5, %v795
      %v904 = vadd.f32 %v903, 1.0
      %v905 = vmul.f32 %v904, %v795
      %v906 = vand.u32 2147483647, %v795
      %vm907 = vcmp.lt.f32.partialorder %v906, 0.0004427343
      %v908 = vsel %vm907, %v905, %v902
      %v909 = vadd.f32 %v797, 1.0
      %v910 = vlog2.pop %v909
      %v911 = vmul.f32 %v910, 0.6931472
      %v912 = vmul.f32 -0.5, %v797
      %v913 = vadd.f32 %v912, 1.0
      %v914 = vmul.f32 %v913, %v797
      %v915 = vand.u32 2147483647, %v797
      %vm916 = vcmp.lt.f32.partialorder %v915, 0.0004427343
      %v917 = vsel %vm916, %v914, %v911
      %v918 = vadd.f32 %v799, 1.0
      %v919 = vlog2.pop %v918
      %v920 = vmul.f32 %v919, 0.6931472
      %v921 = vmul.f32 -0.5, %v799
      %v922 = vadd.f32 %v921, 1.0
      %v923 = vmul.f32 %v922, %v799
      %v924 = vand.u32 2147483647, %v799
      %vm925 = vcmp.lt.f32.partialorder %v924, 0.0004427343
      %v926 = vsel %vm925, %v923, %v920
      %v927 = vadd.f32 %v801, 1.0
      %v928 = vlog2.pop %v927
      %v929 = vmul.f32 %v928, 0.6931472
      %v930 = vmul.f32 -0.5, %v801
      %v931 = vadd.f32 %v930, 1.0
      %v932 = vmul.f32 %v931, %v801
      %v933 = vand.u32 2147483647, %v801
      %vm934 = vcmp.lt.f32.partialorder %v933, 0.0004427343
      %v935 = vsel %vm934, %v932, %v929
      %v936 = vadd.f32 %v803, 1.0
      %v937 = vlog2.pop %v936
      %v938 = vmul.f32 %v937, 0.6931472
      %v939 = vmul.f32 -0.5, %v803
      %v940 = vadd.f32 %v939, 1.0
      %v941 = vmul.f32 %v940, %v803
      %v942 = vand.u32 2147483647, %v803
      %vm943 = vcmp.lt.f32.partialorder %v942, 0.0004427343
      %v944 = vsel %vm943, %v941, %v938
      %v945 = vadd.f32 %v805, 1.0
      %v946 = vlog2.pop %v945
      %v947 = vmul.f32 %v946, 0.6931472
      %v948 = vmul.f32 -0.5, %v805
      %v949 = vadd.f32 %v948, 1.0
      %v950 = vmul.f32 %v949, %v805
      %v951 = vand.u32 2147483647, %v805
      %vm952 = vcmp.lt.f32.partialorder %v951, 0.0004427343
      %v953 = vsel %vm952, %v950, %v947
      %v954 = vadd.f32 %v807, 1.0
      %v955 = vlog2.pop %v954
      %v956 = vmul.f32 %v955, 0.6931472
      %v957 = vmul.f32 -0.5, %v807
      %v958 = vadd.f32 %v957, 1.0
      %v959 = vmul.f32 %v958, %v807
      %v960 = vand.u32 2147483647, %v807
      %vm961 = vcmp.lt.f32.partialorder %v960, 0.0004427343
      %v962 = vsel %vm961, %v959, %v956
      %v963 = vadd.f32 %v809, 1.0
      %v964 = vlog2.pop %v963
      %v965 = vmul.f32 %v964, 0.6931472
      %v966 = vmul.f32 -0.5, %v809
      %v967 = vadd.f32 %v966, 1.0
      %v968 = vmul.f32 %v967, %v809
      %v969 = vand.u32 2147483647, %v809
      %vm970 = vcmp.lt.f32.partialorder %v969, 0.0004427343
      %v971 = vsel %vm970, %v968, %v965
      %v972 = vadd.f32 %v811, 1.0
      %v973 = vlog2.pop %v972
      %v974 = vmul.f32 %v973, 0.6931472
      %v975 = vmul.f32 -0.5, %v811
      %v976 = vadd.f32 %v975, 1.0
      %v977 = vmul.f32 %v976, %v811
      %v978 = vand.u32 2147483647, %v811
      %vm979 = vcmp.lt.f32.partialorder %v978, 0.0004427343
      %v980 = vsel %vm979, %v977, %v974
      %v981 = vadd.f32 %v813, 1.0
      %v982 = vlog2.pop %v981
      %v983 = vmul.f32 %v982, 0.6931472
      %v984 = vmul.f32 -0.5, %v813
      %v985 = vadd.f32 %v984, 1.0
      %v986 = vmul.f32 %v985, %v813
      %v987 = vand.u32 2147483647, %v813
      %vm988 = vcmp.lt.f32.partialorder %v987, 0.0004427343
      %v989 = vsel %vm988, %v986, %v983
      %v990 = vadd.f32 %v815, 1.0
      %v991 = vlog2.pop %v990
      %v992 = vmul.f32 %v991, 0.6931472
      %v993 = vmul.f32 -0.5, %v815
      %v994 = vadd.f32 %v993, 1.0
      %v995 = vmul.f32 %v994, %v815
      %v996 = vand.u32 2147483647, %v815
      %vm997 = vcmp.lt.f32.partialorder %v996, 0.0004427343
      %v998 = vsel %vm997, %v995, %v992
      %v999 = vadd.f32 %v817, 1.0
      %v1000 = vlog2.pop %v999
      %v1001 = vmul.f32 %v1000, 0.6931472
      %v1002 = vmul.f32 -0.5, %v817
      %v1003 = vadd.f32 %v1002, 1.0
      %v1004 = vmul.f32 %v1003, %v817
      %v1005 = vand.u32 2147483647, %v817
      %vm1006 = vcmp.lt.f32.partialorder %v1005, 0.0004427343
      %v1007 = vsel %vm1006, %v1004, %v1001
      %v1008 = vadd.f32 %v819, 1.0
      %v1009 = vlog2.pop %v1008
      %v1010 = vmul.f32 %v1009, 0.6931472
      %v1011 = vmul.f32 -0.5, %v819
      %v1012 = vadd.f32 %v1011, 1.0
      %v1013 = vmul.f32 %v1012, %v819
      %v1014 = vand.u32 2147483647, %v819
      %vm1015 = vcmp.lt.f32.partialorder %v1014, 0.0004427343
      %v1016 = vsel %vm1015, %v1013, %v1010
      %v1017 = vadd.f32 %v821, 1.0
      %v1018 = vlog2.pop %v1017
      %v1019 = vmul.f32 %v1018, 0.6931472
      %v1020 = vmul.f32 -0.5, %v821
      %v1021 = vadd.f32 %v1020, 1.0
      %v1022 = vmul.f32 %v1021, %v821
      %v1023 = vand.u32 2147483647, %v821
      %vm1024 = vcmp.lt.f32.partialorder %v1023, 0.0004427343
      %v1025 = vsel %vm1024, %v1022, %v1019
      %v1026 = vadd.f32 %v823, 1.0
      %v1027 = vlog2.pop %v1026
      %v1028 = vmul.f32 %v1027, 0.6931472
      %v1029 = vmul.f32 -0.5, %v823
      %v1030 = vadd.f32 %v1029, 1.0
      %v1031 = vmul.f32 %v1030, %v823
      %v1032 = vand.u32 2147483647, %v823
      %vm1033 = vcmp.lt.f32.partialorder %v1032, 0.0004427343
      %v1034 = vsel %vm1033, %v1031, %v1028
      %v1035 = vadd.f32 %v825, 1.0
      %v1036 = vlog2.pop %v1035
      %v1037 = vmul.f32 %v1036, 0.6931472
      %v1038 = vmul.f32 -0.5, %v825
      %v1039 = vadd.f32 %v1038, 1.0
      %v1040 = vmul.f32 %v1039, %v825
      %v1041 = vand.u32 2147483647, %v825
      %vm1042 = vcmp.lt.f32.partialorder %v1041, 0.0004427343
      %v1043 = vsel %vm1042, %v1040, %v1037
      %v1044 = vadd.f32 %v827, 1.0
      %v1045 = vlog2.pop %v1044
      %v1046 = vmul.f32 %v1045, 0.6931472
      %v1047 = vmul.f32 -0.5, %v827
      %v1048 = vadd.f32 %v1047, 1.0
      %v1049 = vmul.f32 %v1048, %v827
      %v1050 = vand.u32 2147483647, %v827
      %vm1051 = vcmp.lt.f32.partialorder %v1050, 0.0004427343
      %v1052 = vsel %vm1051, %v1049, %v1046
      %v1053 = vadd.f32 %v829, 1.0
      %v1054 = vlog2.pop %v1053
      %v1055 = vmul.f32 %v1054, 0.6931472
      %v1056 = vmul.f32 -0.5, %v829
      %v1057 = vadd.f32 %v1056, 1.0
      %v1058 = vmul.f32 %v1057, %v829
      %v1059 = vand.u32 2147483647, %v829
      %vm1060 = vcmp.lt.f32.partialorder %v1059, 0.0004427343
      %v1061 = vsel %vm1060, %v1058, %v1055
      %v1062 = vadd.f32 %v831, 1.0
      %v1063 = vlog2.pop %v1062
      %v1064 = vmul.f32 %v1063, 0.6931472
      %v1065 = vmul.f32 -0.5, %v831
      %v1066 = vadd.f32 %v1065, 1.0
      %v1067 = vmul.f32 %v1066, %v831
      %v1068 = vand.u32 2147483647, %v831
      %vm1069 = vcmp.lt.f32.partialorder %v1068, 0.0004427343
      %v1070 = vsel %vm1069, %v1067, %v1064
      %v1071 = vadd.f32 %v833, 1.0
      %v1072 = vlog2.pop %v1071
      %v1073 = vmul.f32 %v1072, 0.6931472
      %v1074 = vmul.f32 -0.5, %v833
      %v1075 = vadd.f32 %v1074, 1.0
      %v1076 = vmul.f32 %v1075, %v833
      %v1077 = vand.u32 2147483647, %v833
      %vm1078 = vcmp.lt.f32.partialorder %v1077, 0.0004427343
      %v1079 = vsel %vm1078, %v1076, %v1073
      %v1080 = vadd.f32 %v835, 1.0
      %v1081 = vlog2.pop %v1080
      %v1082 = vmul.f32 %v1081, 0.6931472
      %v1083 = vmul.f32 -0.5, %v835
      %v1084 = vadd.f32 %v1083, 1.0
      %v1085 = vmul.f32 %v1084, %v835
      %v1086 = vand.u32 2147483647, %v835
      %vm1087 = vcmp.lt.f32.partialorder %v1086, 0.0004427343
      %v1088 = vsel %vm1087, %v1085, %v1082
      %v1089 = vadd.f32 %v837, 1.0
      %v1090 = vlog2.pop %v1089
      %v1091 = vmul.f32 %v1090, 0.6931472
      %v1092 = vmul.f32 -0.5, %v837
      %v1093 = vadd.f32 %v1092, 1.0
      %v1094 = vmul.f32 %v1093, %v837
      %v1095 = vand.u32 2147483647, %v837
      %vm1096 = vcmp.lt.f32.partialorder %v1095, 0.0004427343
      %v1097 = vsel %vm1096, %v1094, %v1091
      %v1098 = vadd.f32 %v839, 1.0
      %v1099 = vlog2.pop %v1098
      %v1100 = vmul.f32 %v1099, 0.6931472
      %v1101 = vmul.f32 -0.5, %v839
      %v1102 = vadd.f32 %v1101, 1.0
      %v1103 = vmul.f32 %v1102, %v839
      %v1104 = vand.u32 2147483647, %v839
      %vm1105 = vcmp.lt.f32.partialorder %v1104, 0.0004427343
      %v1106 = vsel %vm1105, %v1103, %v1100
      %v1107 = vadd.f32 %v841, 1.0
      %v1108 = vlog2.pop %v1107
      %v1109 = vmul.f32 %v1108, 0.6931472
      %v1110 = vmul.f32 -0.5, %v841
      %v1111 = vadd.f32 %v1110, 1.0
      %v1112 = vmul.f32 %v1111, %v841
      %v1113 = vand.u32 2147483647, %v841
      %vm1114 = vcmp.lt.f32.partialorder %v1113, 0.0004427343
      %v1115 = vsel %vm1114, %v1112, %v1109
      %v1116 = vadd.f32 %v843, 1.0
      %v1117 = vlog2.pop %v1116
      %v1118 = vmul.f32 %v1117, 0.6931472
      %v1119 = vmul.f32 -0.5, %v843
      %v1120 = vadd.f32 %v1119, 1.0
      %v1121 = vmul.f32 %v1120, %v843
      %v1122 = vand.u32 2147483647, %v843
      %vm1123 = vcmp.lt.f32.partialorder %v1122, 0.0004427343
      %v1124 = vsel %vm1123, %v1121, %v1118
      %v1125 = vadd.f32 %v845, 1.0
      %v1126 = vlog2.pop %v1125
      %v1127 = vmul.f32 %v1126, 0.6931472
      %v1128 = vmul.f32 -0.5, %v845
      %v1129 = vadd.f32 %v1128, 1.0
      %v1130 = vmul.f32 %v1129, %v845
      %v1131 = vand.u32 2147483647, %v845
      %vm1132 = vcmp.lt.f32.partialorder %v1131, 0.0004427343
      %v1133 = vsel %vm1132, %v1130, %v1127
      %v1134 = vsub.f32 %v686, %v854
      %v1135 = vsub.f32 %v687, %v863
      %v1136 = vsub.f32 %v688, %v872
      %v1137 = vsub.f32 %v689, %v881
      %v1138 = vsub.f32 %v690, %v890
      %v1139 = vsub.f32 %v691, %v899
      %v1140 = vsub.f32 %v692, %v908
      %v1141 = vsub.f32 %v693, %v917
      %v1142 = vsub.f32 %v694, %v926
      %v1143 = vsub.f32 %v695, %v935
      %v1144 = vsub.f32 %v696, %v944
      %v1145 = vsub.f32 %v697, %v953
      %v1146 = vsub.f32 %v698, %v962
      %v1147 = vsub.f32 %v699, %v971
      %v1148 = vsub.f32 %v700, %v980
      %v1149 = vsub.f32 %v701, %v989
      %v1150 = vsub.f32 %v702, %v998
      %v1151 = vsub.f32 %v703, %v1007
      %v1152 = vsub.f32 %v704, %v1016
      %v1153 = vsub.f32 %v705, %v1025
      %v1154 = vsub.f32 %v706, %v1034
      %v1155 = vsub.f32 %v707, %v1043
      %v1156 = vsub.f32 %v708, %v1052
      %v1157 = vsub.f32 %v709, %v1061
      %v1158 = vsub.f32 %v710, %v1070
      %v1159 = vsub.f32 %v711, %v1079
      %v1160 = vsub.f32 %v712, %v1088
      %v1161 = vsub.f32 %v713, %v1097
      %v1162 = vsub.f32 %v714, %v1106
      %v1163 = vsub.f32 %v715, %v1115
      %v1164 = vsub.f32 %v716, %v1124
      %v1165 = vsub.f32 %v717, %v1133
      %v1199 = vunpack.c.l.s4 269488144
      %v1200 = vunpack.c.0.s8 %v1199
      %v1201 = vlaneseq
      %v1202 = vshrl.u32 %v1201, 7
      %v1203 = vsub.s32 %v1200, %v1202
      %v1204 = vrot.slane %v1134, %v1203
      %v1206 = vunpack.c.l.s4 842150450
      %v1207 = vunpack.c.0.s8 %v1206
      %v1208 = vlaneseq
      %v1209 = vshrl.u32 %v1208, 7
      %v1210 = vsub.s32 %v1207, %v1209
      %v1211 = vrot.slane %v1134, %v1210
      %v1213 = vunpack.c.l.s4 1414812756
      %v1214 = vunpack.c.0.s8 %v1213
      %v1215 = vlaneseq
      %v1216 = vshrl.u32 %v1215, 7
      %v1217 = vsub.s32 %v1214, %v1216
      %v1218 = vrot.slane %v1134, %v1217
      %v1220 = vunpack.c.l.s4 1987475062
      %v1221 = vunpack.c.0.s8 %v1220
      %v1222 = vlaneseq
      %v1223 = vshrl.u32 %v1222, 7
      %v1224 = vsub.s32 %v1221, %v1223
      %v1225 = vrot.slane %v1134, %v1224
      %v1227 = vunpack.c.l.s4 269488144
      %v1228 = vunpack.c.0.s8 %v1227
      %v1229 = vlaneseq
      %v1230 = vshrl.u32 %v1229, 7
      %v1231 = vsub.s32 %v1228, %v1230
      %v1232 = vrot.slane %v1135, %v1231
      %v1234 = vunpack.c.l.s4 842150450
      %v1235 = vunpack.c.0.s8 %v1234
      %v1236 = vlaneseq
      %v1237 = vshrl.u32 %v1236, 7
      %v1238 = vsub.s32 %v1235, %v1237
      %v1239 = vrot.slane %v1135, %v1238
      %v1241 = vunpack.c.l.s4 1414812756
      %v1242 = vunpack.c.0.s8 %v1241
      %v1243 = vlaneseq
      %v1244 = vshrl.u32 %v1243, 7
      %v1245 = vsub.s32 %v1242, %v1244
      %v1246 = vrot.slane %v1135, %v1245
      %v1248 = vunpack.c.l.s4 1987475062
      %v1249 = vunpack.c.0.s8 %v1248
      %v1250 = vlaneseq
      %v1251 = vshrl.u32 %v1250, 7
      %v1252 = vsub.s32 %v1249, %v1251
      %v1253 = vrot.slane %v1135, %v1252
      %v1255 = vunpack.c.l.s4 269488144
      %v1256 = vunpack.c.0.s8 %v1255
      %v1257 = vlaneseq
      %v1258 = vshrl.u32 %v1257, 7
      %v1259 = vsub.s32 %v1256, %v1258
      %v1260 = vrot.slane %v1136, %v1259
      %v1262 = vunpack.c.l.s4 842150450
      %v1263 = vunpack.c.0.s8 %v1262
      %v1264 = vlaneseq
      %v1265 = vshrl.u32 %v1264, 7
      %v1266 = vsub.s32 %v1263, %v1265
      %v1267 = vrot.slane %v1136, %v1266
      %v1269 = vunpack.c.l.s4 1414812756
      %v1270 = vunpack.c.0.s8 %v1269
      %v1271 = vlaneseq
      %v1272 = vshrl.u32 %v1271, 7
      %v1273 = vsub.s32 %v1270, %v1272
      %v1274 = vrot.slane %v1136, %v1273
      %v1276 = vunpack.c.l.s4 1987475062
      %v1277 = vunpack.c.0.s8 %v1276
      %v1278 = vlaneseq
      %v1279 = vshrl.u32 %v1278, 7
      %v1280 = vsub.s32 %v1277, %v1279
      %v1281 = vrot.slane %v1136, %v1280
      %v1283 = vunpack.c.l.s4 269488144
      %v1284 = vunpack.c.0.s8 %v1283
      %v1285 = vlaneseq
      %v1286 = vshrl.u32 %v1285, 7
      %v1287 = vsub.s32 %v1284, %v1286
      %v1288 = vrot.slane %v1137, %v1287
      %v1290 = vunpack.c.l.s4 842150450
      %v1291 = vunpack.c.0.s8 %v1290
      %v1292 = vlaneseq
      %v1293 = vshrl.u32 %v1292, 7
      %v1294 = vsub.s32 %v1291, %v1293
      %v1295 = vrot.slane %v1137, %v1294
      %v1297 = vunpack.c.l.s4 1414812756
      %v1298 = vunpack.c.0.s8 %v1297
      %v1299 = vlaneseq
      %v1300 = vshrl.u32 %v1299, 7
      %v1301 = vsub.s32 %v1298, %v1300
      %v1302 = vrot.slane %v1137, %v1301
      %v1304 = vunpack.c.l.s4 1987475062
      %v1305 = vunpack.c.0.s8 %v1304
      %v1306 = vlaneseq
      %v1307 = vshrl.u32 %v1306, 7
      %v1308 = vsub.s32 %v1305, %v1307
      %v1309 = vrot.slane %v1137, %v1308
      %v1311 = vunpack.c.l.s4 269488144
      %v1312 = vunpack.c.0.s8 %v1311
      %v1313 = vlaneseq
      %v1314 = vshrl.u32 %v1313, 7
      %v1315 = vsub.s32 %v1312, %v1314
      %v1316 = vrot.slane %v1138, %v1315
      %v1318 = vunpack.c.l.s4 842150450
      %v1319 = vunpack.c.0.s8 %v1318
      %v1320 = vlaneseq
      %v1321 = vshrl.u32 %v1320, 7
      %v1322 = vsub.s32 %v1319, %v1321
      %v1323 = vrot.slane %v1138, %v1322
      %v1325 = vunpack.c.l.s4 1414812756
      %v1326 = vunpack.c.0.s8 %v1325
      %v1327 = vlaneseq
      %v1328 = vshrl.u32 %v1327, 7
      %v1329 = vsub.s32 %v1326, %v1328
      %v1330 = vrot.slane %v1138, %v1329
      %v1332 = vunpack.c.l.s4 1987475062
      %v1333 = vunpack.c.0.s8 %v1332
      %v1334 = vlaneseq
      %v1335 = vshrl.u32 %v1334, 7
      %v1336 = vsub.s32 %v1333, %v1335
      %v1337 = vrot.slane %v1138, %v1336
      %v1339 = vunpack.c.l.s4 269488144
      %v1340 = vunpack.c.0.s8 %v1339
      %v1341 = vlaneseq
      %v1342 = vshrl.u32 %v1341, 7
      %v1343 = vsub.s32 %v1340, %v1342
      %v1344 = vrot.slane %v1139, %v1343
      %v1346 = vunpack.c.l.s4 842150450
      %v1347 = vunpack.c.0.s8 %v1346
      %v1348 = vlaneseq
      %v1349 = vshrl.u32 %v1348, 7
      %v1350 = vsub.s32 %v1347, %v1349
      %v1351 = vrot.slane %v1139, %v1350
      %v1353 = vunpack.c.l.s4 1414812756
      %v1354 = vunpack.c.0.s8 %v1353
      %v1355 = vlaneseq
      %v1356 = vshrl.u32 %v1355, 7
      %v1357 = vsub.s32 %v1354, %v1356
      %v1358 = vrot.slane %v1139, %v1357
      %v1360 = vunpack.c.l.s4 1987475062
      %v1361 = vunpack.c.0.s8 %v1360
      %v1362 = vlaneseq
      %v1363 = vshrl.u32 %v1362, 7
      %v1364 = vsub.s32 %v1361, %v1363
      %v1365 = vrot.slane %v1139, %v1364
      %v1367 = vunpack.c.l.s4 269488144
      %v1368 = vunpack.c.0.s8 %v1367
      %v1369 = vlaneseq
      %v1370 = vshrl.u32 %v1369, 7
      %v1371 = vsub.s32 %v1368, %v1370
      %v1372 = vrot.slane %v1140, %v1371
      %v1374 = vunpack.c.l.s4 842150450
      %v1375 = vunpack.c.0.s8 %v1374
      %v1376 = vlaneseq
      %v1377 = vshrl.u32 %v1376, 7
      %v1378 = vsub.s32 %v1375, %v1377
      %v1379 = vrot.slane %v1140, %v1378
      %v1381 = vunpack.c.l.s4 1414812756
      %v1382 = vunpack.c.0.s8 %v1381
      %v1383 = vlaneseq
      %v1384 = vshrl.u32 %v1383, 7
      %v1385 = vsub.s32 %v1382, %v1384
      %v1386 = vrot.slane %v1140, %v1385
      %v1388 = vunpack.c.l.s4 1987475062
      %v1389 = vunpack.c.0.s8 %v1388
      %v1390 = vlaneseq
      %v1391 = vshrl.u32 %v1390, 7
      %v1392 = vsub.s32 %v1389, %v1391
      %v1393 = vrot.slane %v1140, %v1392
      %v1395 = vunpack.c.l.s4 269488144
      %v1396 = vunpack.c.0.s8 %v1395
      %v1397 = vlaneseq
      %v1398 = vshrl.u32 %v1397, 7
      %v1399 = vsub.s32 %v1396, %v1398
      %v1400 = vrot.slane %v1141, %v1399
      %v1402 = vunpack.c.l.s4 842150450
      %v1403 = vunpack.c.0.s8 %v1402
      %v1404 = vlaneseq
      %v1405 = vshrl.u32 %v1404, 7
      %v1406 = vsub.s32 %v1403, %v1405
      %v1407 = vrot.slane %v1141, %v1406
      %v1409 = vunpack.c.l.s4 1414812756
      %v1410 = vunpack.c.0.s8 %v1409
      %v1411 = vlaneseq
      %v1412 = vshrl.u32 %v1411, 7
      %v1413 = vsub.s32 %v1410, %v1412
      %v1414 = vrot.slane %v1141, %v1413
      %v1416 = vunpack.c.l.s4 1987475062
      %v1417 = vunpack.c.0.s8 %v1416
      %v1418 = vlaneseq
      %v1419 = vshrl.u32 %v1418, 7
      %v1420 = vsub.s32 %v1417, %v1419
      %v1421 = vrot.slane %v1141, %v1420
      %v1423 = vunpack.c.l.s4 269488144
      %v1424 = vunpack.c.0.s8 %v1423
      %v1425 = vlaneseq
      %v1426 = vshrl.u32 %v1425, 7
      %v1427 = vsub.s32 %v1424, %v1426
      %v1428 = vrot.slane %v1142, %v1427
      %v1430 = vunpack.c.l.s4 842150450
      %v1431 = vunpack.c.0.s8 %v1430
      %v1432 = vlaneseq
      %v1433 = vshrl.u32 %v1432, 7
      %v1434 = vsub.s32 %v1431, %v1433
      %v1435 = vrot.slane %v1142, %v1434
      %v1437 = vunpack.c.l.s4 1414812756
      %v1438 = vunpack.c.0.s8 %v1437
      %v1439 = vlaneseq
      %v1440 = vshrl.u32 %v1439, 7
      %v1441 = vsub.s32 %v1438, %v1440
      %v1442 = vrot.slane %v1142, %v1441
      %v1444 = vunpack.c.l.s4 1987475062
      %v1445 = vunpack.c.0.s8 %v1444
      %v1446 = vlaneseq
      %v1447 = vshrl.u32 %v1446, 7
      %v1448 = vsub.s32 %v1445, %v1447
      %v1449 = vrot.slane %v1142, %v1448
      %v1451 = vunpack.c.l.s4 269488144
      %v1452 = vunpack.c.0.s8 %v1451
      %v1453 = vlaneseq
      %v1454 = vshrl.u32 %v1453, 7
      %v1455 = vsub.s32 %v1452, %v1454
      %v1456 = vrot.slane %v1143, %v1455
      %v1458 = vunpack.c.l.s4 842150450
      %v1459 = vunpack.c.0.s8 %v1458
      %v1460 = vlaneseq
      %v1461 = vshrl.u32 %v1460, 7
      %v1462 = vsub.s32 %v1459, %v1461
      %v1463 = vrot.slane %v1143, %v1462
      %v1465 = vunpack.c.l.s4 1414812756
      %v1466 = vunpack.c.0.s8 %v1465
      %v1467 = vlaneseq
      %v1468 = vshrl.u32 %v1467, 7
      %v1469 = vsub.s32 %v1466, %v1468
      %v1470 = vrot.slane %v1143, %v1469
      %v1472 = vunpack.c.l.s4 1987475062
      %v1473 = vunpack.c.0.s8 %v1472
      %v1474 = vlaneseq
      %v1475 = vshrl.u32 %v1474, 7
      %v1476 = vsub.s32 %v1473, %v1475
      %v1477 = vrot.slane %v1143, %v1476
      %v1479 = vunpack.c.l.s4 269488144
      %v1480 = vunpack.c.0.s8 %v1479
      %v1481 = vlaneseq
      %v1482 = vshrl.u32 %v1481, 7
      %v1483 = vsub.s32 %v1480, %v1482
      %v1484 = vrot.slane %v1144, %v1483
      %v1486 = vunpack.c.l.s4 842150450
      %v1487 = vunpack.c.0.s8 %v1486
      %v1488 = vlaneseq
      %v1489 = vshrl.u32 %v1488, 7
      %v1490 = vsub.s32 %v1487, %v1489
      %v1491 = vrot.slane %v1144, %v1490
      %v1493 = vunpack.c.l.s4 1414812756
      %v1494 = vunpack.c.0.s8 %v1493
      %v1495 = vlaneseq
      %v1496 = vshrl.u32 %v1495, 7
      %v1497 = vsub.s32 %v1494, %v1496
      %v1498 = vrot.slane %v1144, %v1497
      %v1500 = vunpack.c.l.s4 1987475062
      %v1501 = vunpack.c.0.s8 %v1500
      %v1502 = vlaneseq
      %v1503 = vshrl.u32 %v1502, 7
      %v1504 = vsub.s32 %v1501, %v1503
      %v1505 = vrot.slane %v1144, %v1504
      %v1507 = vunpack.c.l.s4 269488144
      %v1508 = vunpack.c.0.s8 %v1507
      %v1509 = vlaneseq
      %v1510 = vshrl.u32 %v1509, 7
      %v1511 = vsub.s32 %v1508, %v1510
      %v1512 = vrot.slane %v1145, %v1511
      %v1514 = vunpack.c.l.s4 842150450
      %v1515 = vunpack.c.0.s8 %v1514
      %v1516 = vlaneseq
      %v1517 = vshrl.u32 %v1516, 7
      %v1518 = vsub.s32 %v1515, %v1517
      %v1519 = vrot.slane %v1145, %v1518
      %v1521 = vunpack.c.l.s4 1414812756
      %v1522 = vunpack.c.0.s8 %v1521
      %v1523 = vlaneseq
      %v1524 = vshrl.u32 %v1523, 7
      %v1525 = vsub.s32 %v1522, %v1524
      %v1526 = vrot.slane %v1145, %v1525
      %v1528 = vunpack.c.l.s4 1987475062
      %v1529 = vunpack.c.0.s8 %v1528
      %v1530 = vlaneseq
      %v1531 = vshrl.u32 %v1530, 7
      %v1532 = vsub.s32 %v1529, %v1531
      %v1533 = vrot.slane %v1145, %v1532
      %v1535 = vunpack.c.l.s4 269488144
      %v1536 = vunpack.c.0.s8 %v1535
      %v1537 = vlaneseq
      %v1538 = vshrl.u32 %v1537, 7
      %v1539 = vsub.s32 %v1536, %v1538
      %v1540 = vrot.slane %v1146, %v1539
      %v1542 = vunpack.c.l.s4 842150450
      %v1543 = vunpack.c.0.s8 %v1542
      %v1544 = vlaneseq
      %v1545 = vshrl.u32 %v1544, 7
      %v1546 = vsub.s32 %v1543, %v1545
      %v1547 = vrot.slane %v1146, %v1546
      %v1549 = vunpack.c.l.s4 1414812756
      %v1550 = vunpack.c.0.s8 %v1549
      %v1551 = vlaneseq
      %v1552 = vshrl.u32 %v1551, 7
      %v1553 = vsub.s32 %v1550, %v1552
      %v1554 = vrot.slane %v1146, %v1553
      %v1556 = vunpack.c.l.s4 1987475062
      %v1557 = vunpack.c.0.s8 %v1556
      %v1558 = vlaneseq
      %v1559 = vshrl.u32 %v1558, 7
      %v1560 = vsub.s32 %v1557, %v1559
      %v1561 = vrot.slane %v1146, %v1560
      %v1563 = vunpack.c.l.s4 269488144
      %v1564 = vunpack.c.0.s8 %v1563
      %v1565 = vlaneseq
      %v1566 = vshrl.u32 %v1565, 7
      %v1567 = vsub.s32 %v1564, %v1566
      %v1568 = vrot.slane %v1147, %v1567
      %v1570 = vunpack.c.l.s4 842150450
      %v1571 = vunpack.c.0.s8 %v1570
      %v1572 = vlaneseq
      %v1573 = vshrl.u32 %v1572, 7
      %v1574 = vsub.s32 %v1571, %v1573
      %v1575 = vrot.slane %v1147, %v1574
      %v1577 = vunpack.c.l.s4 1414812756
      %v1578 = vunpack.c.0.s8 %v1577
      %v1579 = vlaneseq
      %v1580 = vshrl.u32 %v1579, 7
      %v1581 = vsub.s32 %v1578, %v1580
      %v1582 = vrot.slane %v1147, %v1581
      %v1584 = vunpack.c.l.s4 1987475062
      %v1585 = vunpack.c.0.s8 %v1584
      %v1586 = vlaneseq
      %v1587 = vshrl.u32 %v1586, 7
      %v1588 = vsub.s32 %v1585, %v1587
      %v1589 = vrot.slane %v1147, %v1588
      %v1591 = vunpack.c.l.s4 269488144
      %v1592 = vunpack.c.0.s8 %v1591
      %v1593 = vlaneseq
      %v1594 = vshrl.u32 %v1593, 7
      %v1595 = vsub.s32 %v1592, %v1594
      %v1596 = vrot.slane %v1148, %v1595
      %v1598 = vunpack.c.l.s4 842150450
      %v1599 = vunpack.c.0.s8 %v1598
      %v1600 = vlaneseq
      %v1601 = vshrl.u32 %v1600, 7
      %v1602 = vsub.s32 %v1599, %v1601
      %v1603 = vrot.slane %v1148, %v1602
      %v1605 = vunpack.c.l.s4 1414812756
      %v1606 = vunpack.c.0.s8 %v1605
      %v1607 = vlaneseq
      %v1608 = vshrl.u32 %v1607, 7
      %v1609 = vsub.s32 %v1606, %v1608
      %v1610 = vrot.slane %v1148, %v1609
      %v1612 = vunpack.c.l.s4 1987475062
      %v1613 = vunpack.c.0.s8 %v1612
      %v1614 = vlaneseq
      %v1615 = vshrl.u32 %v1614, 7
      %v1616 = vsub.s32 %v1613, %v1615
      %v1617 = vrot.slane %v1148, %v1616
      %v1619 = vunpack.c.l.s4 269488144
      %v1620 = vunpack.c.0.s8 %v1619
      %v1621 = vlaneseq
      %v1622 = vshrl.u32 %v1621, 7
      %v1623 = vsub.s32 %v1620, %v1622
      %v1624 = vrot.slane %v1149, %v1623
      %v1626 = vunpack.c.l.s4 842150450
      %v1627 = vunpack.c.0.s8 %v1626
      %v1628 = vlaneseq
      %v1629 = vshrl.u32 %v1628, 7
      %v1630 = vsub.s32 %v1627, %v1629
      %v1631 = vrot.slane %v1149, %v1630
      %v1633 = vunpack.c.l.s4 1414812756
      %v1634 = vunpack.c.0.s8 %v1633
      %v1635 = vlaneseq
      %v1636 = vshrl.u32 %v1635, 7
      %v1637 = vsub.s32 %v1634, %v1636
      %v1638 = vrot.slane %v1149, %v1637
      %v1640 = vunpack.c.l.s4 1987475062
      %v1641 = vunpack.c.0.s8 %v1640
      %v1642 = vlaneseq
      %v1643 = vshrl.u32 %v1642, 7
      %v1644 = vsub.s32 %v1641, %v1643
      %v1645 = vrot.slane %v1149, %v1644
      %v1647 = vunpack.c.l.s4 269488144
      %v1648 = vunpack.c.0.s8 %v1647
      %v1649 = vlaneseq
      %v1650 = vshrl.u32 %v1649, 7
      %v1651 = vsub.s32 %v1648, %v1650
      %v1652 = vrot.slane %v1150, %v1651
      %v1654 = vunpack.c.l.s4 842150450
      %v1655 = vunpack.c.0.s8 %v1654
      %v1656 = vlaneseq
      %v1657 = vshrl.u32 %v1656, 7
      %v1658 = vsub.s32 %v1655, %v1657
      %v1659 = vrot.slane %v1150, %v1658
      %v1661 = vunpack.c.l.s4 1414812756
      %v1662 = vunpack.c.0.s8 %v1661
      %v1663 = vlaneseq
      %v1664 = vshrl.u32 %v1663, 7
      %v1665 = vsub.s32 %v1662, %v1664
      %v1666 = vrot.slane %v1150, %v1665
      %v1668 = vunpack.c.l.s4 1987475062
      %v1669 = vunpack.c.0.s8 %v1668
      %v1670 = vlaneseq
      %v1671 = vshrl.u32 %v1670, 7
      %v1672 = vsub.s32 %v1669, %v1671
      %v1673 = vrot.slane %v1150, %v1672
      %v1675 = vunpack.c.l.s4 269488144
      %v1676 = vunpack.c.0.s8 %v1675
      %v1677 = vlaneseq
      %v1678 = vshrl.u32 %v1677, 7
      %v1679 = vsub.s32 %v1676, %v1678
      %v1680 = vrot.slane %v1151, %v1679
      %v1682 = vunpack.c.l.s4 842150450
      %v1683 = vunpack.c.0.s8 %v1682
      %v1684 = vlaneseq
      %v1685 = vshrl.u32 %v1684, 7
      %v1686 = vsub.s32 %v1683, %v1685
      %v1687 = vrot.slane %v1151, %v1686
      %v1689 = vunpack.c.l.s4 1414812756
      %v1690 = vunpack.c.0.s8 %v1689
      %v1691 = vlaneseq
      %v1692 = vshrl.u32 %v1691, 7
      %v1693 = vsub.s32 %v1690, %v1692
      %v1694 = vrot.slane %v1151, %v1693
      %v1696 = vunpack.c.l.s4 1987475062
      %v1697 = vunpack.c.0.s8 %v1696
      %v1698 = vlaneseq
      %v1699 = vshrl.u32 %v1698, 7
      %v1700 = vsub.s32 %v1697, %v1699
      %v1701 = vrot.slane %v1151, %v1700
      %v1703 = vunpack.c.l.s4 269488144
      %v1704 = vunpack.c.0.s8 %v1703
      %v1705 = vlaneseq
      %v1706 = vshrl.u32 %v1705, 7
      %v1707 = vsub.s32 %v1704, %v1706
      %v1708 = vrot.slane %v1152, %v1707
      %v1710 = vunpack.c.l.s4 842150450
      %v1711 = vunpack.c.0.s8 %v1710
      %v1712 = vlaneseq
      %v1713 = vshrl.u32 %v1712, 7
      %v1714 = vsub.s32 %v1711, %v1713
      %v1715 = vrot.slane %v1152, %v1714
      %v1717 = vunpack.c.l.s4 1414812756
      %v1718 = vunpack.c.0.s8 %v1717
      %v1719 = vlaneseq
      %v1720 = vshrl.u32 %v1719, 7
      %v1721 = vsub.s32 %v1718, %v1720
      %v1722 = vrot.slane %v1152, %v1721
      %v1724 = vunpack.c.l.s4 1987475062
      %v1725 = vunpack.c.0.s8 %v1724
      %v1726 = vlaneseq
      %v1727 = vshrl.u32 %v1726, 7
      %v1728 = vsub.s32 %v1725, %v1727
      %v1729 = vrot.slane %v1152, %v1728
      %v1731 = vunpack.c.l.s4 269488144
      %v1732 = vunpack.c.0.s8 %v1731
      %v1733 = vlaneseq
      %v1734 = vshrl.u32 %v1733, 7
      %v1735 = vsub.s32 %v1732, %v1734
      %v1736 = vrot.slane %v1153, %v1735
      %v1738 = vunpack.c.l.s4 842150450
      %v1739 = vunpack.c.0.s8 %v1738
      %v1740 = vlaneseq
      %v1741 = vshrl.u32 %v1740, 7
      %v1742 = vsub.s32 %v1739, %v1741
      %v1743 = vrot.slane %v1153, %v1742
      %v1745 = vunpack.c.l.s4 1414812756
      %v1746 = vunpack.c.0.s8 %v1745
      %v1747 = vlaneseq
      %v1748 = vshrl.u32 %v1747, 7
      %v1749 = vsub.s32 %v1746, %v1748
      %v1750 = vrot.slane %v1153, %v1749
      %v1752 = vunpack.c.l.s4 1987475062
      %v1753 = vunpack.c.0.s8 %v1752
      %v1754 = vlaneseq
      %v1755 = vshrl.u32 %v1754, 7
      %v1756 = vsub.s32 %v1753, %v1755
      %v1757 = vrot.slane %v1153, %v1756
      %v1759 = vunpack.c.l.s4 269488144
      %v1760 = vunpack.c.0.s8 %v1759
      %v1761 = vlaneseq
      %v1762 = vshrl.u32 %v1761, 7
      %v1763 = vsub.s32 %v1760, %v1762
      %v1764 = vrot.slane %v1154, %v1763
      %v1766 = vunpack.c.l.s4 842150450
      %v1767 = vunpack.c.0.s8 %v1766
      %v1768 = vlaneseq
      %v1769 = vshrl.u32 %v1768, 7
      %v1770 = vsub.s32 %v1767, %v1769
      %v1771 = vrot.slane %v1154, %v1770
      %v1773 = vunpack.c.l.s4 1414812756
      %v1774 = vunpack.c.0.s8 %v1773
      %v1775 = vlaneseq
      %v1776 = vshrl.u32 %v1775, 7
      %v1777 = vsub.s32 %v1774, %v1776
      %v1778 = vrot.slane %v1154, %v1777
      %v1780 = vunpack.c.l.s4 1987475062
      %v1781 = vunpack.c.0.s8 %v1780
      %v1782 = vlaneseq
      %v1783 = vshrl.u32 %v1782, 7
      %v1784 = vsub.s32 %v1781, %v1783
      %v1785 = vrot.slane %v1154, %v1784
      %v1787 = vunpack.c.l.s4 269488144
      %v1788 = vunpack.c.0.s8 %v1787
      %v1789 = vlaneseq
      %v1790 = vshrl.u32 %v1789, 7
      %v1791 = vsub.s32 %v1788, %v1790
      %v1792 = vrot.slane %v1155, %v1791
      %v1794 = vunpack.c.l.s4 842150450
      %v1795 = vunpack.c.0.s8 %v1794
      %v1796 = vlaneseq
      %v1797 = vshrl.u32 %v1796, 7
      %v1798 = vsub.s32 %v1795, %v1797
      %v1799 = vrot.slane %v1155, %v1798
      %v1801 = vunpack.c.l.s4 1414812756
      %v1802 = vunpack.c.0.s8 %v1801
      %v1803 = vlaneseq
      %v1804 = vshrl.u32 %v1803, 7
      %v1805 = vsub.s32 %v1802, %v1804
      %v1806 = vrot.slane %v1155, %v1805
      %v1808 = vunpack.c.l.s4 1987475062
      %v1809 = vunpack.c.0.s8 %v1808
      %v1810 = vlaneseq
      %v1811 = vshrl.u32 %v1810, 7
      %v1812 = vsub.s32 %v1809, %v1811
      %v1813 = vrot.slane %v1155, %v1812
      %v1815 = vunpack.c.l.s4 269488144
      %v1816 = vunpack.c.0.s8 %v1815
      %v1817 = vlaneseq
      %v1818 = vshrl.u32 %v1817, 7
      %v1819 = vsub.s32 %v1816, %v1818
      %v1820 = vrot.slane %v1156, %v1819
      %v1822 = vunpack.c.l.s4 842150450
      %v1823 = vunpack.c.0.s8 %v1822
      %v1824 = vlaneseq
      %v1825 = vshrl.u32 %v1824, 7
      %v1826 = vsub.s32 %v1823, %v1825
      %v1827 = vrot.slane %v1156, %v1826
      %v1829 = vunpack.c.l.s4 1414812756
      %v1830 = vunpack.c.0.s8 %v1829
      %v1831 = vlaneseq
      %v1832 = vshrl.u32 %v1831, 7
      %v1833 = vsub.s32 %v1830, %v1832
      %v1834 = vrot.slane %v1156, %v1833
      %v1836 = vunpack.c.l.s4 1987475062
      %v1837 = vunpack.c.0.s8 %v1836
      %v1838 = vlaneseq
      %v1839 = vshrl.u32 %v1838, 7
      %v1840 = vsub.s32 %v1837, %v1839
      %v1841 = vrot.slane %v1156, %v1840
      %v1843 = vunpack.c.l.s4 269488144
      %v1844 = vunpack.c.0.s8 %v1843
      %v1845 = vlaneseq
      %v1846 = vshrl.u32 %v1845, 7
      %v1847 = vsub.s32 %v1844, %v1846
      %v1848 = vrot.slane %v1157, %v1847
      %v1850 = vunpack.c.l.s4 842150450
      %v1851 = vunpack.c.0.s8 %v1850
      %v1852 = vlaneseq
      %v1853 = vshrl.u32 %v1852, 7
      %v1854 = vsub.s32 %v1851, %v1853
      %v1855 = vrot.slane %v1157, %v1854
      %v1857 = vunpack.c.l.s4 1414812756
      %v1858 = vunpack.c.0.s8 %v1857
      %v1859 = vlaneseq
      %v1860 = vshrl.u32 %v1859, 7
      %v1861 = vsub.s32 %v1858, %v1860
      %v1862 = vrot.slane %v1157, %v1861
      %v1864 = vunpack.c.l.s4 1987475062
      %v1865 = vunpack.c.0.s8 %v1864
      %v1866 = vlaneseq
      %v1867 = vshrl.u32 %v1866, 7
      %v1868 = vsub.s32 %v1865, %v1867
      %v1869 = vrot.slane %v1157, %v1868
      %v1871 = vunpack.c.l.s4 269488144
      %v1872 = vunpack.c.0.s8 %v1871
      %v1873 = vlaneseq
      %v1874 = vshrl.u32 %v1873, 7
      %v1875 = vsub.s32 %v1872, %v1874
      %v1876 = vrot.slane %v1158, %v1875
      %v1878 = vunpack.c.l.s4 842150450
      %v1879 = vunpack.c.0.s8 %v1878
      %v1880 = vlaneseq
      %v1881 = vshrl.u32 %v1880, 7
      %v1882 = vsub.s32 %v1879, %v1881
      %v1883 = vrot.slane %v1158, %v1882
      %v1885 = vunpack.c.l.s4 1414812756
      %v1886 = vunpack.c.0.s8 %v1885
      %v1887 = vlaneseq
      %v1888 = vshrl.u32 %v1887, 7
      %v1889 = vsub.s32 %v1886, %v1888
      %v1890 = vrot.slane %v1158, %v1889
      %v1892 = vunpack.c.l.s4 1987475062
      %v1893 = vunpack.c.0.s8 %v1892
      %v1894 = vlaneseq
      %v1895 = vshrl.u32 %v1894, 7
      %v1896 = vsub.s32 %v1893, %v1895
      %v1897 = vrot.slane %v1158, %v1896
      %v1899 = vunpack.c.l.s4 269488144
      %v1900 = vunpack.c.0.s8 %v1899
      %v1901 = vlaneseq
      %v1902 = vshrl.u32 %v1901, 7
      %v1903 = vsub.s32 %v1900, %v1902
      %v1904 = vrot.slane %v1159, %v1903
      %v1906 = vunpack.c.l.s4 842150450
      %v1907 = vunpack.c.0.s8 %v1906
      %v1908 = vlaneseq
      %v1909 = vshrl.u32 %v1908, 7
      %v1910 = vsub.s32 %v1907, %v1909
      %v1911 = vrot.slane %v1159, %v1910
      %v1913 = vunpack.c.l.s4 1414812756
      %v1914 = vunpack.c.0.s8 %v1913
      %v1915 = vlaneseq
      %v1916 = vshrl.u32 %v1915, 7
      %v1917 = vsub.s32 %v1914, %v1916
      %v1918 = vrot.slane %v1159, %v1917
      %v1920 = vunpack.c.l.s4 1987475062
      %v1921 = vunpack.c.0.s8 %v1920
      %v1922 = vlaneseq
      %v1923 = vshrl.u32 %v1922, 7
      %v1924 = vsub.s32 %v1921, %v1923
      %v1925 = vrot.slane %v1159, %v1924
      %v1927 = vunpack.c.l.s4 269488144
      %v1928 = vunpack.c.0.s8 %v1927
      %v1929 = vlaneseq
      %v1930 = vshrl.u32 %v1929, 7
      %v1931 = vsub.s32 %v1928, %v1930
      %v1932 = vrot.slane %v1160, %v1931
      %v1934 = vunpack.c.l.s4 842150450
      %v1935 = vunpack.c.0.s8 %v1934
      %v1936 = vlaneseq
      %v1937 = vshrl.u32 %v1936, 7
      %v1938 = vsub.s32 %v1935, %v1937
      %v1939 = vrot.slane %v1160, %v1938
      %v1941 = vunpack.c.l.s4 1414812756
      %v1942 = vunpack.c.0.s8 %v1941
      %v1943 = vlaneseq
      %v1944 = vshrl.u32 %v1943, 7
      %v1945 = vsub.s32 %v1942, %v1944
      %v1946 = vrot.slane %v1160, %v1945
      %v1948 = vunpack.c.l.s4 1987475062
      %v1949 = vunpack.c.0.s8 %v1948
      %v1950 = vlaneseq
      %v1951 = vshrl.u32 %v1950, 7
      %v1952 = vsub.s32 %v1949, %v1951
      %v1953 = vrot.slane %v1160, %v1952
      %v1955 = vunpack.c.l.s4 269488144
      %v1956 = vunpack.c.0.s8 %v1955
      %v1957 = vlaneseq
      %v1958 = vshrl.u32 %v1957, 7
      %v1959 = vsub.s32 %v1956, %v1958
      %v1960 = vrot.slane %v1161, %v1959
      %v1962 = vunpack.c.l.s4 842150450
      %v1963 = vunpack.c.0.s8 %v1962
      %v1964 = vlaneseq
      %v1965 = vshrl.u32 %v1964, 7
      %v1966 = vsub.s32 %v1963, %v1965
      %v1967 = vrot.slane %v1161, %v1966
      %v1969 = vunpack.c.l.s4 1414812756
      %v1970 = vunpack.c.0.s8 %v1969
      %v1971 = vlaneseq
      %v1972 = vshrl.u32 %v1971, 7
      %v1973 = vsub.s32 %v1970, %v1972
      %v1974 = vrot.slane %v1161, %v1973
      %v1976 = vunpack.c.l.s4 1987475062
      %v1977 = vunpack.c.0.s8 %v1976
      %v1978 = vlaneseq
      %v1979 = vshrl.u32 %v1978, 7
      %v1980 = vsub.s32 %v1977, %v1979
      %v1981 = vrot.slane %v1161, %v1980
      %v1983 = vunpack.c.l.s4 269488144
      %v1984 = vunpack.c.0.s8 %v1983
      %v1985 = vlaneseq
      %v1986 = vshrl.u32 %v1985, 7
      %v1987 = vsub.s32 %v1984, %v1986
      %v1988 = vrot.slane %v1162, %v1987
      %v1990 = vunpack.c.l.s4 842150450
      %v1991 = vunpack.c.0.s8 %v1990
      %v1992 = vlaneseq
      %v1993 = vshrl.u32 %v1992, 7
      %v1994 = vsub.s32 %v1991, %v1993
      %v1995 = vrot.slane %v1162, %v1994
      %v1997 = vunpack.c.l.s4 1414812756
      %v1998 = vunpack.c.0.s8 %v1997
      %v1999 = vlaneseq
      %v2000 = vshrl.u32 %v1999, 7
      %v2001 = vsub.s32 %v1998, %v2000
      %v2002 = vrot.slane %v1162, %v2001
      %v2004 = vunpack.c.l.s4 1987475062
      %v2005 = vunpack.c.0.s8 %v2004
      %v2006 = vlaneseq
      %v2007 = vshrl.u32 %v2006, 7
      %v2008 = vsub.s32 %v2005, %v2007
      %v2009 = vrot.slane %v1162, %v2008
      %v2011 = vunpack.c.l.s4 269488144
      %v2012 = vunpack.c.0.s8 %v2011
      %v2013 = vlaneseq
      %v2014 = vshrl.u32 %v2013, 7
      %v2015 = vsub.s32 %v2012, %v2014
      %v2016 = vrot.slane %v1163, %v2015
      %v2018 = vunpack.c.l.s4 842150450
      %v2019 = vunpack.c.0.s8 %v2018
      %v2020 = vlaneseq
      %v2021 = vshrl.u32 %v2020, 7
      %v2022 = vsub.s32 %v2019, %v2021
      %v2023 = vrot.slane %v1163, %v2022
      %v2025 = vunpack.c.l.s4 1414812756
      %v2026 = vunpack.c.0.s8 %v2025
      %v2027 = vlaneseq
      %v2028 = vshrl.u32 %v2027, 7
      %v2029 = vsub.s32 %v2026, %v2028
      %v2030 = vrot.slane %v1163, %v2029
      %v2032 = vunpack.c.l.s4 1987475062
      %v2033 = vunpack.c.0.s8 %v2032
      %v2034 = vlaneseq
      %v2035 = vshrl.u32 %v2034, 7
      %v2036 = vsub.s32 %v2033, %v2035
      %v2037 = vrot.slane %v1163, %v2036
      %v2039 = vunpack.c.l.s4 269488144
      %v2040 = vunpack.c.0.s8 %v2039
      %v2041 = vlaneseq
      %v2042 = vshrl.u32 %v2041, 7
      %v2043 = vsub.s32 %v2040, %v2042
      %v2044 = vrot.slane %v1164, %v2043
      %v2046 = vunpack.c.l.s4 842150450
      %v2047 = vunpack.c.0.s8 %v2046
      %v2048 = vlaneseq
      %v2049 = vshrl.u32 %v2048, 7
      %v2050 = vsub.s32 %v2047, %v2049
      %v2051 = vrot.slane %v1164, %v2050
      %v2053 = vunpack.c.l.s4 1414812756
      %v2054 = vunpack.c.0.s8 %v2053
      %v2055 = vlaneseq
      %v2056 = vshrl.u32 %v2055, 7
      %v2057 = vsub.s32 %v2054, %v2056
      %v2058 = vrot.slane %v1164, %v2057
      %v2060 = vunpack.c.l.s4 1987475062
      %v2061 = vunpack.c.0.s8 %v2060
      %v2062 = vlaneseq
      %v2063 = vshrl.u32 %v2062, 7
      %v2064 = vsub.s32 %v2061, %v2063
      %v2065 = vrot.slane %v1164, %v2064
      %v2067 = vunpack.c.l.s4 269488144
      %v2068 = vunpack.c.0.s8 %v2067
      %v2069 = vlaneseq
      %v2070 = vshrl.u32 %v2069, 7
      %v2071 = vsub.s32 %v2068, %v2070
      %v2072 = vrot.slane %v1165, %v2071
      %v2074 = vunpack.c.l.s4 842150450
      %v2075 = vunpack.c.0.s8 %v2074
      %v2076 = vlaneseq
      %v2077 = vshrl.u32 %v2076, 7
      %v2078 = vsub.s32 %v2075, %v2077
      %v2079 = vrot.slane %v1165, %v2078
      %v2081 = vunpack.c.l.s4 1414812756
      %v2082 = vunpack.c.0.s8 %v2081
      %v2083 = vlaneseq
      %v2084 = vshrl.u32 %v2083, 7
      %v2085 = vsub.s32 %v2082, %v2084
      %v2086 = vrot.slane %v1165, %v2085
      %v2088 = vunpack.c.l.s4 1987475062
      %v2089 = vunpack.c.0.s8 %v2088
      %v2090 = vlaneseq
      %v2091 = vshrl.u32 %v2090, 7
      %v2092 = vsub.s32 %v2089, %v2091
      %v2093 = vrot.slane %v1165, %v2092
      %v2094 = vcombine.low %v1204, %v1211
      %v2095 = vcombine.low %v1218, %v1225
      %v2097 = vunpack.c.l.s4 1983009808
      %v2098 = vunpack.c.0.s8 %v2097
      %v2099 = vlaneseq
      %v2100 = vshrl.u32 %v2099, 7
      %v2101 = vsub.s32 %v2098, %v2100
      %v2102 = vrot.slane %v2094, %v2101
      %v2104 = vunpack.c.l.s4 1983009808
      %v2105 = vunpack.c.0.s8 %v2104
      %v2106 = vlaneseq
      %v2107 = vshrl.u32 %v2106, 7
      %v2108 = vsub.s32 %v2105, %v2107
      %v2109 = vrot.slane %v2095, %v2108
      %v2110 = vcombine.low %v2102, %v2109
      %v2111 = vcombine.low %v1232, %v1239
      %v2112 = vcombine.low %v1246, %v1253
      %v2114 = vunpack.c.l.s4 1983009808
      %v2115 = vunpack.c.0.s8 %v2114
      %v2116 = vlaneseq
      %v2117 = vshrl.u32 %v2116, 7
      %v2118 = vsub.s32 %v2115, %v2117
      %v2119 = vrot.slane %v2111, %v2118
      %v2121 = vunpack.c.l.s4 1983009808
      %v2122 = vunpack.c.0.s8 %v2121
      %v2123 = vlaneseq
      %v2124 = vshrl.u32 %v2123, 7
      %v2125 = vsub.s32 %v2122, %v2124
      %v2126 = vrot.slane %v2112, %v2125
      %v2127 = vcombine.low %v2119, %v2126
      %v2128 = vcombine.low %v1260, %v1267
      %v2129 = vcombine.low %v1274, %v1281
      %v2131 = vunpack.c.l.s4 1983009808
      %v2132 = vunpack.c.0.s8 %v2131
      %v2133 = vlaneseq
      %v2134 = vshrl.u32 %v2133, 7
      %v2135 = vsub.s32 %v2132, %v2134
      %v2136 = vrot.slane %v2128, %v2135
      %v2138 = vunpack.c.l.s4 1983009808
      %v2139 = vunpack.c.0.s8 %v2138
      %v2140 = vlaneseq
      %v2141 = vshrl.u32 %v2140, 7
      %v2142 = vsub.s32 %v2139, %v2141
      %v2143 = vrot.slane %v2129, %v2142
      %v2144 = vcombine.low %v2136, %v2143
      %v2145 = vcombine.low %v1288, %v1295
      %v2146 = vcombine.low %v1302, %v1309
      %v2148 = vunpack.c.l.s4 1983009808
      %v2149 = vunpack.c.0.s8 %v2148
      %v2150 = vlaneseq
      %v2151 = vshrl.u32 %v2150, 7
      %v2152 = vsub.s32 %v2149, %v2151
      %v2153 = vrot.slane %v2145, %v2152
      %v2155 = vunpack.c.l.s4 1983009808
      %v2156 = vunpack.c.0.s8 %v2155
      %v2157 = vlaneseq
      %v2158 = vshrl.u32 %v2157, 7
      %v2159 = vsub.s32 %v2156, %v2158
      %v2160 = vrot.slane %v2146, %v2159
      %v2161 = vcombine.low %v2153, %v2160
      %v2162 = vcombine.low %v1316, %v1323
      %v2163 = vcombine.low %v1330, %v1337
      %v2165 = vunpack.c.l.s4 1983009808
      %v2166 = vunpack.c.0.s8 %v2165
      %v2167 = vlaneseq
      %v2168 = vshrl.u32 %v2167, 7
      %v2169 = vsub.s32 %v2166, %v2168
      %v2170 = vrot.slane %v2162, %v2169
      %v2172 = vunpack.c.l.s4 1983009808
      %v2173 = vunpack.c.0.s8 %v2172
      %v2174 = vlaneseq
      %v2175 = vshrl.u32 %v2174, 7
      %v2176 = vsub.s32 %v2173, %v2175
      %v2177 = vrot.slane %v2163, %v2176
      %v2178 = vcombine.low %v2170, %v2177
      %v2179 = vcombine.low %v1344, %v1351
      %v2180 = vcombine.low %v1358, %v1365
      %v2182 = vunpack.c.l.s4 1983009808
      %v2183 = vunpack.c.0.s8 %v2182
      %v2184 = vlaneseq
      %v2185 = vshrl.u32 %v2184, 7
      %v2186 = vsub.s32 %v2183, %v2185
      %v2187 = vrot.slane %v2179, %v2186
      %v2189 = vunpack.c.l.s4 1983009808
      %v2190 = vunpack.c.0.s8 %v2189
      %v2191 = vlaneseq
      %v2192 = vshrl.u32 %v2191, 7
      %v2193 = vsub.s32 %v2190, %v2192
      %v2194 = vrot.slane %v2180, %v2193
      %v2195 = vcombine.low %v2187, %v2194
      %v2196 = vcombine.low %v1372, %v1379
      %v2197 = vcombine.low %v1386, %v1393
      %v2199 = vunpack.c.l.s4 1983009808
      %v2200 = vunpack.c.0.s8 %v2199
      %v2201 = vlaneseq
      %v2202 = vshrl.u32 %v2201, 7
      %v2203 = vsub.s32 %v2200, %v2202
      %v2204 = vrot.slane %v2196, %v2203
      %v2206 = vunpack.c.l.s4 1983009808
      %v2207 = vunpack.c.0.s8 %v2206
      %v2208 = vlaneseq
      %v2209 = vshrl.u32 %v2208, 7
      %v2210 = vsub.s32 %v2207, %v2209
      %v2211 = vrot.slane %v2197, %v2210
      %v2212 = vcombine.low %v2204, %v2211
      %v2213 = vcombine.low %v1400, %v1407
      %v2214 = vcombine.low %v1414, %v1421
      %v2216 = vunpack.c.l.s4 1983009808
      %v2217 = vunpack.c.0.s8 %v2216
      %v2218 = vlaneseq
      %v2219 = vshrl.u32 %v2218, 7
      %v2220 = vsub.s32 %v2217, %v2219
      %v2221 = vrot.slane %v2213, %v2220
      %v2223 = vunpack.c.l.s4 1983009808
      %v2224 = vunpack.c.0.s8 %v2223
      %v2225 = vlaneseq
      %v2226 = vshrl.u32 %v2225, 7
      %v2227 = vsub.s32 %v2224, %v2226
      %v2228 = vrot.slane %v2214, %v2227
      %v2229 = vcombine.low %v2221, %v2228
      %v2230 = vcombine.low %v1428, %v1435
      %v2231 = vcombine.low %v1442, %v1449
      %v2233 = vunpack.c.l.s4 1983009808
      %v2234 = vunpack.c.0.s8 %v2233
      %v2235 = vlaneseq
      %v2236 = vshrl.u32 %v2235, 7
      %v2237 = vsub.s32 %v2234, %v2236
      %v2238 = vrot.slane %v2230, %v2237
      %v2240 = vunpack.c.l.s4 1983009808
      %v2241 = vunpack.c.0.s8 %v2240
      %v2242 = vlaneseq
      %v2243 = vshrl.u32 %v2242, 7
      %v2244 = vsub.s32 %v2241, %v2243
      %v2245 = vrot.slane %v2231, %v2244
      %v2246 = vcombine.low %v2238, %v2245
      %v2247 = vcombine.low %v1456, %v1463
      %v2248 = vcombine.low %v1470, %v1477
      %v2250 = vunpack.c.l.s4 1983009808
      %v2251 = vunpack.c.0.s8 %v2250
      %v2252 = vlaneseq
      %v2253 = vshrl.u32 %v2252, 7
      %v2254 = vsub.s32 %v2251, %v2253
      %v2255 = vrot.slane %v2247, %v2254
      %v2257 = vunpack.c.l.s4 1983009808
      %v2258 = vunpack.c.0.s8 %v2257
      %v2259 = vlaneseq
      %v2260 = vshrl.u32 %v2259, 7
      %v2261 = vsub.s32 %v2258, %v2260
      %v2262 = vrot.slane %v2248, %v2261
      %v2263 = vcombine.low %v2255, %v2262
      %v2264 = vcombine.low %v1484, %v1491
      %v2265 = vcombine.low %v1498, %v1505
      %v2267 = vunpack.c.l.s4 1983009808
      %v2268 = vunpack.c.0.s8 %v2267
      %v2269 = vlaneseq
      %v2270 = vshrl.u32 %v2269, 7
      %v2271 = vsub.s32 %v2268, %v2270
      %v2272 = vrot.slane %v2264, %v2271
      %v2274 = vunpack.c.l.s4 1983009808
      %v2275 = vunpack.c.0.s8 %v2274
      %v2276 = vlaneseq
      %v2277 = vshrl.u32 %v2276, 7
      %v2278 = vsub.s32 %v2275, %v2277
      %v2279 = vrot.slane %v2265, %v2278
      %v2280 = vcombine.low %v2272, %v2279
      %v2281 = vcombine.low %v1512, %v1519
      %v2282 = vcombine.low %v1526, %v1533
      %v2284 = vunpack.c.l.s4 1983009808
      %v2285 = vunpack.c.0.s8 %v2284
      %v2286 = vlaneseq
      %v2287 = vshrl.u32 %v2286, 7
      %v2288 = vsub.s32 %v2285, %v2287
      %v2289 = vrot.slane %v2281, %v2288
      %v2291 = vunpack.c.l.s4 1983009808
      %v2292 = vunpack.c.0.s8 %v2291
      %v2293 = vlaneseq
      %v2294 = vshrl.u32 %v2293, 7
      %v2295 = vsub.s32 %v2292, %v2294
      %v2296 = vrot.slane %v2282, %v2295
      %v2297 = vcombine.low %v2289, %v2296
      %v2298 = vcombine.low %v1540, %v1547
      %v2299 = vcombine.low %v1554, %v1561
      %v2301 = vunpack.c.l.s4 1983009808
      %v2302 = vunpack.c.0.s8 %v2301
      %v2303 = vlaneseq
      %v2304 = vshrl.u32 %v2303, 7
      %v2305 = vsub.s32 %v2302, %v2304
      %v2306 = vrot.slane %v2298, %v2305
      %v2308 = vunpack.c.l.s4 1983009808
      %v2309 = vunpack.c.0.s8 %v2308
      %v2310 = vlaneseq
      %v2311 = vshrl.u32 %v2310, 7
      %v2312 = vsub.s32 %v2309, %v2311
      %v2313 = vrot.slane %v2299, %v2312
      %v2314 = vcombine.low %v2306, %v2313
      %v2315 = vcombine.low %v1568, %v1575
      %v2316 = vcombine.low %v1582, %v1589
      %v2318 = vunpack.c.l.s4 1983009808
      %v2319 = vunpack.c.0.s8 %v2318
      %v2320 = vlaneseq
      %v2321 = vshrl.u32 %v2320, 7
      %v2322 = vsub.s32 %v2319, %v2321
      %v2323 = vrot.slane %v2315, %v2322
      %v2325 = vunpack.c.l.s4 1983009808
      %v2326 = vunpack.c.0.s8 %v2325
      %v2327 = vlaneseq
      %v2328 = vshrl.u32 %v2327, 7
      %v2329 = vsub.s32 %v2326, %v2328
      %v2330 = vrot.slane %v2316, %v2329
      %v2331 = vcombine.low %v2323, %v2330
      %v2332 = vcombine.low %v1596, %v1603
      %v2333 = vcombine.low %v1610, %v1617
      %v2335 = vunpack.c.l.s4 1983009808
      %v2336 = vunpack.c.0.s8 %v2335
      %v2337 = vlaneseq
      %v2338 = vshrl.u32 %v2337, 7
      %v2339 = vsub.s32 %v2336, %v2338
      %v2340 = vrot.slane %v2332, %v2339
      %v2342 = vunpack.c.l.s4 1983009808
      %v2343 = vunpack.c.0.s8 %v2342
      %v2344 = vlaneseq
      %v2345 = vshrl.u32 %v2344, 7
      %v2346 = vsub.s32 %v2343, %v2345
      %v2347 = vrot.slane %v2333, %v2346
      %v2348 = vcombine.low %v2340, %v2347
      %v2349 = vcombine.low %v1624, %v1631
      %v2350 = vcombine.low %v1638, %v1645
      %v2352 = vunpack.c.l.s4 1983009808
      %v2353 = vunpack.c.0.s8 %v2352
      %v2354 = vlaneseq
      %v2355 = vshrl.u32 %v2354, 7
      %v2356 = vsub.s32 %v2353, %v2355
      %v2357 = vrot.slane %v2349, %v2356
      %v2359 = vunpack.c.l.s4 1983009808
      %v2360 = vunpack.c.0.s8 %v2359
      %v2361 = vlaneseq
      %v2362 = vshrl.u32 %v2361, 7
      %v2363 = vsub.s32 %v2360, %v2362
      %v2364 = vrot.slane %v2350, %v2363
      %v2365 = vcombine.low %v2357, %v2364
      %v2366 = vcombine.low %v1652, %v1659
      %v2367 = vcombine.low %v1666, %v1673
      %v2369 = vunpack.c.l.s4 1983009808
      %v2370 = vunpack.c.0.s8 %v2369
      %v2371 = vlaneseq
      %v2372 = vshrl.u32 %v2371, 7
      %v2373 = vsub.s32 %v2370, %v2372
      %v2374 = vrot.slane %v2366, %v2373
      %v2376 = vunpack.c.l.s4 1983009808
      %v2377 = vunpack.c.0.s8 %v2376
      %v2378 = vlaneseq
      %v2379 = vshrl.u32 %v2378, 7
      %v2380 = vsub.s32 %v2377, %v2379
      %v2381 = vrot.slane %v2367, %v2380
      %v2382 = vcombine.low %v2374, %v2381
      %v2383 = vcombine.low %v1680, %v1687
      %v2384 = vcombine.low %v1694, %v1701
      %v2386 = vunpack.c.l.s4 1983009808
      %v2387 = vunpack.c.0.s8 %v2386
      %v2388 = vlaneseq
      %v2389 = vshrl.u32 %v2388, 7
      %v2390 = vsub.s32 %v2387, %v2389
      %v2391 = vrot.slane %v2383, %v2390
      %v2393 = vunpack.c.l.s4 1983009808
      %v2394 = vunpack.c.0.s8 %v2393
      %v2395 = vlaneseq
      %v2396 = vshrl.u32 %v2395, 7
      %v2397 = vsub.s32 %v2394, %v2396
      %v2398 = vrot.slane %v2384, %v2397
      %v2399 = vcombine.low %v2391, %v2398
      %v2400 = vcombine.low %v1708, %v1715
      %v2401 = vcombine.low %v1722, %v1729
      %v2403 = vunpack.c.l.s4 1983009808
      %v2404 = vunpack.c.0.s8 %v2403
      %v2405 = vlaneseq
      %v2406 = vshrl.u32 %v2405, 7
      %v2407 = vsub.s32 %v2404, %v2406
      %v2408 = vrot.slane %v2400, %v2407
      %v2410 = vunpack.c.l.s4 1983009808
      %v2411 = vunpack.c.0.s8 %v2410
      %v2412 = vlaneseq
      %v2413 = vshrl.u32 %v2412, 7
      %v2414 = vsub.s32 %v2411, %v2413
      %v2415 = vrot.slane %v2401, %v2414
      %v2416 = vcombine.low %v2408, %v2415
      %v2417 = vcombine.low %v1736, %v1743
      %v2418 = vcombine.low %v1750, %v1757
      %v2420 = vunpack.c.l.s4 1983009808
      %v2421 = vunpack.c.0.s8 %v2420
      %v2422 = vlaneseq
      %v2423 = vshrl.u32 %v2422, 7
      %v2424 = vsub.s32 %v2421, %v2423
      %v2425 = vrot.slane %v2417, %v2424
      %v2427 = vunpack.c.l.s4 1983009808
      %v2428 = vunpack.c.0.s8 %v2427
      %v2429 = vlaneseq
      %v2430 = vshrl.u32 %v2429, 7
      %v2431 = vsub.s32 %v2428, %v2430
      %v2432 = vrot.slane %v2418, %v2431
      %v2433 = vcombine.low %v2425, %v2432
      %v2434 = vcombine.low %v1764, %v1771
      %v2435 = vcombine.low %v1778, %v1785
      %v2437 = vunpack.c.l.s4 1983009808
      %v2438 = vunpack.c.0.s8 %v2437
      %v2439 = vlaneseq
      %v2440 = vshrl.u32 %v2439, 7
      %v2441 = vsub.s32 %v2438, %v2440
      %v2442 = vrot.slane %v2434, %v2441
      %v2444 = vunpack.c.l.s4 1983009808
      %v2445 = vunpack.c.0.s8 %v2444
      %v2446 = vlaneseq
      %v2447 = vshrl.u32 %v2446, 7
      %v2448 = vsub.s32 %v2445, %v2447
      %v2449 = vrot.slane %v2435, %v2448
      %v2450 = vcombine.low %v2442, %v2449
      %v2451 = vcombine.low %v1792, %v1799
      %v2452 = vcombine.low %v1806, %v1813
      %v2454 = vunpack.c.l.s4 1983009808
      %v2455 = vunpack.c.0.s8 %v2454
      %v2456 = vlaneseq
      %v2457 = vshrl.u32 %v2456, 7
      %v2458 = vsub.s32 %v2455, %v2457
      %v2459 = vrot.slane %v2451, %v2458
      %v2461 = vunpack.c.l.s4 1983009808
      %v2462 = vunpack.c.0.s8 %v2461
      %v2463 = vlaneseq
      %v2464 = vshrl.u32 %v2463, 7
      %v2465 = vsub.s32 %v2462, %v2464
      %v2466 = vrot.slane %v2452, %v2465
      %v2467 = vcombine.low %v2459, %v2466
      %v2468 = vcombine.low %v1820, %v1827
      %v2469 = vcombine.low %v1834, %v1841
      %v2471 = vunpack.c.l.s4 1983009808
      %v2472 = vunpack.c.0.s8 %v2471
      %v2473 = vlaneseq
      %v2474 = vshrl.u32 %v2473, 7
      %v2475 = vsub.s32 %v2472, %v2474
      %v2476 = vrot.slane %v2468, %v2475
      %v2478 = vunpack.c.l.s4 1983009808
      %v2479 = vunpack.c.0.s8 %v2478
      %v2480 = vlaneseq
      %v2481 = vshrl.u32 %v2480, 7
      %v2482 = vsub.s32 %v2479, %v2481
      %v2483 = vrot.slane %v2469, %v2482
      %v2484 = vcombine.low %v2476, %v2483
      %v2485 = vcombine.low %v1848, %v1855
      %v2486 = vcombine.low %v1862, %v1869
      %v2488 = vunpack.c.l.s4 1983009808
      %v2489 = vunpack.c.0.s8 %v2488
      %v2490 = vlaneseq
      %v2491 = vshrl.u32 %v2490, 7
      %v2492 = vsub.s32 %v2489, %v2491
      %v2493 = vrot.slane %v2485, %v2492
      %v2495 = vunpack.c.l.s4 1983009808
      %v2496 = vunpack.c.0.s8 %v2495
      %v2497 = vlaneseq
      %v2498 = vshrl.u32 %v2497, 7
      %v2499 = vsub.s32 %v2496, %v2498
      %v2500 = vrot.slane %v2486, %v2499
      %v2501 = vcombine.low %v2493, %v2500
      %v2502 = vcombine.low %v1876, %v1883
      %v2503 = vcombine.low %v1890, %v1897
      %v2505 = vunpack.c.l.s4 1983009808
      %v2506 = vunpack.c.0.s8 %v2505
      %v2507 = vlaneseq
      %v2508 = vshrl.u32 %v2507, 7
      %v2509 = vsub.s32 %v2506, %v2508
      %v2510 = vrot.slane %v2502, %v2509
      %v2512 = vunpack.c.l.s4 1983009808
      %v2513 = vunpack.c.0.s8 %v2512
      %v2514 = vlaneseq
      %v2515 = vshrl.u32 %v2514, 7
      %v2516 = vsub.s32 %v2513, %v2515
      %v2517 = vrot.slane %v2503, %v2516
      %v2518 = vcombine.low %v2510, %v2517
      %v2519 = vcombine.low %v1904, %v1911
      %v2520 = vcombine.low %v1918, %v1925
      %v2522 = vunpack.c.l.s4 1983009808
      %v2523 = vunpack.c.0.s8 %v2522
      %v2524 = vlaneseq
      %v2525 = vshrl.u32 %v2524, 7
      %v2526 = vsub.s32 %v2523, %v2525
      %v2527 = vrot.slane %v2519, %v2526
      %v2529 = vunpack.c.l.s4 1983009808
      %v2530 = vunpack.c.0.s8 %v2529
      %v2531 = vlaneseq
      %v2532 = vshrl.u32 %v2531, 7
      %v2533 = vsub.s32 %v2530, %v2532
      %v2534 = vrot.slane %v2520, %v2533
      %v2535 = vcombine.low %v2527, %v2534
      %v2536 = vcombine.low %v1932, %v1939
      %v2537 = vcombine.low %v1946, %v1953
      %v2539 = vunpack.c.l.s4 1983009808
      %v2540 = vunpack.c.0.s8 %v2539
      %v2541 = vlaneseq
      %v2542 = vshrl.u32 %v2541, 7
      %v2543 = vsub.s32 %v2540, %v2542
      %v2544 = vrot.slane %v2536, %v2543
      %v2546 = vunpack.c.l.s4 1983009808
      %v2547 = vunpack.c.0.s8 %v2546
      %v2548 = vlaneseq
      %v2549 = vshrl.u32 %v2548, 7
      %v2550 = vsub.s32 %v2547, %v2549
      %v2551 = vrot.slane %v2537, %v2550
      %v2552 = vcombine.low %v2544, %v2551
      %v2553 = vcombine.low %v1960, %v1967
      %v2554 = vcombine.low %v1974, %v1981
      %v2556 = vunpack.c.l.s4 1983009808
      %v2557 = vunpack.c.0.s8 %v2556
      %v2558 = vlaneseq
      %v2559 = vshrl.u32 %v2558, 7
      %v2560 = vsub.s32 %v2557, %v2559
      %v2561 = vrot.slane %v2553, %v2560
      %v2563 = vunpack.c.l.s4 1983009808
      %v2564 = vunpack.c.0.s8 %v2563
      %v2565 = vlaneseq
      %v2566 = vshrl.u32 %v2565, 7
      %v2567 = vsub.s32 %v2564, %v2566
      %v2568 = vrot.slane %v2554, %v2567
      %v2569 = vcombine.low %v2561, %v2568
      %v2570 = vcombine.low %v1988, %v1995
      %v2571 = vcombine.low %v2002, %v2009
      %v2573 = vunpack.c.l.s4 1983009808
      %v2574 = vunpack.c.0.s8 %v2573
      %v2575 = vlaneseq
      %v2576 = vshrl.u32 %v2575, 7
      %v2577 = vsub.s32 %v2574, %v2576
      %v2578 = vrot.slane %v2570, %v2577
      %v2580 = vunpack.c.l.s4 1983009808
      %v2581 = vunpack.c.0.s8 %v2580
      %v2582 = vlaneseq
      %v2583 = vshrl.u32 %v2582, 7
      %v2584 = vsub.s32 %v2581, %v2583
      %v2585 = vrot.slane %v2571, %v2584
      %v2586 = vcombine.low %v2578, %v2585
      %v2587 = vcombine.low %v2016, %v2023
      %v2588 = vcombine.low %v2030, %v2037
      %v2590 = vunpack.c.l.s4 1983009808
      %v2591 = vunpack.c.0.s8 %v2590
      %v2592 = vlaneseq
      %v2593 = vshrl.u32 %v2592, 7
      %v2594 = vsub.s32 %v2591, %v2593
      %v2595 = vrot.slane %v2587, %v2594
      %v2597 = vunpack.c.l.s4 1983009808
      %v2598 = vunpack.c.0.s8 %v2597
      %v2599 = vlaneseq
      %v2600 = vshrl.u32 %v2599, 7
      %v2601 = vsub.s32 %v2598, %v2600
      %v2602 = vrot.slane %v2588, %v2601
      %v2603 = vcombine.low %v2595, %v2602
      %v2604 = vcombine.low %v2044, %v2051
      %v2605 = vcombine.low %v2058, %v2065
      %v2607 = vunpack.c.l.s4 1983009808
      %v2608 = vunpack.c.0.s8 %v2607
      %v2609 = vlaneseq
      %v2610 = vshrl.u32 %v2609, 7
      %v2611 = vsub.s32 %v2608, %v2610
      %v2612 = vrot.slane %v2604, %v2611
      %v2614 = vunpack.c.l.s4 1983009808
      %v2615 = vunpack.c.0.s8 %v2614
      %v2616 = vlaneseq
      %v2617 = vshrl.u32 %v2616, 7
      %v2618 = vsub.s32 %v2615, %v2617
      %v2619 = vrot.slane %v2605, %v2618
      %v2620 = vcombine.low %v2612, %v2619
      %v2621 = vcombine.low %v2072, %v2079
      %v2622 = vcombine.low %v2086, %v2093
      %v2624 = vunpack.c.l.s4 1983009808
      %v2625 = vunpack.c.0.s8 %v2624
      %v2626 = vlaneseq
      %v2627 = vshrl.u32 %v2626, 7
      %v2628 = vsub.s32 %v2625, %v2627
      %v2629 = vrot.slane %v2621, %v2628
      %v2631 = vunpack.c.l.s4 1983009808
      %v2632 = vunpack.c.0.s8 %v2631
      %v2633 = vlaneseq
      %v2634 = vshrl.u32 %v2633, 7
      %v2635 = vsub.s32 %v2632, %v2634
      %v2636 = vrot.slane %v2622, %v2635
      %v2637 = vcombine.low %v2629, %v2636
      %2638 = vset.pattern.permute.xlu0 0
      %2639 = vperm.xlu0 %2638, %v2110
      %v2640 = vpop.permute.xlu0 %2639
      %2641 = vset.pattern.permute.xlu0 0
      %2642 = vperm.xlu0 %2641, %v2127
      %v2643 = vpop.permute.xlu0 %2642
      %2644 = vset.pattern.permute.xlu0 0
      %2645 = vperm.xlu0 %2644, %v2144
      %v2646 = vpop.permute.xlu0 %2645
      %2647 = vset.pattern.permute.xlu0 0
      %2648 = vperm.xlu0 %2647, %v2161
      %v2649 = vpop.permute.xlu0 %2648
      %2650 = vset.pattern.permute.xlu0 0
      %2651 = vperm.xlu0 %2650, %v2178
      %v2652 = vpop.permute.xlu0 %2651
      %2653 = vset.pattern.permute.xlu0 0
      %2654 = vperm.xlu0 %2653, %v2195
      %v2655 = vpop.permute.xlu0 %2654
      %2656 = vset.pattern.permute.xlu0 0
      %2657 = vperm.xlu0 %2656, %v2212
      %v2658 = vpop.permute.xlu0 %2657
      %2659 = vset.pattern.permute.xlu0 0
      %2660 = vperm.xlu0 %2659, %v2229
      %v2661 = vpop.permute.xlu0 %2660
      %2662 = vset.pattern.permute.xlu0 0
      %2663 = vperm.xlu0 %2662, %v2246
      %v2664 = vpop.permute.xlu0 %2663
      %2665 = vset.pattern.permute.xlu0 0
      %2666 = vperm.xlu0 %2665, %v2263
      %v2667 = vpop.permute.xlu0 %2666
      %2668 = vset.pattern.permute.xlu0 0
      %2669 = vperm.xlu0 %2668, %v2280
      %v2670 = vpop.permute.xlu0 %2669
      %2671 = vset.pattern.permute.xlu0 0
      %2672 = vperm.xlu0 %2671, %v2297
      %v2673 = vpop.permute.xlu0 %2672
      %2674 = vset.pattern.permute.xlu0 0
      %2675 = vperm.xlu0 %2674, %v2314
      %v2676 = vpop.permute.xlu0 %2675
      %2677 = vset.pattern.permute.xlu0 0
      %2678 = vperm.xlu0 %2677, %v2331
      %v2679 = vpop.permute.xlu0 %2678
      %2680 = vset.pattern.permute.xlu0 0
      %2681 = vperm.xlu0 %2680, %v2348
      %v2682 = vpop.permute.xlu0 %2681
      %2683 = vset.pattern.permute.xlu0 0
      %2684 = vperm.xlu0 %2683, %v2365
      %v2685 = vpop.permute.xlu0 %2684
      %2686 = vset.pattern.permute.xlu0 0
      %2687 = vperm.xlu0 %2686, %v2382
      %v2688 = vpop.permute.xlu0 %2687
      %2689 = vset.pattern.permute.xlu0 0
      %2690 = vperm.xlu0 %2689, %v2399
      %v2691 = vpop.permute.xlu0 %2690
      %2692 = vset.pattern.permute.xlu0 0
      %2693 = vperm.xlu0 %2692, %v2416
      %v2694 = vpop.permute.xlu0 %2693
      %2695 = vset.pattern.permute.xlu0 0
      %2696 = vperm.xlu0 %2695, %v2433
      %v2697 = vpop.permute.xlu0 %2696
      %2698 = vset.pattern.permute.xlu0 0
      %2699 = vperm.xlu0 %2698, %v2450
      %v2700 = vpop.permute.xlu0 %2699
      %2701 = vset.pattern.permute.xlu0 0
      %2702 = vperm.xlu0 %2701, %v2467
      %v2703 = vpop.permute.xlu0 %2702
      %2704 = vset.pattern.permute.xlu0 0
      %2705 = vperm.xlu0 %2704, %v2484
      %v2706 = vpop.permute.xlu0 %2705
      %2707 = vset.pattern.permute.xlu0 0
      %2708 = vperm.xlu0 %2707, %v2501
      %v2709 = vpop.permute.xlu0 %2708
      %2710 = vset.pattern.permute.xlu0 0
      %2711 = vperm.xlu0 %2710, %v2518
      %v2712 = vpop.permute.xlu0 %2711
      %2713 = vset.pattern.permute.xlu0 0
      %2714 = vperm.xlu0 %2713, %v2535
      %v2715 = vpop.permute.xlu0 %2714
      %2716 = vset.pattern.permute.xlu0 0
      %2717 = vperm.xlu0 %2716, %v2552
      %v2718 = vpop.permute.xlu0 %2717
      %2719 = vset.pattern.permute.xlu0 0
      %2720 = vperm.xlu0 %2719, %v2569
      %v2721 = vpop.permute.xlu0 %2720
      %2722 = vset.pattern.permute.xlu0 0
      %2723 = vperm.xlu0 %2722, %v2586
      %v2724 = vpop.permute.xlu0 %2723
      %2725 = vset.pattern.permute.xlu0 0
      %2726 = vperm.xlu0 %2725, %v2603
      %v2727 = vpop.permute.xlu0 %2726
      %2728 = vset.pattern.permute.xlu0 0
      %2729 = vperm.xlu0 %2728, %v2620
      %v2730 = vpop.permute.xlu0 %2729
      %2731 = vset.pattern.permute.xlu0 0
      %2732 = vperm.xlu0 %2731, %v2637
      %v2733 = vpop.permute.xlu0 %2732
      %v2734 = vlaneseq
      %v2735 = vand.u32 %v2734, 127
      %v2736 = vlaneseq
      %v2737 = vshrl.u32 %v2736, 7
      %v2738 = vsub.s32 %v2735, %v2737
      %v2739 = vrot.slane %v2640, %v2738
      %v2740 = vadd.s32 %v2735, 4294967288
      %v2741 = vlaneseq
      %v2742 = vshrl.u32 %v2741, 7
      %v2743 = vsub.s32 %v2740, %v2742
      %v2744 = vrot.slane %v2643, %v2743
      %vm2745 = vcmask 130112
      %v2746 = vsel %vm2745, %v2744, %v2739
      %v2747 = vadd.s32 %v2735, 4294967280
      %v2748 = vlaneseq
      %v2749 = vshrl.u32 %v2748, 7
      %v2750 = vsub.s32 %v2747, %v2749
      %v2751 = vrot.slane %v2646, %v2750
      %vm2752 = vcmask 195712
      %v2753 = vsel %vm2752, %v2751, %v2746
      %v2754 = vadd.s32 %v2735, 4294967272
      %v2755 = vlaneseq
      %v2756 = vshrl.u32 %v2755, 7
      %v2757 = vsub.s32 %v2754, %v2756
      %v2758 = vrot.slane %v2649, %v2757
      %vm2759 = vcmask 261312
      %v2760 = vsel %vm2759, %v2758, %v2753
      %v2761 = vadd.s32 %v2735, 4294967264
      %v2762 = vlaneseq
      %v2763 = vshrl.u32 %v2762, 7
      %v2764 = vsub.s32 %v2761, %v2763
      %v2765 = vrot.slane %v2652, %v2764
      %vm2766 = vcmask 326912
      %v2767 = vsel %vm2766, %v2765, %v2760
      %v2768 = vadd.s32 %v2735, 4294967256
      %v2769 = vlaneseq
      %v2770 = vshrl.u32 %v2769, 7
      %v2771 = vsub.s32 %v2768, %v2770
      %v2772 = vrot.slane %v2655, %v2771
      %vm2773 = vcmask 392512
      %v2774 = vsel %vm2773, %v2772, %v2767
      %v2775 = vadd.s32 %v2735, 4294967248
      %v2776 = vlaneseq
      %v2777 = vshrl.u32 %v2776, 7
      %v2778 = vsub.s32 %v2775, %v2777
      %v2779 = vrot.slane %v2658, %v2778
      %vm2780 = vcmask 458112
      %v2781 = vsel %vm2780, %v2779, %v2774
      %v2782 = vadd.s32 %v2735, 4294967240
      %v2783 = vlaneseq
      %v2784 = vshrl.u32 %v2783, 7
      %v2785 = vsub.s32 %v2782, %v2784
      %v2786 = vrot.slane %v2661, %v2785
      %vm2787 = vcmask 523712
      %v2788 = vsel %vm2787, %v2786, %v2781
      %v2789 = vadd.s32 %v2735, 4294967232
      %v2790 = vlaneseq
      %v2791 = vshrl.u32 %v2790, 7
      %v2792 = vsub.s32 %v2789, %v2791
      %v2793 = vrot.slane %v2664, %v2792
      %vm2794 = vcmask 589312
      %v2795 = vsel %vm2794, %v2793, %v2788
      %v2796 = vadd.s32 %v2735, 4294967224
      %v2797 = vlaneseq
      %v2798 = vshrl.u32 %v2797, 7
      %v2799 = vsub.s32 %v2796, %v2798
      %v2800 = vrot.slane %v2667, %v2799
      %vm2801 = vcmask 654912
      %v2802 = vsel %vm2801, %v2800, %v2795
      %v2803 = vadd.s32 %v2735, 4294967216
      %v2804 = vlaneseq
      %v2805 = vshrl.u32 %v2804, 7
      %v2806 = vsub.s32 %v2803, %v2805
      %v2807 = vrot.slane %v2670, %v2806
      %vm2808 = vcmask 720512
      %v2809 = vsel %vm2808, %v2807, %v2802
      %v2810 = vadd.s32 %v2735, 4294967208
      %v2811 = vlaneseq
      %v2812 = vshrl.u32 %v2811, 7
      %v2813 = vsub.s32 %v2810, %v2812
      %v2814 = vrot.slane %v2673, %v2813
      %vm2815 = vcmask 786112
      %v2816 = vsel %vm2815, %v2814, %v2809
      %v2817 = vadd.s32 %v2735, 4294967200
      %v2818 = vlaneseq
      %v2819 = vshrl.u32 %v2818, 7
      %v2820 = vsub.s32 %v2817, %v2819
      %v2821 = vrot.slane %v2676, %v2820
      %vm2822 = vcmask 851712
      %v2823 = vsel %vm2822, %v2821, %v2816
      %v2824 = vadd.s32 %v2735, 4294967192
      %v2825 = vlaneseq
      %v2826 = vshrl.u32 %v2825, 7
      %v2827 = vsub.s32 %v2824, %v2826
      %v2828 = vrot.slane %v2679, %v2827
      %vm2829 = vcmask 917312
      %v2830 = vsel %vm2829, %v2828, %v2823
      %v2831 = vadd.s32 %v2735, 4294967184
      %v2832 = vlaneseq
      %v2833 = vshrl.u32 %v2832, 7
      %v2834 = vsub.s32 %v2831, %v2833
      %v2835 = vrot.slane %v2682, %v2834
      %vm2836 = vcmask 982912
      %v2837 = vsel %vm2836, %v2835, %v2830
      %v2838 = vadd.s32 %v2735, 4294967176
      %v2839 = vlaneseq
      %v2840 = vshrl.u32 %v2839, 7
      %v2841 = vsub.s32 %v2838, %v2840
      %v2842 = vrot.slane %v2685, %v2841
      %vm2843 = vcmask 1048512
      %v2844 = vsel %vm2843, %v2842, %v2837
      %v2845 = vlaneseq
      %v2846 = vshrl.u32 %v2845, 7
      %v2847 = vsub.s32 %v2735, %v2846
      %v2848 = vrot.slane %v2688, %v2847
      %v2849 = vlaneseq
      %v2850 = vshrl.u32 %v2849, 7
      %v2851 = vsub.s32 %v2740, %v2850
      %v2852 = vrot.slane %v2691, %v2851
      %v2853 = vsel %vm2745, %v2852, %v2848
      %v2854 = vlaneseq
      %v2855 = vshrl.u32 %v2854, 7
      %v2856 = vsub.s32 %v2747, %v2855
      %v2857 = vrot.slane %v2694, %v2856
      %v2858 = vsel %vm2752, %v2857, %v2853
      %v2859 = vlaneseq
      %v2860 = vshrl.u32 %v2859, 7
      %v2861 = vsub.s32 %v2754, %v2860
      %v2862 = vrot.slane %v2697, %v2861
      %v2863 = vsel %vm2759, %v2862, %v2858
      %v2864 = vlaneseq
      %v2865 = vshrl.u32 %v2864, 7
      %v2866 = vsub.s32 %v2761, %v2865
      %v2867 = vrot.slane %v2700, %v2866
      %v2868 = vsel %vm2766, %v2867, %v2863
      %v2869 = vlaneseq
      %v2870 = vshrl.u32 %v2869, 7
      %v2871 = vsub.s32 %v2768, %v2870
      %v2872 = vrot.slane %v2703, %v2871
      %v2873 = vsel %vm2773, %v2872, %v2868
      %v2874 = vlaneseq
      %v2875 = vshrl.u32 %v2874, 7
      %v2876 = vsub.s32 %v2775, %v2875
      %v2877 = vrot.slane %v2706, %v2876
      %v2878 = vsel %vm2780, %v2877, %v2873
      %v2879 = vlaneseq
      %v2880 = vshrl.u32 %v2879, 7
      %v2881 = vsub.s32 %v2782, %v2880
      %v2882 = vrot.slane %v2709, %v2881
      %v2883 = vsel %vm2787, %v2882, %v2878
      %v2884 = vlaneseq
      %v2885 = vshrl.u32 %v2884, 7
      %v2886 = vsub.s32 %v2789, %v2885
      %v2887 = vrot.slane %v2712, %v2886
      %v2888 = vsel %vm2794, %v2887, %v2883
      %v2889 = vlaneseq
      %v2890 = vshrl.u32 %v2889, 7
      %v2891 = vsub.s32 %v2796, %v2890
      %v2892 = vrot.slane %v2715, %v2891
      %v2893 = vsel %vm2801, %v2892, %v2888
      %v2894 = vlaneseq
      %v2895 = vshrl.u32 %v2894, 7
      %v2896 = vsub.s32 %v2803, %v2895
      %v2897 = vrot.slane %v2718, %v2896
      %v2898 = vsel %vm2808, %v2897, %v2893
      %v2899 = vlaneseq
      %v2900 = vshrl.u32 %v2899, 7
      %v2901 = vsub.s32 %v2810, %v2900
      %v2902 = vrot.slane %v2721, %v2901
      %v2903 = vsel %vm2815, %v2902, %v2898
      %v2904 = vlaneseq
      %v2905 = vshrl.u32 %v2904, 7
      %v2906 = vsub.s32 %v2817, %v2905
      %v2907 = vrot.slane %v2724, %v2906
      %v2908 = vsel %vm2822, %v2907, %v2903
      %v2909 = vlaneseq
      %v2910 = vshrl.u32 %v2909, 7
      %v2911 = vsub.s32 %v2824, %v2910
      %v2912 = vrot.slane %v2727, %v2911
      %v2913 = vsel %vm2829, %v2912, %v2908
      %v2914 = vlaneseq
      %v2915 = vshrl.u32 %v2914, 7
      %v2916 = vsub.s32 %v2831, %v2915
      %v2917 = vrot.slane %v2730, %v2916
      %v2918 = vsel %vm2836, %v2917, %v2913
      %v2919 = vlaneseq
      %v2920 = vshrl.u32 %v2919, 7
      %v2921 = vsub.s32 %v2838, %v2920
      %v2922 = vrot.slane %v2733, %v2921
      %v2923 = vsel %vm2843, %v2922, %v2918
      %vm2924 = vcmask 1041409
      %v2925 = vsel %vm2924, %v2923, %v2844
      %v2927 = vunpack.c.l.s4 1983009808
      %v2928 = vunpack.c.0.s8 %v2927
      %v2929 = vlaneseq
      %v2930 = vshrl.u32 %v2929, 7
      %v2931 = vsub.s32 %v2928, %v2930
      %v2932 = vrot.slane %v2925, %v2931
      %2934 = vst [vmem:[%s189] sm:$0x3] %v2932
      loop: start=0, step=1, limit=32
      $region44: #{kge_forward.1} parent=35 // loop_pre_header
        _
      $region45: #{kge_forward.1} parent=35 // loop_header
        %s2936 = sphi 0, %s2940
        %p2937 = scmp.ge.s32.totalorder %s2936, 32
      $region46: #{kge_forward.1} parent=35 // loop_header_branch
        %2939 = sbr.rel (%p2937) target = $region50
      $region47: #{kge_forward.1} parent=35 // loop_body
        %s2941 = smul.u32 %s2936, 4
        %s2942 = sadd.s32 %s191, 128
        %s2943 = sadd.s32 %s2942, %s2941
        %s2944 = sld [smem:[#allocation5 + %s2943]]
        %s2945 = sld [smem:[#allocation6 + %s2943]]
        %s2946 = scalar_lea.vmem %s5, %s2944
        %v2947 = vld [vmem:[%s2946] sm:$0x1]
        %s2948 = scalar_lea.vmem [#allocation2], %s2941
        %2949 = vst [vmem:[%s2948] sm:$0x1] %v2947
        %s2950 = scalar_lea.vmem %s5, %s2945
        %v2951 = vld [vmem:[%s2950] sm:$0x1]
        %s2952 = scalar_lea.vmem [#allocation3], %s2941
        %2953 = vst [vmem:[%s2952] sm:$0x1] %v2951
        %s2954 = sadd.s32 %s191, 1152
        %s2955 = sadd.s32 %s2954, %s2941
        %s2956 = sld [smem:[#allocation5 + %s2955]]
        %s2957 = sld [smem:[#allocation6 + %s2955]]
        %s2958 = scalar_lea.vmem %s5, %s2956
        %v2959 = vld [vmem:[%s2958] sm:$0x1]
        %s2960 = sadd.s32 %s2941, 128
        %s2961 = scalar_lea.vmem [#allocation2], %s2960
        %2962 = vst [vmem:[%s2961] sm:$0x1] %v2959
        %s2963 = scalar_lea.vmem %s5, %s2957
        %v2964 = vld [vmem:[%s2963] sm:$0x1]
        %s2965 = scalar_lea.vmem [#allocation3], %s2960
        %2966 = vst [vmem:[%s2965] sm:$0x1] %v2964
        %s2967 = sadd.s32 %s2941, 1
        %s2968 = sadd.s32 %s2942, %s2967
        %s2969 = sld [smem:[#allocation5 + %s2968]]
        %s2970 = sld [smem:[#allocation6 + %s2968]]
        %s2971 = scalar_lea.vmem %s5, %s2969
        %v2972 = vld [vmem:[%s2971] sm:$0x1]
        %s2973 = scalar_lea.vmem [#allocation2], %s2967
        %2974 = vst [vmem:[%s2973] sm:$0x1] %v2972
        %s2975 = scalar_lea.vmem %s5, %s2970
        %v2976 = vld [vmem:[%s2975] sm:$0x1]
        %s2977 = scalar_lea.vmem [#allocation3], %s2967
        %2978 = vst [vmem:[%s2977] sm:$0x1] %v2976
        %s2979 = sadd.s32 %s2954, %s2967
        %s2980 = sld [smem:[#allocation5 + %s2979]]
        %s2981 = sld [smem:[#allocation6 + %s2979]]
        %s2982 = scalar_lea.vmem %s5, %s2980
        %v2983 = vld [vmem:[%s2982] sm:$0x1]
        %s2984 = sadd.s32 %s2967, 128
        %s2985 = scalar_lea.vmem [#allocation2], %s2984
        %2986 = vst [vmem:[%s2985] sm:$0x1] %v2983
        %s2987 = scalar_lea.vmem %s5, %s2981
        %v2988 = vld [vmem:[%s2987] sm:$0x1]
        %s2989 = scalar_lea.vmem [#allocation3], %s2984
        %2990 = vst [vmem:[%s2989] sm:$0x1] %v2988
        %s2991 = sadd.s32 %s2941, 2
        %s2992 = sadd.s32 %s2942, %s2991
        %s2993 = sld [smem:[#allocation5 + %s2992]]
        %s2994 = sld [smem:[#allocation6 + %s2992]]
        %s2995 = scalar_lea.vmem %s5, %s2993
        %v2996 = vld [vmem:[%s2995] sm:$0x1]
        %s2997 = scalar_lea.vmem [#allocation2], %s2991
        %2998 = vst [vmem:[%s2997] sm:$0x1] %v2996
        %s2999 = scalar_lea.vmem %s5, %s2994
        %v3000 = vld [vmem:[%s2999] sm:$0x1]
        %s3001 = scalar_lea.vmem [#allocation3], %s2991
        %3002 = vst [vmem:[%s3001] sm:$0x1] %v3000
        %s3003 = sadd.s32 %s2954, %s2991
        %s3004 = sld [smem:[#allocation5 + %s3003]]
        %s3005 = sld [smem:[#allocation6 + %s3003]]
        %s3006 = scalar_lea.vmem %s5, %s3004
        %v3007 = vld [vmem:[%s3006] sm:$0x1]
        %s3008 = sadd.s32 %s2991, 128
        %s3009 = scalar_lea.vmem [#allocation2], %s3008
        %3010 = vst [vmem:[%s3009] sm:$0x1] %v3007
        %s3011 = scalar_lea.vmem %s5, %s3005
        %v3012 = vld [vmem:[%s3011] sm:$0x1]
        %s3013 = scalar_lea.vmem [#allocation3], %s3008
        %3014 = vst [vmem:[%s3013] sm:$0x1] %v3012
        %s3015 = sadd.s32 %s2941, 3
        %s3016 = sadd.s32 %s2942, %s3015
        %s3017 = sld [smem:[#allocation5 + %s3016]]
        %s3018 = sld [smem:[#allocation6 + %s3016]]
        %s3019 = scalar_lea.vmem %s5, %s3017
        %v3020 = vld [vmem:[%s3019] sm:$0x1]
        %s3021 = scalar_lea.vmem [#allocation2], %s3015
        %3022 = vst [vmem:[%s3021] sm:$0x1] %v3020
        %s3023 = scalar_lea.vmem %s5, %s3018
        %v3024 = vld [vmem:[%s3023] sm:$0x1]
        %s3025 = scalar_lea.vmem [#allocation3], %s3015
        %3026 = vst [vmem:[%s3025] sm:$0x1] %v3024
        %s3027 = sadd.s32 %s2954, %s3015
        %s3028 = sld [smem:[#allocation5 + %s3027]]
        %s3029 = sld [smem:[#allocation6 + %s3027]]
        %s3030 = scalar_lea.vmem %s5, %s3028
        %v3031 = vld [vmem:[%s3030] sm:$0x1]
        %s3032 = sadd.s32 %s3015, 128
        %s3033 = scalar_lea.vmem [#allocation2], %s3032
        %3034 = vst [vmem:[%s3033] sm:$0x1] %v3031
        %s3035 = scalar_lea.vmem %s5, %s3029
        %v3036 = vld [vmem:[%s3035] sm:$0x1]
        %s3037 = scalar_lea.vmem [#allocation3], %s3032
        %3038 = vst [vmem:[%s3037] sm:$0x1] %v3036
      $region48: #{kge_forward.1} parent=35 // loop_footer
        %s2940 = sadd.s32 1, %s2936
      $region49: #{kge_forward.1} parent=35 // loop_footer_branch
        %2935 = sbr.rel target = $region45
      $region50: #{kge_forward.1} parent=35 // loop_exit
        _
      %v3039 = vld [vmem:[#allocation2] sm:$0xff]
      %v3040 = vld [vmem:[#allocation2 + $0x8] sm:$0xff]
      %v3041 = vld [vmem:[#allocation2 + $0x10] sm:$0xff]
      %v3042 = vld [vmem:[#allocation2 + $0x18] sm:$0xff]
      %v3043 = vld [vmem:[#allocation2 + $0x20] sm:$0xff]
      %v3044 = vld [vmem:[#allocation2 + $0x28] sm:$0xff]
      %v3045 = vld [vmem:[#allocation2 + $0x30] sm:$0xff]
      %v3046 = vld [vmem:[#allocation2 + $0x38] sm:$0xff]
      %v3047 = vld [vmem:[#allocation2 + $0x40] sm:$0xff]
      %v3048 = vld [vmem:[#allocation2 + $0x48] sm:$0xff]
      %v3049 = vld [vmem:[#allocation2 + $0x50] sm:$0xff]
      %v3050 = vld [vmem:[#allocation2 + $0x58] sm:$0xff]
      %v3051 = vld [vmem:[#allocation2 + $0x60] sm:$0xff]
      %v3052 = vld [vmem:[#allocation2 + $0x68] sm:$0xff]
      %v3053 = vld [vmem:[#allocation2 + $0x70] sm:$0xff]
      %v3054 = vld [vmem:[#allocation2 + $0x78] sm:$0xff]
      %v3055 = vld [vmem:[#allocation2 + $0x80] sm:$0xff]
      %v3056 = vld [vmem:[#allocation2 + $0x88] sm:$0xff]
      %v3057 = vld [vmem:[#allocation2 + $0x90] sm:$0xff]
      %v3058 = vld [vmem:[#allocation2 + $0x98] sm:$0xff]
      %v3059 = vld [vmem:[#allocation2 + $0xa0] sm:$0xff]
      %v3060 = vld [vmem:[#allocation2 + $0xa8] sm:$0xff]
      %v3061 = vld [vmem:[#allocation2 + $0xb0] sm:$0xff]
      %v3062 = vld [vmem:[#allocation2 + $0xb8] sm:$0xff]
      %v3063 = vld [vmem:[#allocation2 + $0xc0] sm:$0xff]
      %v3064 = vld [vmem:[#allocation2 + $0xc8] sm:$0xff]
      %v3065 = vld [vmem:[#allocation2 + $0xd0] sm:$0xff]
      %v3066 = vld [vmem:[#allocation2 + $0xd8] sm:$0xff]
      %v3067 = vld [vmem:[#allocation2 + $0xe0] sm:$0xff]
      %v3068 = vld [vmem:[#allocation2 + $0xe8] sm:$0xff]
      %v3069 = vld [vmem:[#allocation2 + $0xf0] sm:$0xff]
      %v3070 = vld [vmem:[#allocation2 + $0xf8] sm:$0xff]
      %v3071 = vld [vmem:[#allocation3] sm:$0xff]
      %v3072 = vld [vmem:[#allocation3 + $0x8] sm:$0xff]
      %v3073 = vld [vmem:[#allocation3 + $0x10] sm:$0xff]
      %v3074 = vld [vmem:[#allocation3 + $0x18] sm:$0xff]
      %v3075 = vld [vmem:[#allocation3 + $0x20] sm:$0xff]
      %v3076 = vld [vmem:[#allocation3 + $0x28] sm:$0xff]
      %v3077 = vld [vmem:[#allocation3 + $0x30] sm:$0xff]
      %v3078 = vld [vmem:[#allocation3 + $0x38] sm:$0xff]
      %v3079 = vld [vmem:[#allocation3 + $0x40] sm:$0xff]
      %v3080 = vld [vmem:[#allocation3 + $0x48] sm:$0xff]
      %v3081 = vld [vmem:[#allocation3 + $0x50] sm:$0xff]
      %v3082 = vld [vmem:[#allocation3 + $0x58] sm:$0xff]
      %v3083 = vld [vmem:[#allocation3 + $0x60] sm:$0xff]
      %v3084 = vld [vmem:[#allocation3 + $0x68] sm:$0xff]
      %v3085 = vld [vmem:[#allocation3 + $0x70] sm:$0xff]
      %v3086 = vld [vmem:[#allocation3 + $0x78] sm:$0xff]
      %v3087 = vld [vmem:[#allocation3 + $0x80] sm:$0xff]
      %v3088 = vld [vmem:[#allocation3 + $0x88] sm:$0xff]
      %v3089 = vld [vmem:[#allocation3 + $0x90] sm:$0xff]
      %v3090 = vld [vmem:[#allocation3 + $0x98] sm:$0xff]
      %v3091 = vld [vmem:[#allocation3 + $0xa0] sm:$0xff]
      %v3092 = vld [vmem:[#allocation3 + $0xa8] sm:$0xff]
      %v3093 = vld [vmem:[#allocation3 + $0xb0] sm:$0xff]
      %v3094 = vld [vmem:[#allocation3 + $0xb8] sm:$0xff]
      %v3095 = vld [vmem:[#allocation3 + $0xc0] sm:$0xff]
      %v3096 = vld [vmem:[#allocation3 + $0xc8] sm:$0xff]
      %v3097 = vld [vmem:[#allocation3 + $0xd0] sm:$0xff]
      %v3098 = vld [vmem:[#allocation3 + $0xd8] sm:$0xff]
      %v3099 = vld [vmem:[#allocation3 + $0xe0] sm:$0xff]
      %v3100 = vld [vmem:[#allocation3 + $0xe8] sm:$0xff]
      %v3101 = vld [vmem:[#allocation3 + $0xf0] sm:$0xff]
      %v3102 = vld [vmem:[#allocation3 + $0xf8] sm:$0xff]
      %v3103 = vmul.f32 %v3039, %v413
      %v3104 = vmul.f32 %v3040, %v413
      %v3105 = vmul.f32 %v3041, %v413
      %v3106 = vmul.f32 %v3042, %v413
      %v3107 = vmul.f32 %v3043, %v413
      %v3108 = vmul.f32 %v3044, %v413
      %v3109 = vmul.f32 %v3045, %v413
      %v3110 = vmul.f32 %v3046, %v413
      %v3111 = vmul.f32 %v3047, %v413
      %v3112 = vmul.f32 %v3048, %v413
      %v3113 = vmul.f32 %v3049, %v413
      %v3114 = vmul.f32 %v3050, %v413
      %v3115 = vmul.f32 %v3051, %v413
      %v3116 = vmul.f32 %v3052, %v413
      %v3117 = vmul.f32 %v3053, %v413
      %v3118 = vmul.f32 %v3054, %v413
      %v3119 = vmul.f32 %v3055, %v417
      %v3120 = vmul.f32 %v3056, %v417
      %v3121 = vmul.f32 %v3057, %v417
      %v3122 = vmul.f32 %v3058, %v417
      %v3123 = vmul.f32 %v3059, %v417
      %v3124 = vmul.f32 %v3060, %v417
      %v3125 = vmul.f32 %v3061, %v417
      %v3126 = vmul.f32 %v3062, %v417
      %v3127 = vmul.f32 %v3063, %v417
      %v3128 = vmul.f32 %v3064, %v417
      %v3129 = vmul.f32 %v3065, %v417
      %v3130 = vmul.f32 %v3066, %v417
      %v3131 = vmul.f32 %v3067, %v417
      %v3132 = vmul.f32 %v3068, %v417
      %v3133 = vmul.f32 %v3069, %v417
      %v3134 = vmul.f32 %v3070, %v417
      %3135 = vadd.xlane.f32.xlu0 %v3103
      %v3136 = vpop.xlane.xlu0 %3135
      %3137 = vadd.xlane.f32.xlu0 %v3104
      %v3138 = vpop.xlane.xlu0 %3137
      %3139 = vadd.xlane.f32.xlu0 %v3105
      %v3140 = vpop.xlane.xlu0 %3139
      %3141 = vadd.xlane.f32.xlu0 %v3106
      %v3142 = vpop.xlane.xlu0 %3141
      %3143 = vadd.xlane.f32.xlu0 %v3107
      %v3144 = vpop.xlane.xlu0 %3143
      %3145 = vadd.xlane.f32.xlu0 %v3108
      %v3146 = vpop.xlane.xlu0 %3145
      %3147 = vadd.xlane.f32.xlu0 %v3109
      %v3148 = vpop.xlane.xlu0 %3147
      %3149 = vadd.xlane.f32.xlu0 %v3110
      %v3150 = vpop.xlane.xlu0 %3149
      %3151 = vadd.xlane.f32.xlu0 %v3111
      %v3152 = vpop.xlane.xlu0 %3151
      %3153 = vadd.xlane.f32.xlu0 %v3112
      %v3154 = vpop.xlane.xlu0 %3153
      %3155 = vadd.xlane.f32.xlu0 %v3113
      %v3156 = vpop.xlane.xlu0 %3155
      %3157 = vadd.xlane.f32.xlu0 %v3114
      %v3158 = vpop.xlane.xlu0 %3157
      %3159 = vadd.xlane.f32.xlu0 %v3115
      %v3160 = vpop.xlane.xlu0 %3159
      %3161 = vadd.xlane.f32.xlu0 %v3116
      %v3162 = vpop.xlane.xlu0 %3161
      %3163 = vadd.xlane.f32.xlu0 %v3117
      %v3164 = vpop.xlane.xlu0 %3163
      %3165 = vadd.xlane.f32.xlu0 %v3118
      %v3166 = vpop.xlane.xlu0 %3165
      %3167 = vadd.xlane.f32.xlu0 %v3119
      %v3168 = vpop.xlane.xlu0 %3167
      %3169 = vadd.xlane.f32.xlu0 %v3120
      %v3170 = vpop.xlane.xlu0 %3169
      %3171 = vadd.xlane.f32.xlu0 %v3121
      %v3172 = vpop.xlane.xlu0 %3171
      %3173 = vadd.xlane.f32.xlu0 %v3122
      %v3174 = vpop.xlane.xlu0 %3173
      %3175 = vadd.xlane.f32.xlu0 %v3123
      %v3176 = vpop.xlane.xlu0 %3175
      %3177 = vadd.xlane.f32.xlu0 %v3124
      %v3178 = vpop.xlane.xlu0 %3177
      %3179 = vadd.xlane.f32.xlu0 %v3125
      %v3180 = vpop.xlane.xlu0 %3179
      %3181 = vadd.xlane.f32.xlu0 %v3126
      %v3182 = vpop.xlane.xlu0 %3181
      %3183 = vadd.xlane.f32.xlu0 %v3127
      %v3184 = vpop.xlane.xlu0 %3183
      %3185 = vadd.xlane.f32.xlu0 %v3128
      %v3186 = vpop.xlane.xlu0 %3185
      %3187 = vadd.xlane.f32.xlu0 %v3129
      %v3188 = vpop.xlane.xlu0 %3187
      %3189 = vadd.xlane.f32.xlu0 %v3130
      %v3190 = vpop.xlane.xlu0 %3189
      %3191 = vadd.xlane.f32.xlu0 %v3131
      %v3192 = vpop.xlane.xlu0 %3191
      %3193 = vadd.xlane.f32.xlu0 %v3132
      %v3194 = vpop.xlane.xlu0 %3193
      %3195 = vadd.xlane.f32.xlu0 %v3133
      %v3196 = vpop.xlane.xlu0 %3195
      %3197 = vadd.xlane.f32.xlu0 %v3134
      %v3198 = vpop.xlane.xlu0 %3197
      %v3199 = vmul.f32 %v3071, %v519
      %v3200 = vmul.f32 %v3072, %v519
      %v3201 = vmul.f32 %v3073, %v519
      %v3202 = vmul.f32 %v3074, %v519
      %v3203 = vmul.f32 %v3075, %v519
      %v3204 = vmul.f32 %v3076, %v519
      %v3205 = vmul.f32 %v3077, %v519
      %v3206 = vmul.f32 %v3078, %v519
      %v3207 = vmul.f32 %v3079, %v519
      %v3208 = vmul.f32 %v3080, %v519
      %v3209 = vmul.f32 %v3081, %v519
      %v3210 = vmul.f32 %v3082, %v519
      %v3211 = vmul.f32 %v3083, %v519
      %v3212 = vmul.f32 %v3084, %v519
      %v3213 = vmul.f32 %v3085, %v519
      %v3214 = vmul.f32 %v3086, %v519
      %v3215 = vmul.f32 %v3087, %v523
      %v3216 = vmul.f32 %v3088, %v523
      %v3217 = vmul.f32 %v3089, %v523
      %v3218 = vmul.f32 %v3090, %v523
      %v3219 = vmul.f32 %v3091, %v523
      %v3220 = vmul.f32 %v3092, %v523
      %v3221 = vmul.f32 %v3093, %v523
      %v3222 = vmul.f32 %v3094, %v523
      %v3223 = vmul.f32 %v3095, %v523
      %v3224 = vmul.f32 %v3096, %v523
      %v3225 = vmul.f32 %v3097, %v523
      %v3226 = vmul.f32 %v3098, %v523
      %v3227 = vmul.f32 %v3099, %v523
      %v3228 = vmul.f32 %v3100, %v523
      %v3229 = vmul.f32 %v3101, %v523
      %v3230 = vmul.f32 %v3102, %v523
      %3231 = vadd.xlane.f32.xlu0 %v3199
      %v3232 = vpop.xlane.xlu0 %3231
      %3233 = vadd.xlane.f32.xlu0 %v3200
      %v3234 = vpop.xlane.xlu0 %3233
      %3235 = vadd.xlane.f32.xlu0 %v3201
      %v3236 = vpop.xlane.xlu0 %3235
      %3237 = vadd.xlane.f32.xlu0 %v3202
      %v3238 = vpop.xlane.xlu0 %3237
      %3239 = vadd.xlane.f32.xlu0 %v3203
      %v3240 = vpop.xlane.xlu0 %3239
      %3241 = vadd.xlane.f32.xlu0 %v3204
      %v3242 = vpop.xlane.xlu0 %3241
      %3243 = vadd.xlane.f32.xlu0 %v3205
      %v3244 = vpop.xlane.xlu0 %3243
      %3245 = vadd.xlane.f32.xlu0 %v3206
      %v3246 = vpop.xlane.xlu0 %3245
      %3247 = vadd.xlane.f32.xlu0 %v3207
      %v3248 = vpop.xlane.xlu0 %3247
      %3249 = vadd.xlane.f32.xlu0 %v3208
      %v3250 = vpop.xlane.xlu0 %3249
      %3251 = vadd.xlane.f32.xlu0 %v3209
      %v3252 = vpop.xlane.xlu0 %3251
      %3253 = vadd.xlane.f32.xlu0 %v3210
      %v3254 = vpop.xlane.xlu0 %3253
      %3255 = vadd.xlane.f32.xlu0 %v3211
      %v3256 = vpop.xlane.xlu0 %3255
      %3257 = vadd.xlane.f32.xlu0 %v3212
      %v3258 = vpop.xlane.xlu0 %3257
      %3259 = vadd.xlane.f32.xlu0 %v3213
      %v3260 = vpop.xlane.xlu0 %3259
      %3261 = vadd.xlane.f32.xlu0 %v3214
      %v3262 = vpop.xlane.xlu0 %3261
      %3263 = vadd.xlane.f32.xlu0 %v3215
      %v3264 = vpop.xlane.xlu0 %3263
      %3265 = vadd.xlane.f32.xlu0 %v3216
      %v3266 = vpop.xlane.xlu0 %3265
      %3267 = vadd.xlane.f32.xlu0 %v3217
      %v3268 = vpop.xlane.xlu0 %3267
      %3269 = vadd.xlane.f32.xlu0 %v3218
      %v3270 = vpop.xlane.xlu0 %3269
      %3271 = vadd.xlane.f32.xlu0 %v3219
      %v3272 = vpop.xlane.xlu0 %3271
      %3273 = vadd.xlane.f32.xlu0 %v3220
      %v3274 = vpop.xlane.xlu0 %3273
      %3275 = vadd.xlane.f32.xlu0 %v3221
      %v3276 = vpop.xlane.xlu0 %3275
      %3277 = vadd.xlane.f32.xlu0 %v3222
      %v3278 = vpop.xlane.xlu0 %3277
      %3279 = vadd.xlane.f32.xlu0 %v3223
      %v3280 = vpop.xlane.xlu0 %3279
      %3281 = vadd.xlane.f32.xlu0 %v3224
      %v3282 = vpop.xlane.xlu0 %3281
      %3283 = vadd.xlane.f32.xlu0 %v3225
      %v3284 = vpop.xlane.xlu0 %3283
      %3285 = vadd.xlane.f32.xlu0 %v3226
      %v3286 = vpop.xlane.xlu0 %3285
      %3287 = vadd.xlane.f32.xlu0 %v3227
      %v3288 = vpop.xlane.xlu0 %3287
      %3289 = vadd.xlane.f32.xlu0 %v3228
      %v3290 = vpop.xlane.xlu0 %3289
      %3291 = vadd.xlane.f32.xlu0 %v3229
      %v3292 = vpop.xlane.xlu0 %3291
      %3293 = vadd.xlane.f32.xlu0 %v3230
      %v3294 = vpop.xlane.xlu0 %3293
      %v3295 = vadd.f32 %v3136, %v3232
      %v3296 = vadd.f32 %v3138, %v3234
      %v3297 = vadd.f32 %v3140, %v3236
      %v3298 = vadd.f32 %v3142, %v3238
      %v3299 = vadd.f32 %v3144, %v3240
      %v3300 = vadd.f32 %v3146, %v3242
      %v3301 = vadd.f32 %v3148, %v3244
      %v3302 = vadd.f32 %v3150, %v3246
      %v3303 = vadd.f32 %v3152, %v3248
      %v3304 = vadd.f32 %v3154, %v3250
      %v3305 = vadd.f32 %v3156, %v3252
      %v3306 = vadd.f32 %v3158, %v3254
      %v3307 = vadd.f32 %v3160, %v3256
      %v3308 = vadd.f32 %v3162, %v3258
      %v3309 = vadd.f32 %v3164, %v3260
      %v3310 = vadd.f32 %v3166, %v3262
      %v3311 = vadd.f32 %v3168, %v3264
      %v3312 = vadd.f32 %v3170, %v3266
      %v3313 = vadd.f32 %v3172, %v3268
      %v3314 = vadd.f32 %v3174, %v3270
      %v3315 = vadd.f32 %v3176, %v3272
      %v3316 = vadd.f32 %v3178, %v3274
      %v3317 = vadd.f32 %v3180, %v3276
      %v3318 = vadd.f32 %v3182, %v3278
      %v3319 = vadd.f32 %v3184, %v3280
      %v3320 = vadd.f32 %v3186, %v3282
      %v3321 = vadd.f32 %v3188, %v3284
      %v3322 = vadd.f32 %v3190, %v3286
      %v3323 = vadd.f32 %v3192, %v3288
      %v3324 = vadd.f32 %v3194, %v3290
      %v3325 = vadd.f32 %v3196, %v3292
      %v3326 = vadd.f32 %v3198, %v3294
      %v3327 = vsub.f32 0.0, %v3295
      %v3328 = vsub.f32 0.0, %v3296
      %v3329 = vsub.f32 0.0, %v3297
      %v3330 = vsub.f32 0.0, %v3298
      %v3331 = vsub.f32 0.0, %v3299
      %v3332 = vsub.f32 0.0, %v3300
      %v3333 = vsub.f32 0.0, %v3301
      %v3334 = vsub.f32 0.0, %v3302
      %v3335 = vsub.f32 0.0, %v3303
      %v3336 = vsub.f32 0.0, %v3304
      %v3337 = vsub.f32 0.0, %v3305
      %v3338 = vsub.f32 0.0, %v3306
      %v3339 = vsub.f32 0.0, %v3307
      %v3340 = vsub.f32 0.0, %v3308
      %v3341 = vsub.f32 0.0, %v3309
      %v3342 = vsub.f32 0.0, %v3310
      %v3343 = vsub.f32 0.0, %v3311
      %v3344 = vsub.f32 0.0, %v3312
      %v3345 = vsub.f32 0.0, %v3313
      %v3346 = vsub.f32 0.0, %v3314
      %v3347 = vsub.f32 0.0, %v3315
      %v3348 = vsub.f32 0.0, %v3316
      %v3349 = vsub.f32 0.0, %v3317
      %v3350 = vsub.f32 0.0, %v3318
      %v3351 = vsub.f32 0.0, %v3319
      %v3352 = vsub.f32 0.0, %v3320
      %v3353 = vsub.f32 0.0, %v3321
      %v3354 = vsub.f32 0.0, %v3322
      %v3355 = vsub.f32 0.0, %v3323
      %v3356 = vsub.f32 0.0, %v3324
      %v3357 = vsub.f32 0.0, %v3325
      %v3358 = vsub.f32 0.0, %v3326
      %v3359 = vmin.f32 %v3327, 0.0
      %v3360 = vmin.f32 %v3328, 0.0
      %v3361 = vmin.f32 %v3329, 0.0
      %v3362 = vmin.f32 %v3330, 0.0
      %v3363 = vmin.f32 %v3331, 0.0
      %v3364 = vmin.f32 %v3332, 0.0
      %v3365 = vmin.f32 %v3333, 0.0
      %v3366 = vmin.f32 %v3334, 0.0
      %v3367 = vmin.f32 %v3335, 0.0
      %v3368 = vmin.f32 %v3336, 0.0
      %v3369 = vmin.f32 %v3337, 0.0
      %v3370 = vmin.f32 %v3338, 0.0
      %v3371 = vmin.f32 %v3339, 0.0
      %v3372 = vmin.f32 %v3340, 0.0
      %v3373 = vmin.f32 %v3341, 0.0
      %v3374 = vmin.f32 %v3342, 0.0
      %v3375 = vmin.f32 %v3343, 0.0
      %v3376 = vmin.f32 %v3344, 0.0
      %v3377 = vmin.f32 %v3345, 0.0
      %v3378 = vmin.f32 %v3346, 0.0
      %v3379 = vmin.f32 %v3347, 0.0
      %v3380 = vmin.f32 %v3348, 0.0
      %v3381 = vmin.f32 %v3349, 0.0
      %v3382 = vmin.f32 %v3350, 0.0
      %v3383 = vmin.f32 %v3351, 0.0
      %v3384 = vmin.f32 %v3352, 0.0
      %v3385 = vmin.f32 %v3353, 0.0
      %v3386 = vmin.f32 %v3354, 0.0
      %v3387 = vmin.f32 %v3355, 0.0
      %v3388 = vmin.f32 %v3356, 0.0
      %v3389 = vmin.f32 %v3357, 0.0
      %v3390 = vmin.f32 %v3358, 0.0
      %v3391 = vand.u32 2147483647, %v3327
      %v3392 = vand.u32 2147483647, %v3328
      %v3393 = vand.u32 2147483647, %v3329
      %v3394 = vand.u32 2147483647, %v3330
      %v3395 = vand.u32 2147483647, %v3331
      %v3396 = vand.u32 2147483647, %v3332
      %v3397 = vand.u32 2147483647, %v3333
      %v3398 = vand.u32 2147483647, %v3334
      %v3399 = vand.u32 2147483647, %v3335
      %v3400 = vand.u32 2147483647, %v3336
      %v3401 = vand.u32 2147483647, %v3337
      %v3402 = vand.u32 2147483647, %v3338
      %v3403 = vand.u32 2147483647, %v3339
      %v3404 = vand.u32 2147483647, %v3340
      %v3405 = vand.u32 2147483647, %v3341
      %v3406 = vand.u32 2147483647, %v3342
      %v3407 = vand.u32 2147483647, %v3343
      %v3408 = vand.u32 2147483647, %v3344
      %v3409 = vand.u32 2147483647, %v3345
      %v3410 = vand.u32 2147483647, %v3346
      %v3411 = vand.u32 2147483647, %v3347
      %v3412 = vand.u32 2147483647, %v3348
      %v3413 = vand.u32 2147483647, %v3349
      %v3414 = vand.u32 2147483647, %v3350
      %v3415 = vand.u32 2147483647, %v3351
      %v3416 = vand.u32 2147483647, %v3352
      %v3417 = vand.u32 2147483647, %v3353
      %v3418 = vand.u32 2147483647, %v3354
      %v3419 = vand.u32 2147483647, %v3355
      %v3420 = vand.u32 2147483647, %v3356
      %v3421 = vand.u32 2147483647, %v3357
      %v3422 = vand.u32 2147483647, %v3358
      %v3423 = vsub.f32 0.0, %v3391
      %v3424 = vsub.f32 0.0, %v3392
      %v3425 = vsub.f32 0.0, %v3393
      %v3426 = vsub.f32 0.0, %v3394
      %v3427 = vsub.f32 0.0, %v3395
      %v3428 = vsub.f32 0.0, %v3396
      %v3429 = vsub.f32 0.0, %v3397
      %v3430 = vsub.f32 0.0, %v3398
      %v3431 = vsub.f32 0.0, %v3399
      %v3432 = vsub.f32 0.0, %v3400
      %v3433 = vsub.f32 0.0, %v3401
      %v3434 = vsub.f32 0.0, %v3402
      %v3435 = vsub.f32 0.0, %v3403
      %v3436 = vsub.f32 0.0, %v3404
      %v3437 = vsub.f32 0.0, %v3405
      %v3438 = vsub.f32 0.0, %v3406
      %v3439 = vsub.f32 0.0, %v3407
      %v3440 = vsub.f32 0.0, %v3408
      %v3441 = vsub.f32 0.0, %v3409
      %v3442 = vsub.f32 0.0, %v3410
      %v3443 = vsub.f32 0.0, %v3411
      %v3444 = vsub.f32 0.0, %v3412
      %v3445 = vsub.f32 0.0, %v3413
      %v3446 = vsub.f32 0.0, %v3414
      %v3447 = vsub.f32 0.0, %v3415
      %v3448 = vsub.f32 0.0, %v3416
      %v3449 = vsub.f32 0.0, %v3417
      %v3450 = vsub.f32 0.0, %v3418
      %v3451 = vsub.f32 0.0, %v3419
      %v3452 = vsub.f32 0.0, %v3420
      %v3453 = vsub.f32 0.0, %v3421
      %v3454 = vsub.f32 0.0, %v3422
      %v3455 = vmul.f32 %v3423, 1.442695
      %v3456 = vpow.pop %v3455
      %v3457 = vmul.f32 %v3424, 1.442695
      %v3458 = vpow.pop %v3457
      %v3459 = vmul.f32 %v3425, 1.442695
      %v3460 = vpow.pop %v3459
      %v3461 = vmul.f32 %v3426, 1.442695
      %v3462 = vpow.pop %v3461
      %v3463 = vmul.f32 %v3427, 1.442695
      %v3464 = vpow.pop %v3463
      %v3465 = vmul.f32 %v3428, 1.442695
      %v3466 = vpow.pop %v3465
      %v3467 = vmul.f32 %v3429, 1.442695
      %v3468 = vpow.pop %v3467
      %v3469 = vmul.f32 %v3430, 1.442695
      %v3470 = vpow.pop %v3469
      %v3471 = vmul.f32 %v3431, 1.442695
      %v3472 = vpow.pop %v3471
      %v3473 = vmul.f32 %v3432, 1.442695
      %v3474 = vpow.pop %v3473
      %v3475 = vmul.f32 %v3433, 1.442695
      %v3476 = vpow.pop %v3475
      %v3477 = vmul.f32 %v3434, 1.442695
      %v3478 = vpow.pop %v3477
      %v3479 = vmul.f32 %v3435, 1.442695
      %v3480 = vpow.pop %v3479
      %v3481 = vmul.f32 %v3436, 1.442695
      %v3482 = vpow.pop %v3481
      %v3483 = vmul.f32 %v3437, 1.442695
      %v3484 = vpow.pop %v3483
      %v3485 = vmul.f32 %v3438, 1.442695
      %v3486 = vpow.pop %v3485
      %v3487 = vmul.f32 %v3439, 1.442695
      %v3488 = vpow.pop %v3487
      %v3489 = vmul.f32 %v3440, 1.442695
      %v3490 = vpow.pop %v3489
      %v3491 = vmul.f32 %v3441, 1.442695
      %v3492 = vpow.pop %v3491
      %v3493 = vmul.f32 %v3442, 1.442695
      %v3494 = vpow.pop %v3493
      %v3495 = vmul.f32 %v3443, 1.442695
      %v3496 = vpow.pop %v3495
      %v3497 = vmul.f32 %v3444, 1.442695
      %v3498 = vpow.pop %v3497
      %v3499 = vmul.f32 %v3445, 1.442695
      %v3500 = vpow.pop %v3499
      %v3501 = vmul.f32 %v3446, 1.442695
      %v3502 = vpow.pop %v3501
      %v3503 = vmul.f32 %v3447, 1.442695
      %v3504 = vpow.pop %v3503
      %v3505 = vmul.f32 %v3448, 1.442695
      %v3506 = vpow.pop %v3505
      %v3507 = vmul.f32 %v3449, 1.442695
      %v3508 = vpow.pop %v3507
      %v3509 = vmul.f32 %v3450, 1.442695
      %v3510 = vpow.pop %v3509
      %v3511 = vmul.f32 %v3451, 1.442695
      %v3512 = vpow.pop %v3511
      %v3513 = vmul.f32 %v3452, 1.442695
      %v3514 = vpow.pop %v3513
      %v3515 = vmul.f32 %v3453, 1.442695
      %v3516 = vpow.pop %v3515
      %v3517 = vmul.f32 %v3454, 1.442695
      %v3518 = vpow.pop %v3517
      %v3519 = vadd.f32 %v3456, 1.0
      %v3520 = vlog2.pop %v3519
      %v3521 = vmul.f32 %v3520, 0.6931472
      %v3522 = vmul.f32 -0.5, %v3456
      %v3523 = vadd.f32 %v3522, 1.0
      %v3524 = vmul.f32 %v3523, %v3456
      %v3525 = vand.u32 2147483647, %v3456
      %vm3526 = vcmp.lt.f32.partialorder %v3525, 0.0004427343
      %v3527 = vsel %vm3526, %v3524, %v3521
      %v3528 = vadd.f32 %v3458, 1.0
      %v3529 = vlog2.pop %v3528
      %v3530 = vmul.f32 %v3529, 0.6931472
      %v3531 = vmul.f32 -0.5, %v3458
      %v3532 = vadd.f32 %v3531, 1.0
      %v3533 = vmul.f32 %v3532, %v3458
      %v3534 = vand.u32 2147483647, %v3458
      %vm3535 = vcmp.lt.f32.partialorder %v3534, 0.0004427343
      %v3536 = vsel %vm3535, %v3533, %v3530
      %v3537 = vadd.f32 %v3460, 1.0
      %v3538 = vlog2.pop %v3537
      %v3539 = vmul.f32 %v3538, 0.6931472
      %v3540 = vmul.f32 -0.5, %v3460
      %v3541 = vadd.f32 %v3540, 1.0
      %v3542 = vmul.f32 %v3541, %v3460
      %v3543 = vand.u32 2147483647, %v3460
      %vm3544 = vcmp.lt.f32.partialorder %v3543, 0.0004427343
      %v3545 = vsel %vm3544, %v3542, %v3539
      %v3546 = vadd.f32 %v3462, 1.0
      %v3547 = vlog2.pop %v3546
      %v3548 = vmul.f32 %v3547, 0.6931472
      %v3549 = vmul.f32 -0.5, %v3462
      %v3550 = vadd.f32 %v3549, 1.0
      %v3551 = vmul.f32 %v3550, %v3462
      %v3552 = vand.u32 2147483647, %v3462
      %vm3553 = vcmp.lt.f32.partialorder %v3552, 0.0004427343
      %v3554 = vsel %vm3553, %v3551, %v3548
      %v3555 = vadd.f32 %v3464, 1.0
      %v3556 = vlog2.pop %v3555
      %v3557 = vmul.f32 %v3556, 0.6931472
      %v3558 = vmul.f32 -0.5, %v3464
      %v3559 = vadd.f32 %v3558, 1.0
      %v3560 = vmul.f32 %v3559, %v3464
      %v3561 = vand.u32 2147483647, %v3464
      %vm3562 = vcmp.lt.f32.partialorder %v3561, 0.0004427343
      %v3563 = vsel %vm3562, %v3560, %v3557
      %v3564 = vadd.f32 %v3466, 1.0
      %v3565 = vlog2.pop %v3564
      %v3566 = vmul.f32 %v3565, 0.6931472
      %v3567 = vmul.f32 -0.5, %v3466
      %v3568 = vadd.f32 %v3567, 1.0
      %v3569 = vmul.f32 %v3568, %v3466
      %v3570 = vand.u32 2147483647, %v3466
      %vm3571 = vcmp.lt.f32.partialorder %v3570, 0.0004427343
      %v3572 = vsel %vm3571, %v3569, %v3566
      %v3573 = vadd.f32 %v3468, 1.0
      %v3574 = vlog2.pop %v3573
      %v3575 = vmul.f32 %v3574, 0.6931472
      %v3576 = vmul.f32 -0.5, %v3468
      %v3577 = vadd.f32 %v3576, 1.0
      %v3578 = vmul.f32 %v3577, %v3468
      %v3579 = vand.u32 2147483647, %v3468
      %vm3580 = vcmp.lt.f32.partialorder %v3579, 0.0004427343
      %v3581 = vsel %vm3580, %v3578, %v3575
      %v3582 = vadd.f32 %v3470, 1.0
      %v3583 = vlog2.pop %v3582
      %v3584 = vmul.f32 %v3583, 0.6931472
      %v3585 = vmul.f32 -0.5, %v3470
      %v3586 = vadd.f32 %v3585, 1.0
      %v3587 = vmul.f32 %v3586, %v3470
      %v3588 = vand.u32 2147483647, %v3470
      %vm3589 = vcmp.lt.f32.partialorder %v3588, 0.0004427343
      %v3590 = vsel %vm3589, %v3587, %v3584
      %v3591 = vadd.f32 %v3472, 1.0
      %v3592 = vlog2.pop %v3591
      %v3593 = vmul.f32 %v3592, 0.6931472
      %v3594 = vmul.f32 -0.5, %v3472
      %v3595 = vadd.f32 %v3594, 1.0
      %v3596 = vmul.f32 %v3595, %v3472
      %v3597 = vand.u32 2147483647, %v3472
      %vm3598 = vcmp.lt.f32.partialorder %v3597, 0.0004427343
      %v3599 = vsel %vm3598, %v3596, %v3593
      %v3600 = vadd.f32 %v3474, 1.0
      %v3601 = vlog2.pop %v3600
      %v3602 = vmul.f32 %v3601, 0.6931472
      %v3603 = vmul.f32 -0.5, %v3474
      %v3604 = vadd.f32 %v3603, 1.0
      %v3605 = vmul.f32 %v3604, %v3474
      %v3606 = vand.u32 2147483647, %v3474
      %vm3607 = vcmp.lt.f32.partialorder %v3606, 0.0004427343
      %v3608 = vsel %vm3607, %v3605, %v3602
      %v3609 = vadd.f32 %v3476, 1.0
      %v3610 = vlog2.pop %v3609
      %v3611 = vmul.f32 %v3610, 0.6931472
      %v3612 = vmul.f32 -0.5, %v3476
      %v3613 = vadd.f32 %v3612, 1.0
      %v3614 = vmul.f32 %v3613, %v3476
      %v3615 = vand.u32 2147483647, %v3476
      %vm3616 = vcmp.lt.f32.partialorder %v3615, 0.0004427343
      %v3617 = vsel %vm3616, %v3614, %v3611
      %v3618 = vadd.f32 %v3478, 1.0
      %v3619 = vlog2.pop %v3618
      %v3620 = vmul.f32 %v3619, 0.6931472
      %v3621 = vmul.f32 -0.5, %v3478
      %v3622 = vadd.f32 %v3621, 1.0
      %v3623 = vmul.f32 %v3622, %v3478
      %v3624 = vand.u32 2147483647, %v3478
      %vm3625 = vcmp.lt.f32.partialorder %v3624, 0.0004427343
      %v3626 = vsel %vm3625, %v3623, %v3620
      %v3627 = vadd.f32 %v3480, 1.0
      %v3628 = vlog2.pop %v3627
      %v3629 = vmul.f32 %v3628, 0.6931472
      %v3630 = vmul.f32 -0.5, %v3480
      %v3631 = vadd.f32 %v3630, 1.0
      %v3632 = vmul.f32 %v3631, %v3480
      %v3633 = vand.u32 2147483647, %v3480
      %vm3634 = vcmp.lt.f32.partialorder %v3633, 0.0004427343
      %v3635 = vsel %vm3634, %v3632, %v3629
      %v3636 = vadd.f32 %v3482, 1.0
      %v3637 = vlog2.pop %v3636
      %v3638 = vmul.f32 %v3637, 0.6931472
      %v3639 = vmul.f32 -0.5, %v3482
      %v3640 = vadd.f32 %v3639, 1.0
      %v3641 = vmul.f32 %v3640, %v3482
      %v3642 = vand.u32 2147483647, %v3482
      %vm3643 = vcmp.lt.f32.partialorder %v3642, 0.0004427343
      %v3644 = vsel %vm3643, %v3641, %v3638
      %v3645 = vadd.f32 %v3484, 1.0
      %v3646 = vlog2.pop %v3645
      %v3647 = vmul.f32 %v3646, 0.6931472
      %v3648 = vmul.f32 -0.5, %v3484
      %v3649 = vadd.f32 %v3648, 1.0
      %v3650 = vmul.f32 %v3649, %v3484
      %v3651 = vand.u32 2147483647, %v3484
      %vm3652 = vcmp.lt.f32.partialorder %v3651, 0.0004427343
      %v3653 = vsel %vm3652, %v3650, %v3647
      %v3654 = vadd.f32 %v3486, 1.0
      %v3655 = vlog2.pop %v3654
      %v3656 = vmul.f32 %v3655, 0.6931472
      %v3657 = vmul.f32 -0.5, %v3486
      %v3658 = vadd.f32 %v3657, 1.0
      %v3659 = vmul.f32 %v3658, %v3486
      %v3660 = vand.u32 2147483647, %v3486
      %vm3661 = vcmp.lt.f32.partialorder %v3660, 0.0004427343
      %v3662 = vsel %vm3661, %v3659, %v3656
      %v3663 = vadd.f32 %v3488, 1.0
      %v3664 = vlog2.pop %v3663
      %v3665 = vmul.f32 %v3664, 0.6931472
      %v3666 = vmul.f32 -0.5, %v3488
      %v3667 = vadd.f32 %v3666, 1.0
      %v3668 = vmul.f32 %v3667, %v3488
      %v3669 = vand.u32 2147483647, %v3488
      %vm3670 = vcmp.lt.f32.partialorder %v3669, 0.0004427343
      %v3671 = vsel %vm3670, %v3668, %v3665
      %v3672 = vadd.f32 %v3490, 1.0
      %v3673 = vlog2.pop %v3672
      %v3674 = vmul.f32 %v3673, 0.6931472
      %v3675 = vmul.f32 -0.5, %v3490
      %v3676 = vadd.f32 %v3675, 1.0
      %v3677 = vmul.f32 %v3676, %v3490
      %v3678 = vand.u32 2147483647, %v3490
      %vm3679 = vcmp.lt.f32.partialorder %v3678, 0.0004427343
      %v3680 = vsel %vm3679, %v3677, %v3674
      %v3681 = vadd.f32 %v3492, 1.0
      %v3682 = vlog2.pop %v3681
      %v3683 = vmul.f32 %v3682, 0.6931472
      %v3684 = vmul.f32 -0.5, %v3492
      %v3685 = vadd.f32 %v3684, 1.0
      %v3686 = vmul.f32 %v3685, %v3492
      %v3687 = vand.u32 2147483647, %v3492
      %vm3688 = vcmp.lt.f32.partialorder %v3687, 0.0004427343
      %v3689 = vsel %vm3688, %v3686, %v3683
      %v3690 = vadd.f32 %v3494, 1.0
      %v3691 = vlog2.pop %v3690
      %v3692 = vmul.f32 %v3691, 0.6931472
      %v3693 = vmul.f32 -0.5, %v3494
      %v3694 = vadd.f32 %v3693, 1.0
      %v3695 = vmul.f32 %v3694, %v3494
      %v3696 = vand.u32 2147483647, %v3494
      %vm3697 = vcmp.lt.f32.partialorder %v3696, 0.0004427343
      %v3698 = vsel %vm3697, %v3695, %v3692
      %v3699 = vadd.f32 %v3496, 1.0
      %v3700 = vlog2.pop %v3699
      %v3701 = vmul.f32 %v3700, 0.6931472
      %v3702 = vmul.f32 -0.5, %v3496
      %v3703 = vadd.f32 %v3702, 1.0
      %v3704 = vmul.f32 %v3703, %v3496
      %v3705 = vand.u32 2147483647, %v3496
      %vm3706 = vcmp.lt.f32.partialorder %v3705, 0.0004427343
      %v3707 = vsel %vm3706, %v3704, %v3701
      %v3708 = vadd.f32 %v3498, 1.0
      %v3709 = vlog2.pop %v3708
      %v3710 = vmul.f32 %v3709, 0.6931472
      %v3711 = vmul.f32 -0.5, %v3498
      %v3712 = vadd.f32 %v3711, 1.0
      %v3713 = vmul.f32 %v3712, %v3498
      %v3714 = vand.u32 2147483647, %v3498
      %vm3715 = vcmp.lt.f32.partialorder %v3714, 0.0004427343
      %v3716 = vsel %vm3715, %v3713, %v3710
      %v3717 = vadd.f32 %v3500, 1.0
      %v3718 = vlog2.pop %v3717
      %v3719 = vmul.f32 %v3718, 0.6931472
      %v3720 = vmul.f32 -0.5, %v3500
      %v3721 = vadd.f32 %v3720, 1.0
      %v3722 = vmul.f32 %v3721, %v3500
      %v3723 = vand.u32 2147483647, %v3500
      %vm3724 = vcmp.lt.f32.partialorder %v3723, 0.0004427343
      %v3725 = vsel %vm3724, %v3722, %v3719
      %v3726 = vadd.f32 %v3502, 1.0
      %v3727 = vlog2.pop %v3726
      %v3728 = vmul.f32 %v3727, 0.6931472
      %v3729 = vmul.f32 -0.5, %v3502
      %v3730 = vadd.f32 %v3729, 1.0
      %v3731 = vmul.f32 %v3730, %v3502
      %v3732 = vand.u32 2147483647, %v3502
      %vm3733 = vcmp.lt.f32.partialorder %v3732, 0.0004427343
      %v3734 = vsel %vm3733, %v3731, %v3728
      %v3735 = vadd.f32 %v3504, 1.0
      %v3736 = vlog2.pop %v3735
      %v3737 = vmul.f32 %v3736, 0.6931472
      %v3738 = vmul.f32 -0.5, %v3504
      %v3739 = vadd.f32 %v3738, 1.0
      %v3740 = vmul.f32 %v3739, %v3504
      %v3741 = vand.u32 2147483647, %v3504
      %vm3742 = vcmp.lt.f32.partialorder %v3741, 0.0004427343
      %v3743 = vsel %vm3742, %v3740, %v3737
      %v3744 = vadd.f32 %v3506, 1.0
      %v3745 = vlog2.pop %v3744
      %v3746 = vmul.f32 %v3745, 0.6931472
      %v3747 = vmul.f32 -0.5, %v3506
      %v3748 = vadd.f32 %v3747, 1.0
      %v3749 = vmul.f32 %v3748, %v3506
      %v3750 = vand.u32 2147483647, %v3506
      %vm3751 = vcmp.lt.f32.partialorder %v3750, 0.0004427343
      %v3752 = vsel %vm3751, %v3749, %v3746
      %v3753 = vadd.f32 %v3508, 1.0
      %v3754 = vlog2.pop %v3753
      %v3755 = vmul.f32 %v3754, 0.6931472
      %v3756 = vmul.f32 -0.5, %v3508
      %v3757 = vadd.f32 %v3756, 1.0
      %v3758 = vmul.f32 %v3757, %v3508
      %v3759 = vand.u32 2147483647, %v3508
      %vm3760 = vcmp.lt.f32.partialorder %v3759, 0.0004427343
      %v3761 = vsel %vm3760, %v3758, %v3755
      %v3762 = vadd.f32 %v3510, 1.0
      %v3763 = vlog2.pop %v3762
      %v3764 = vmul.f32 %v3763, 0.6931472
      %v3765 = vmul.f32 -0.5, %v3510
      %v3766 = vadd.f32 %v3765, 1.0
      %v3767 = vmul.f32 %v3766, %v3510
      %v3768 = vand.u32 2147483647, %v3510
      %vm3769 = vcmp.lt.f32.partialorder %v3768, 0.0004427343
      %v3770 = vsel %vm3769, %v3767, %v3764
      %v3771 = vadd.f32 %v3512, 1.0
      %v3772 = vlog2.pop %v3771
      %v3773 = vmul.f32 %v3772, 0.6931472
      %v3774 = vmul.f32 -0.5, %v3512
      %v3775 = vadd.f32 %v3774, 1.0
      %v3776 = vmul.f32 %v3775, %v3512
      %v3777 = vand.u32 2147483647, %v3512
      %vm3778 = vcmp.lt.f32.partialorder %v3777, 0.0004427343
      %v3779 = vsel %vm3778, %v3776, %v3773
      %v3780 = vadd.f32 %v3514, 1.0
      %v3781 = vlog2.pop %v3780
      %v3782 = vmul.f32 %v3781, 0.6931472
      %v3783 = vmul.f32 -0.5, %v3514
      %v3784 = vadd.f32 %v3783, 1.0
      %v3785 = vmul.f32 %v3784, %v3514
      %v3786 = vand.u32 2147483647, %v3514
      %vm3787 = vcmp.lt.f32.partialorder %v3786, 0.0004427343
      %v3788 = vsel %vm3787, %v3785, %v3782
      %v3789 = vadd.f32 %v3516, 1.0
      %v3790 = vlog2.pop %v3789
      %v3791 = vmul.f32 %v3790, 0.6931472
      %v3792 = vmul.f32 -0.5, %v3516
      %v3793 = vadd.f32 %v3792, 1.0
      %v3794 = vmul.f32 %v3793, %v3516
      %v3795 = vand.u32 2147483647, %v3516
      %vm3796 = vcmp.lt.f32.partialorder %v3795, 0.0004427343
      %v3797 = vsel %vm3796, %v3794, %v3791
      %v3798 = vadd.f32 %v3518, 1.0
      %v3799 = vlog2.pop %v3798
      %v3800 = vmul.f32 %v3799, 0.6931472
      %v3801 = vmul.f32 -0.5, %v3518
      %v3802 = vadd.f32 %v3801, 1.0
      %v3803 = vmul.f32 %v3802, %v3518
      %v3804 = vand.u32 2147483647, %v3518
      %vm3805 = vcmp.lt.f32.partialorder %v3804, 0.0004427343
      %v3806 = vsel %vm3805, %v3803, %v3800
      %v3807 = vsub.f32 %v3359, %v3527
      %v3808 = vsub.f32 %v3360, %v3536
      %v3809 = vsub.f32 %v3361, %v3545
      %v3810 = vsub.f32 %v3362, %v3554
      %v3811 = vsub.f32 %v3363, %v3563
      %v3812 = vsub.f32 %v3364, %v3572
      %v3813 = vsub.f32 %v3365, %v3581
      %v3814 = vsub.f32 %v3366, %v3590
      %v3815 = vsub.f32 %v3367, %v3599
      %v3816 = vsub.f32 %v3368, %v3608
      %v3817 = vsub.f32 %v3369, %v3617
      %v3818 = vsub.f32 %v3370, %v3626
      %v3819 = vsub.f32 %v3371, %v3635
      %v3820 = vsub.f32 %v3372, %v3644
      %v3821 = vsub.f32 %v3373, %v3653
      %v3822 = vsub.f32 %v3374, %v3662
      %v3823 = vsub.f32 %v3375, %v3671
      %v3824 = vsub.f32 %v3376, %v3680
      %v3825 = vsub.f32 %v3377, %v3689
      %v3826 = vsub.f32 %v3378, %v3698
      %v3827 = vsub.f32 %v3379, %v3707
      %v3828 = vsub.f32 %v3380, %v3716
      %v3829 = vsub.f32 %v3381, %v3725
      %v3830 = vsub.f32 %v3382, %v3734
      %v3831 = vsub.f32 %v3383, %v3743
      %v3832 = vsub.f32 %v3384, %v3752
      %v3833 = vsub.f32 %v3385, %v3761
      %v3834 = vsub.f32 %v3386, %v3770
      %v3835 = vsub.f32 %v3387, %v3779
      %v3836 = vsub.f32 %v3388, %v3788
      %v3837 = vsub.f32 %v3389, %v3797
      %v3838 = vsub.f32 %v3390, %v3806
      %v3872 = vunpack.c.l.s4 269488144
      %v3873 = vunpack.c.0.s8 %v3872
      %v3874 = vlaneseq
      %v3875 = vshrl.u32 %v3874, 7
      %v3876 = vsub.s32 %v3873, %v3875
      %v3877 = vrot.slane %v3807, %v3876
      %v3879 = vunpack.c.l.s4 842150450
      %v3880 = vunpack.c.0.s8 %v3879
      %v3881 = vlaneseq
      %v3882 = vshrl.u32 %v3881, 7
      %v3883 = vsub.s32 %v3880, %v3882
      %v3884 = vrot.slane %v3807, %v3883
      %v3886 = vunpack.c.l.s4 1414812756
      %v3887 = vunpack.c.0.s8 %v3886
      %v3888 = vlaneseq
      %v3889 = vshrl.u32 %v3888, 7
      %v3890 = vsub.s32 %v3887, %v3889
      %v3891 = vrot.slane %v3807, %v3890
      %v3893 = vunpack.c.l.s4 1987475062
      %v3894 = vunpack.c.0.s8 %v3893
      %v3895 = vlaneseq
      %v3896 = vshrl.u32 %v3895, 7
      %v3897 = vsub.s32 %v3894, %v3896
      %v3898 = vrot.slane %v3807, %v3897
      %v3900 = vunpack.c.l.s4 269488144
      %v3901 = vunpack.c.0.s8 %v3900
      %v3902 = vlaneseq
      %v3903 = vshrl.u32 %v3902, 7
      %v3904 = vsub.s32 %v3901, %v3903
      %v3905 = vrot.slane %v3808, %v3904
      %v3907 = vunpack.c.l.s4 842150450
      %v3908 = vunpack.c.0.s8 %v3907
      %v3909 = vlaneseq
      %v3910 = vshrl.u32 %v3909, 7
      %v3911 = vsub.s32 %v3908, %v3910
      %v3912 = vrot.slane %v3808, %v3911
      %v3914 = vunpack.c.l.s4 1414812756
      %v3915 = vunpack.c.0.s8 %v3914
      %v3916 = vlaneseq
      %v3917 = vshrl.u32 %v3916, 7
      %v3918 = vsub.s32 %v3915, %v3917
      %v3919 = vrot.slane %v3808, %v3918
      %v3921 = vunpack.c.l.s4 1987475062
      %v3922 = vunpack.c.0.s8 %v3921
      %v3923 = vlaneseq
      %v3924 = vshrl.u32 %v3923, 7
      %v3925 = vsub.s32 %v3922, %v3924
      %v3926 = vrot.slane %v3808, %v3925
      %v3928 = vunpack.c.l.s4 269488144
      %v3929 = vunpack.c.0.s8 %v3928
      %v3930 = vlaneseq
      %v3931 = vshrl.u32 %v3930, 7
      %v3932 = vsub.s32 %v3929, %v3931
      %v3933 = vrot.slane %v3809, %v3932
      %v3935 = vunpack.c.l.s4 842150450
      %v3936 = vunpack.c.0.s8 %v3935
      %v3937 = vlaneseq
      %v3938 = vshrl.u32 %v3937, 7
      %v3939 = vsub.s32 %v3936, %v3938
      %v3940 = vrot.slane %v3809, %v3939
      %v3942 = vunpack.c.l.s4 1414812756
      %v3943 = vunpack.c.0.s8 %v3942
      %v3944 = vlaneseq
      %v3945 = vshrl.u32 %v3944, 7
      %v3946 = vsub.s32 %v3943, %v3945
      %v3947 = vrot.slane %v3809, %v3946
      %v3949 = vunpack.c.l.s4 1987475062
      %v3950 = vunpack.c.0.s8 %v3949
      %v3951 = vlaneseq
      %v3952 = vshrl.u32 %v3951, 7
      %v3953 = vsub.s32 %v3950, %v3952
      %v3954 = vrot.slane %v3809, %v3953
      %v3956 = vunpack.c.l.s4 269488144
      %v3957 = vunpack.c.0.s8 %v3956
      %v3958 = vlaneseq
      %v3959 = vshrl.u32 %v3958, 7
      %v3960 = vsub.s32 %v3957, %v3959
      %v3961 = vrot.slane %v3810, %v3960
      %v3963 = vunpack.c.l.s4 842150450
      %v3964 = vunpack.c.0.s8 %v3963
      %v3965 = vlaneseq
      %v3966 = vshrl.u32 %v3965, 7
      %v3967 = vsub.s32 %v3964, %v3966
      %v3968 = vrot.slane %v3810, %v3967
      %v3970 = vunpack.c.l.s4 1414812756
      %v3971 = vunpack.c.0.s8 %v3970
      %v3972 = vlaneseq
      %v3973 = vshrl.u32 %v3972, 7
      %v3974 = vsub.s32 %v3971, %v3973
      %v3975 = vrot.slane %v3810, %v3974
      %v3977 = vunpack.c.l.s4 1987475062
      %v3978 = vunpack.c.0.s8 %v3977
      %v3979 = vlaneseq
      %v3980 = vshrl.u32 %v3979, 7
      %v3981 = vsub.s32 %v3978, %v3980
      %v3982 = vrot.slane %v3810, %v3981
      %v3984 = vunpack.c.l.s4 269488144
      %v3985 = vunpack.c.0.s8 %v3984
      %v3986 = vlaneseq
      %v3987 = vshrl.u32 %v3986, 7
      %v3988 = vsub.s32 %v3985, %v3987
      %v3989 = vrot.slane %v3811, %v3988
      %v3991 = vunpack.c.l.s4 842150450
      %v3992 = vunpack.c.0.s8 %v3991
      %v3993 = vlaneseq
      %v3994 = vshrl.u32 %v3993, 7
      %v3995 = vsub.s32 %v3992, %v3994
      %v3996 = vrot.slane %v3811, %v3995
      %v3998 = vunpack.c.l.s4 1414812756
      %v3999 = vunpack.c.0.s8 %v3998
      %v4000 = vlaneseq
      %v4001 = vshrl.u32 %v4000, 7
      %v4002 = vsub.s32 %v3999, %v4001
      %v4003 = vrot.slane %v3811, %v4002
      %v4005 = vunpack.c.l.s4 1987475062
      %v4006 = vunpack.c.0.s8 %v4005
      %v4007 = vlaneseq
      %v4008 = vshrl.u32 %v4007, 7
      %v4009 = vsub.s32 %v4006, %v4008
      %v4010 = vrot.slane %v3811, %v4009
      %v4012 = vunpack.c.l.s4 269488144
      %v4013 = vunpack.c.0.s8 %v4012
      %v4014 = vlaneseq
      %v4015 = vshrl.u32 %v4014, 7
      %v4016 = vsub.s32 %v4013, %v4015
      %v4017 = vrot.slane %v3812, %v4016
      %v4019 = vunpack.c.l.s4 842150450
      %v4020 = vunpack.c.0.s8 %v4019
      %v4021 = vlaneseq
      %v4022 = vshrl.u32 %v4021, 7
      %v4023 = vsub.s32 %v4020, %v4022
      %v4024 = vrot.slane %v3812, %v4023
      %v4026 = vunpack.c.l.s4 1414812756
      %v4027 = vunpack.c.0.s8 %v4026
      %v4028 = vlaneseq
      %v4029 = vshrl.u32 %v4028, 7
      %v4030 = vsub.s32 %v4027, %v4029
      %v4031 = vrot.slane %v3812, %v4030
      %v4033 = vunpack.c.l.s4 1987475062
      %v4034 = vunpack.c.0.s8 %v4033
      %v4035 = vlaneseq
      %v4036 = vshrl.u32 %v4035, 7
      %v4037 = vsub.s32 %v4034, %v4036
      %v4038 = vrot.slane %v3812, %v4037
      %v4040 = vunpack.c.l.s4 269488144
      %v4041 = vunpack.c.0.s8 %v4040
      %v4042 = vlaneseq
      %v4043 = vshrl.u32 %v4042, 7
      %v4044 = vsub.s32 %v4041, %v4043
      %v4045 = vrot.slane %v3813, %v4044
      %v4047 = vunpack.c.l.s4 842150450
      %v4048 = vunpack.c.0.s8 %v4047
      %v4049 = vlaneseq
      %v4050 = vshrl.u32 %v4049, 7
      %v4051 = vsub.s32 %v4048, %v4050
      %v4052 = vrot.slane %v3813, %v4051
      %v4054 = vunpack.c.l.s4 1414812756
      %v4055 = vunpack.c.0.s8 %v4054
      %v4056 = vlaneseq
      %v4057 = vshrl.u32 %v4056, 7
      %v4058 = vsub.s32 %v4055, %v4057
      %v4059 = vrot.slane %v3813, %v4058
      %v4061 = vunpack.c.l.s4 1987475062
      %v4062 = vunpack.c.0.s8 %v4061
      %v4063 = vlaneseq
      %v4064 = vshrl.u32 %v4063, 7
      %v4065 = vsub.s32 %v4062, %v4064
      %v4066 = vrot.slane %v3813, %v4065
      %v4068 = vunpack.c.l.s4 269488144
      %v4069 = vunpack.c.0.s8 %v4068
      %v4070 = vlaneseq
      %v4071 = vshrl.u32 %v4070, 7
      %v4072 = vsub.s32 %v4069, %v4071
      %v4073 = vrot.slane %v3814, %v4072
      %v4075 = vunpack.c.l.s4 842150450
      %v4076 = vunpack.c.0.s8 %v4075
      %v4077 = vlaneseq
      %v4078 = vshrl.u32 %v4077, 7
      %v4079 = vsub.s32 %v4076, %v4078
      %v4080 = vrot.slane %v3814, %v4079
      %v4082 = vunpack.c.l.s4 1414812756
      %v4083 = vunpack.c.0.s8 %v4082
      %v4084 = vlaneseq
      %v4085 = vshrl.u32 %v4084, 7
      %v4086 = vsub.s32 %v4083, %v4085
      %v4087 = vrot.slane %v3814, %v4086
      %v4089 = vunpack.c.l.s4 1987475062
      %v4090 = vunpack.c.0.s8 %v4089
      %v4091 = vlaneseq
      %v4092 = vshrl.u32 %v4091, 7
      %v4093 = vsub.s32 %v4090, %v4092
      %v4094 = vrot.slane %v3814, %v4093
      %v4096 = vunpack.c.l.s4 269488144
      %v4097 = vunpack.c.0.s8 %v4096
      %v4098 = vlaneseq
      %v4099 = vshrl.u32 %v4098, 7
      %v4100 = vsub.s32 %v4097, %v4099
      %v4101 = vrot.slane %v3815, %v4100
      %v4103 = vunpack.c.l.s4 842150450
      %v4104 = vunpack.c.0.s8 %v4103
      %v4105 = vlaneseq
      %v4106 = vshrl.u32 %v4105, 7
      %v4107 = vsub.s32 %v4104, %v4106
      %v4108 = vrot.slane %v3815, %v4107
      %v4110 = vunpack.c.l.s4 1414812756
      %v4111 = vunpack.c.0.s8 %v4110
      %v4112 = vlaneseq
      %v4113 = vshrl.u32 %v4112, 7
      %v4114 = vsub.s32 %v4111, %v4113
      %v4115 = vrot.slane %v3815, %v4114
      %v4117 = vunpack.c.l.s4 1987475062
      %v4118 = vunpack.c.0.s8 %v4117
      %v4119 = vlaneseq
      %v4120 = vshrl.u32 %v4119, 7
      %v4121 = vsub.s32 %v4118, %v4120
      %v4122 = vrot.slane %v3815, %v4121
      %v4124 = vunpack.c.l.s4 269488144
      %v4125 = vunpack.c.0.s8 %v4124
      %v4126 = vlaneseq
      %v4127 = vshrl.u32 %v4126, 7
      %v4128 = vsub.s32 %v4125, %v4127
      %v4129 = vrot.slane %v3816, %v4128
      %v4131 = vunpack.c.l.s4 842150450
      %v4132 = vunpack.c.0.s8 %v4131
      %v4133 = vlaneseq
      %v4134 = vshrl.u32 %v4133, 7
      %v4135 = vsub.s32 %v4132, %v4134
      %v4136 = vrot.slane %v3816, %v4135
      %v4138 = vunpack.c.l.s4 1414812756
      %v4139 = vunpack.c.0.s8 %v4138
      %v4140 = vlaneseq
      %v4141 = vshrl.u32 %v4140, 7
      %v4142 = vsub.s32 %v4139, %v4141
      %v4143 = vrot.slane %v3816, %v4142
      %v4145 = vunpack.c.l.s4 1987475062
      %v4146 = vunpack.c.0.s8 %v4145
      %v4147 = vlaneseq
      %v4148 = vshrl.u32 %v4147, 7
      %v4149 = vsub.s32 %v4146, %v4148
      %v4150 = vrot.slane %v3816, %v4149
      %v4152 = vunpack.c.l.s4 269488144
      %v4153 = vunpack.c.0.s8 %v4152
      %v4154 = vlaneseq
      %v4155 = vshrl.u32 %v4154, 7
      %v4156 = vsub.s32 %v4153, %v4155
      %v4157 = vrot.slane %v3817, %v4156
      %v4159 = vunpack.c.l.s4 842150450
      %v4160 = vunpack.c.0.s8 %v4159
      %v4161 = vlaneseq
      %v4162 = vshrl.u32 %v4161, 7
      %v4163 = vsub.s32 %v4160, %v4162
      %v4164 = vrot.slane %v3817, %v4163
      %v4166 = vunpack.c.l.s4 1414812756
      %v4167 = vunpack.c.0.s8 %v4166
      %v4168 = vlaneseq
      %v4169 = vshrl.u32 %v4168, 7
      %v4170 = vsub.s32 %v4167, %v4169
      %v4171 = vrot.slane %v3817, %v4170
      %v4173 = vunpack.c.l.s4 1987475062
      %v4174 = vunpack.c.0.s8 %v4173
      %v4175 = vlaneseq
      %v4176 = vshrl.u32 %v4175, 7
      %v4177 = vsub.s32 %v4174, %v4176
      %v4178 = vrot.slane %v3817, %v4177
      %v4180 = vunpack.c.l.s4 269488144
      %v4181 = vunpack.c.0.s8 %v4180
      %v4182 = vlaneseq
      %v4183 = vshrl.u32 %v4182, 7
      %v4184 = vsub.s32 %v4181, %v4183
      %v4185 = vrot.slane %v3818, %v4184
      %v4187 = vunpack.c.l.s4 842150450
      %v4188 = vunpack.c.0.s8 %v4187
      %v4189 = vlaneseq
      %v4190 = vshrl.u32 %v4189, 7
      %v4191 = vsub.s32 %v4188, %v4190
      %v4192 = vrot.slane %v3818, %v4191
      %v4194 = vunpack.c.l.s4 1414812756
      %v4195 = vunpack.c.0.s8 %v4194
      %v4196 = vlaneseq
      %v4197 = vshrl.u32 %v4196, 7
      %v4198 = vsub.s32 %v4195, %v4197
      %v4199 = vrot.slane %v3818, %v4198
      %v4201 = vunpack.c.l.s4 1987475062
      %v4202 = vunpack.c.0.s8 %v4201
      %v4203 = vlaneseq
      %v4204 = vshrl.u32 %v4203, 7
      %v4205 = vsub.s32 %v4202, %v4204
      %v4206 = vrot.slane %v3818, %v4205
      %v4208 = vunpack.c.l.s4 269488144
      %v4209 = vunpack.c.0.s8 %v4208
      %v4210 = vlaneseq
      %v4211 = vshrl.u32 %v4210, 7
      %v4212 = vsub.s32 %v4209, %v4211
      %v4213 = vrot.slane %v3819, %v4212
      %v4215 = vunpack.c.l.s4 842150450
      %v4216 = vunpack.c.0.s8 %v4215
      %v4217 = vlaneseq
      %v4218 = vshrl.u32 %v4217, 7
      %v4219 = vsub.s32 %v4216, %v4218
      %v4220 = vrot.slane %v3819, %v4219
      %v4222 = vunpack.c.l.s4 1414812756
      %v4223 = vunpack.c.0.s8 %v4222
      %v4224 = vlaneseq
      %v4225 = vshrl.u32 %v4224, 7
      %v4226 = vsub.s32 %v4223, %v4225
      %v4227 = vrot.slane %v3819, %v4226
      %v4229 = vunpack.c.l.s4 1987475062
      %v4230 = vunpack.c.0.s8 %v4229
      %v4231 = vlaneseq
      %v4232 = vshrl.u32 %v4231, 7
      %v4233 = vsub.s32 %v4230, %v4232
      %v4234 = vrot.slane %v3819, %v4233
      %v4236 = vunpack.c.l.s4 269488144
      %v4237 = vunpack.c.0.s8 %v4236
      %v4238 = vlaneseq
      %v4239 = vshrl.u32 %v4238, 7
      %v4240 = vsub.s32 %v4237, %v4239
      %v4241 = vrot.slane %v3820, %v4240
      %v4243 = vunpack.c.l.s4 842150450
      %v4244 = vunpack.c.0.s8 %v4243
      %v4245 = vlaneseq
      %v4246 = vshrl.u32 %v4245, 7
      %v4247 = vsub.s32 %v4244, %v4246
      %v4248 = vrot.slane %v3820, %v4247
      %v4250 = vunpack.c.l.s4 1414812756
      %v4251 = vunpack.c.0.s8 %v4250
      %v4252 = vlaneseq
      %v4253 = vshrl.u32 %v4252, 7
      %v4254 = vsub.s32 %v4251, %v4253
      %v4255 = vrot.slane %v3820, %v4254
      %v4257 = vunpack.c.l.s4 1987475062
      %v4258 = vunpack.c.0.s8 %v4257
      %v4259 = vlaneseq
      %v4260 = vshrl.u32 %v4259, 7
      %v4261 = vsub.s32 %v4258, %v4260
      %v4262 = vrot.slane %v3820, %v4261
      %v4264 = vunpack.c.l.s4 269488144
      %v4265 = vunpack.c.0.s8 %v4264
      %v4266 = vlaneseq
      %v4267 = vshrl.u32 %v4266, 7
      %v4268 = vsub.s32 %v4265, %v4267
      %v4269 = vrot.slane %v3821, %v4268
      %v4271 = vunpack.c.l.s4 842150450
      %v4272 = vunpack.c.0.s8 %v4271
      %v4273 = vlaneseq
      %v4274 = vshrl.u32 %v4273, 7
      %v4275 = vsub.s32 %v4272, %v4274
      %v4276 = vrot.slane %v3821, %v4275
      %v4278 = vunpack.c.l.s4 1414812756
      %v4279 = vunpack.c.0.s8 %v4278
      %v4280 = vlaneseq
      %v4281 = vshrl.u32 %v4280, 7
      %v4282 = vsub.s32 %v4279, %v4281
      %v4283 = vrot.slane %v3821, %v4282
      %v4285 = vunpack.c.l.s4 1987475062
      %v4286 = vunpack.c.0.s8 %v4285
      %v4287 = vlaneseq
      %v4288 = vshrl.u32 %v4287, 7
      %v4289 = vsub.s32 %v4286, %v4288
      %v4290 = vrot.slane %v3821, %v4289
      %v4292 = vunpack.c.l.s4 269488144
      %v4293 = vunpack.c.0.s8 %v4292
      %v4294 = vlaneseq
      %v4295 = vshrl.u32 %v4294, 7
      %v4296 = vsub.s32 %v4293, %v4295
      %v4297 = vrot.slane %v3822, %v4296
      %v4299 = vunpack.c.l.s4 842150450
      %v4300 = vunpack.c.0.s8 %v4299
      %v4301 = vlaneseq
      %v4302 = vshrl.u32 %v4301, 7
      %v4303 = vsub.s32 %v4300, %v4302
      %v4304 = vrot.slane %v3822, %v4303
      %v4306 = vunpack.c.l.s4 1414812756
      %v4307 = vunpack.c.0.s8 %v4306
      %v4308 = vlaneseq
      %v4309 = vshrl.u32 %v4308, 7
      %v4310 = vsub.s32 %v4307, %v4309
      %v4311 = vrot.slane %v3822, %v4310
      %v4313 = vunpack.c.l.s4 1987475062
      %v4314 = vunpack.c.0.s8 %v4313
      %v4315 = vlaneseq
      %v4316 = vshrl.u32 %v4315, 7
      %v4317 = vsub.s32 %v4314, %v4316
      %v4318 = vrot.slane %v3822, %v4317
      %v4320 = vunpack.c.l.s4 269488144
      %v4321 = vunpack.c.0.s8 %v4320
      %v4322 = vlaneseq
      %v4323 = vshrl.u32 %v4322, 7
      %v4324 = vsub.s32 %v4321, %v4323
      %v4325 = vrot.slane %v3823, %v4324
      %v4327 = vunpack.c.l.s4 842150450
      %v4328 = vunpack.c.0.s8 %v4327
      %v4329 = vlaneseq
      %v4330 = vshrl.u32 %v4329, 7
      %v4331 = vsub.s32 %v4328, %v4330
      %v4332 = vrot.slane %v3823, %v4331
      %v4334 = vunpack.c.l.s4 1414812756
      %v4335 = vunpack.c.0.s8 %v4334
      %v4336 = vlaneseq
      %v4337 = vshrl.u32 %v4336, 7
      %v4338 = vsub.s32 %v4335, %v4337
      %v4339 = vrot.slane %v3823, %v4338
      %v4341 = vunpack.c.l.s4 1987475062
      %v4342 = vunpack.c.0.s8 %v4341
      %v4343 = vlaneseq
      %v4344 = vshrl.u32 %v4343, 7
      %v4345 = vsub.s32 %v4342, %v4344
      %v4346 = vrot.slane %v3823, %v4345
      %v4348 = vunpack.c.l.s4 269488144
      %v4349 = vunpack.c.0.s8 %v4348
      %v4350 = vlaneseq
      %v4351 = vshrl.u32 %v4350, 7
      %v4352 = vsub.s32 %v4349, %v4351
      %v4353 = vrot.slane %v3824, %v4352
      %v4355 = vunpack.c.l.s4 842150450
      %v4356 = vunpack.c.0.s8 %v4355
      %v4357 = vlaneseq
      %v4358 = vshrl.u32 %v4357, 7
      %v4359 = vsub.s32 %v4356, %v4358
      %v4360 = vrot.slane %v3824, %v4359
      %v4362 = vunpack.c.l.s4 1414812756
      %v4363 = vunpack.c.0.s8 %v4362
      %v4364 = vlaneseq
      %v4365 = vshrl.u32 %v4364, 7
      %v4366 = vsub.s32 %v4363, %v4365
      %v4367 = vrot.slane %v3824, %v4366
      %v4369 = vunpack.c.l.s4 1987475062
      %v4370 = vunpack.c.0.s8 %v4369
      %v4371 = vlaneseq
      %v4372 = vshrl.u32 %v4371, 7
      %v4373 = vsub.s32 %v4370, %v4372
      %v4374 = vrot.slane %v3824, %v4373
      %v4376 = vunpack.c.l.s4 269488144
      %v4377 = vunpack.c.0.s8 %v4376
      %v4378 = vlaneseq
      %v4379 = vshrl.u32 %v4378, 7
      %v4380 = vsub.s32 %v4377, %v4379
      %v4381 = vrot.slane %v3825, %v4380
      %v4383 = vunpack.c.l.s4 842150450
      %v4384 = vunpack.c.0.s8 %v4383
      %v4385 = vlaneseq
      %v4386 = vshrl.u32 %v4385, 7
      %v4387 = vsub.s32 %v4384, %v4386
      %v4388 = vrot.slane %v3825, %v4387
      %v4390 = vunpack.c.l.s4 1414812756
      %v4391 = vunpack.c.0.s8 %v4390
      %v4392 = vlaneseq
      %v4393 = vshrl.u32 %v4392, 7
      %v4394 = vsub.s32 %v4391, %v4393
      %v4395 = vrot.slane %v3825, %v4394
      %v4397 = vunpack.c.l.s4 1987475062
      %v4398 = vunpack.c.0.s8 %v4397
      %v4399 = vlaneseq
      %v4400 = vshrl.u32 %v4399, 7
      %v4401 = vsub.s32 %v4398, %v4400
      %v4402 = vrot.slane %v3825, %v4401
      %v4404 = vunpack.c.l.s4 269488144
      %v4405 = vunpack.c.0.s8 %v4404
      %v4406 = vlaneseq
      %v4407 = vshrl.u32 %v4406, 7
      %v4408 = vsub.s32 %v4405, %v4407
      %v4409 = vrot.slane %v3826, %v4408
      %v4411 = vunpack.c.l.s4 842150450
      %v4412 = vunpack.c.0.s8 %v4411
      %v4413 = vlaneseq
      %v4414 = vshrl.u32 %v4413, 7
      %v4415 = vsub.s32 %v4412, %v4414
      %v4416 = vrot.slane %v3826, %v4415
      %v4418 = vunpack.c.l.s4 1414812756
      %v4419 = vunpack.c.0.s8 %v4418
      %v4420 = vlaneseq
      %v4421 = vshrl.u32 %v4420, 7
      %v4422 = vsub.s32 %v4419, %v4421
      %v4423 = vrot.slane %v3826, %v4422
      %v4425 = vunpack.c.l.s4 1987475062
      %v4426 = vunpack.c.0.s8 %v4425
      %v4427 = vlaneseq
      %v4428 = vshrl.u32 %v4427, 7
      %v4429 = vsub.s32 %v4426, %v4428
      %v4430 = vrot.slane %v3826, %v4429
      %v4432 = vunpack.c.l.s4 269488144
      %v4433 = vunpack.c.0.s8 %v4432
      %v4434 = vlaneseq
      %v4435 = vshrl.u32 %v4434, 7
      %v4436 = vsub.s32 %v4433, %v4435
      %v4437 = vrot.slane %v3827, %v4436
      %v4439 = vunpack.c.l.s4 842150450
      %v4440 = vunpack.c.0.s8 %v4439
      %v4441 = vlaneseq
      %v4442 = vshrl.u32 %v4441, 7
      %v4443 = vsub.s32 %v4440, %v4442
      %v4444 = vrot.slane %v3827, %v4443
      %v4446 = vunpack.c.l.s4 1414812756
      %v4447 = vunpack.c.0.s8 %v4446
      %v4448 = vlaneseq
      %v4449 = vshrl.u32 %v4448, 7
      %v4450 = vsub.s32 %v4447, %v4449
      %v4451 = vrot.slane %v3827, %v4450
      %v4453 = vunpack.c.l.s4 1987475062
      %v4454 = vunpack.c.0.s8 %v4453
      %v4455 = vlaneseq
      %v4456 = vshrl.u32 %v4455, 7
      %v4457 = vsub.s32 %v4454, %v4456
      %v4458 = vrot.slane %v3827, %v4457
      %v4460 = vunpack.c.l.s4 269488144
      %v4461 = vunpack.c.0.s8 %v4460
      %v4462 = vlaneseq
      %v4463 = vshrl.u32 %v4462, 7
      %v4464 = vsub.s32 %v4461, %v4463
      %v4465 = vrot.slane %v3828, %v4464
      %v4467 = vunpack.c.l.s4 842150450
      %v4468 = vunpack.c.0.s8 %v4467
      %v4469 = vlaneseq
      %v4470 = vshrl.u32 %v4469, 7
      %v4471 = vsub.s32 %v4468, %v4470
      %v4472 = vrot.slane %v3828, %v4471
      %v4474 = vunpack.c.l.s4 1414812756
      %v4475 = vunpack.c.0.s8 %v4474
      %v4476 = vlaneseq
      %v4477 = vshrl.u32 %v4476, 7
      %v4478 = vsub.s32 %v4475, %v4477
      %v4479 = vrot.slane %v3828, %v4478
      %v4481 = vunpack.c.l.s4 1987475062
      %v4482 = vunpack.c.0.s8 %v4481
      %v4483 = vlaneseq
      %v4484 = vshrl.u32 %v4483, 7
      %v4485 = vsub.s32 %v4482, %v4484
      %v4486 = vrot.slane %v3828, %v4485
      %v4488 = vunpack.c.l.s4 269488144
      %v4489 = vunpack.c.0.s8 %v4488
      %v4490 = vlaneseq
      %v4491 = vshrl.u32 %v4490, 7
      %v4492 = vsub.s32 %v4489, %v4491
      %v4493 = vrot.slane %v3829, %v4492
      %v4495 = vunpack.c.l.s4 842150450
      %v4496 = vunpack.c.0.s8 %v4495
      %v4497 = vlaneseq
      %v4498 = vshrl.u32 %v4497, 7
      %v4499 = vsub.s32 %v4496, %v4498
      %v4500 = vrot.slane %v3829, %v4499
      %v4502 = vunpack.c.l.s4 1414812756
      %v4503 = vunpack.c.0.s8 %v4502
      %v4504 = vlaneseq
      %v4505 = vshrl.u32 %v4504, 7
      %v4506 = vsub.s32 %v4503, %v4505
      %v4507 = vrot.slane %v3829, %v4506
      %v4509 = vunpack.c.l.s4 1987475062
      %v4510 = vunpack.c.0.s8 %v4509
      %v4511 = vlaneseq
      %v4512 = vshrl.u32 %v4511, 7
      %v4513 = vsub.s32 %v4510, %v4512
      %v4514 = vrot.slane %v3829, %v4513
      %v4516 = vunpack.c.l.s4 269488144
      %v4517 = vunpack.c.0.s8 %v4516
      %v4518 = vlaneseq
      %v4519 = vshrl.u32 %v4518, 7
      %v4520 = vsub.s32 %v4517, %v4519
      %v4521 = vrot.slane %v3830, %v4520
      %v4523 = vunpack.c.l.s4 842150450
      %v4524 = vunpack.c.0.s8 %v4523
      %v4525 = vlaneseq
      %v4526 = vshrl.u32 %v4525, 7
      %v4527 = vsub.s32 %v4524, %v4526
      %v4528 = vrot.slane %v3830, %v4527
      %v4530 = vunpack.c.l.s4 1414812756
      %v4531 = vunpack.c.0.s8 %v4530
      %v4532 = vlaneseq
      %v4533 = vshrl.u32 %v4532, 7
      %v4534 = vsub.s32 %v4531, %v4533
      %v4535 = vrot.slane %v3830, %v4534
      %v4537 = vunpack.c.l.s4 1987475062
      %v4538 = vunpack.c.0.s8 %v4537
      %v4539 = vlaneseq
      %v4540 = vshrl.u32 %v4539, 7
      %v4541 = vsub.s32 %v4538, %v4540
      %v4542 = vrot.slane %v3830, %v4541
      %v4544 = vunpack.c.l.s4 269488144
      %v4545 = vunpack.c.0.s8 %v4544
      %v4546 = vlaneseq
      %v4547 = vshrl.u32 %v4546, 7
      %v4548 = vsub.s32 %v4545, %v4547
      %v4549 = vrot.slane %v3831, %v4548
      %v4551 = vunpack.c.l.s4 842150450
      %v4552 = vunpack.c.0.s8 %v4551
      %v4553 = vlaneseq
      %v4554 = vshrl.u32 %v4553, 7
      %v4555 = vsub.s32 %v4552, %v4554
      %v4556 = vrot.slane %v3831, %v4555
      %v4558 = vunpack.c.l.s4 1414812756
      %v4559 = vunpack.c.0.s8 %v4558
      %v4560 = vlaneseq
      %v4561 = vshrl.u32 %v4560, 7
      %v4562 = vsub.s32 %v4559, %v4561
      %v4563 = vrot.slane %v3831, %v4562
      %v4565 = vunpack.c.l.s4 1987475062
      %v4566 = vunpack.c.0.s8 %v4565
      %v4567 = vlaneseq
      %v4568 = vshrl.u32 %v4567, 7
      %v4569 = vsub.s32 %v4566, %v4568
      %v4570 = vrot.slane %v3831, %v4569
      %v4572 = vunpack.c.l.s4 269488144
      %v4573 = vunpack.c.0.s8 %v4572
      %v4574 = vlaneseq
      %v4575 = vshrl.u32 %v4574, 7
      %v4576 = vsub.s32 %v4573, %v4575
      %v4577 = vrot.slane %v3832, %v4576
      %v4579 = vunpack.c.l.s4 842150450
      %v4580 = vunpack.c.0.s8 %v4579
      %v4581 = vlaneseq
      %v4582 = vshrl.u32 %v4581, 7
      %v4583 = vsub.s32 %v4580, %v4582
      %v4584 = vrot.slane %v3832, %v4583
      %v4586 = vunpack.c.l.s4 1414812756
      %v4587 = vunpack.c.0.s8 %v4586
      %v4588 = vlaneseq
      %v4589 = vshrl.u32 %v4588, 7
      %v4590 = vsub.s32 %v4587, %v4589
      %v4591 = vrot.slane %v3832, %v4590
      %v4593 = vunpack.c.l.s4 1987475062
      %v4594 = vunpack.c.0.s8 %v4593
      %v4595 = vlaneseq
      %v4596 = vshrl.u32 %v4595, 7
      %v4597 = vsub.s32 %v4594, %v4596
      %v4598 = vrot.slane %v3832, %v4597
      %v4600 = vunpack.c.l.s4 269488144
      %v4601 = vunpack.c.0.s8 %v4600
      %v4602 = vlaneseq
      %v4603 = vshrl.u32 %v4602, 7
      %v4604 = vsub.s32 %v4601, %v4603
      %v4605 = vrot.slane %v3833, %v4604
      %v4607 = vunpack.c.l.s4 842150450
      %v4608 = vunpack.c.0.s8 %v4607
      %v4609 = vlaneseq
      %v4610 = vshrl.u32 %v4609, 7
      %v4611 = vsub.s32 %v4608, %v4610
      %v4612 = vrot.slane %v3833, %v4611
      %v4614 = vunpack.c.l.s4 1414812756
      %v4615 = vunpack.c.0.s8 %v4614
      %v4616 = vlaneseq
      %v4617 = vshrl.u32 %v4616, 7
      %v4618 = vsub.s32 %v4615, %v4617
      %v4619 = vrot.slane %v3833, %v4618
      %v4621 = vunpack.c.l.s4 1987475062
      %v4622 = vunpack.c.0.s8 %v4621
      %v4623 = vlaneseq
      %v4624 = vshrl.u32 %v4623, 7
      %v4625 = vsub.s32 %v4622, %v4624
      %v4626 = vrot.slane %v3833, %v4625
      %v4628 = vunpack.c.l.s4 269488144
      %v4629 = vunpack.c.0.s8 %v4628
      %v4630 = vlaneseq
      %v4631 = vshrl.u32 %v4630, 7
      %v4632 = vsub.s32 %v4629, %v4631
      %v4633 = vrot.slane %v3834, %v4632
      %v4635 = vunpack.c.l.s4 842150450
      %v4636 = vunpack.c.0.s8 %v4635
      %v4637 = vlaneseq
      %v4638 = vshrl.u32 %v4637, 7
      %v4639 = vsub.s32 %v4636, %v4638
      %v4640 = vrot.slane %v3834, %v4639
      %v4642 = vunpack.c.l.s4 1414812756
      %v4643 = vunpack.c.0.s8 %v4642
      %v4644 = vlaneseq
      %v4645 = vshrl.u32 %v4644, 7
      %v4646 = vsub.s32 %v4643, %v4645
      %v4647 = vrot.slane %v3834, %v4646
      %v4649 = vunpack.c.l.s4 1987475062
      %v4650 = vunpack.c.0.s8 %v4649
      %v4651 = vlaneseq
      %v4652 = vshrl.u32 %v4651, 7
      %v4653 = vsub.s32 %v4650, %v4652
      %v4654 = vrot.slane %v3834, %v4653
      %v4656 = vunpack.c.l.s4 269488144
      %v4657 = vunpack.c.0.s8 %v4656
      %v4658 = vlaneseq
      %v4659 = vshrl.u32 %v4658, 7
      %v4660 = vsub.s32 %v4657, %v4659
      %v4661 = vrot.slane %v3835, %v4660
      %v4663 = vunpack.c.l.s4 842150450
      %v4664 = vunpack.c.0.s8 %v4663
      %v4665 = vlaneseq
      %v4666 = vshrl.u32 %v4665, 7
      %v4667 = vsub.s32 %v4664, %v4666
      %v4668 = vrot.slane %v3835, %v4667
      %v4670 = vunpack.c.l.s4 1414812756
      %v4671 = vunpack.c.0.s8 %v4670
      %v4672 = vlaneseq
      %v4673 = vshrl.u32 %v4672, 7
      %v4674 = vsub.s32 %v4671, %v4673
      %v4675 = vrot.slane %v3835, %v4674
      %v4677 = vunpack.c.l.s4 1987475062
      %v4678 = vunpack.c.0.s8 %v4677
      %v4679 = vlaneseq
      %v4680 = vshrl.u32 %v4679, 7
      %v4681 = vsub.s32 %v4678, %v4680
      %v4682 = vrot.slane %v3835, %v4681
      %v4684 = vunpack.c.l.s4 269488144
      %v4685 = vunpack.c.0.s8 %v4684
      %v4686 = vlaneseq
      %v4687 = vshrl.u32 %v4686, 7
      %v4688 = vsub.s32 %v4685, %v4687
      %v4689 = vrot.slane %v3836, %v4688
      %v4691 = vunpack.c.l.s4 842150450
      %v4692 = vunpack.c.0.s8 %v4691
      %v4693 = vlaneseq
      %v4694 = vshrl.u32 %v4693, 7
      %v4695 = vsub.s32 %v4692, %v4694
      %v4696 = vrot.slane %v3836, %v4695
      %v4698 = vunpack.c.l.s4 1414812756
      %v4699 = vunpack.c.0.s8 %v4698
      %v4700 = vlaneseq
      %v4701 = vshrl.u32 %v4700, 7
      %v4702 = vsub.s32 %v4699, %v4701
      %v4703 = vrot.slane %v3836, %v4702
      %v4705 = vunpack.c.l.s4 1987475062
      %v4706 = vunpack.c.0.s8 %v4705
      %v4707 = vlaneseq
      %v4708 = vshrl.u32 %v4707, 7
      %v4709 = vsub.s32 %v4706, %v4708
      %v4710 = vrot.slane %v3836, %v4709
      %v4712 = vunpack.c.l.s4 269488144
      %v4713 = vunpack.c.0.s8 %v4712
      %v4714 = vlaneseq
      %v4715 = vshrl.u32 %v4714, 7
      %v4716 = vsub.s32 %v4713, %v4715
      %v4717 = vrot.slane %v3837, %v4716
      %v4719 = vunpack.c.l.s4 842150450
      %v4720 = vunpack.c.0.s8 %v4719
      %v4721 = vlaneseq
      %v4722 = vshrl.u32 %v4721, 7
      %v4723 = vsub.s32 %v4720, %v4722
      %v4724 = vrot.slane %v3837, %v4723
      %v4726 = vunpack.c.l.s4 1414812756
      %v4727 = vunpack.c.0.s8 %v4726
      %v4728 = vlaneseq
      %v4729 = vshrl.u32 %v4728, 7
      %v4730 = vsub.s32 %v4727, %v4729
      %v4731 = vrot.slane %v3837, %v4730
      %v4733 = vunpack.c.l.s4 1987475062
      %v4734 = vunpack.c.0.s8 %v4733
      %v4735 = vlaneseq
      %v4736 = vshrl.u32 %v4735, 7
      %v4737 = vsub.s32 %v4734, %v4736
      %v4738 = vrot.slane %v3837, %v4737
      %v4740 = vunpack.c.l.s4 269488144
      %v4741 = vunpack.c.0.s8 %v4740
      %v4742 = vlaneseq
      %v4743 = vshrl.u32 %v4742, 7
      %v4744 = vsub.s32 %v4741, %v4743
      %v4745 = vrot.slane %v3838, %v4744
      %v4747 = vunpack.c.l.s4 842150450
      %v4748 = vunpack.c.0.s8 %v4747
      %v4749 = vlaneseq
      %v4750 = vshrl.u32 %v4749, 7
      %v4751 = vsub.s32 %v4748, %v4750
      %v4752 = vrot.slane %v3838, %v4751
      %v4754 = vunpack.c.l.s4 1414812756
      %v4755 = vunpack.c.0.s8 %v4754
      %v4756 = vlaneseq
      %v4757 = vshrl.u32 %v4756, 7
      %v4758 = vsub.s32 %v4755, %v4757
      %v4759 = vrot.slane %v3838, %v4758
      %v4761 = vunpack.c.l.s4 1987475062
      %v4762 = vunpack.c.0.s8 %v4761
      %v4763 = vlaneseq
      %v4764 = vshrl.u32 %v4763, 7
      %v4765 = vsub.s32 %v4762, %v4764
      %v4766 = vrot.slane %v3838, %v4765
      %v4767 = vcombine.low %v3877, %v3884
      %v4768 = vcombine.low %v3891, %v3898
      %v4770 = vunpack.c.l.s4 1983009808
      %v4771 = vunpack.c.0.s8 %v4770
      %v4772 = vlaneseq
      %v4773 = vshrl.u32 %v4772, 7
      %v4774 = vsub.s32 %v4771, %v4773
      %v4775 = vrot.slane %v4767, %v4774
      %v4777 = vunpack.c.l.s4 1983009808
      %v4778 = vunpack.c.0.s8 %v4777
      %v4779 = vlaneseq
      %v4780 = vshrl.u32 %v4779, 7
      %v4781 = vsub.s32 %v4778, %v4780
      %v4782 = vrot.slane %v4768, %v4781
      %v4783 = vcombine.low %v4775, %v4782
      %v4784 = vcombine.low %v3905, %v3912
      %v4785 = vcombine.low %v3919, %v3926
      %v4787 = vunpack.c.l.s4 1983009808
      %v4788 = vunpack.c.0.s8 %v4787
      %v4789 = vlaneseq
      %v4790 = vshrl.u32 %v4789, 7
      %v4791 = vsub.s32 %v4788, %v4790
      %v4792 = vrot.slane %v4784, %v4791
      %v4794 = vunpack.c.l.s4 1983009808
      %v4795 = vunpack.c.0.s8 %v4794
      %v4796 = vlaneseq
      %v4797 = vshrl.u32 %v4796, 7
      %v4798 = vsub.s32 %v4795, %v4797
      %v4799 = vrot.slane %v4785, %v4798
      %v4800 = vcombine.low %v4792, %v4799
      %v4801 = vcombine.low %v3933, %v3940
      %v4802 = vcombine.low %v3947, %v3954
      %v4804 = vunpack.c.l.s4 1983009808
      %v4805 = vunpack.c.0.s8 %v4804
      %v4806 = vlaneseq
      %v4807 = vshrl.u32 %v4806, 7
      %v4808 = vsub.s32 %v4805, %v4807
      %v4809 = vrot.slane %v4801, %v4808
      %v4811 = vunpack.c.l.s4 1983009808
      %v4812 = vunpack.c.0.s8 %v4811
      %v4813 = vlaneseq
      %v4814 = vshrl.u32 %v4813, 7
      %v4815 = vsub.s32 %v4812, %v4814
      %v4816 = vrot.slane %v4802, %v4815
      %v4817 = vcombine.low %v4809, %v4816
      %v4818 = vcombine.low %v3961, %v3968
      %v4819 = vcombine.low %v3975, %v3982
      %v4821 = vunpack.c.l.s4 1983009808
      %v4822 = vunpack.c.0.s8 %v4821
      %v4823 = vlaneseq
      %v4824 = vshrl.u32 %v4823, 7
      %v4825 = vsub.s32 %v4822, %v4824
      %v4826 = vrot.slane %v4818, %v4825
      %v4828 = vunpack.c.l.s4 1983009808
      %v4829 = vunpack.c.0.s8 %v4828
      %v4830 = vlaneseq
      %v4831 = vshrl.u32 %v4830, 7
      %v4832 = vsub.s32 %v4829, %v4831
      %v4833 = vrot.slane %v4819, %v4832
      %v4834 = vcombine.low %v4826, %v4833
      %v4835 = vcombine.low %v3989, %v3996
      %v4836 = vcombine.low %v4003, %v4010
      %v4838 = vunpack.c.l.s4 1983009808
      %v4839 = vunpack.c.0.s8 %v4838
      %v4840 = vlaneseq
      %v4841 = vshrl.u32 %v4840, 7
      %v4842 = vsub.s32 %v4839, %v4841
      %v4843 = vrot.slane %v4835, %v4842
      %v4845 = vunpack.c.l.s4 1983009808
      %v4846 = vunpack.c.0.s8 %v4845
      %v4847 = vlaneseq
      %v4848 = vshrl.u32 %v4847, 7
      %v4849 = vsub.s32 %v4846, %v4848
      %v4850 = vrot.slane %v4836, %v4849
      %v4851 = vcombine.low %v4843, %v4850
      %v4852 = vcombine.low %v4017, %v4024
      %v4853 = vcombine.low %v4031, %v4038
      %v4855 = vunpack.c.l.s4 1983009808
      %v4856 = vunpack.c.0.s8 %v4855
      %v4857 = vlaneseq
      %v4858 = vshrl.u32 %v4857, 7
      %v4859 = vsub.s32 %v4856, %v4858
      %v4860 = vrot.slane %v4852, %v4859
      %v4862 = vunpack.c.l.s4 1983009808
      %v4863 = vunpack.c.0.s8 %v4862
      %v4864 = vlaneseq
      %v4865 = vshrl.u32 %v4864, 7
      %v4866 = vsub.s32 %v4863, %v4865
      %v4867 = vrot.slane %v4853, %v4866
      %v4868 = vcombine.low %v4860, %v4867
      %v4869 = vcombine.low %v4045, %v4052
      %v4870 = vcombine.low %v4059, %v4066
      %v4872 = vunpack.c.l.s4 1983009808
      %v4873 = vunpack.c.0.s8 %v4872
      %v4874 = vlaneseq
      %v4875 = vshrl.u32 %v4874, 7
      %v4876 = vsub.s32 %v4873, %v4875
      %v4877 = vrot.slane %v4869, %v4876
      %v4879 = vunpack.c.l.s4 1983009808
      %v4880 = vunpack.c.0.s8 %v4879
      %v4881 = vlaneseq
      %v4882 = vshrl.u32 %v4881, 7
      %v4883 = vsub.s32 %v4880, %v4882
      %v4884 = vrot.slane %v4870, %v4883
      %v4885 = vcombine.low %v4877, %v4884
      %v4886 = vcombine.low %v4073, %v4080
      %v4887 = vcombine.low %v4087, %v4094
      %v4889 = vunpack.c.l.s4 1983009808
      %v4890 = vunpack.c.0.s8 %v4889
      %v4891 = vlaneseq
      %v4892 = vshrl.u32 %v4891, 7
      %v4893 = vsub.s32 %v4890, %v4892
      %v4894 = vrot.slane %v4886, %v4893
      %v4896 = vunpack.c.l.s4 1983009808
      %v4897 = vunpack.c.0.s8 %v4896
      %v4898 = vlaneseq
      %v4899 = vshrl.u32 %v4898, 7
      %v4900 = vsub.s32 %v4897, %v4899
      %v4901 = vrot.slane %v4887, %v4900
      %v4902 = vcombine.low %v4894, %v4901
      %v4903 = vcombine.low %v4101, %v4108
      %v4904 = vcombine.low %v4115, %v4122
      %v4906 = vunpack.c.l.s4 1983009808
      %v4907 = vunpack.c.0.s8 %v4906
      %v4908 = vlaneseq
      %v4909 = vshrl.u32 %v4908, 7
      %v4910 = vsub.s32 %v4907, %v4909
      %v4911 = vrot.slane %v4903, %v4910
      %v4913 = vunpack.c.l.s4 1983009808
      %v4914 = vunpack.c.0.s8 %v4913
      %v4915 = vlaneseq
      %v4916 = vshrl.u32 %v4915, 7
      %v4917 = vsub.s32 %v4914, %v4916
      %v4918 = vrot.slane %v4904, %v4917
      %v4919 = vcombine.low %v4911, %v4918
      %v4920 = vcombine.low %v4129, %v4136
      %v4921 = vcombine.low %v4143, %v4150
      %v4923 = vunpack.c.l.s4 1983009808
      %v4924 = vunpack.c.0.s8 %v4923
      %v4925 = vlaneseq
      %v4926 = vshrl.u32 %v4925, 7
      %v4927 = vsub.s32 %v4924, %v4926
      %v4928 = vrot.slane %v4920, %v4927
      %v4930 = vunpack.c.l.s4 1983009808
      %v4931 = vunpack.c.0.s8 %v4930
      %v4932 = vlaneseq
      %v4933 = vshrl.u32 %v4932, 7
      %v4934 = vsub.s32 %v4931, %v4933
      %v4935 = vrot.slane %v4921, %v4934
      %v4936 = vcombine.low %v4928, %v4935
      %v4937 = vcombine.low %v4157, %v4164
      %v4938 = vcombine.low %v4171, %v4178
      %v4940 = vunpack.c.l.s4 1983009808
      %v4941 = vunpack.c.0.s8 %v4940
      %v4942 = vlaneseq
      %v4943 = vshrl.u32 %v4942, 7
      %v4944 = vsub.s32 %v4941, %v4943
      %v4945 = vrot.slane %v4937, %v4944
      %v4947 = vunpack.c.l.s4 1983009808
      %v4948 = vunpack.c.0.s8 %v4947
      %v4949 = vlaneseq
      %v4950 = vshrl.u32 %v4949, 7
      %v4951 = vsub.s32 %v4948, %v4950
      %v4952 = vrot.slane %v4938, %v4951
      %v4953 = vcombine.low %v4945, %v4952
      %v4954 = vcombine.low %v4185, %v4192
      %v4955 = vcombine.low %v4199, %v4206
      %v4957 = vunpack.c.l.s4 1983009808
      %v4958 = vunpack.c.0.s8 %v4957
      %v4959 = vlaneseq
      %v4960 = vshrl.u32 %v4959, 7
      %v4961 = vsub.s32 %v4958, %v4960
      %v4962 = vrot.slane %v4954, %v4961
      %v4964 = vunpack.c.l.s4 1983009808
      %v4965 = vunpack.c.0.s8 %v4964
      %v4966 = vlaneseq
      %v4967 = vshrl.u32 %v4966, 7
      %v4968 = vsub.s32 %v4965, %v4967
      %v4969 = vrot.slane %v4955, %v4968
      %v4970 = vcombine.low %v4962, %v4969
      %v4971 = vcombine.low %v4213, %v4220
      %v4972 = vcombine.low %v4227, %v4234
      %v4974 = vunpack.c.l.s4 1983009808
      %v4975 = vunpack.c.0.s8 %v4974
      %v4976 = vlaneseq
      %v4977 = vshrl.u32 %v4976, 7
      %v4978 = vsub.s32 %v4975, %v4977
      %v4979 = vrot.slane %v4971, %v4978
      %v4981 = vunpack.c.l.s4 1983009808
      %v4982 = vunpack.c.0.s8 %v4981
      %v4983 = vlaneseq
      %v4984 = vshrl.u32 %v4983, 7
      %v4985 = vsub.s32 %v4982, %v4984
      %v4986 = vrot.slane %v4972, %v4985
      %v4987 = vcombine.low %v4979, %v4986
      %v4988 = vcombine.low %v4241, %v4248
      %v4989 = vcombine.low %v4255, %v4262
      %v4991 = vunpack.c.l.s4 1983009808
      %v4992 = vunpack.c.0.s8 %v4991
      %v4993 = vlaneseq
      %v4994 = vshrl.u32 %v4993, 7
      %v4995 = vsub.s32 %v4992, %v4994
      %v4996 = vrot.slane %v4988, %v4995
      %v4998 = vunpack.c.l.s4 1983009808
      %v4999 = vunpack.c.0.s8 %v4998
      %v5000 = vlaneseq
      %v5001 = vshrl.u32 %v5000, 7
      %v5002 = vsub.s32 %v4999, %v5001
      %v5003 = vrot.slane %v4989, %v5002
      %v5004 = vcombine.low %v4996, %v5003
      %v5005 = vcombine.low %v4269, %v4276
      %v5006 = vcombine.low %v4283, %v4290
      %v5008 = vunpack.c.l.s4 1983009808
      %v5009 = vunpack.c.0.s8 %v5008
      %v5010 = vlaneseq
      %v5011 = vshrl.u32 %v5010, 7
      %v5012 = vsub.s32 %v5009, %v5011
      %v5013 = vrot.slane %v5005, %v5012
      %v5015 = vunpack.c.l.s4 1983009808
      %v5016 = vunpack.c.0.s8 %v5015
      %v5017 = vlaneseq
      %v5018 = vshrl.u32 %v5017, 7
      %v5019 = vsub.s32 %v5016, %v5018
      %v5020 = vrot.slane %v5006, %v5019
      %v5021 = vcombine.low %v5013, %v5020
      %v5022 = vcombine.low %v4297, %v4304
      %v5023 = vcombine.low %v4311, %v4318
      %v5025 = vunpack.c.l.s4 1983009808
      %v5026 = vunpack.c.0.s8 %v5025
      %v5027 = vlaneseq
      %v5028 = vshrl.u32 %v5027, 7
      %v5029 = vsub.s32 %v5026, %v5028
      %v5030 = vrot.slane %v5022, %v5029
      %v5032 = vunpack.c.l.s4 1983009808
      %v5033 = vunpack.c.0.s8 %v5032
      %v5034 = vlaneseq
      %v5035 = vshrl.u32 %v5034, 7
      %v5036 = vsub.s32 %v5033, %v5035
      %v5037 = vrot.slane %v5023, %v5036
      %v5038 = vcombine.low %v5030, %v5037
      %v5039 = vcombine.low %v4325, %v4332
      %v5040 = vcombine.low %v4339, %v4346
      %v5042 = vunpack.c.l.s4 1983009808
      %v5043 = vunpack.c.0.s8 %v5042
      %v5044 = vlaneseq
      %v5045 = vshrl.u32 %v5044, 7
      %v5046 = vsub.s32 %v5043, %v5045
      %v5047 = vrot.slane %v5039, %v5046
      %v5049 = vunpack.c.l.s4 1983009808
      %v5050 = vunpack.c.0.s8 %v5049
      %v5051 = vlaneseq
      %v5052 = vshrl.u32 %v5051, 7
      %v5053 = vsub.s32 %v5050, %v5052
      %v5054 = vrot.slane %v5040, %v5053
      %v5055 = vcombine.low %v5047, %v5054
      %v5056 = vcombine.low %v4353, %v4360
      %v5057 = vcombine.low %v4367, %v4374
      %v5059 = vunpack.c.l.s4 1983009808
      %v5060 = vunpack.c.0.s8 %v5059
      %v5061 = vlaneseq
      %v5062 = vshrl.u32 %v5061, 7
      %v5063 = vsub.s32 %v5060, %v5062
      %v5064 = vrot.slane %v5056, %v5063
      %v5066 = vunpack.c.l.s4 1983009808
      %v5067 = vunpack.c.0.s8 %v5066
      %v5068 = vlaneseq
      %v5069 = vshrl.u32 %v5068, 7
      %v5070 = vsub.s32 %v5067, %v5069
      %v5071 = vrot.slane %v5057, %v5070
      %v5072 = vcombine.low %v5064, %v5071
      %v5073 = vcombine.low %v4381, %v4388
      %v5074 = vcombine.low %v4395, %v4402
      %v5076 = vunpack.c.l.s4 1983009808
      %v5077 = vunpack.c.0.s8 %v5076
      %v5078 = vlaneseq
      %v5079 = vshrl.u32 %v5078, 7
      %v5080 = vsub.s32 %v5077, %v5079
      %v5081 = vrot.slane %v5073, %v5080
      %v5083 = vunpack.c.l.s4 1983009808
      %v5084 = vunpack.c.0.s8 %v5083
      %v5085 = vlaneseq
      %v5086 = vshrl.u32 %v5085, 7
      %v5087 = vsub.s32 %v5084, %v5086
      %v5088 = vrot.slane %v5074, %v5087
      %v5089 = vcombine.low %v5081, %v5088
      %v5090 = vcombine.low %v4409, %v4416
      %v5091 = vcombine.low %v4423, %v4430
      %v5093 = vunpack.c.l.s4 1983009808
      %v5094 = vunpack.c.0.s8 %v5093
      %v5095 = vlaneseq
      %v5096 = vshrl.u32 %v5095, 7
      %v5097 = vsub.s32 %v5094, %v5096
      %v5098 = vrot.slane %v5090, %v5097
      %v5100 = vunpack.c.l.s4 1983009808
      %v5101 = vunpack.c.0.s8 %v5100
      %v5102 = vlaneseq
      %v5103 = vshrl.u32 %v5102, 7
      %v5104 = vsub.s32 %v5101, %v5103
      %v5105 = vrot.slane %v5091, %v5104
      %v5106 = vcombine.low %v5098, %v5105
      %v5107 = vcombine.low %v4437, %v4444
      %v5108 = vcombine.low %v4451, %v4458
      %v5110 = vunpack.c.l.s4 1983009808
      %v5111 = vunpack.c.0.s8 %v5110
      %v5112 = vlaneseq
      %v5113 = vshrl.u32 %v5112, 7
      %v5114 = vsub.s32 %v5111, %v5113
      %v5115 = vrot.slane %v5107, %v5114
      %v5117 = vunpack.c.l.s4 1983009808
      %v5118 = vunpack.c.0.s8 %v5117
      %v5119 = vlaneseq
      %v5120 = vshrl.u32 %v5119, 7
      %v5121 = vsub.s32 %v5118, %v5120
      %v5122 = vrot.slane %v5108, %v5121
      %v5123 = vcombine.low %v5115, %v5122
      %v5124 = vcombine.low %v4465, %v4472
      %v5125 = vcombine.low %v4479, %v4486
      %v5127 = vunpack.c.l.s4 1983009808
      %v5128 = vunpack.c.0.s8 %v5127
      %v5129 = vlaneseq
      %v5130 = vshrl.u32 %v5129, 7
      %v5131 = vsub.s32 %v5128, %v5130
      %v5132 = vrot.slane %v5124, %v5131
      %v5134 = vunpack.c.l.s4 1983009808
      %v5135 = vunpack.c.0.s8 %v5134
      %v5136 = vlaneseq
      %v5137 = vshrl.u32 %v5136, 7
      %v5138 = vsub.s32 %v5135, %v5137
      %v5139 = vrot.slane %v5125, %v5138
      %v5140 = vcombine.low %v5132, %v5139
      %v5141 = vcombine.low %v4493, %v4500
      %v5142 = vcombine.low %v4507, %v4514
      %v5144 = vunpack.c.l.s4 1983009808
      %v5145 = vunpack.c.0.s8 %v5144
      %v5146 = vlaneseq
      %v5147 = vshrl.u32 %v5146, 7
      %v5148 = vsub.s32 %v5145, %v5147
      %v5149 = vrot.slane %v5141, %v5148
      %v5151 = vunpack.c.l.s4 1983009808
      %v5152 = vunpack.c.0.s8 %v5151
      %v5153 = vlaneseq
      %v5154 = vshrl.u32 %v5153, 7
      %v5155 = vsub.s32 %v5152, %v5154
      %v5156 = vrot.slane %v5142, %v5155
      %v5157 = vcombine.low %v5149, %v5156
      %v5158 = vcombine.low %v4521, %v4528
      %v5159 = vcombine.low %v4535, %v4542
      %v5161 = vunpack.c.l.s4 1983009808
      %v5162 = vunpack.c.0.s8 %v5161
      %v5163 = vlaneseq
      %v5164 = vshrl.u32 %v5163, 7
      %v5165 = vsub.s32 %v5162, %v5164
      %v5166 = vrot.slane %v5158, %v5165
      %v5168 = vunpack.c.l.s4 1983009808
      %v5169 = vunpack.c.0.s8 %v5168
      %v5170 = vlaneseq
      %v5171 = vshrl.u32 %v5170, 7
      %v5172 = vsub.s32 %v5169, %v5171
      %v5173 = vrot.slane %v5159, %v5172
      %v5174 = vcombine.low %v5166, %v5173
      %v5175 = vcombine.low %v4549, %v4556
      %v5176 = vcombine.low %v4563, %v4570
      %v5178 = vunpack.c.l.s4 1983009808
      %v5179 = vunpack.c.0.s8 %v5178
      %v5180 = vlaneseq
      %v5181 = vshrl.u32 %v5180, 7
      %v5182 = vsub.s32 %v5179, %v5181
      %v5183 = vrot.slane %v5175, %v5182
      %v5185 = vunpack.c.l.s4 1983009808
      %v5186 = vunpack.c.0.s8 %v5185
      %v5187 = vlaneseq
      %v5188 = vshrl.u32 %v5187, 7
      %v5189 = vsub.s32 %v5186, %v5188
      %v5190 = vrot.slane %v5176, %v5189
      %v5191 = vcombine.low %v5183, %v5190
      %v5192 = vcombine.low %v4577, %v4584
      %v5193 = vcombine.low %v4591, %v4598
      %v5195 = vunpack.c.l.s4 1983009808
      %v5196 = vunpack.c.0.s8 %v5195
      %v5197 = vlaneseq
      %v5198 = vshrl.u32 %v5197, 7
      %v5199 = vsub.s32 %v5196, %v5198
      %v5200 = vrot.slane %v5192, %v5199
      %v5202 = vunpack.c.l.s4 1983009808
      %v5203 = vunpack.c.0.s8 %v5202
      %v5204 = vlaneseq
      %v5205 = vshrl.u32 %v5204, 7
      %v5206 = vsub.s32 %v5203, %v5205
      %v5207 = vrot.slane %v5193, %v5206
      %v5208 = vcombine.low %v5200, %v5207
      %v5209 = vcombine.low %v4605, %v4612
      %v5210 = vcombine.low %v4619, %v4626
      %v5212 = vunpack.c.l.s4 1983009808
      %v5213 = vunpack.c.0.s8 %v5212
      %v5214 = vlaneseq
      %v5215 = vshrl.u32 %v5214, 7
      %v5216 = vsub.s32 %v5213, %v5215
      %v5217 = vrot.slane %v5209, %v5216
      %v5219 = vunpack.c.l.s4 1983009808
      %v5220 = vunpack.c.0.s8 %v5219
      %v5221 = vlaneseq
      %v5222 = vshrl.u32 %v5221, 7
      %v5223 = vsub.s32 %v5220, %v5222
      %v5224 = vrot.slane %v5210, %v5223
      %v5225 = vcombine.low %v5217, %v5224
      %v5226 = vcombine.low %v4633, %v4640
      %v5227 = vcombine.low %v4647, %v4654
      %v5229 = vunpack.c.l.s4 1983009808
      %v5230 = vunpack.c.0.s8 %v5229
      %v5231 = vlaneseq
      %v5232 = vshrl.u32 %v5231, 7
      %v5233 = vsub.s32 %v5230, %v5232
      %v5234 = vrot.slane %v5226, %v5233
      %v5236 = vunpack.c.l.s4 1983009808
      %v5237 = vunpack.c.0.s8 %v5236
      %v5238 = vlaneseq
      %v5239 = vshrl.u32 %v5238, 7
      %v5240 = vsub.s32 %v5237, %v5239
      %v5241 = vrot.slane %v5227, %v5240
      %v5242 = vcombine.low %v5234, %v5241
      %v5243 = vcombine.low %v4661, %v4668
      %v5244 = vcombine.low %v4675, %v4682
      %v5246 = vunpack.c.l.s4 1983009808
      %v5247 = vunpack.c.0.s8 %v5246
      %v5248 = vlaneseq
      %v5249 = vshrl.u32 %v5248, 7
      %v5250 = vsub.s32 %v5247, %v5249
      %v5251 = vrot.slane %v5243, %v5250
      %v5253 = vunpack.c.l.s4 1983009808
      %v5254 = vunpack.c.0.s8 %v5253
      %v5255 = vlaneseq
      %v5256 = vshrl.u32 %v5255, 7
      %v5257 = vsub.s32 %v5254, %v5256
      %v5258 = vrot.slane %v5244, %v5257
      %v5259 = vcombine.low %v5251, %v5258
      %v5260 = vcombine.low %v4689, %v4696
      %v5261 = vcombine.low %v4703, %v4710
      %v5263 = vunpack.c.l.s4 1983009808
      %v5264 = vunpack.c.0.s8 %v5263
      %v5265 = vlaneseq
      %v5266 = vshrl.u32 %v5265, 7
      %v5267 = vsub.s32 %v5264, %v5266
      %v5268 = vrot.slane %v5260, %v5267
      %v5270 = vunpack.c.l.s4 1983009808
      %v5271 = vunpack.c.0.s8 %v5270
      %v5272 = vlaneseq
      %v5273 = vshrl.u32 %v5272, 7
      %v5274 = vsub.s32 %v5271, %v5273
      %v5275 = vrot.slane %v5261, %v5274
      %v5276 = vcombine.low %v5268, %v5275
      %v5277 = vcombine.low %v4717, %v4724
      %v5278 = vcombine.low %v4731, %v4738
      %v5280 = vunpack.c.l.s4 1983009808
      %v5281 = vunpack.c.0.s8 %v5280
      %v5282 = vlaneseq
      %v5283 = vshrl.u32 %v5282, 7
      %v5284 = vsub.s32 %v5281, %v5283
      %v5285 = vrot.slane %v5277, %v5284
      %v5287 = vunpack.c.l.s4 1983009808
      %v5288 = vunpack.c.0.s8 %v5287
      %v5289 = vlaneseq
      %v5290 = vshrl.u32 %v5289, 7
      %v5291 = vsub.s32 %v5288, %v5290
      %v5292 = vrot.slane %v5278, %v5291
      %v5293 = vcombine.low %v5285, %v5292
      %v5294 = vcombine.low %v4745, %v4752
      %v5295 = vcombine.low %v4759, %v4766
      %v5297 = vunpack.c.l.s4 1983009808
      %v5298 = vunpack.c.0.s8 %v5297
      %v5299 = vlaneseq
      %v5300 = vshrl.u32 %v5299, 7
      %v5301 = vsub.s32 %v5298, %v5300
      %v5302 = vrot.slane %v5294, %v5301
      %v5304 = vunpack.c.l.s4 1983009808
      %v5305 = vunpack.c.0.s8 %v5304
      %v5306 = vlaneseq
      %v5307 = vshrl.u32 %v5306, 7
      %v5308 = vsub.s32 %v5305, %v5307
      %v5309 = vrot.slane %v5295, %v5308
      %v5310 = vcombine.low %v5302, %v5309
      %5311 = vset.pattern.permute.xlu0 0
      %5312 = vperm.xlu0 %5311, %v4783
      %v5313 = vpop.permute.xlu0 %5312
      %5314 = vset.pattern.permute.xlu0 0
      %5315 = vperm.xlu0 %5314, %v4800
      %v5316 = vpop.permute.xlu0 %5315
      %5317 = vset.pattern.permute.xlu0 0
      %5318 = vperm.xlu0 %5317, %v4817
      %v5319 = vpop.permute.xlu0 %5318
      %5320 = vset.pattern.permute.xlu0 0
      %5321 = vperm.xlu0 %5320, %v4834
      %v5322 = vpop.permute.xlu0 %5321
      %5323 = vset.pattern.permute.xlu0 0
      %5324 = vperm.xlu0 %5323, %v4851
      %v5325 = vpop.permute.xlu0 %5324
      %5326 = vset.pattern.permute.xlu0 0
      %5327 = vperm.xlu0 %5326, %v4868
      %v5328 = vpop.permute.xlu0 %5327
      %5329 = vset.pattern.permute.xlu0 0
      %5330 = vperm.xlu0 %5329, %v4885
      %v5331 = vpop.permute.xlu0 %5330
      %5332 = vset.pattern.permute.xlu0 0
      %5333 = vperm.xlu0 %5332, %v4902
      %v5334 = vpop.permute.xlu0 %5333
      %5335 = vset.pattern.permute.xlu0 0
      %5336 = vperm.xlu0 %5335, %v4919
      %v5337 = vpop.permute.xlu0 %5336
      %5338 = vset.pattern.permute.xlu0 0
      %5339 = vperm.xlu0 %5338, %v4936
      %v5340 = vpop.permute.xlu0 %5339
      %5341 = vset.pattern.permute.xlu0 0
      %5342 = vperm.xlu0 %5341, %v4953
      %v5343 = vpop.permute.xlu0 %5342
      %5344 = vset.pattern.permute.xlu0 0
      %5345 = vperm.xlu0 %5344, %v4970
      %v5346 = vpop.permute.xlu0 %5345
      %5347 = vset.pattern.permute.xlu0 0
      %5348 = vperm.xlu0 %5347, %v4987
      %v5349 = vpop.permute.xlu0 %5348
      %5350 = vset.pattern.permute.xlu0 0
      %5351 = vperm.xlu0 %5350, %v5004
      %v5352 = vpop.permute.xlu0 %5351
      %5353 = vset.pattern.permute.xlu0 0
      %5354 = vperm.xlu0 %5353, %v5021
      %v5355 = vpop.permute.xlu0 %5354
      %5356 = vset.pattern.permute.xlu0 0
      %5357 = vperm.xlu0 %5356, %v5038
      %v5358 = vpop.permute.xlu0 %5357
      %5359 = vset.pattern.permute.xlu0 0
      %5360 = vperm.xlu0 %5359, %v5055
      %v5361 = vpop.permute.xlu0 %5360
      %5362 = vset.pattern.permute.xlu0 0
      %5363 = vperm.xlu0 %5362, %v5072
      %v5364 = vpop.permute.xlu0 %5363
      %5365 = vset.pattern.permute.xlu0 0
      %5366 = vperm.xlu0 %5365, %v5089
      %v5367 = vpop.permute.xlu0 %5366
      %5368 = vset.pattern.permute.xlu0 0
      %5369 = vperm.xlu0 %5368, %v5106
      %v5370 = vpop.permute.xlu0 %5369
      %5371 = vset.pattern.permute.xlu0 0
      %5372 = vperm.xlu0 %5371, %v5123
      %v5373 = vpop.permute.xlu0 %5372
      %5374 = vset.pattern.permute.xlu0 0
      %5375 = vperm.xlu0 %5374, %v5140
      %v5376 = vpop.permute.xlu0 %5375
      %5377 = vset.pattern.permute.xlu0 0
      %5378 = vperm.xlu0 %5377, %v5157
      %v5379 = vpop.permute.xlu0 %5378
      %5380 = vset.pattern.permute.xlu0 0
      %5381 = vperm.xlu0 %5380, %v5174
      %v5382 = vpop.permute.xlu0 %5381
      %5383 = vset.pattern.permute.xlu0 0
      %5384 = vperm.xlu0 %5383, %v5191
      %v5385 = vpop.permute.xlu0 %5384
      %5386 = vset.pattern.permute.xlu0 0
      %5387 = vperm.xlu0 %5386, %v5208
      %v5388 = vpop.permute.xlu0 %5387
      %5389 = vset.pattern.permute.xlu0 0
      %5390 = vperm.xlu0 %5389, %v5225
      %v5391 = vpop.permute.xlu0 %5390
      %5392 = vset.pattern.permute.xlu0 0
      %5393 = vperm.xlu0 %5392, %v5242
      %v5394 = vpop.permute.xlu0 %5393
      %5395 = vset.pattern.permute.xlu0 0
      %5396 = vperm.xlu0 %5395, %v5259
      %v5397 = vpop.permute.xlu0 %5396
      %5398 = vset.pattern.permute.xlu0 0
      %5399 = vperm.xlu0 %5398, %v5276
      %v5400 = vpop.permute.xlu0 %5399
      %5401 = vset.pattern.permute.xlu0 0
      %5402 = vperm.xlu0 %5401, %v5293
      %v5403 = vpop.permute.xlu0 %5402
      %5404 = vset.pattern.permute.xlu0 0
      %5405 = vperm.xlu0 %5404, %v5310
      %v5406 = vpop.permute.xlu0 %5405
      %v5407 = vlaneseq
      %v5408 = vshrl.u32 %v5407, 7
      %v5409 = vsub.s32 %v2735, %v5408
      %v5410 = vrot.slane %v5313, %v5409
      %v5411 = vlaneseq
      %v5412 = vshrl.u32 %v5411, 7
      %v5413 = vsub.s32 %v2740, %v5412
      %v5414 = vrot.slane %v5316, %v5413
      %v5415 = vsel %vm2745, %v5414, %v5410
      %v5416 = vlaneseq
      %v5417 = vshrl.u32 %v5416, 7
      %v5418 = vsub.s32 %v2747, %v5417
      %v5419 = vrot.slane %v5319, %v5418
      %v5420 = vsel %vm2752, %v5419, %v5415
      %v5421 = vlaneseq
      %v5422 = vshrl.u32 %v5421, 7
      %v5423 = vsub.s32 %v2754, %v5422
      %v5424 = vrot.slane %v5322, %v5423
      %v5425 = vsel %vm2759, %v5424, %v5420
      %v5426 = vlaneseq
      %v5427 = vshrl.u32 %v5426, 7
      %v5428 = vsub.s32 %v2761, %v5427
      %v5429 = vrot.slane %v5325, %v5428
      %v5430 = vsel %vm2766, %v5429, %v5425
      %v5431 = vlaneseq
      %v5432 = vshrl.u32 %v5431, 7
      %v5433 = vsub.s32 %v2768, %v5432
      %v5434 = vrot.slane %v5328, %v5433
      %v5435 = vsel %vm2773, %v5434, %v5430
      %v5436 = vlaneseq
      %v5437 = vshrl.u32 %v5436, 7
      %v5438 = vsub.s32 %v2775, %v5437
      %v5439 = vrot.slane %v5331, %v5438
      %v5440 = vsel %vm2780, %v5439, %v5435
      %v5441 = vlaneseq
      %v5442 = vshrl.u32 %v5441, 7
      %v5443 = vsub.s32 %v2782, %v5442
      %v5444 = vrot.slane %v5334, %v5443
      %v5445 = vsel %vm2787, %v5444, %v5440
      %v5446 = vlaneseq
      %v5447 = vshrl.u32 %v5446, 7
      %v5448 = vsub.s32 %v2789, %v5447
      %v5449 = vrot.slane %v5337, %v5448
      %v5450 = vsel %vm2794, %v5449, %v5445
      %v5451 = vlaneseq
      %v5452 = vshrl.u32 %v5451, 7
      %v5453 = vsub.s32 %v2796, %v5452
      %v5454 = vrot.slane %v5340, %v5453
      %v5455 = vsel %vm2801, %v5454, %v5450
      %v5456 = vlaneseq
      %v5457 = vshrl.u32 %v5456, 7
      %v5458 = vsub.s32 %v2803, %v5457
      %v5459 = vrot.slane %v5343, %v5458
      %v5460 = vsel %vm2808, %v5459, %v5455
      %v5461 = vlaneseq
      %v5462 = vshrl.u32 %v5461, 7
      %v5463 = vsub.s32 %v2810, %v5462
      %v5464 = vrot.slane %v5346, %v5463
      %v5465 = vsel %vm2815, %v5464, %v5460
      %v5466 = vlaneseq
      %v5467 = vshrl.u32 %v5466, 7
      %v5468 = vsub.s32 %v2817, %v5467
      %v5469 = vrot.slane %v5349, %v5468
      %v5470 = vsel %vm2822, %v5469, %v5465
      %v5471 = vlaneseq
      %v5472 = vshrl.u32 %v5471, 7
      %v5473 = vsub.s32 %v2824, %v5472
      %v5474 = vrot.slane %v5352, %v5473
      %v5475 = vsel %vm2829, %v5474, %v5470
      %v5476 = vlaneseq
      %v5477 = vshrl.u32 %v5476, 7
      %v5478 = vsub.s32 %v2831, %v5477
      %v5479 = vrot.slane %v5355, %v5478
      %v5480 = vsel %vm2836, %v5479, %v5475
      %v5481 = vlaneseq
      %v5482 = vshrl.u32 %v5481, 7
      %v5483 = vsub.s32 %v2838, %v5482
      %v5484 = vrot.slane %v5358, %v5483
      %v5485 = vsel %vm2843, %v5484, %v5480
      %v5486 = vlaneseq
      %v5487 = vshrl.u32 %v5486, 7
      %v5488 = vsub.s32 %v2735, %v5487
      %v5489 = vrot.slane %v5361, %v5488
      %v5490 = vlaneseq
      %v5491 = vshrl.u32 %v5490, 7
      %v5492 = vsub.s32 %v2740, %v5491
      %v5493 = vrot.slane %v5364, %v5492
      %v5494 = vsel %vm2745, %v5493, %v5489
      %v5495 = vlaneseq
      %v5496 = vshrl.u32 %v5495, 7
      %v5497 = vsub.s32 %v2747, %v5496
      %v5498 = vrot.slane %v5367, %v5497
      %v5499 = vsel %vm2752, %v5498, %v5494
      %v5500 = vlaneseq
      %v5501 = vshrl.u32 %v5500, 7
      %v5502 = vsub.s32 %v2754, %v5501
      %v5503 = vrot.slane %v5370, %v5502
      %v5504 = vsel %vm2759, %v5503, %v5499
      %v5505 = vlaneseq
      %v5506 = vshrl.u32 %v5505, 7
      %v5507 = vsub.s32 %v2761, %v5506
      %v5508 = vrot.slane %v5373, %v5507
      %v5509 = vsel %vm2766, %v5508, %v5504
      %v5510 = vlaneseq
      %v5511 = vshrl.u32 %v5510, 7
      %v5512 = vsub.s32 %v2768, %v5511
      %v5513 = vrot.slane %v5376, %v5512
      %v5514 = vsel %vm2773, %v5513, %v5509
      %v5515 = vlaneseq
      %v5516 = vshrl.u32 %v5515, 7
      %v5517 = vsub.s32 %v2775, %v5516
      %v5518 = vrot.slane %v5379, %v5517
      %v5519 = vsel %vm2780, %v5518, %v5514
      %v5520 = vlaneseq
      %v5521 = vshrl.u32 %v5520, 7
      %v5522 = vsub.s32 %v2782, %v5521
      %v5523 = vrot.slane %v5382, %v5522
      %v5524 = vsel %vm2787, %v5523, %v5519
      %v5525 = vlaneseq
      %v5526 = vshrl.u32 %v5525, 7
      %v5527 = vsub.s32 %v2789, %v5526
      %v5528 = vrot.slane %v5385, %v5527
      %v5529 = vsel %vm2794, %v5528, %v5524
      %v5530 = vlaneseq
      %v5531 = vshrl.u32 %v5530, 7
      %v5532 = vsub.s32 %v2796, %v5531
      %v5533 = vrot.slane %v5388, %v5532
      %v5534 = vsel %vm2801, %v5533, %v5529
      %v5535 = vlaneseq
      %v5536 = vshrl.u32 %v5535, 7
      %v5537 = vsub.s32 %v2803, %v5536
      %v5538 = vrot.slane %v5391, %v5537
      %v5539 = vsel %vm2808, %v5538, %v5534
      %v5540 = vlaneseq
      %v5541 = vshrl.u32 %v5540, 7
      %v5542 = vsub.s32 %v2810, %v5541
      %v5543 = vrot.slane %v5394, %v5542
      %v5544 = vsel %vm2815, %v5543, %v5539
      %v5545 = vlaneseq
      %v5546 = vshrl.u32 %v5545, 7
      %v5547 = vsub.s32 %v2817, %v5546
      %v5548 = vrot.slane %v5397, %v5547
      %v5549 = vsel %vm2822, %v5548, %v5544
      %v5550 = vlaneseq
      %v5551 = vshrl.u32 %v5550, 7
      %v5552 = vsub.s32 %v2824, %v5551
      %v5553 = vrot.slane %v5400, %v5552
      %v5554 = vsel %vm2829, %v5553, %v5549
      %v5555 = vlaneseq
      %v5556 = vshrl.u32 %v5555, 7
      %v5557 = vsub.s32 %v2831, %v5556
      %v5558 = vrot.slane %v5403, %v5557
      %v5559 = vsel %vm2836, %v5558, %v5554
      %v5560 = vlaneseq
      %v5561 = vshrl.u32 %v5560, 7
      %v5562 = vsub.s32 %v2838, %v5561
      %v5563 = vrot.slane %v5406, %v5562
      %v5564 = vsel %vm2843, %v5563, %v5559
      %v5565 = vsel %vm2924, %v5564, %v5485
      %v5567 = vunpack.c.l.s4 1983009808
      %v5568 = vunpack.c.0.s8 %v5567
      %v5569 = vlaneseq
      %v5570 = vshrl.u32 %v5569, 7
      %v5571 = vsub.s32 %v5568, %v5570
      %v5572 = vrot.slane %v5565, %v5571
      %5574 = vst [vmem:[%s189 + $0x2] sm:$0x3] %v5572
      loop: start=0, step=1, limit=32
      $region51: #{kge_forward.1} parent=35 // loop_pre_header
        _
      $region52: #{kge_forward.1} parent=35 // loop_header
        %s5576 = sphi 0, %s5580
        %p5577 = scmp.ge.s32.totalorder %s5576, 32
      $region53: #{kge_forward.1} parent=35 // loop_header_branch
        %5579 = sbr.rel (%p5577) target = $region57
      $region54: #{kge_forward.1} parent=35 // loop_body
        %s5581 = smul.u32 %s5576, 4
        %s5582 = sadd.s32 %s191, 256
        %s5583 = sadd.s32 %s5582, %s5581
        %s5584 = sld [smem:[#allocation5 + %s5583]]
        %s5585 = sld [smem:[#allocation6 + %s5583]]
        %s5586 = scalar_lea.vmem %s5, %s5584
        %v5587 = vld [vmem:[%s5586] sm:$0x1]
        %s5588 = scalar_lea.vmem [#allocation2], %s5581
        %5589 = vst [vmem:[%s5588] sm:$0x1] %v5587
        %s5590 = scalar_lea.vmem %s5, %s5585
        %v5591 = vld [vmem:[%s5590] sm:$0x1]
        %s5592 = scalar_lea.vmem [#allocation3], %s5581
        %5593 = vst [vmem:[%s5592] sm:$0x1] %v5591
        %s5594 = sadd.s32 %s191, 1280
        %s5595 = sadd.s32 %s5594, %s5581
        %s5596 = sld [smem:[#allocation5 + %s5595]]
        %s5597 = sld [smem:[#allocation6 + %s5595]]
        %s5598 = scalar_lea.vmem %s5, %s5596
        %v5599 = vld [vmem:[%s5598] sm:$0x1]
        %s5600 = sadd.s32 %s5581, 128
        %s5601 = scalar_lea.vmem [#allocation2], %s5600
        %5602 = vst [vmem:[%s5601] sm:$0x1] %v5599
        %s5603 = scalar_lea.vmem %s5, %s5597
        %v5604 = vld [vmem:[%s5603] sm:$0x1]
        %s5605 = scalar_lea.vmem [#allocation3], %s5600
        %5606 = vst [vmem:[%s5605] sm:$0x1] %v5604
        %s5607 = sadd.s32 %s5581, 1
        %s5608 = sadd.s32 %s5582, %s5607
        %s5609 = sld [smem:[#allocation5 + %s5608]]
        %s5610 = sld [smem:[#allocation6 + %s5608]]
        %s5611 = scalar_lea.vmem %s5, %s5609
        %v5612 = vld [vmem:[%s5611] sm:$0x1]
        %s5613 = scalar_lea.vmem [#allocation2], %s5607
        %5614 = vst [vmem:[%s5613] sm:$0x1] %v5612
        %s5615 = scalar_lea.vmem %s5, %s5610
        %v5616 = vld [vmem:[%s5615] sm:$0x1]
        %s5617 = scalar_lea.vmem [#allocation3], %s5607
        %5618 = vst [vmem:[%s5617] sm:$0x1] %v5616
        %s5619 = sadd.s32 %s5594, %s5607
        %s5620 = sld [smem:[#allocation5 + %s5619]]
        %s5621 = sld [smem:[#allocation6 + %s5619]]
        %s5622 = scalar_lea.vmem %s5, %s5620
        %v5623 = vld [vmem:[%s5622] sm:$0x1]
        %s5624 = sadd.s32 %s5607, 128
        %s5625 = scalar_lea.vmem [#allocation2], %s5624
        %5626 = vst [vmem:[%s5625] sm:$0x1] %v5623
        %s5627 = scalar_lea.vmem %s5, %s5621
        %v5628 = vld [vmem:[%s5627] sm:$0x1]
        %s5629 = scalar_lea.vmem [#allocation3], %s5624
        %5630 = vst [vmem:[%s5629] sm:$0x1] %v5628
        %s5631 = sadd.s32 %s5581, 2
        %s5632 = sadd.s32 %s5582, %s5631
        %s5633 = sld [smem:[#allocation5 + %s5632]]
        %s5634 = sld [smem:[#allocation6 + %s5632]]
        %s5635 = scalar_lea.vmem %s5, %s5633
        %v5636 = vld [vmem:[%s5635] sm:$0x1]
        %s5637 = scalar_lea.vmem [#allocation2], %s5631
        %5638 = vst [vmem:[%s5637] sm:$0x1] %v5636
        %s5639 = scalar_lea.vmem %s5, %s5634
        %v5640 = vld [vmem:[%s5639] sm:$0x1]
        %s5641 = scalar_lea.vmem [#allocation3], %s5631
        %5642 = vst [vmem:[%s5641] sm:$0x1] %v5640
        %s5643 = sadd.s32 %s5594, %s5631
        %s5644 = sld [smem:[#allocation5 + %s5643]]
        %s5645 = sld [smem:[#allocation6 + %s5643]]
        %s5646 = scalar_lea.vmem %s5, %s5644
        %v5647 = vld [vmem:[%s5646] sm:$0x1]
        %s5648 = sadd.s32 %s5631, 128
        %s5649 = scalar_lea.vmem [#allocation2], %s5648
        %5650 = vst [vmem:[%s5649] sm:$0x1] %v5647
        %s5651 = scalar_lea.vmem %s5, %s5645
        %v5652 = vld [vmem:[%s5651] sm:$0x1]
        %s5653 = scalar_lea.vmem [#allocation3], %s5648
        %5654 = vst [vmem:[%s5653] sm:$0x1] %v5652
        %s5655 = sadd.s32 %s5581, 3
        %s5656 = sadd.s32 %s5582, %s5655
        %s5657 = sld [smem:[#allocation5 + %s5656]]
        %s5658 = sld [smem:[#allocation6 + %s5656]]
        %s5659 = scalar_lea.vmem %s5, %s5657
        %v5660 = vld [vmem:[%s5659] sm:$0x1]
        %s5661 = scalar_lea.vmem [#allocation2], %s5655
        %5662 = vst [vmem:[%s5661] sm:$0x1] %v5660
        %s5663 = scalar_lea.vmem %s5, %s5658
        %v5664 = vld [vmem:[%s5663] sm:$0x1]
        %s5665 = scalar_lea.vmem [#allocation3], %s5655
        %5666 = vst [vmem:[%s5665] sm:$0x1] %v5664
        %s5667 = sadd.s32 %s5594, %s5655
        %s5668 = sld [smem:[#allocation5 + %s5667]]
        %s5669 = sld [smem:[#allocation6 + %s5667]]
        %s5670 = scalar_lea.vmem %s5, %s5668
        %v5671 = vld [vmem:[%s5670] sm:$0x1]
        %s5672 = sadd.s32 %s5655, 128
        %s5673 = scalar_lea.vmem [#allocation2], %s5672
        %5674 = vst [vmem:[%s5673] sm:$0x1] %v5671
        %s5675 = scalar_lea.vmem %s5, %s5669
        %v5676 = vld [vmem:[%s5675] sm:$0x1]
        %s5677 = scalar_lea.vmem [#allocation3], %s5672
        %5678 = vst [vmem:[%s5677] sm:$0x1] %v5676
      $region55: #{kge_forward.1} parent=35 // loop_footer
        %s5580 = sadd.s32 1, %s5576
      $region56: #{kge_forward.1} parent=35 // loop_footer_branch
        %5575 = sbr.rel target = $region52
      $region57: #{kge_forward.1} parent=35 // loop_exit
        _
      %v5679 = vld [vmem:[#allocation2] sm:$0xff]
      %v5680 = vld [vmem:[#allocation2 + $0x8] sm:$0xff]
      %v5681 = vld [vmem:[#allocation2 + $0x10] sm:$0xff]
      %v5682 = vld [vmem:[#allocation2 + $0x18] sm:$0xff]
      %v5683 = vld [vmem:[#allocation2 + $0x20] sm:$0xff]
      %v5684 = vld [vmem:[#allocation2 + $0x28] sm:$0xff]
      %v5685 = vld [vmem:[#allocation2 + $0x30] sm:$0xff]
      %v5686 = vld [vmem:[#allocation2 + $0x38] sm:$0xff]
      %v5687 = vld [vmem:[#allocation2 + $0x40] sm:$0xff]
      %v5688 = vld [vmem:[#allocation2 + $0x48] sm:$0xff]
      %v5689 = vld [vmem:[#allocation2 + $0x50] sm:$0xff]
      %v5690 = vld [vmem:[#allocation2 + $0x58] sm:$0xff]
      %v5691 = vld [vmem:[#allocation2 + $0x60] sm:$0xff]
      %v5692 = vld [vmem:[#allocation2 + $0x68] sm:$0xff]
      %v5693 = vld [vmem:[#allocation2 + $0x70] sm:$0xff]
      %v5694 = vld [vmem:[#allocation2 + $0x78] sm:$0xff]
      %v5695 = vld [vmem:[#allocation2 + $0x80] sm:$0xff]
      %v5696 = vld [vmem:[#allocation2 + $0x88] sm:$0xff]
      %v5697 = vld [vmem:[#allocation2 + $0x90] sm:$0xff]
      %v5698 = vld [vmem:[#allocation2 + $0x98] sm:$0xff]
      %v5699 = vld [vmem:[#allocation2 + $0xa0] sm:$0xff]
      %v5700 = vld [vmem:[#allocation2 + $0xa8] sm:$0xff]
      %v5701 = vld [vmem:[#allocation2 + $0xb0] sm:$0xff]
      %v5702 = vld [vmem:[#allocation2 + $0xb8] sm:$0xff]
      %v5703 = vld [vmem:[#allocation2 + $0xc0] sm:$0xff]
      %v5704 = vld [vmem:[#allocation2 + $0xc8] sm:$0xff]
      %v5705 = vld [vmem:[#allocation2 + $0xd0] sm:$0xff]
      %v5706 = vld [vmem:[#allocation2 + $0xd8] sm:$0xff]
      %v5707 = vld [vmem:[#allocation2 + $0xe0] sm:$0xff]
      %v5708 = vld [vmem:[#allocation2 + $0xe8] sm:$0xff]
      %v5709 = vld [vmem:[#allocation2 + $0xf0] sm:$0xff]
      %v5710 = vld [vmem:[#allocation2 + $0xf8] sm:$0xff]
      %v5711 = vld [vmem:[#allocation3] sm:$0xff]
      %v5712 = vld [vmem:[#allocation3 + $0x8] sm:$0xff]
      %v5713 = vld [vmem:[#allocation3 + $0x10] sm:$0xff]
      %v5714 = vld [vmem:[#allocation3 + $0x18] sm:$0xff]
      %v5715 = vld [vmem:[#allocation3 + $0x20] sm:$0xff]
      %v5716 = vld [vmem:[#allocation3 + $0x28] sm:$0xff]
      %v5717 = vld [vmem:[#allocation3 + $0x30] sm:$0xff]
      %v5718 = vld [vmem:[#allocation3 + $0x38] sm:$0xff]
      %v5719 = vld [vmem:[#allocation3 + $0x40] sm:$0xff]
      %v5720 = vld [vmem:[#allocation3 + $0x48] sm:$0xff]
      %v5721 = vld [vmem:[#allocation3 + $0x50] sm:$0xff]
      %v5722 = vld [vmem:[#allocation3 + $0x58] sm:$0xff]
      %v5723 = vld [vmem:[#allocation3 + $0x60] sm:$0xff]
      %v5724 = vld [vmem:[#allocation3 + $0x68] sm:$0xff]
      %v5725 = vld [vmem:[#allocation3 + $0x70] sm:$0xff]
      %v5726 = vld [vmem:[#allocation3 + $0x78] sm:$0xff]
      %v5727 = vld [vmem:[#allocation3 + $0x80] sm:$0xff]
      %v5728 = vld [vmem:[#allocation3 + $0x88] sm:$0xff]
      %v5729 = vld [vmem:[#allocation3 + $0x90] sm:$0xff]
      %v5730 = vld [vmem:[#allocation3 + $0x98] sm:$0xff]
      %v5731 = vld [vmem:[#allocation3 + $0xa0] sm:$0xff]
      %v5732 = vld [vmem:[#allocation3 + $0xa8] sm:$0xff]
      %v5733 = vld [vmem:[#allocation3 + $0xb0] sm:$0xff]
      %v5734 = vld [vmem:[#allocation3 + $0xb8] sm:$0xff]
      %v5735 = vld [vmem:[#allocation3 + $0xc0] sm:$0xff]
      %v5736 = vld [vmem:[#allocation3 + $0xc8] sm:$0xff]
      %v5737 = vld [vmem:[#allocation3 + $0xd0] sm:$0xff]
      %v5738 = vld [vmem:[#allocation3 + $0xd8] sm:$0xff]
      %v5739 = vld [vmem:[#allocation3 + $0xe0] sm:$0xff]
      %v5740 = vld [vmem:[#allocation3 + $0xe8] sm:$0xff]
      %v5741 = vld [vmem:[#allocation3 + $0xf0] sm:$0xff]
      %v5742 = vld [vmem:[#allocation3 + $0xf8] sm:$0xff]
      %v5743 = vmul.f32 %v5679, %v413
      %v5744 = vmul.f32 %v5680, %v413
      %v5745 = vmul.f32 %v5681, %v413
      %v5746 = vmul.f32 %v5682, %v413
      %v5747 = vmul.f32 %v5683, %v413
      %v5748 = vmul.f32 %v5684, %v413
      %v5749 = vmul.f32 %v5685, %v413
      %v5750 = vmul.f32 %v5686, %v413
      %v5751 = vmul.f32 %v5687, %v413
      %v5752 = vmul.f32 %v5688, %v413
      %v5753 = vmul.f32 %v5689, %v413
      %v5754 = vmul.f32 %v5690, %v413
      %v5755 = vmul.f32 %v5691, %v413
      %v5756 = vmul.f32 %v5692, %v413
      %v5757 = vmul.f32 %v5693, %v413
      %v5758 = vmul.f32 %v5694, %v413
      %v5759 = vmul.f32 %v5695, %v417
      %v5760 = vmul.f32 %v5696, %v417
      %v5761 = vmul.f32 %v5697, %v417
      %v5762 = vmul.f32 %v5698, %v417
      %v5763 = vmul.f32 %v5699, %v417
      %v5764 = vmul.f32 %v5700, %v417
      %v5765 = vmul.f32 %v5701, %v417
      %v5766 = vmul.f32 %v5702, %v417
      %v5767 = vmul.f32 %v5703, %v417
      %v5768 = vmul.f32 %v5704, %v417
      %v5769 = vmul.f32 %v5705, %v417
      %v5770 = vmul.f32 %v5706, %v417
      %v5771 = vmul.f32 %v5707, %v417
      %v5772 = vmul.f32 %v5708, %v417
      %v5773 = vmul.f32 %v5709, %v417
      %v5774 = vmul.f32 %v5710, %v417
      %5775 = vadd.xlane.f32.xlu0 %v5743
      %v5776 = vpop.xlane.xlu0 %5775
      %5777 = vadd.xlane.f32.xlu0 %v5744
      %v5778 = vpop.xlane.xlu0 %5777
      %5779 = vadd.xlane.f32.xlu0 %v5745
      %v5780 = vpop.xlane.xlu0 %5779
      %5781 = vadd.xlane.f32.xlu0 %v5746
      %v5782 = vpop.xlane.xlu0 %5781
      %5783 = vadd.xlane.f32.xlu0 %v5747
      %v5784 = vpop.xlane.xlu0 %5783
      %5785 = vadd.xlane.f32.xlu0 %v5748
      %v5786 = vpop.xlane.xlu0 %5785
      %5787 = vadd.xlane.f32.xlu0 %v5749
      %v5788 = vpop.xlane.xlu0 %5787
      %5789 = vadd.xlane.f32.xlu0 %v5750
      %v5790 = vpop.xlane.xlu0 %5789
      %5791 = vadd.xlane.f32.xlu0 %v5751
      %v5792 = vpop.xlane.xlu0 %5791
      %5793 = vadd.xlane.f32.xlu0 %v5752
      %v5794 = vpop.xlane.xlu0 %5793
      %5795 = vadd.xlane.f32.xlu0 %v5753
      %v5796 = vpop.xlane.xlu0 %5795
      %5797 = vadd.xlane.f32.xlu0 %v5754
      %v5798 = vpop.xlane.xlu0 %5797
      %5799 = vadd.xlane.f32.xlu0 %v5755
      %v5800 = vpop.xlane.xlu0 %5799
      %5801 = vadd.xlane.f32.xlu0 %v5756
      %v5802 = vpop.xlane.xlu0 %5801
      %5803 = vadd.xlane.f32.xlu0 %v5757
      %v5804 = vpop.xlane.xlu0 %5803
      %5805 = vadd.xlane.f32.xlu0 %v5758
      %v5806 = vpop.xlane.xlu0 %5805
      %5807 = vadd.xlane.f32.xlu0 %v5759
      %v5808 = vpop.xlane.xlu0 %5807
      %5809 = vadd.xlane.f32.xlu0 %v5760
      %v5810 = vpop.xlane.xlu0 %5809
      %5811 = vadd.xlane.f32.xlu0 %v5761
      %v5812 = vpop.xlane.xlu0 %5811
      %5813 = vadd.xlane.f32.xlu0 %v5762
      %v5814 = vpop.xlane.xlu0 %5813
      %5815 = vadd.xlane.f32.xlu0 %v5763
      %v5816 = vpop.xlane.xlu0 %5815
      %5817 = vadd.xlane.f32.xlu0 %v5764
      %v5818 = vpop.xlane.xlu0 %5817
      %5819 = vadd.xlane.f32.xlu0 %v5765
      %v5820 = vpop.xlane.xlu0 %5819
      %5821 = vadd.xlane.f32.xlu0 %v5766
      %v5822 = vpop.xlane.xlu0 %5821
      %5823 = vadd.xlane.f32.xlu0 %v5767
      %v5824 = vpop.xlane.xlu0 %5823
      %5825 = vadd.xlane.f32.xlu0 %v5768
      %v5826 = vpop.xlane.xlu0 %5825
      %5827 = vadd.xlane.f32.xlu0 %v5769
      %v5828 = vpop.xlane.xlu0 %5827
      %5829 = vadd.xlane.f32.xlu0 %v5770
      %v5830 = vpop.xlane.xlu0 %5829
      %5831 = vadd.xlane.f32.xlu0 %v5771
      %v5832 = vpop.xlane.xlu0 %5831
      %5833 = vadd.xlane.f32.xlu0 %v5772
      %v5834 = vpop.xlane.xlu0 %5833
      %5835 = vadd.xlane.f32.xlu0 %v5773
      %v5836 = vpop.xlane.xlu0 %5835
      %5837 = vadd.xlane.f32.xlu0 %v5774
      %v5838 = vpop.xlane.xlu0 %5837
      %v5839 = vmul.f32 %v5711, %v519
      %v5840 = vmul.f32 %v5712, %v519
      %v5841 = vmul.f32 %v5713, %v519
      %v5842 = vmul.f32 %v5714, %v519
      %v5843 = vmul.f32 %v5715, %v519
      %v5844 = vmul.f32 %v5716, %v519
      %v5845 = vmul.f32 %v5717, %v519
      %v5846 = vmul.f32 %v5718, %v519
      %v5847 = vmul.f32 %v5719, %v519
      %v5848 = vmul.f32 %v5720, %v519
      %v5849 = vmul.f32 %v5721, %v519
      %v5850 = vmul.f32 %v5722, %v519
      %v5851 = vmul.f32 %v5723, %v519
      %v5852 = vmul.f32 %v5724, %v519
      %v5853 = vmul.f32 %v5725, %v519
      %v5854 = vmul.f32 %v5726, %v519
      %v5855 = vmul.f32 %v5727, %v523
      %v5856 = vmul.f32 %v5728, %v523
      %v5857 = vmul.f32 %v5729, %v523
      %v5858 = vmul.f32 %v5730, %v523
      %v5859 = vmul.f32 %v5731, %v523
      %v5860 = vmul.f32 %v5732, %v523
      %v5861 = vmul.f32 %v5733, %v523
      %v5862 = vmul.f32 %v5734, %v523
      %v5863 = vmul.f32 %v5735, %v523
      %v5864 = vmul.f32 %v5736, %v523
      %v5865 = vmul.f32 %v5737, %v523
      %v5866 = vmul.f32 %v5738, %v523
      %v5867 = vmul.f32 %v5739, %v523
      %v5868 = vmul.f32 %v5740, %v523
      %v5869 = vmul.f32 %v5741, %v523
      %v5870 = vmul.f32 %v5742, %v523
      %5871 = vadd.xlane.f32.xlu0 %v5839
      %v5872 = vpop.xlane.xlu0 %5871
      %5873 = vadd.xlane.f32.xlu0 %v5840
      %v5874 = vpop.xlane.xlu0 %5873
      %5875 = vadd.xlane.f32.xlu0 %v5841
      %v5876 = vpop.xlane.xlu0 %5875
      %5877 = vadd.xlane.f32.xlu0 %v5842
      %v5878 = vpop.xlane.xlu0 %5877
      %5879 = vadd.xlane.f32.xlu0 %v5843
      %v5880 = vpop.xlane.xlu0 %5879
      %5881 = vadd.xlane.f32.xlu0 %v5844
      %v5882 = vpop.xlane.xlu0 %5881
      %5883 = vadd.xlane.f32.xlu0 %v5845
      %v5884 = vpop.xlane.xlu0 %5883
      %5885 = vadd.xlane.f32.xlu0 %v5846
      %v5886 = vpop.xlane.xlu0 %5885
      %5887 = vadd.xlane.f32.xlu0 %v5847
      %v5888 = vpop.xlane.xlu0 %5887
      %5889 = vadd.xlane.f32.xlu0 %v5848
      %v5890 = vpop.xlane.xlu0 %5889
      %5891 = vadd.xlane.f32.xlu0 %v5849
      %v5892 = vpop.xlane.xlu0 %5891
      %5893 = vadd.xlane.f32.xlu0 %v5850
      %v5894 = vpop.xlane.xlu0 %5893
      %5895 = vadd.xlane.f32.xlu0 %v5851
      %v5896 = vpop.xlane.xlu0 %5895
      %5897 = vadd.xlane.f32.xlu0 %v5852
      %v5898 = vpop.xlane.xlu0 %5897
      %5899 = vadd.xlane.f32.xlu0 %v5853
      %v5900 = vpop.xlane.xlu0 %5899
      %5901 = vadd.xlane.f32.xlu0 %v5854
      %v5902 = vpop.xlane.xlu0 %5901
      %5903 = vadd.xlane.f32.xlu0 %v5855
      %v5904 = vpop.xlane.xlu0 %5903
      %5905 = vadd.xlane.f32.xlu0 %v5856
      %v5906 = vpop.xlane.xlu0 %5905
      %5907 = vadd.xlane.f32.xlu0 %v5857
      %v5908 = vpop.xlane.xlu0 %5907
      %5909 = vadd.xlane.f32.xlu0 %v5858
      %v5910 = vpop.xlane.xlu0 %5909
      %5911 = vadd.xlane.f32.xlu0 %v5859
      %v5912 = vpop.xlane.xlu0 %5911
      %5913 = vadd.xlane.f32.xlu0 %v5860
      %v5914 = vpop.xlane.xlu0 %5913
      %5915 = vadd.xlane.f32.xlu0 %v5861
      %v5916 = vpop.xlane.xlu0 %5915
      %5917 = vadd.xlane.f32.xlu0 %v5862
      %v5918 = vpop.xlane.xlu0 %5917
      %5919 = vadd.xlane.f32.xlu0 %v5863
      %v5920 = vpop.xlane.xlu0 %5919
      %5921 = vadd.xlane.f32.xlu0 %v5864
      %v5922 = vpop.xlane.xlu0 %5921
      %5923 = vadd.xlane.f32.xlu0 %v5865
      %v5924 = vpop.xlane.xlu0 %5923
      %5925 = vadd.xlane.f32.xlu0 %v5866
      %v5926 = vpop.xlane.xlu0 %5925
      %5927 = vadd.xlane.f32.xlu0 %v5867
      %v5928 = vpop.xlane.xlu0 %5927
      %5929 = vadd.xlane.f32.xlu0 %v5868
      %v5930 = vpop.xlane.xlu0 %5929
      %5931 = vadd.xlane.f32.xlu0 %v5869
      %v5932 = vpop.xlane.xlu0 %5931
      %5933 = vadd.xlane.f32.xlu0 %v5870
      %v5934 = vpop.xlane.xlu0 %5933
      %v5935 = vadd.f32 %v5776, %v5872
      %v5936 = vadd.f32 %v5778, %v5874
      %v5937 = vadd.f32 %v5780, %v5876
      %v5938 = vadd.f32 %v5782, %v5878
      %v5939 = vadd.f32 %v5784, %v5880
      %v5940 = vadd.f32 %v5786, %v5882
      %v5941 = vadd.f32 %v5788, %v5884
      %v5942 = vadd.f32 %v5790, %v5886
      %v5943 = vadd.f32 %v5792, %v5888
      %v5944 = vadd.f32 %v5794, %v5890
      %v5945 = vadd.f32 %v5796, %v5892
      %v5946 = vadd.f32 %v5798, %v5894
      %v5947 = vadd.f32 %v5800, %v5896
      %v5948 = vadd.f32 %v5802, %v5898
      %v5949 = vadd.f32 %v5804, %v5900
      %v5950 = vadd.f32 %v5806, %v5902
      %v5951 = vadd.f32 %v5808, %v5904
      %v5952 = vadd.f32 %v5810, %v5906
      %v5953 = vadd.f32 %v5812, %v5908
      %v5954 = vadd.f32 %v5814, %v5910
      %v5955 = vadd.f32 %v5816, %v5912
      %v5956 = vadd.f32 %v5818, %v5914
      %v5957 = vadd.f32 %v5820, %v5916
      %v5958 = vadd.f32 %v5822, %v5918
      %v5959 = vadd.f32 %v5824, %v5920
      %v5960 = vadd.f32 %v5826, %v5922
      %v5961 = vadd.f32 %v5828, %v5924
      %v5962 = vadd.f32 %v5830, %v5926
      %v5963 = vadd.f32 %v5832, %v5928
      %v5964 = vadd.f32 %v5834, %v5930
      %v5965 = vadd.f32 %v5836, %v5932
      %v5966 = vadd.f32 %v5838, %v5934
      %v5967 = vsub.f32 0.0, %v5935
      %v5968 = vsub.f32 0.0, %v5936
      %v5969 = vsub.f32 0.0, %v5937
      %v5970 = vsub.f32 0.0, %v5938
      %v5971 = vsub.f32 0.0, %v5939
      %v5972 = vsub.f32 0.0, %v5940
      %v5973 = vsub.f32 0.0, %v5941
      %v5974 = vsub.f32 0.0, %v5942
      %v5975 = vsub.f32 0.0, %v5943
      %v5976 = vsub.f32 0.0, %v5944
      %v5977 = vsub.f32 0.0, %v5945
      %v5978 = vsub.f32 0.0, %v5946
      %v5979 = vsub.f32 0.0, %v5947
      %v5980 = vsub.f32 0.0, %v5948
      %v5981 = vsub.f32 0.0, %v5949
      %v5982 = vsub.f32 0.0, %v5950
      %v5983 = vsub.f32 0.0, %v5951
      %v5984 = vsub.f32 0.0, %v5952
      %v5985 = vsub.f32 0.0, %v5953
      %v5986 = vsub.f32 0.0, %v5954
      %v5987 = vsub.f32 0.0, %v5955
      %v5988 = vsub.f32 0.0, %v5956
      %v5989 = vsub.f32 0.0, %v5957
      %v5990 = vsub.f32 0.0, %v5958
      %v5991 = vsub.f32 0.0, %v5959
      %v5992 = vsub.f32 0.0, %v5960
      %v5993 = vsub.f32 0.0, %v5961
      %v5994 = vsub.f32 0.0, %v5962
      %v5995 = vsub.f32 0.0, %v5963
      %v5996 = vsub.f32 0.0, %v5964
      %v5997 = vsub.f32 0.0, %v5965
      %v5998 = vsub.f32 0.0, %v5966
      %v5999 = vmin.f32 %v5967, 0.0
      %v6000 = vmin.f32 %v5968, 0.0
      %v6001 = vmin.f32 %v5969, 0.0
      %v6002 = vmin.f32 %v5970, 0.0
      %v6003 = vmin.f32 %v5971, 0.0
      %v6004 = vmin.f32 %v5972, 0.0
      %v6005 = vmin.f32 %v5973, 0.0
      %v6006 = vmin.f32 %v5974, 0.0
      %v6007 = vmin.f32 %v5975, 0.0
      %v6008 = vmin.f32 %v5976, 0.0
      %v6009 = vmin.f32 %v5977, 0.0
      %v6010 = vmin.f32 %v5978, 0.0
      %v6011 = vmin.f32 %v5979, 0.0
      %v6012 = vmin.f32 %v5980, 0.0
      %v6013 = vmin.f32 %v5981, 0.0
      %v6014 = vmin.f32 %v5982, 0.0
      %v6015 = vmin.f32 %v5983, 0.0
      %v6016 = vmin.f32 %v5984, 0.0
      %v6017 = vmin.f32 %v5985, 0.0
      %v6018 = vmin.f32 %v5986, 0.0
      %v6019 = vmin.f32 %v5987, 0.0
      %v6020 = vmin.f32 %v5988, 0.0
      %v6021 = vmin.f32 %v5989, 0.0
      %v6022 = vmin.f32 %v5990, 0.0
      %v6023 = vmin.f32 %v5991, 0.0
      %v6024 = vmin.f32 %v5992, 0.0
      %v6025 = vmin.f32 %v5993, 0.0
      %v6026 = vmin.f32 %v5994, 0.0
      %v6027 = vmin.f32 %v5995, 0.0
      %v6028 = vmin.f32 %v5996, 0.0
      %v6029 = vmin.f32 %v5997, 0.0
      %v6030 = vmin.f32 %v5998, 0.0
      %v6031 = vand.u32 2147483647, %v5967
      %v6032 = vand.u32 2147483647, %v5968
      %v6033 = vand.u32 2147483647, %v5969
      %v6034 = vand.u32 2147483647, %v5970
      %v6035 = vand.u32 2147483647, %v5971
      %v6036 = vand.u32 2147483647, %v5972
      %v6037 = vand.u32 2147483647, %v5973
      %v6038 = vand.u32 2147483647, %v5974
      %v6039 = vand.u32 2147483647, %v5975
      %v6040 = vand.u32 2147483647, %v5976
      %v6041 = vand.u32 2147483647, %v5977
      %v6042 = vand.u32 2147483647, %v5978
      %v6043 = vand.u32 2147483647, %v5979
      %v6044 = vand.u32 2147483647, %v5980
      %v6045 = vand.u32 2147483647, %v5981
      %v6046 = vand.u32 2147483647, %v5982
      %v6047 = vand.u32 2147483647, %v5983
      %v6048 = vand.u32 2147483647, %v5984
      %v6049 = vand.u32 2147483647, %v5985
      %v6050 = vand.u32 2147483647, %v5986
      %v6051 = vand.u32 2147483647, %v5987
      %v6052 = vand.u32 2147483647, %v5988
      %v6053 = vand.u32 2147483647, %v5989
      %v6054 = vand.u32 2147483647, %v5990
      %v6055 = vand.u32 2147483647, %v5991
      %v6056 = vand.u32 2147483647, %v5992
      %v6057 = vand.u32 2147483647, %v5993
      %v6058 = vand.u32 2147483647, %v5994
      %v6059 = vand.u32 2147483647, %v5995
      %v6060 = vand.u32 2147483647, %v5996
      %v6061 = vand.u32 2147483647, %v5997
      %v6062 = vand.u32 2147483647, %v5998
      %v6063 = vsub.f32 0.0, %v6031
      %v6064 = vsub.f32 0.0, %v6032
      %v6065 = vsub.f32 0.0, %v6033
      %v6066 = vsub.f32 0.0, %v6034
      %v6067 = vsub.f32 0.0, %v6035
      %v6068 = vsub.f32 0.0, %v6036
      %v6069 = vsub.f32 0.0, %v6037
      %v6070 = vsub.f32 0.0, %v6038
      %v6071 = vsub.f32 0.0, %v6039
      %v6072 = vsub.f32 0.0, %v6040
      %v6073 = vsub.f32 0.0, %v6041
      %v6074 = vsub.f32 0.0, %v6042
      %v6075 = vsub.f32 0.0, %v6043
      %v6076 = vsub.f32 0.0, %v6044
      %v6077 = vsub.f32 0.0, %v6045
      %v6078 = vsub.f32 0.0, %v6046
      %v6079 = vsub.f32 0.0, %v6047
      %v6080 = vsub.f32 0.0, %v6048
      %v6081 = vsub.f32 0.0, %v6049
      %v6082 = vsub.f32 0.0, %v6050
      %v6083 = vsub.f32 0.0, %v6051
      %v6084 = vsub.f32 0.0, %v6052
      %v6085 = vsub.f32 0.0, %v6053
      %v6086 = vsub.f32 0.0, %v6054
      %v6087 = vsub.f32 0.0, %v6055
      %v6088 = vsub.f32 0.0, %v6056
      %v6089 = vsub.f32 0.0, %v6057
      %v6090 = vsub.f32 0.0, %v6058
      %v6091 = vsub.f32 0.0, %v6059
      %v6092 = vsub.f32 0.0, %v6060
      %v6093 = vsub.f32 0.0, %v6061
      %v6094 = vsub.f32 0.0, %v6062
      %v6095 = vmul.f32 %v6063, 1.442695
      %v6096 = vpow.pop %v6095
      %v6097 = vmul.f32 %v6064, 1.442695
      %v6098 = vpow.pop %v6097
      %v6099 = vmul.f32 %v6065, 1.442695
      %v6100 = vpow.pop %v6099
      %v6101 = vmul.f32 %v6066, 1.442695
      %v6102 = vpow.pop %v6101
      %v6103 = vmul.f32 %v6067, 1.442695
      %v6104 = vpow.pop %v6103
      %v6105 = vmul.f32 %v6068, 1.442695
      %v6106 = vpow.pop %v6105
      %v6107 = vmul.f32 %v6069, 1.442695
      %v6108 = vpow.pop %v6107
      %v6109 = vmul.f32 %v6070, 1.442695
      %v6110 = vpow.pop %v6109
      %v6111 = vmul.f32 %v6071, 1.442695
      %v6112 = vpow.pop %v6111
      %v6113 = vmul.f32 %v6072, 1.442695
      %v6114 = vpow.pop %v6113
      %v6115 = vmul.f32 %v6073, 1.442695
      %v6116 = vpow.pop %v6115
      %v6117 = vmul.f32 %v6074, 1.442695
      %v6118 = vpow.pop %v6117
      %v6119 = vmul.f32 %v6075, 1.442695
      %v6120 = vpow.pop %v6119
      %v6121 = vmul.f32 %v6076, 1.442695
      %v6122 = vpow.pop %v6121
      %v6123 = vmul.f32 %v6077, 1.442695
      %v6124 = vpow.pop %v6123
      %v6125 = vmul.f32 %v6078, 1.442695
      %v6126 = vpow.pop %v6125
      %v6127 = vmul.f32 %v6079, 1.442695
      %v6128 = vpow.pop %v6127
      %v6129 = vmul.f32 %v6080, 1.442695
      %v6130 = vpow.pop %v6129
      %v6131 = vmul.f32 %v6081, 1.442695
      %v6132 = vpow.pop %v6131
      %v6133 = vmul.f32 %v6082, 1.442695
      %v6134 = vpow.pop %v6133
      %v6135 = vmul.f32 %v6083, 1.442695
      %v6136 = vpow.pop %v6135
      %v6137 = vmul.f32 %v6084, 1.442695
      %v6138 = vpow.pop %v6137
      %v6139 = vmul.f32 %v6085, 1.442695
      %v6140 = vpow.pop %v6139
      %v6141 = vmul.f32 %v6086, 1.442695
      %v6142 = vpow.pop %v6141
      %v6143 = vmul.f32 %v6087, 1.442695
      %v6144 = vpow.pop %v6143
      %v6145 = vmul.f32 %v6088, 1.442695
      %v6146 = vpow.pop %v6145
      %v6147 = vmul.f32 %v6089, 1.442695
      %v6148 = vpow.pop %v6147
      %v6149 = vmul.f32 %v6090, 1.442695
      %v6150 = vpow.pop %v6149
      %v6151 = vmul.f32 %v6091, 1.442695
      %v6152 = vpow.pop %v6151
      %v6153 = vmul.f32 %v6092, 1.442695
      %v6154 = vpow.pop %v6153
      %v6155 = vmul.f32 %v6093, 1.442695
      %v6156 = vpow.pop %v6155
      %v6157 = vmul.f32 %v6094, 1.442695
      %v6158 = vpow.pop %v6157
      %v6159 = vadd.f32 %v6096, 1.0
      %v6160 = vlog2.pop %v6159
      %v6161 = vmul.f32 %v6160, 0.6931472
      %v6162 = vmul.f32 -0.5, %v6096
      %v6163 = vadd.f32 %v6162, 1.0
      %v6164 = vmul.f32 %v6163, %v6096
      %v6165 = vand.u32 2147483647, %v6096
      %vm6166 = vcmp.lt.f32.partialorder %v6165, 0.0004427343
      %v6167 = vsel %vm6166, %v6164, %v6161
      %v6168 = vadd.f32 %v6098, 1.0
      %v6169 = vlog2.pop %v6168
      %v6170 = vmul.f32 %v6169, 0.6931472
      %v6171 = vmul.f32 -0.5, %v6098
      %v6172 = vadd.f32 %v6171, 1.0
      %v6173 = vmul.f32 %v6172, %v6098
      %v6174 = vand.u32 2147483647, %v6098
      %vm6175 = vcmp.lt.f32.partialorder %v6174, 0.0004427343
      %v6176 = vsel %vm6175, %v6173, %v6170
      %v6177 = vadd.f32 %v6100, 1.0
      %v6178 = vlog2.pop %v6177
      %v6179 = vmul.f32 %v6178, 0.6931472
      %v6180 = vmul.f32 -0.5, %v6100
      %v6181 = vadd.f32 %v6180, 1.0
      %v6182 = vmul.f32 %v6181, %v6100
      %v6183 = vand.u32 2147483647, %v6100
      %vm6184 = vcmp.lt.f32.partialorder %v6183, 0.0004427343
      %v6185 = vsel %vm6184, %v6182, %v6179
      %v6186 = vadd.f32 %v6102, 1.0
      %v6187 = vlog2.pop %v6186
      %v6188 = vmul.f32 %v6187, 0.6931472
      %v6189 = vmul.f32 -0.5, %v6102
      %v6190 = vadd.f32 %v6189, 1.0
      %v6191 = vmul.f32 %v6190, %v6102
      %v6192 = vand.u32 2147483647, %v6102
      %vm6193 = vcmp.lt.f32.partialorder %v6192, 0.0004427343
      %v6194 = vsel %vm6193, %v6191, %v6188
      %v6195 = vadd.f32 %v6104, 1.0
      %v6196 = vlog2.pop %v6195
      %v6197 = vmul.f32 %v6196, 0.6931472
      %v6198 = vmul.f32 -0.5, %v6104
      %v6199 = vadd.f32 %v6198, 1.0
      %v6200 = vmul.f32 %v6199, %v6104
      %v6201 = vand.u32 2147483647, %v6104
      %vm6202 = vcmp.lt.f32.partialorder %v6201, 0.0004427343
      %v6203 = vsel %vm6202, %v6200, %v6197
      %v6204 = vadd.f32 %v6106, 1.0
      %v6205 = vlog2.pop %v6204
      %v6206 = vmul.f32 %v6205, 0.6931472
      %v6207 = vmul.f32 -0.5, %v6106
      %v6208 = vadd.f32 %v6207, 1.0
      %v6209 = vmul.f32 %v6208, %v6106
      %v6210 = vand.u32 2147483647, %v6106
      %vm6211 = vcmp.lt.f32.partialorder %v6210, 0.0004427343
      %v6212 = vsel %vm6211, %v6209, %v6206
      %v6213 = vadd.f32 %v6108, 1.0
      %v6214 = vlog2.pop %v6213
      %v6215 = vmul.f32 %v6214, 0.6931472
      %v6216 = vmul.f32 -0.5, %v6108
      %v6217 = vadd.f32 %v6216, 1.0
      %v6218 = vmul.f32 %v6217, %v6108
      %v6219 = vand.u32 2147483647, %v6108
      %vm6220 = vcmp.lt.f32.partialorder %v6219, 0.0004427343
      %v6221 = vsel %vm6220, %v6218, %v6215
      %v6222 = vadd.f32 %v6110, 1.0
      %v6223 = vlog2.pop %v6222
      %v6224 = vmul.f32 %v6223, 0.6931472
      %v6225 = vmul.f32 -0.5, %v6110
      %v6226 = vadd.f32 %v6225, 1.0
      %v6227 = vmul.f32 %v6226, %v6110
      %v6228 = vand.u32 2147483647, %v6110
      %vm6229 = vcmp.lt.f32.partialorder %v6228, 0.0004427343
      %v6230 = vsel %vm6229, %v6227, %v6224
      %v6231 = vadd.f32 %v6112, 1.0
      %v6232 = vlog2.pop %v6231
      %v6233 = vmul.f32 %v6232, 0.6931472
      %v6234 = vmul.f32 -0.5, %v6112
      %v6235 = vadd.f32 %v6234, 1.0
      %v6236 = vmul.f32 %v6235, %v6112
      %v6237 = vand.u32 2147483647, %v6112
      %vm6238 = vcmp.lt.f32.partialorder %v6237, 0.0004427343
      %v6239 = vsel %vm6238, %v6236, %v6233
      %v6240 = vadd.f32 %v6114, 1.0
      %v6241 = vlog2.pop %v6240
      %v6242 = vmul.f32 %v6241, 0.6931472
      %v6243 = vmul.f32 -0.5, %v6114
      %v6244 = vadd.f32 %v6243, 1.0
      %v6245 = vmul.f32 %v6244, %v6114
      %v6246 = vand.u32 2147483647, %v6114
      %vm6247 = vcmp.lt.f32.partialorder %v6246, 0.0004427343
      %v6248 = vsel %vm6247, %v6245, %v6242
      %v6249 = vadd.f32 %v6116, 1.0
      %v6250 = vlog2.pop %v6249
      %v6251 = vmul.f32 %v6250, 0.6931472
      %v6252 = vmul.f32 -0.5, %v6116
      %v6253 = vadd.f32 %v6252, 1.0
      %v6254 = vmul.f32 %v6253, %v6116
      %v6255 = vand.u32 2147483647, %v6116
      %vm6256 = vcmp.lt.f32.partialorder %v6255, 0.0004427343
      %v6257 = vsel %vm6256, %v6254, %v6251
      %v6258 = vadd.f32 %v6118, 1.0
      %v6259 = vlog2.pop %v6258
      %v6260 = vmul.f32 %v6259, 0.6931472
      %v6261 = vmul.f32 -0.5, %v6118
      %v6262 = vadd.f32 %v6261, 1.0
      %v6263 = vmul.f32 %v6262, %v6118
      %v6264 = vand.u32 2147483647, %v6118
      %vm6265 = vcmp.lt.f32.partialorder %v6264, 0.0004427343
      %v6266 = vsel %vm6265, %v6263, %v6260
      %v6267 = vadd.f32 %v6120, 1.0
      %v6268 = vlog2.pop %v6267
      %v6269 = vmul.f32 %v6268, 0.6931472
      %v6270 = vmul.f32 -0.5, %v6120
      %v6271 = vadd.f32 %v6270, 1.0
      %v6272 = vmul.f32 %v6271, %v6120
      %v6273 = vand.u32 2147483647, %v6120
      %vm6274 = vcmp.lt.f32.partialorder %v6273, 0.0004427343
      %v6275 = vsel %vm6274, %v6272, %v6269
      %v6276 = vadd.f32 %v6122, 1.0
      %v6277 = vlog2.pop %v6276
      %v6278 = vmul.f32 %v6277, 0.6931472
      %v6279 = vmul.f32 -0.5, %v6122
      %v6280 = vadd.f32 %v6279, 1.0
      %v6281 = vmul.f32 %v6280, %v6122
      %v6282 = vand.u32 2147483647, %v6122
      %vm6283 = vcmp.lt.f32.partialorder %v6282, 0.0004427343
      %v6284 = vsel %vm6283, %v6281, %v6278
      %v6285 = vadd.f32 %v6124, 1.0
      %v6286 = vlog2.pop %v6285
      %v6287 = vmul.f32 %v6286, 0.6931472
      %v6288 = vmul.f32 -0.5, %v6124
      %v6289 = vadd.f32 %v6288, 1.0
      %v6290 = vmul.f32 %v6289, %v6124
      %v6291 = vand.u32 2147483647, %v6124
      %vm6292 = vcmp.lt.f32.partialorder %v6291, 0.0004427343
      %v6293 = vsel %vm6292, %v6290, %v6287
      %v6294 = vadd.f32 %v6126, 1.0
      %v6295 = vlog2.pop %v6294
      %v6296 = vmul.f32 %v6295, 0.6931472
      %v6297 = vmul.f32 -0.5, %v6126
      %v6298 = vadd.f32 %v6297, 1.0
      %v6299 = vmul.f32 %v6298, %v6126
      %v6300 = vand.u32 2147483647, %v6126
      %vm6301 = vcmp.lt.f32.partialorder %v6300, 0.0004427343
      %v6302 = vsel %vm6301, %v6299, %v6296
      %v6303 = vadd.f32 %v6128, 1.0
      %v6304 = vlog2.pop %v6303
      %v6305 = vmul.f32 %v6304, 0.6931472
      %v6306 = vmul.f32 -0.5, %v6128
      %v6307 = vadd.f32 %v6306, 1.0
      %v6308 = vmul.f32 %v6307, %v6128
      %v6309 = vand.u32 2147483647, %v6128
      %vm6310 = vcmp.lt.f32.partialorder %v6309, 0.0004427343
      %v6311 = vsel %vm6310, %v6308, %v6305
      %v6312 = vadd.f32 %v6130, 1.0
      %v6313 = vlog2.pop %v6312
      %v6314 = vmul.f32 %v6313, 0.6931472
      %v6315 = vmul.f32 -0.5, %v6130
      %v6316 = vadd.f32 %v6315, 1.0
      %v6317 = vmul.f32 %v6316, %v6130
      %v6318 = vand.u32 2147483647, %v6130
      %vm6319 = vcmp.lt.f32.partialorder %v6318, 0.0004427343
      %v6320 = vsel %vm6319, %v6317, %v6314
      %v6321 = vadd.f32 %v6132, 1.0
      %v6322 = vlog2.pop %v6321
      %v6323 = vmul.f32 %v6322, 0.6931472
      %v6324 = vmul.f32 -0.5, %v6132
      %v6325 = vadd.f32 %v6324, 1.0
      %v6326 = vmul.f32 %v6325, %v6132
      %v6327 = vand.u32 2147483647, %v6132
      %vm6328 = vcmp.lt.f32.partialorder %v6327, 0.0004427343
      %v6329 = vsel %vm6328, %v6326, %v6323
      %v6330 = vadd.f32 %v6134, 1.0
      %v6331 = vlog2.pop %v6330
      %v6332 = vmul.f32 %v6331, 0.6931472
      %v6333 = vmul.f32 -0.5, %v6134
      %v6334 = vadd.f32 %v6333, 1.0
      %v6335 = vmul.f32 %v6334, %v6134
      %v6336 = vand.u32 2147483647, %v6134
      %vm6337 = vcmp.lt.f32.partialorder %v6336, 0.0004427343
      %v6338 = vsel %vm6337, %v6335, %v6332
      %v6339 = vadd.f32 %v6136, 1.0
      %v6340 = vlog2.pop %v6339
      %v6341 = vmul.f32 %v6340, 0.6931472
      %v6342 = vmul.f32 -0.5, %v6136
      %v6343 = vadd.f32 %v6342, 1.0
      %v6344 = vmul.f32 %v6343, %v6136
      %v6345 = vand.u32 2147483647, %v6136
      %vm6346 = vcmp.lt.f32.partialorder %v6345, 0.0004427343
      %v6347 = vsel %vm6346, %v6344, %v6341
      %v6348 = vadd.f32 %v6138, 1.0
      %v6349 = vlog2.pop %v6348
      %v6350 = vmul.f32 %v6349, 0.6931472
      %v6351 = vmul.f32 -0.5, %v6138
      %v6352 = vadd.f32 %v6351, 1.0
      %v6353 = vmul.f32 %v6352, %v6138
      %v6354 = vand.u32 2147483647, %v6138
      %vm6355 = vcmp.lt.f32.partialorder %v6354, 0.0004427343
      %v6356 = vsel %vm6355, %v6353, %v6350
      %v6357 = vadd.f32 %v6140, 1.0
      %v6358 = vlog2.pop %v6357
      %v6359 = vmul.f32 %v6358, 0.6931472
      %v6360 = vmul.f32 -0.5, %v6140
      %v6361 = vadd.f32 %v6360, 1.0
      %v6362 = vmul.f32 %v6361, %v6140
      %v6363 = vand.u32 2147483647, %v6140
      %vm6364 = vcmp.lt.f32.partialorder %v6363, 0.0004427343
      %v6365 = vsel %vm6364, %v6362, %v6359
      %v6366 = vadd.f32 %v6142, 1.0
      %v6367 = vlog2.pop %v6366
      %v6368 = vmul.f32 %v6367, 0.6931472
      %v6369 = vmul.f32 -0.5, %v6142
      %v6370 = vadd.f32 %v6369, 1.0
      %v6371 = vmul.f32 %v6370, %v6142
      %v6372 = vand.u32 2147483647, %v6142
      %vm6373 = vcmp.lt.f32.partialorder %v6372, 0.0004427343
      %v6374 = vsel %vm6373, %v6371, %v6368
      %v6375 = vadd.f32 %v6144, 1.0
      %v6376 = vlog2.pop %v6375
      %v6377 = vmul.f32 %v6376, 0.6931472
      %v6378 = vmul.f32 -0.5, %v6144
      %v6379 = vadd.f32 %v6378, 1.0
      %v6380 = vmul.f32 %v6379, %v6144
      %v6381 = vand.u32 2147483647, %v6144
      %vm6382 = vcmp.lt.f32.partialorder %v6381, 0.0004427343
      %v6383 = vsel %vm6382, %v6380, %v6377
      %v6384 = vadd.f32 %v6146, 1.0
      %v6385 = vlog2.pop %v6384
      %v6386 = vmul.f32 %v6385, 0.6931472
      %v6387 = vmul.f32 -0.5, %v6146
      %v6388 = vadd.f32 %v6387, 1.0
      %v6389 = vmul.f32 %v6388, %v6146
      %v6390 = vand.u32 2147483647, %v6146
      %vm6391 = vcmp.lt.f32.partialorder %v6390, 0.0004427343
      %v6392 = vsel %vm6391, %v6389, %v6386
      %v6393 = vadd.f32 %v6148, 1.0
      %v6394 = vlog2.pop %v6393
      %v6395 = vmul.f32 %v6394, 0.6931472
      %v6396 = vmul.f32 -0.5, %v6148
      %v6397 = vadd.f32 %v6396, 1.0
      %v6398 = vmul.f32 %v6397, %v6148
      %v6399 = vand.u32 2147483647, %v6148
      %vm6400 = vcmp.lt.f32.partialorder %v6399, 0.0004427343
      %v6401 = vsel %vm6400, %v6398, %v6395
      %v6402 = vadd.f32 %v6150, 1.0
      %v6403 = vlog2.pop %v6402
      %v6404 = vmul.f32 %v6403, 0.6931472
      %v6405 = vmul.f32 -0.5, %v6150
      %v6406 = vadd.f32 %v6405, 1.0
      %v6407 = vmul.f32 %v6406, %v6150
      %v6408 = vand.u32 2147483647, %v6150
      %vm6409 = vcmp.lt.f32.partialorder %v6408, 0.0004427343
      %v6410 = vsel %vm6409, %v6407, %v6404
      %v6411 = vadd.f32 %v6152, 1.0
      %v6412 = vlog2.pop %v6411
      %v6413 = vmul.f32 %v6412, 0.6931472
      %v6414 = vmul.f32 -0.5, %v6152
      %v6415 = vadd.f32 %v6414, 1.0
      %v6416 = vmul.f32 %v6415, %v6152
      %v6417 = vand.u32 2147483647, %v6152
      %vm6418 = vcmp.lt.f32.partialorder %v6417, 0.0004427343
      %v6419 = vsel %vm6418, %v6416, %v6413
      %v6420 = vadd.f32 %v6154, 1.0
      %v6421 = vlog2.pop %v6420
      %v6422 = vmul.f32 %v6421, 0.6931472
      %v6423 = vmul.f32 -0.5, %v6154
      %v6424 = vadd.f32 %v6423, 1.0
      %v6425 = vmul.f32 %v6424, %v6154
      %v6426 = vand.u32 2147483647, %v6154
      %vm6427 = vcmp.lt.f32.partialorder %v6426, 0.0004427343
      %v6428 = vsel %vm6427, %v6425, %v6422
      %v6429 = vadd.f32 %v6156, 1.0
      %v6430 = vlog2.pop %v6429
      %v6431 = vmul.f32 %v6430, 0.6931472
      %v6432 = vmul.f32 -0.5, %v6156
      %v6433 = vadd.f32 %v6432, 1.0
      %v6434 = vmul.f32 %v6433, %v6156
      %v6435 = vand.u32 2147483647, %v6156
      %vm6436 = vcmp.lt.f32.partialorder %v6435, 0.0004427343
      %v6437 = vsel %vm6436, %v6434, %v6431
      %v6438 = vadd.f32 %v6158, 1.0
      %v6439 = vlog2.pop %v6438
      %v6440 = vmul.f32 %v6439, 0.6931472
      %v6441 = vmul.f32 -0.5, %v6158
      %v6442 = vadd.f32 %v6441, 1.0
      %v6443 = vmul.f32 %v6442, %v6158
      %v6444 = vand.u32 2147483647, %v6158
      %vm6445 = vcmp.lt.f32.partialorder %v6444, 0.0004427343
      %v6446 = vsel %vm6445, %v6443, %v6440
      %v6447 = vsub.f32 %v5999, %v6167
      %v6448 = vsub.f32 %v6000, %v6176
      %v6449 = vsub.f32 %v6001, %v6185
      %v6450 = vsub.f32 %v6002, %v6194
      %v6451 = vsub.f32 %v6003, %v6203
      %v6452 = vsub.f32 %v6004, %v6212
      %v6453 = vsub.f32 %v6005, %v6221
      %v6454 = vsub.f32 %v6006, %v6230
      %v6455 = vsub.f32 %v6007, %v6239
      %v6456 = vsub.f32 %v6008, %v6248
      %v6457 = vsub.f32 %v6009, %v6257
      %v6458 = vsub.f32 %v6010, %v6266
      %v6459 = vsub.f32 %v6011, %v6275
      %v6460 = vsub.f32 %v6012, %v6284
      %v6461 = vsub.f32 %v6013, %v6293
      %v6462 = vsub.f32 %v6014, %v6302
      %v6463 = vsub.f32 %v6015, %v6311
      %v6464 = vsub.f32 %v6016, %v6320
      %v6465 = vsub.f32 %v6017, %v6329
      %v6466 = vsub.f32 %v6018, %v6338
      %v6467 = vsub.f32 %v6019, %v6347
      %v6468 = vsub.f32 %v6020, %v6356
      %v6469 = vsub.f32 %v6021, %v6365
      %v6470 = vsub.f32 %v6022, %v6374
      %v6471 = vsub.f32 %v6023, %v6383
      %v6472 = vsub.f32 %v6024, %v6392
      %v6473 = vsub.f32 %v6025, %v6401
      %v6474 = vsub.f32 %v6026, %v6410
      %v6475 = vsub.f32 %v6027, %v6419
      %v6476 = vsub.f32 %v6028, %v6428
      %v6477 = vsub.f32 %v6029, %v6437
      %v6478 = vsub.f32 %v6030, %v6446
      %v6512 = vunpack.c.l.s4 269488144
      %v6513 = vunpack.c.0.s8 %v6512
      %v6514 = vlaneseq
      %v6515 = vshrl.u32 %v6514, 7
      %v6516 = vsub.s32 %v6513, %v6515
      %v6517 = vrot.slane %v6447, %v6516
      %v6519 = vunpack.c.l.s4 842150450
      %v6520 = vunpack.c.0.s8 %v6519
      %v6521 = vlaneseq
      %v6522 = vshrl.u32 %v6521, 7
      %v6523 = vsub.s32 %v6520, %v6522
      %v6524 = vrot.slane %v6447, %v6523
      %v6526 = vunpack.c.l.s4 1414812756
      %v6527 = vunpack.c.0.s8 %v6526
      %v6528 = vlaneseq
      %v6529 = vshrl.u32 %v6528, 7
      %v6530 = vsub.s32 %v6527, %v6529
      %v6531 = vrot.slane %v6447, %v6530
      %v6533 = vunpack.c.l.s4 1987475062
      %v6534 = vunpack.c.0.s8 %v6533
      %v6535 = vlaneseq
      %v6536 = vshrl.u32 %v6535, 7
      %v6537 = vsub.s32 %v6534, %v6536
      %v6538 = vrot.slane %v6447, %v6537
      %v6540 = vunpack.c.l.s4 269488144
      %v6541 = vunpack.c.0.s8 %v6540
      %v6542 = vlaneseq
      %v6543 = vshrl.u32 %v6542, 7
      %v6544 = vsub.s32 %v6541, %v6543
      %v6545 = vrot.slane %v6448, %v6544
      %v6547 = vunpack.c.l.s4 842150450
      %v6548 = vunpack.c.0.s8 %v6547
      %v6549 = vlaneseq
      %v6550 = vshrl.u32 %v6549, 7
      %v6551 = vsub.s32 %v6548, %v6550
      %v6552 = vrot.slane %v6448, %v6551
      %v6554 = vunpack.c.l.s4 1414812756
      %v6555 = vunpack.c.0.s8 %v6554
      %v6556 = vlaneseq
      %v6557 = vshrl.u32 %v6556, 7
      %v6558 = vsub.s32 %v6555, %v6557
      %v6559 = vrot.slane %v6448, %v6558
      %v6561 = vunpack.c.l.s4 1987475062
      %v6562 = vunpack.c.0.s8 %v6561
      %v6563 = vlaneseq
      %v6564 = vshrl.u32 %v6563, 7
      %v6565 = vsub.s32 %v6562, %v6564
      %v6566 = vrot.slane %v6448, %v6565
      %v6568 = vunpack.c.l.s4 269488144
      %v6569 = vunpack.c.0.s8 %v6568
      %v6570 = vlaneseq
      %v6571 = vshrl.u32 %v6570, 7
      %v6572 = vsub.s32 %v6569, %v6571
      %v6573 = vrot.slane %v6449, %v6572
      %v6575 = vunpack.c.l.s4 842150450
      %v6576 = vunpack.c.0.s8 %v6575
      %v6577 = vlaneseq
      %v6578 = vshrl.u32 %v6577, 7
      %v6579 = vsub.s32 %v6576, %v6578
      %v6580 = vrot.slane %v6449, %v6579
      %v6582 = vunpack.c.l.s4 1414812756
      %v6583 = vunpack.c.0.s8 %v6582
      %v6584 = vlaneseq
      %v6585 = vshrl.u32 %v6584, 7
      %v6586 = vsub.s32 %v6583, %v6585
      %v6587 = vrot.slane %v6449, %v6586
      %v6589 = vunpack.c.l.s4 1987475062
      %v6590 = vunpack.c.0.s8 %v6589
      %v6591 = vlaneseq
      %v6592 = vshrl.u32 %v6591, 7
      %v6593 = vsub.s32 %v6590, %v6592
      %v6594 = vrot.slane %v6449, %v6593
      %v6596 = vunpack.c.l.s4 269488144
      %v6597 = vunpack.c.0.s8 %v6596
      %v6598 = vlaneseq
      %v6599 = vshrl.u32 %v6598, 7
      %v6600 = vsub.s32 %v6597, %v6599
      %v6601 = vrot.slane %v6450, %v6600
      %v6603 = vunpack.c.l.s4 842150450
      %v6604 = vunpack.c.0.s8 %v6603
      %v6605 = vlaneseq
      %v6606 = vshrl.u32 %v6605, 7
      %v6607 = vsub.s32 %v6604, %v6606
      %v6608 = vrot.slane %v6450, %v6607
      %v6610 = vunpack.c.l.s4 1414812756
      %v6611 = vunpack.c.0.s8 %v6610
      %v6612 = vlaneseq
      %v6613 = vshrl.u32 %v6612, 7
      %v6614 = vsub.s32 %v6611, %v6613
      %v6615 = vrot.slane %v6450, %v6614
      %v6617 = vunpack.c.l.s4 1987475062
      %v6618 = vunpack.c.0.s8 %v6617
      %v6619 = vlaneseq
      %v6620 = vshrl.u32 %v6619, 7
      %v6621 = vsub.s32 %v6618, %v6620
      %v6622 = vrot.slane %v6450, %v6621
      %v6624 = vunpack.c.l.s4 269488144
      %v6625 = vunpack.c.0.s8 %v6624
      %v6626 = vlaneseq
      %v6627 = vshrl.u32 %v6626, 7
      %v6628 = vsub.s32 %v6625, %v6627
      %v6629 = vrot.slane %v6451, %v6628
      %v6631 = vunpack.c.l.s4 842150450
      %v6632 = vunpack.c.0.s8 %v6631
      %v6633 = vlaneseq
      %v6634 = vshrl.u32 %v6633, 7
      %v6635 = vsub.s32 %v6632, %v6634
      %v6636 = vrot.slane %v6451, %v6635
      %v6638 = vunpack.c.l.s4 1414812756
      %v6639 = vunpack.c.0.s8 %v6638
      %v6640 = vlaneseq
      %v6641 = vshrl.u32 %v6640, 7
      %v6642 = vsub.s32 %v6639, %v6641
      %v6643 = vrot.slane %v6451, %v6642
      %v6645 = vunpack.c.l.s4 1987475062
      %v6646 = vunpack.c.0.s8 %v6645
      %v6647 = vlaneseq
      %v6648 = vshrl.u32 %v6647, 7
      %v6649 = vsub.s32 %v6646, %v6648
      %v6650 = vrot.slane %v6451, %v6649
      %v6652 = vunpack.c.l.s4 269488144
      %v6653 = vunpack.c.0.s8 %v6652
      %v6654 = vlaneseq
      %v6655 = vshrl.u32 %v6654, 7
      %v6656 = vsub.s32 %v6653, %v6655
      %v6657 = vrot.slane %v6452, %v6656
      %v6659 = vunpack.c.l.s4 842150450
      %v6660 = vunpack.c.0.s8 %v6659
      %v6661 = vlaneseq
      %v6662 = vshrl.u32 %v6661, 7
      %v6663 = vsub.s32 %v6660, %v6662
      %v6664 = vrot.slane %v6452, %v6663
      %v6666 = vunpack.c.l.s4 1414812756
      %v6667 = vunpack.c.0.s8 %v6666
      %v6668 = vlaneseq
      %v6669 = vshrl.u32 %v6668, 7
      %v6670 = vsub.s32 %v6667, %v6669
      %v6671 = vrot.slane %v6452, %v6670
      %v6673 = vunpack.c.l.s4 1987475062
      %v6674 = vunpack.c.0.s8 %v6673
      %v6675 = vlaneseq
      %v6676 = vshrl.u32 %v6675, 7
      %v6677 = vsub.s32 %v6674, %v6676
      %v6678 = vrot.slane %v6452, %v6677
      %v6680 = vunpack.c.l.s4 269488144
      %v6681 = vunpack.c.0.s8 %v6680
      %v6682 = vlaneseq
      %v6683 = vshrl.u32 %v6682, 7
      %v6684 = vsub.s32 %v6681, %v6683
      %v6685 = vrot.slane %v6453, %v6684
      %v6687 = vunpack.c.l.s4 842150450
      %v6688 = vunpack.c.0.s8 %v6687
      %v6689 = vlaneseq
      %v6690 = vshrl.u32 %v6689, 7
      %v6691 = vsub.s32 %v6688, %v6690
      %v6692 = vrot.slane %v6453, %v6691
      %v6694 = vunpack.c.l.s4 1414812756
      %v6695 = vunpack.c.0.s8 %v6694
      %v6696 = vlaneseq
      %v6697 = vshrl.u32 %v6696, 7
      %v6698 = vsub.s32 %v6695, %v6697
      %v6699 = vrot.slane %v6453, %v6698
      %v6701 = vunpack.c.l.s4 1987475062
      %v6702 = vunpack.c.0.s8 %v6701
      %v6703 = vlaneseq
      %v6704 = vshrl.u32 %v6703, 7
      %v6705 = vsub.s32 %v6702, %v6704
      %v6706 = vrot.slane %v6453, %v6705
      %v6708 = vunpack.c.l.s4 269488144
      %v6709 = vunpack.c.0.s8 %v6708
      %v6710 = vlaneseq
      %v6711 = vshrl.u32 %v6710, 7
      %v6712 = vsub.s32 %v6709, %v6711
      %v6713 = vrot.slane %v6454, %v6712
      %v6715 = vunpack.c.l.s4 842150450
      %v6716 = vunpack.c.0.s8 %v6715
      %v6717 = vlaneseq
      %v6718 = vshrl.u32 %v6717, 7
      %v6719 = vsub.s32 %v6716, %v6718
      %v6720 = vrot.slane %v6454, %v6719
      %v6722 = vunpack.c.l.s4 1414812756
      %v6723 = vunpack.c.0.s8 %v6722
      %v6724 = vlaneseq
      %v6725 = vshrl.u32 %v6724, 7
      %v6726 = vsub.s32 %v6723, %v6725
      %v6727 = vrot.slane %v6454, %v6726
      %v6729 = vunpack.c.l.s4 1987475062
      %v6730 = vunpack.c.0.s8 %v6729
      %v6731 = vlaneseq
      %v6732 = vshrl.u32 %v6731, 7
      %v6733 = vsub.s32 %v6730, %v6732
      %v6734 = vrot.slane %v6454, %v6733
      %v6736 = vunpack.c.l.s4 269488144
      %v6737 = vunpack.c.0.s8 %v6736
      %v6738 = vlaneseq
      %v6739 = vshrl.u32 %v6738, 7
      %v6740 = vsub.s32 %v6737, %v6739
      %v6741 = vrot.slane %v6455, %v6740
      %v6743 = vunpack.c.l.s4 842150450
      %v6744 = vunpack.c.0.s8 %v6743
      %v6745 = vlaneseq
      %v6746 = vshrl.u32 %v6745, 7
      %v6747 = vsub.s32 %v6744, %v6746
      %v6748 = vrot.slane %v6455, %v6747
      %v6750 = vunpack.c.l.s4 1414812756
      %v6751 = vunpack.c.0.s8 %v6750
      %v6752 = vlaneseq
      %v6753 = vshrl.u32 %v6752, 7
      %v6754 = vsub.s32 %v6751, %v6753
      %v6755 = vrot.slane %v6455, %v6754
      %v6757 = vunpack.c.l.s4 1987475062
      %v6758 = vunpack.c.0.s8 %v6757
      %v6759 = vlaneseq
      %v6760 = vshrl.u32 %v6759, 7
      %v6761 = vsub.s32 %v6758, %v6760
      %v6762 = vrot.slane %v6455, %v6761
      %v6764 = vunpack.c.l.s4 269488144
      %v6765 = vunpack.c.0.s8 %v6764
      %v6766 = vlaneseq
      %v6767 = vshrl.u32 %v6766, 7
      %v6768 = vsub.s32 %v6765, %v6767
      %v6769 = vrot.slane %v6456, %v6768
      %v6771 = vunpack.c.l.s4 842150450
      %v6772 = vunpack.c.0.s8 %v6771
      %v6773 = vlaneseq
      %v6774 = vshrl.u32 %v6773, 7
      %v6775 = vsub.s32 %v6772, %v6774
      %v6776 = vrot.slane %v6456, %v6775
      %v6778 = vunpack.c.l.s4 1414812756
      %v6779 = vunpack.c.0.s8 %v6778
      %v6780 = vlaneseq
      %v6781 = vshrl.u32 %v6780, 7
      %v6782 = vsub.s32 %v6779, %v6781
      %v6783 = vrot.slane %v6456, %v6782
      %v6785 = vunpack.c.l.s4 1987475062
      %v6786 = vunpack.c.0.s8 %v6785
      %v6787 = vlaneseq
      %v6788 = vshrl.u32 %v6787, 7
      %v6789 = vsub.s32 %v6786, %v6788
      %v6790 = vrot.slane %v6456, %v6789
      %v6792 = vunpack.c.l.s4 269488144
      %v6793 = vunpack.c.0.s8 %v6792
      %v6794 = vlaneseq
      %v6795 = vshrl.u32 %v6794, 7
      %v6796 = vsub.s32 %v6793, %v6795
      %v6797 = vrot.slane %v6457, %v6796
      %v6799 = vunpack.c.l.s4 842150450
      %v6800 = vunpack.c.0.s8 %v6799
      %v6801 = vlaneseq
      %v6802 = vshrl.u32 %v6801, 7
      %v6803 = vsub.s32 %v6800, %v6802
      %v6804 = vrot.slane %v6457, %v6803
      %v6806 = vunpack.c.l.s4 1414812756
      %v6807 = vunpack.c.0.s8 %v6806
      %v6808 = vlaneseq
      %v6809 = vshrl.u32 %v6808, 7
      %v6810 = vsub.s32 %v6807, %v6809
      %v6811 = vrot.slane %v6457, %v6810
      %v6813 = vunpack.c.l.s4 1987475062
      %v6814 = vunpack.c.0.s8 %v6813
      %v6815 = vlaneseq
      %v6816 = vshrl.u32 %v6815, 7
      %v6817 = vsub.s32 %v6814, %v6816
      %v6818 = vrot.slane %v6457, %v6817
      %v6820 = vunpack.c.l.s4 269488144
      %v6821 = vunpack.c.0.s8 %v6820
      %v6822 = vlaneseq
      %v6823 = vshrl.u32 %v6822, 7
      %v6824 = vsub.s32 %v6821, %v6823
      %v6825 = vrot.slane %v6458, %v6824
      %v6827 = vunpack.c.l.s4 842150450
      %v6828 = vunpack.c.0.s8 %v6827
      %v6829 = vlaneseq
      %v6830 = vshrl.u32 %v6829, 7
      %v6831 = vsub.s32 %v6828, %v6830
      %v6832 = vrot.slane %v6458, %v6831
      %v6834 = vunpack.c.l.s4 1414812756
      %v6835 = vunpack.c.0.s8 %v6834
      %v6836 = vlaneseq
      %v6837 = vshrl.u32 %v6836, 7
      %v6838 = vsub.s32 %v6835, %v6837
      %v6839 = vrot.slane %v6458, %v6838
      %v6841 = vunpack.c.l.s4 1987475062
      %v6842 = vunpack.c.0.s8 %v6841
      %v6843 = vlaneseq
      %v6844 = vshrl.u32 %v6843, 7
      %v6845 = vsub.s32 %v6842, %v6844
      %v6846 = vrot.slane %v6458, %v6845
      %v6848 = vunpack.c.l.s4 269488144
      %v6849 = vunpack.c.0.s8 %v6848
      %v6850 = vlaneseq
      %v6851 = vshrl.u32 %v6850, 7
      %v6852 = vsub.s32 %v6849, %v6851
      %v6853 = vrot.slane %v6459, %v6852
      %v6855 = vunpack.c.l.s4 842150450
      %v6856 = vunpack.c.0.s8 %v6855
      %v6857 = vlaneseq
      %v6858 = vshrl.u32 %v6857, 7
      %v6859 = vsub.s32 %v6856, %v6858
      %v6860 = vrot.slane %v6459, %v6859
      %v6862 = vunpack.c.l.s4 1414812756
      %v6863 = vunpack.c.0.s8 %v6862
      %v6864 = vlaneseq
      %v6865 = vshrl.u32 %v6864, 7
      %v6866 = vsub.s32 %v6863, %v6865
      %v6867 = vrot.slane %v6459, %v6866
      %v6869 = vunpack.c.l.s4 1987475062
      %v6870 = vunpack.c.0.s8 %v6869
      %v6871 = vlaneseq
      %v6872 = vshrl.u32 %v6871, 7
      %v6873 = vsub.s32 %v6870, %v6872
      %v6874 = vrot.slane %v6459, %v6873
      %v6876 = vunpack.c.l.s4 269488144
      %v6877 = vunpack.c.0.s8 %v6876
      %v6878 = vlaneseq
      %v6879 = vshrl.u32 %v6878, 7
      %v6880 = vsub.s32 %v6877, %v6879
      %v6881 = vrot.slane %v6460, %v6880
      %v6883 = vunpack.c.l.s4 842150450
      %v6884 = vunpack.c.0.s8 %v6883
      %v6885 = vlaneseq
      %v6886 = vshrl.u32 %v6885, 7
      %v6887 = vsub.s32 %v6884, %v6886
      %v6888 = vrot.slane %v6460, %v6887
      %v6890 = vunpack.c.l.s4 1414812756
      %v6891 = vunpack.c.0.s8 %v6890
      %v6892 = vlaneseq
      %v6893 = vshrl.u32 %v6892, 7
      %v6894 = vsub.s32 %v6891, %v6893
      %v6895 = vrot.slane %v6460, %v6894
      %v6897 = vunpack.c.l.s4 1987475062
      %v6898 = vunpack.c.0.s8 %v6897
      %v6899 = vlaneseq
      %v6900 = vshrl.u32 %v6899, 7
      %v6901 = vsub.s32 %v6898, %v6900
      %v6902 = vrot.slane %v6460, %v6901
      %v6904 = vunpack.c.l.s4 269488144
      %v6905 = vunpack.c.0.s8 %v6904
      %v6906 = vlaneseq
      %v6907 = vshrl.u32 %v6906, 7
      %v6908 = vsub.s32 %v6905, %v6907
      %v6909 = vrot.slane %v6461, %v6908
      %v6911 = vunpack.c.l.s4 842150450
      %v6912 = vunpack.c.0.s8 %v6911
      %v6913 = vlaneseq
      %v6914 = vshrl.u32 %v6913, 7
      %v6915 = vsub.s32 %v6912, %v6914
      %v6916 = vrot.slane %v6461, %v6915
      %v6918 = vunpack.c.l.s4 1414812756
      %v6919 = vunpack.c.0.s8 %v6918
      %v6920 = vlaneseq
      %v6921 = vshrl.u32 %v6920, 7
      %v6922 = vsub.s32 %v6919, %v6921
      %v6923 = vrot.slane %v6461, %v6922
      %v6925 = vunpack.c.l.s4 1987475062
      %v6926 = vunpack.c.0.s8 %v6925
      %v6927 = vlaneseq
      %v6928 = vshrl.u32 %v6927, 7
      %v6929 = vsub.s32 %v6926, %v6928
      %v6930 = vrot.slane %v6461, %v6929
      %v6932 = vunpack.c.l.s4 269488144
      %v6933 = vunpack.c.0.s8 %v6932
      %v6934 = vlaneseq
      %v6935 = vshrl.u32 %v6934, 7
      %v6936 = vsub.s32 %v6933, %v6935
      %v6937 = vrot.slane %v6462, %v6936
      %v6939 = vunpack.c.l.s4 842150450
      %v6940 = vunpack.c.0.s8 %v6939
      %v6941 = vlaneseq
      %v6942 = vshrl.u32 %v6941, 7
      %v6943 = vsub.s32 %v6940, %v6942
      %v6944 = vrot.slane %v6462, %v6943
      %v6946 = vunpack.c.l.s4 1414812756
      %v6947 = vunpack.c.0.s8 %v6946
      %v6948 = vlaneseq
      %v6949 = vshrl.u32 %v6948, 7
      %v6950 = vsub.s32 %v6947, %v6949
      %v6951 = vrot.slane %v6462, %v6950
      %v6953 = vunpack.c.l.s4 1987475062
      %v6954 = vunpack.c.0.s8 %v6953
      %v6955 = vlaneseq
      %v6956 = vshrl.u32 %v6955, 7
      %v6957 = vsub.s32 %v6954, %v6956
      %v6958 = vrot.slane %v6462, %v6957
      %v6960 = vunpack.c.l.s4 269488144
      %v6961 = vunpack.c.0.s8 %v6960
      %v6962 = vlaneseq
      %v6963 = vshrl.u32 %v6962, 7
      %v6964 = vsub.s32 %v6961, %v6963
      %v6965 = vrot.slane %v6463, %v6964
      %v6967 = vunpack.c.l.s4 842150450
      %v6968 = vunpack.c.0.s8 %v6967
      %v6969 = vlaneseq
      %v6970 = vshrl.u32 %v6969, 7
      %v6971 = vsub.s32 %v6968, %v6970
      %v6972 = vrot.slane %v6463, %v6971
      %v6974 = vunpack.c.l.s4 1414812756
      %v6975 = vunpack.c.0.s8 %v6974
      %v6976 = vlaneseq
      %v6977 = vshrl.u32 %v6976, 7
      %v6978 = vsub.s32 %v6975, %v6977
      %v6979 = vrot.slane %v6463, %v6978
      %v6981 = vunpack.c.l.s4 1987475062
      %v6982 = vunpack.c.0.s8 %v6981
      %v6983 = vlaneseq
      %v6984 = vshrl.u32 %v6983, 7
      %v6985 = vsub.s32 %v6982, %v6984
      %v6986 = vrot.slane %v6463, %v6985
      %v6988 = vunpack.c.l.s4 269488144
      %v6989 = vunpack.c.0.s8 %v6988
      %v6990 = vlaneseq
      %v6991 = vshrl.u32 %v6990, 7
      %v6992 = vsub.s32 %v6989, %v6991
      %v6993 = vrot.slane %v6464, %v6992
      %v6995 = vunpack.c.l.s4 842150450
      %v6996 = vunpack.c.0.s8 %v6995
      %v6997 = vlaneseq
      %v6998 = vshrl.u32 %v6997, 7
      %v6999 = vsub.s32 %v6996, %v6998
      %v7000 = vrot.slane %v6464, %v6999
      %v7002 = vunpack.c.l.s4 1414812756
      %v7003 = vunpack.c.0.s8 %v7002
      %v7004 = vlaneseq
      %v7005 = vshrl.u32 %v7004, 7
      %v7006 = vsub.s32 %v7003, %v7005
      %v7007 = vrot.slane %v6464, %v7006
      %v7009 = vunpack.c.l.s4 1987475062
      %v7010 = vunpack.c.0.s8 %v7009
      %v7011 = vlaneseq
      %v7012 = vshrl.u32 %v7011, 7
      %v7013 = vsub.s32 %v7010, %v7012
      %v7014 = vrot.slane %v6464, %v7013
      %v7016 = vunpack.c.l.s4 269488144
      %v7017 = vunpack.c.0.s8 %v7016
      %v7018 = vlaneseq
      %v7019 = vshrl.u32 %v7018, 7
      %v7020 = vsub.s32 %v7017, %v7019
      %v7021 = vrot.slane %v6465, %v7020
      %v7023 = vunpack.c.l.s4 842150450
      %v7024 = vunpack.c.0.s8 %v7023
      %v7025 = vlaneseq
      %v7026 = vshrl.u32 %v7025, 7
      %v7027 = vsub.s32 %v7024, %v7026
      %v7028 = vrot.slane %v6465, %v7027
      %v7030 = vunpack.c.l.s4 1414812756
      %v7031 = vunpack.c.0.s8 %v7030
      %v7032 = vlaneseq
      %v7033 = vshrl.u32 %v7032, 7
      %v7034 = vsub.s32 %v7031, %v7033
      %v7035 = vrot.slane %v6465, %v7034
      %v7037 = vunpack.c.l.s4 1987475062
      %v7038 = vunpack.c.0.s8 %v7037
      %v7039 = vlaneseq
      %v7040 = vshrl.u32 %v7039, 7
      %v7041 = vsub.s32 %v7038, %v7040
      %v7042 = vrot.slane %v6465, %v7041
      %v7044 = vunpack.c.l.s4 269488144
      %v7045 = vunpack.c.0.s8 %v7044
      %v7046 = vlaneseq
      %v7047 = vshrl.u32 %v7046, 7
      %v7048 = vsub.s32 %v7045, %v7047
      %v7049 = vrot.slane %v6466, %v7048
      %v7051 = vunpack.c.l.s4 842150450
      %v7052 = vunpack.c.0.s8 %v7051
      %v7053 = vlaneseq
      %v7054 = vshrl.u32 %v7053, 7
      %v7055 = vsub.s32 %v7052, %v7054
      %v7056 = vrot.slane %v6466, %v7055
      %v7058 = vunpack.c.l.s4 1414812756
      %v7059 = vunpack.c.0.s8 %v7058
      %v7060 = vlaneseq
      %v7061 = vshrl.u32 %v7060, 7
      %v7062 = vsub.s32 %v7059, %v7061
      %v7063 = vrot.slane %v6466, %v7062
      %v7065 = vunpack.c.l.s4 1987475062
      %v7066 = vunpack.c.0.s8 %v7065
      %v7067 = vlaneseq
      %v7068 = vshrl.u32 %v7067, 7
      %v7069 = vsub.s32 %v7066, %v7068
      %v7070 = vrot.slane %v6466, %v7069
      %v7072 = vunpack.c.l.s4 269488144
      %v7073 = vunpack.c.0.s8 %v7072
      %v7074 = vlaneseq
      %v7075 = vshrl.u32 %v7074, 7
      %v7076 = vsub.s32 %v7073, %v7075
      %v7077 = vrot.slane %v6467, %v7076
      %v7079 = vunpack.c.l.s4 842150450
      %v7080 = vunpack.c.0.s8 %v7079
      %v7081 = vlaneseq
      %v7082 = vshrl.u32 %v7081, 7
      %v7083 = vsub.s32 %v7080, %v7082
      %v7084 = vrot.slane %v6467, %v7083
      %v7086 = vunpack.c.l.s4 1414812756
      %v7087 = vunpack.c.0.s8 %v7086
      %v7088 = vlaneseq
      %v7089 = vshrl.u32 %v7088, 7
      %v7090 = vsub.s32 %v7087, %v7089
      %v7091 = vrot.slane %v6467, %v7090
      %v7093 = vunpack.c.l.s4 1987475062
      %v7094 = vunpack.c.0.s8 %v7093
      %v7095 = vlaneseq
      %v7096 = vshrl.u32 %v7095, 7
      %v7097 = vsub.s32 %v7094, %v7096
      %v7098 = vrot.slane %v6467, %v7097
      %v7100 = vunpack.c.l.s4 269488144
      %v7101 = vunpack.c.0.s8 %v7100
      %v7102 = vlaneseq
      %v7103 = vshrl.u32 %v7102, 7
      %v7104 = vsub.s32 %v7101, %v7103
      %v7105 = vrot.slane %v6468, %v7104
      %v7107 = vunpack.c.l.s4 842150450
      %v7108 = vunpack.c.0.s8 %v7107
      %v7109 = vlaneseq
      %v7110 = vshrl.u32 %v7109, 7
      %v7111 = vsub.s32 %v7108, %v7110
      %v7112 = vrot.slane %v6468, %v7111
      %v7114 = vunpack.c.l.s4 1414812756
      %v7115 = vunpack.c.0.s8 %v7114
      %v7116 = vlaneseq
      %v7117 = vshrl.u32 %v7116, 7
      %v7118 = vsub.s32 %v7115, %v7117
      %v7119 = vrot.slane %v6468, %v7118
      %v7121 = vunpack.c.l.s4 1987475062
      %v7122 = vunpack.c.0.s8 %v7121
      %v7123 = vlaneseq
      %v7124 = vshrl.u32 %v7123, 7
      %v7125 = vsub.s32 %v7122, %v7124
      %v7126 = vrot.slane %v6468, %v7125
      %v7128 = vunpack.c.l.s4 269488144
      %v7129 = vunpack.c.0.s8 %v7128
      %v7130 = vlaneseq
      %v7131 = vshrl.u32 %v7130, 7
      %v7132 = vsub.s32 %v7129, %v7131
      %v7133 = vrot.slane %v6469, %v7132
      %v7135 = vunpack.c.l.s4 842150450
      %v7136 = vunpack.c.0.s8 %v7135
      %v7137 = vlaneseq
      %v7138 = vshrl.u32 %v7137, 7
      %v7139 = vsub.s32 %v7136, %v7138
      %v7140 = vrot.slane %v6469, %v7139
      %v7142 = vunpack.c.l.s4 1414812756
      %v7143 = vunpack.c.0.s8 %v7142
      %v7144 = vlaneseq
      %v7145 = vshrl.u32 %v7144, 7
      %v7146 = vsub.s32 %v7143, %v7145
      %v7147 = vrot.slane %v6469, %v7146
      %v7149 = vunpack.c.l.s4 1987475062
      %v7150 = vunpack.c.0.s8 %v7149
      %v7151 = vlaneseq
      %v7152 = vshrl.u32 %v7151, 7
      %v7153 = vsub.s32 %v7150, %v7152
      %v7154 = vrot.slane %v6469, %v7153
      %v7156 = vunpack.c.l.s4 269488144
      %v7157 = vunpack.c.0.s8 %v7156
      %v7158 = vlaneseq
      %v7159 = vshrl.u32 %v7158, 7
      %v7160 = vsub.s32 %v7157, %v7159
      %v7161 = vrot.slane %v6470, %v7160
      %v7163 = vunpack.c.l.s4 842150450
      %v7164 = vunpack.c.0.s8 %v7163
      %v7165 = vlaneseq
      %v7166 = vshrl.u32 %v7165, 7
      %v7167 = vsub.s32 %v7164, %v7166
      %v7168 = vrot.slane %v6470, %v7167
      %v7170 = vunpack.c.l.s4 1414812756
      %v7171 = vunpack.c.0.s8 %v7170
      %v7172 = vlaneseq
      %v7173 = vshrl.u32 %v7172, 7
      %v7174 = vsub.s32 %v7171, %v7173
      %v7175 = vrot.slane %v6470, %v7174
      %v7177 = vunpack.c.l.s4 1987475062
      %v7178 = vunpack.c.0.s8 %v7177
      %v7179 = vlaneseq
      %v7180 = vshrl.u32 %v7179, 7
      %v7181 = vsub.s32 %v7178, %v7180
      %v7182 = vrot.slane %v6470, %v7181
      %v7184 = vunpack.c.l.s4 269488144
      %v7185 = vunpack.c.0.s8 %v7184
      %v7186 = vlaneseq
      %v7187 = vshrl.u32 %v7186, 7
      %v7188 = vsub.s32 %v7185, %v7187
      %v7189 = vrot.slane %v6471, %v7188
      %v7191 = vunpack.c.l.s4 842150450
      %v7192 = vunpack.c.0.s8 %v7191
      %v7193 = vlaneseq
      %v7194 = vshrl.u32 %v7193, 7
      %v7195 = vsub.s32 %v7192, %v7194
      %v7196 = vrot.slane %v6471, %v7195
      %v7198 = vunpack.c.l.s4 1414812756
      %v7199 = vunpack.c.0.s8 %v7198
      %v7200 = vlaneseq
      %v7201 = vshrl.u32 %v7200, 7
      %v7202 = vsub.s32 %v7199, %v7201
      %v7203 = vrot.slane %v6471, %v7202
      %v7205 = vunpack.c.l.s4 1987475062
      %v7206 = vunpack.c.0.s8 %v7205
      %v7207 = vlaneseq
      %v7208 = vshrl.u32 %v7207, 7
      %v7209 = vsub.s32 %v7206, %v7208
      %v7210 = vrot.slane %v6471, %v7209
      %v7212 = vunpack.c.l.s4 269488144
      %v7213 = vunpack.c.0.s8 %v7212
      %v7214 = vlaneseq
      %v7215 = vshrl.u32 %v7214, 7
      %v7216 = vsub.s32 %v7213, %v7215
      %v7217 = vrot.slane %v6472, %v7216
      %v7219 = vunpack.c.l.s4 842150450
      %v7220 = vunpack.c.0.s8 %v7219
      %v7221 = vlaneseq
      %v7222 = vshrl.u32 %v7221, 7
      %v7223 = vsub.s32 %v7220, %v7222
      %v7224 = vrot.slane %v6472, %v7223
      %v7226 = vunpack.c.l.s4 1414812756
      %v7227 = vunpack.c.0.s8 %v7226
      %v7228 = vlaneseq
      %v7229 = vshrl.u32 %v7228, 7
      %v7230 = vsub.s32 %v7227, %v7229
      %v7231 = vrot.slane %v6472, %v7230
      %v7233 = vunpack.c.l.s4 1987475062
      %v7234 = vunpack.c.0.s8 %v7233
      %v7235 = vlaneseq
      %v7236 = vshrl.u32 %v7235, 7
      %v7237 = vsub.s32 %v7234, %v7236
      %v7238 = vrot.slane %v6472, %v7237
      %v7240 = vunpack.c.l.s4 269488144
      %v7241 = vunpack.c.0.s8 %v7240
      %v7242 = vlaneseq
      %v7243 = vshrl.u32 %v7242, 7
      %v7244 = vsub.s32 %v7241, %v7243
      %v7245 = vrot.slane %v6473, %v7244
      %v7247 = vunpack.c.l.s4 842150450
      %v7248 = vunpack.c.0.s8 %v7247
      %v7249 = vlaneseq
      %v7250 = vshrl.u32 %v7249, 7
      %v7251 = vsub.s32 %v7248, %v7250
      %v7252 = vrot.slane %v6473, %v7251
      %v7254 = vunpack.c.l.s4 1414812756
      %v7255 = vunpack.c.0.s8 %v7254
      %v7256 = vlaneseq
      %v7257 = vshrl.u32 %v7256, 7
      %v7258 = vsub.s32 %v7255, %v7257
      %v7259 = vrot.slane %v6473, %v7258
      %v7261 = vunpack.c.l.s4 1987475062
      %v7262 = vunpack.c.0.s8 %v7261
      %v7263 = vlaneseq
      %v7264 = vshrl.u32 %v7263, 7
      %v7265 = vsub.s32 %v7262, %v7264
      %v7266 = vrot.slane %v6473, %v7265
      %v7268 = vunpack.c.l.s4 269488144
      %v7269 = vunpack.c.0.s8 %v7268
      %v7270 = vlaneseq
      %v7271 = vshrl.u32 %v7270, 7
      %v7272 = vsub.s32 %v7269, %v7271
      %v7273 = vrot.slane %v6474, %v7272
      %v7275 = vunpack.c.l.s4 842150450
      %v7276 = vunpack.c.0.s8 %v7275
      %v7277 = vlaneseq
      %v7278 = vshrl.u32 %v7277, 7
      %v7279 = vsub.s32 %v7276, %v7278
      %v7280 = vrot.slane %v6474, %v7279
      %v7282 = vunpack.c.l.s4 1414812756
      %v7283 = vunpack.c.0.s8 %v7282
      %v7284 = vlaneseq
      %v7285 = vshrl.u32 %v7284, 7
      %v7286 = vsub.s32 %v7283, %v7285
      %v7287 = vrot.slane %v6474, %v7286
      %v7289 = vunpack.c.l.s4 1987475062
      %v7290 = vunpack.c.0.s8 %v7289
      %v7291 = vlaneseq
      %v7292 = vshrl.u32 %v7291, 7
      %v7293 = vsub.s32 %v7290, %v7292
      %v7294 = vrot.slane %v6474, %v7293
      %v7296 = vunpack.c.l.s4 269488144
      %v7297 = vunpack.c.0.s8 %v7296
      %v7298 = vlaneseq
      %v7299 = vshrl.u32 %v7298, 7
      %v7300 = vsub.s32 %v7297, %v7299
      %v7301 = vrot.slane %v6475, %v7300
      %v7303 = vunpack.c.l.s4 842150450
      %v7304 = vunpack.c.0.s8 %v7303
      %v7305 = vlaneseq
      %v7306 = vshrl.u32 %v7305, 7
      %v7307 = vsub.s32 %v7304, %v7306
      %v7308 = vrot.slane %v6475, %v7307
      %v7310 = vunpack.c.l.s4 1414812756
      %v7311 = vunpack.c.0.s8 %v7310
      %v7312 = vlaneseq
      %v7313 = vshrl.u32 %v7312, 7
      %v7314 = vsub.s32 %v7311, %v7313
      %v7315 = vrot.slane %v6475, %v7314
      %v7317 = vunpack.c.l.s4 1987475062
      %v7318 = vunpack.c.0.s8 %v7317
      %v7319 = vlaneseq
      %v7320 = vshrl.u32 %v7319, 7
      %v7321 = vsub.s32 %v7318, %v7320
      %v7322 = vrot.slane %v6475, %v7321
      %v7324 = vunpack.c.l.s4 269488144
      %v7325 = vunpack.c.0.s8 %v7324
      %v7326 = vlaneseq
      %v7327 = vshrl.u32 %v7326, 7
      %v7328 = vsub.s32 %v7325, %v7327
      %v7329 = vrot.slane %v6476, %v7328
      %v7331 = vunpack.c.l.s4 842150450
      %v7332 = vunpack.c.0.s8 %v7331
      %v7333 = vlaneseq
      %v7334 = vshrl.u32 %v7333, 7
      %v7335 = vsub.s32 %v7332, %v7334
      %v7336 = vrot.slane %v6476, %v7335
      %v7338 = vunpack.c.l.s4 1414812756
      %v7339 = vunpack.c.0.s8 %v7338
      %v7340 = vlaneseq
      %v7341 = vshrl.u32 %v7340, 7
      %v7342 = vsub.s32 %v7339, %v7341
      %v7343 = vrot.slane %v6476, %v7342
      %v7345 = vunpack.c.l.s4 1987475062
      %v7346 = vunpack.c.0.s8 %v7345
      %v7347 = vlaneseq
      %v7348 = vshrl.u32 %v7347, 7
      %v7349 = vsub.s32 %v7346, %v7348
      %v7350 = vrot.slane %v6476, %v7349
      %v7352 = vunpack.c.l.s4 269488144
      %v7353 = vunpack.c.0.s8 %v7352
      %v7354 = vlaneseq
      %v7355 = vshrl.u32 %v7354, 7
      %v7356 = vsub.s32 %v7353, %v7355
      %v7357 = vrot.slane %v6477, %v7356
      %v7359 = vunpack.c.l.s4 842150450
      %v7360 = vunpack.c.0.s8 %v7359
      %v7361 = vlaneseq
      %v7362 = vshrl.u32 %v7361, 7
      %v7363 = vsub.s32 %v7360, %v7362
      %v7364 = vrot.slane %v6477, %v7363
      %v7366 = vunpack.c.l.s4 1414812756
      %v7367 = vunpack.c.0.s8 %v7366
      %v7368 = vlaneseq
      %v7369 = vshrl.u32 %v7368, 7
      %v7370 = vsub.s32 %v7367, %v7369
      %v7371 = vrot.slane %v6477, %v7370
      %v7373 = vunpack.c.l.s4 1987475062
      %v7374 = vunpack.c.0.s8 %v7373
      %v7375 = vlaneseq
      %v7376 = vshrl.u32 %v7375, 7
      %v7377 = vsub.s32 %v7374, %v7376
      %v7378 = vrot.slane %v6477, %v7377
      %v7380 = vunpack.c.l.s4 269488144
      %v7381 = vunpack.c.0.s8 %v7380
      %v7382 = vlaneseq
      %v7383 = vshrl.u32 %v7382, 7
      %v7384 = vsub.s32 %v7381, %v7383
      %v7385 = vrot.slane %v6478, %v7384
      %v7387 = vunpack.c.l.s4 842150450
      %v7388 = vunpack.c.0.s8 %v7387
      %v7389 = vlaneseq
      %v7390 = vshrl.u32 %v7389, 7
      %v7391 = vsub.s32 %v7388, %v7390
      %v7392 = vrot.slane %v6478, %v7391
      %v7394 = vunpack.c.l.s4 1414812756
      %v7395 = vunpack.c.0.s8 %v7394
      %v7396 = vlaneseq
      %v7397 = vshrl.u32 %v7396, 7
      %v7398 = vsub.s32 %v7395, %v7397
      %v7399 = vrot.slane %v6478, %v7398
      %v7401 = vunpack.c.l.s4 1987475062
      %v7402 = vunpack.c.0.s8 %v7401
      %v7403 = vlaneseq
      %v7404 = vshrl.u32 %v7403, 7
      %v7405 = vsub.s32 %v7402, %v7404
      %v7406 = vrot.slane %v6478, %v7405
      %v7407 = vcombine.low %v6517, %v6524
      %v7408 = vcombine.low %v6531, %v6538
      %v7410 = vunpack.c.l.s4 1983009808
      %v7411 = vunpack.c.0.s8 %v7410
      %v7412 = vlaneseq
      %v7413 = vshrl.u32 %v7412, 7
      %v7414 = vsub.s32 %v7411, %v7413
      %v7415 = vrot.slane %v7407, %v7414
      %v7417 = vunpack.c.l.s4 1983009808
      %v7418 = vunpack.c.0.s8 %v7417
      %v7419 = vlaneseq
      %v7420 = vshrl.u32 %v7419, 7
      %v7421 = vsub.s32 %v7418, %v7420
      %v7422 = vrot.slane %v7408, %v7421
      %v7423 = vcombine.low %v7415, %v7422
      %v7424 = vcombine.low %v6545, %v6552
      %v7425 = vcombine.low %v6559, %v6566
      %v7427 = vunpack.c.l.s4 1983009808
      %v7428 = vunpack.c.0.s8 %v7427
      %v7429 = vlaneseq
      %v7430 = vshrl.u32 %v7429, 7
      %v7431 = vsub.s32 %v7428, %v7430
      %v7432 = vrot.slane %v7424, %v7431
      %v7434 = vunpack.c.l.s4 1983009808
      %v7435 = vunpack.c.0.s8 %v7434
      %v7436 = vlaneseq
      %v7437 = vshrl.u32 %v7436, 7
      %v7438 = vsub.s32 %v7435, %v7437
      %v7439 = vrot.slane %v7425, %v7438
      %v7440 = vcombine.low %v7432, %v7439
      %v7441 = vcombine.low %v6573, %v6580
      %v7442 = vcombine.low %v6587, %v6594
      %v7444 = vunpack.c.l.s4 1983009808
      %v7445 = vunpack.c.0.s8 %v7444
      %v7446 = vlaneseq
      %v7447 = vshrl.u32 %v7446, 7
      %v7448 = vsub.s32 %v7445, %v7447
      %v7449 = vrot.slane %v7441, %v7448
      %v7451 = vunpack.c.l.s4 1983009808
      %v7452 = vunpack.c.0.s8 %v7451
      %v7453 = vlaneseq
      %v7454 = vshrl.u32 %v7453, 7
      %v7455 = vsub.s32 %v7452, %v7454
      %v7456 = vrot.slane %v7442, %v7455
      %v7457 = vcombine.low %v7449, %v7456
      %v7458 = vcombine.low %v6601, %v6608
      %v7459 = vcombine.low %v6615, %v6622
      %v7461 = vunpack.c.l.s4 1983009808
      %v7462 = vunpack.c.0.s8 %v7461
      %v7463 = vlaneseq
      %v7464 = vshrl.u32 %v7463, 7
      %v7465 = vsub.s32 %v7462, %v7464
      %v7466 = vrot.slane %v7458, %v7465
      %v7468 = vunpack.c.l.s4 1983009808
      %v7469 = vunpack.c.0.s8 %v7468
      %v7470 = vlaneseq
      %v7471 = vshrl.u32 %v7470, 7
      %v7472 = vsub.s32 %v7469, %v7471
      %v7473 = vrot.slane %v7459, %v7472
      %v7474 = vcombine.low %v7466, %v7473
      %v7475 = vcombine.low %v6629, %v6636
      %v7476 = vcombine.low %v6643, %v6650
      %v7478 = vunpack.c.l.s4 1983009808
      %v7479 = vunpack.c.0.s8 %v7478
      %v7480 = vlaneseq
      %v7481 = vshrl.u32 %v7480, 7
      %v7482 = vsub.s32 %v7479, %v7481
      %v7483 = vrot.slane %v7475, %v7482
      %v7485 = vunpack.c.l.s4 1983009808
      %v7486 = vunpack.c.0.s8 %v7485
      %v7487 = vlaneseq
      %v7488 = vshrl.u32 %v7487, 7
      %v7489 = vsub.s32 %v7486, %v7488
      %v7490 = vrot.slane %v7476, %v7489
      %v7491 = vcombine.low %v7483, %v7490
      %v7492 = vcombine.low %v6657, %v6664
      %v7493 = vcombine.low %v6671, %v6678
      %v7495 = vunpack.c.l.s4 1983009808
      %v7496 = vunpack.c.0.s8 %v7495
      %v7497 = vlaneseq
      %v7498 = vshrl.u32 %v7497, 7
      %v7499 = vsub.s32 %v7496, %v7498
      %v7500 = vrot.slane %v7492, %v7499
      %v7502 = vunpack.c.l.s4 1983009808
      %v7503 = vunpack.c.0.s8 %v7502
      %v7504 = vlaneseq
      %v7505 = vshrl.u32 %v7504, 7
      %v7506 = vsub.s32 %v7503, %v7505
      %v7507 = vrot.slane %v7493, %v7506
      %v7508 = vcombine.low %v7500, %v7507
      %v7509 = vcombine.low %v6685, %v6692
      %v7510 = vcombine.low %v6699, %v6706
      %v7512 = vunpack.c.l.s4 1983009808
      %v7513 = vunpack.c.0.s8 %v7512
      %v7514 = vlaneseq
      %v7515 = vshrl.u32 %v7514, 7
      %v7516 = vsub.s32 %v7513, %v7515
      %v7517 = vrot.slane %v7509, %v7516
      %v7519 = vunpack.c.l.s4 1983009808
      %v7520 = vunpack.c.0.s8 %v7519
      %v7521 = vlaneseq
      %v7522 = vshrl.u32 %v7521, 7
      %v7523 = vsub.s32 %v7520, %v7522
      %v7524 = vrot.slane %v7510, %v7523
      %v7525 = vcombine.low %v7517, %v7524
      %v7526 = vcombine.low %v6713, %v6720
      %v7527 = vcombine.low %v6727, %v6734
      %v7529 = vunpack.c.l.s4 1983009808
      %v7530 = vunpack.c.0.s8 %v7529
      %v7531 = vlaneseq
      %v7532 = vshrl.u32 %v7531, 7
      %v7533 = vsub.s32 %v7530, %v7532
      %v7534 = vrot.slane %v7526, %v7533
      %v7536 = vunpack.c.l.s4 1983009808
      %v7537 = vunpack.c.0.s8 %v7536
      %v7538 = vlaneseq
      %v7539 = vshrl.u32 %v7538, 7
      %v7540 = vsub.s32 %v7537, %v7539
      %v7541 = vrot.slane %v7527, %v7540
      %v7542 = vcombine.low %v7534, %v7541
      %v7543 = vcombine.low %v6741, %v6748
      %v7544 = vcombine.low %v6755, %v6762
      %v7546 = vunpack.c.l.s4 1983009808
      %v7547 = vunpack.c.0.s8 %v7546
      %v7548 = vlaneseq
      %v7549 = vshrl.u32 %v7548, 7
      %v7550 = vsub.s32 %v7547, %v7549
      %v7551 = vrot.slane %v7543, %v7550
      %v7553 = vunpack.c.l.s4 1983009808
      %v7554 = vunpack.c.0.s8 %v7553
      %v7555 = vlaneseq
      %v7556 = vshrl.u32 %v7555, 7
      %v7557 = vsub.s32 %v7554, %v7556
      %v7558 = vrot.slane %v7544, %v7557
      %v7559 = vcombine.low %v7551, %v7558
      %v7560 = vcombine.low %v6769, %v6776
      %v7561 = vcombine.low %v6783, %v6790
      %v7563 = vunpack.c.l.s4 1983009808
      %v7564 = vunpack.c.0.s8 %v7563
      %v7565 = vlaneseq
      %v7566 = vshrl.u32 %v7565, 7
      %v7567 = vsub.s32 %v7564, %v7566
      %v7568 = vrot.slane %v7560, %v7567
      %v7570 = vunpack.c.l.s4 1983009808
      %v7571 = vunpack.c.0.s8 %v7570
      %v7572 = vlaneseq
      %v7573 = vshrl.u32 %v7572, 7
      %v7574 = vsub.s32 %v7571, %v7573
      %v7575 = vrot.slane %v7561, %v7574
      %v7576 = vcombine.low %v7568, %v7575
      %v7577 = vcombine.low %v6797, %v6804
      %v7578 = vcombine.low %v6811, %v6818
      %v7580 = vunpack.c.l.s4 1983009808
      %v7581 = vunpack.c.0.s8 %v7580
      %v7582 = vlaneseq
      %v7583 = vshrl.u32 %v7582, 7
      %v7584 = vsub.s32 %v7581, %v7583
      %v7585 = vrot.slane %v7577, %v7584
      %v7587 = vunpack.c.l.s4 1983009808
      %v7588 = vunpack.c.0.s8 %v7587
      %v7589 = vlaneseq
      %v7590 = vshrl.u32 %v7589, 7
      %v7591 = vsub.s32 %v7588, %v7590
      %v7592 = vrot.slane %v7578, %v7591
      %v7593 = vcombine.low %v7585, %v7592
      %v7594 = vcombine.low %v6825, %v6832
      %v7595 = vcombine.low %v6839, %v6846
      %v7597 = vunpack.c.l.s4 1983009808
      %v7598 = vunpack.c.0.s8 %v7597
      %v7599 = vlaneseq
      %v7600 = vshrl.u32 %v7599, 7
      %v7601 = vsub.s32 %v7598, %v7600
      %v7602 = vrot.slane %v7594, %v7601
      %v7604 = vunpack.c.l.s4 1983009808
      %v7605 = vunpack.c.0.s8 %v7604
      %v7606 = vlaneseq
      %v7607 = vshrl.u32 %v7606, 7
      %v7608 = vsub.s32 %v7605, %v7607
      %v7609 = vrot.slane %v7595, %v7608
      %v7610 = vcombine.low %v7602, %v7609
      %v7611 = vcombine.low %v6853, %v6860
      %v7612 = vcombine.low %v6867, %v6874
      %v7614 = vunpack.c.l.s4 1983009808
      %v7615 = vunpack.c.0.s8 %v7614
      %v7616 = vlaneseq
      %v7617 = vshrl.u32 %v7616, 7
      %v7618 = vsub.s32 %v7615, %v7617
      %v7619 = vrot.slane %v7611, %v7618
      %v7621 = vunpack.c.l.s4 1983009808
      %v7622 = vunpack.c.0.s8 %v7621
      %v7623 = vlaneseq
      %v7624 = vshrl.u32 %v7623, 7
      %v7625 = vsub.s32 %v7622, %v7624
      %v7626 = vrot.slane %v7612, %v7625
      %v7627 = vcombine.low %v7619, %v7626
      %v7628 = vcombine.low %v6881, %v6888
      %v7629 = vcombine.low %v6895, %v6902
      %v7631 = vunpack.c.l.s4 1983009808
      %v7632 = vunpack.c.0.s8 %v7631
      %v7633 = vlaneseq
      %v7634 = vshrl.u32 %v7633, 7
      %v7635 = vsub.s32 %v7632, %v7634
      %v7636 = vrot.slane %v7628, %v7635
      %v7638 = vunpack.c.l.s4 1983009808
      %v7639 = vunpack.c.0.s8 %v7638
      %v7640 = vlaneseq
      %v7641 = vshrl.u32 %v7640, 7
      %v7642 = vsub.s32 %v7639, %v7641
      %v7643 = vrot.slane %v7629, %v7642
      %v7644 = vcombine.low %v7636, %v7643
      %v7645 = vcombine.low %v6909, %v6916
      %v7646 = vcombine.low %v6923, %v6930
      %v7648 = vunpack.c.l.s4 1983009808
      %v7649 = vunpack.c.0.s8 %v7648
      %v7650 = vlaneseq
      %v7651 = vshrl.u32 %v7650, 7
      %v7652 = vsub.s32 %v7649, %v7651
      %v7653 = vrot.slane %v7645, %v7652
      %v7655 = vunpack.c.l.s4 1983009808
      %v7656 = vunpack.c.0.s8 %v7655
      %v7657 = vlaneseq
      %v7658 = vshrl.u32 %v7657, 7
      %v7659 = vsub.s32 %v7656, %v7658
      %v7660 = vrot.slane %v7646, %v7659
      %v7661 = vcombine.low %v7653, %v7660
      %v7662 = vcombine.low %v6937, %v6944
      %v7663 = vcombine.low %v6951, %v6958
      %v7665 = vunpack.c.l.s4 1983009808
      %v7666 = vunpack.c.0.s8 %v7665
      %v7667 = vlaneseq
      %v7668 = vshrl.u32 %v7667, 7
      %v7669 = vsub.s32 %v7666, %v7668
      %v7670 = vrot.slane %v7662, %v7669
      %v7672 = vunpack.c.l.s4 1983009808
      %v7673 = vunpack.c.0.s8 %v7672
      %v7674 = vlaneseq
      %v7675 = vshrl.u32 %v7674, 7
      %v7676 = vsub.s32 %v7673, %v7675
      %v7677 = vrot.slane %v7663, %v7676
      %v7678 = vcombine.low %v7670, %v7677
      %v7679 = vcombine.low %v6965, %v6972
      %v7680 = vcombine.low %v6979, %v6986
      %v7682 = vunpack.c.l.s4 1983009808
      %v7683 = vunpack.c.0.s8 %v7682
      %v7684 = vlaneseq
      %v7685 = vshrl.u32 %v7684, 7
      %v7686 = vsub.s32 %v7683, %v7685
      %v7687 = vrot.slane %v7679, %v7686
      %v7689 = vunpack.c.l.s4 1983009808
      %v7690 = vunpack.c.0.s8 %v7689
      %v7691 = vlaneseq
      %v7692 = vshrl.u32 %v7691, 7
      %v7693 = vsub.s32 %v7690, %v7692
      %v7694 = vrot.slane %v7680, %v7693
      %v7695 = vcombine.low %v7687, %v7694
      %v7696 = vcombine.low %v6993, %v7000
      %v7697 = vcombine.low %v7007, %v7014
      %v7699 = vunpack.c.l.s4 1983009808
      %v7700 = vunpack.c.0.s8 %v7699
      %v7701 = vlaneseq
      %v7702 = vshrl.u32 %v7701, 7
      %v7703 = vsub.s32 %v7700, %v7702
      %v7704 = vrot.slane %v7696, %v7703
      %v7706 = vunpack.c.l.s4 1983009808
      %v7707 = vunpack.c.0.s8 %v7706
      %v7708 = vlaneseq
      %v7709 = vshrl.u32 %v7708, 7
      %v7710 = vsub.s32 %v7707, %v7709
      %v7711 = vrot.slane %v7697, %v7710
      %v7712 = vcombine.low %v7704, %v7711
      %v7713 = vcombine.low %v7021, %v7028
      %v7714 = vcombine.low %v7035, %v7042
      %v7716 = vunpack.c.l.s4 1983009808
      %v7717 = vunpack.c.0.s8 %v7716
      %v7718 = vlaneseq
      %v7719 = vshrl.u32 %v7718, 7
      %v7720 = vsub.s32 %v7717, %v7719
      %v7721 = vrot.slane %v7713, %v7720
      %v7723 = vunpack.c.l.s4 1983009808
      %v7724 = vunpack.c.0.s8 %v7723
      %v7725 = vlaneseq
      %v7726 = vshrl.u32 %v7725, 7
      %v7727 = vsub.s32 %v7724, %v7726
      %v7728 = vrot.slane %v7714, %v7727
      %v7729 = vcombine.low %v7721, %v7728
      %v7730 = vcombine.low %v7049, %v7056
      %v7731 = vcombine.low %v7063, %v7070
      %v7733 = vunpack.c.l.s4 1983009808
      %v7734 = vunpack.c.0.s8 %v7733
      %v7735 = vlaneseq
      %v7736 = vshrl.u32 %v7735, 7
      %v7737 = vsub.s32 %v7734, %v7736
      %v7738 = vrot.slane %v7730, %v7737
      %v7740 = vunpack.c.l.s4 1983009808
      %v7741 = vunpack.c.0.s8 %v7740
      %v7742 = vlaneseq
      %v7743 = vshrl.u32 %v7742, 7
      %v7744 = vsub.s32 %v7741, %v7743
      %v7745 = vrot.slane %v7731, %v7744
      %v7746 = vcombine.low %v7738, %v7745
      %v7747 = vcombine.low %v7077, %v7084
      %v7748 = vcombine.low %v7091, %v7098
      %v7750 = vunpack.c.l.s4 1983009808
      %v7751 = vunpack.c.0.s8 %v7750
      %v7752 = vlaneseq
      %v7753 = vshrl.u32 %v7752, 7
      %v7754 = vsub.s32 %v7751, %v7753
      %v7755 = vrot.slane %v7747, %v7754
      %v7757 = vunpack.c.l.s4 1983009808
      %v7758 = vunpack.c.0.s8 %v7757
      %v7759 = vlaneseq
      %v7760 = vshrl.u32 %v7759, 7
      %v7761 = vsub.s32 %v7758, %v7760
      %v7762 = vrot.slane %v7748, %v7761
      %v7763 = vcombine.low %v7755, %v7762
      %v7764 = vcombine.low %v7105, %v7112
      %v7765 = vcombine.low %v7119, %v7126
      %v7767 = vunpack.c.l.s4 1983009808
      %v7768 = vunpack.c.0.s8 %v7767
      %v7769 = vlaneseq
      %v7770 = vshrl.u32 %v7769, 7
      %v7771 = vsub.s32 %v7768, %v7770
      %v7772 = vrot.slane %v7764, %v7771
      %v7774 = vunpack.c.l.s4 1983009808
      %v7775 = vunpack.c.0.s8 %v7774
      %v7776 = vlaneseq
      %v7777 = vshrl.u32 %v7776, 7
      %v7778 = vsub.s32 %v7775, %v7777
      %v7779 = vrot.slane %v7765, %v7778
      %v7780 = vcombine.low %v7772, %v7779
      %v7781 = vcombine.low %v7133, %v7140
      %v7782 = vcombine.low %v7147, %v7154
      %v7784 = vunpack.c.l.s4 1983009808
      %v7785 = vunpack.c.0.s8 %v7784
      %v7786 = vlaneseq
      %v7787 = vshrl.u32 %v7786, 7
      %v7788 = vsub.s32 %v7785, %v7787
      %v7789 = vrot.slane %v7781, %v7788
      %v7791 = vunpack.c.l.s4 1983009808
      %v7792 = vunpack.c.0.s8 %v7791
      %v7793 = vlaneseq
      %v7794 = vshrl.u32 %v7793, 7
      %v7795 = vsub.s32 %v7792, %v7794
      %v7796 = vrot.slane %v7782, %v7795
      %v7797 = vcombine.low %v7789, %v7796
      %v7798 = vcombine.low %v7161, %v7168
      %v7799 = vcombine.low %v7175, %v7182
      %v7801 = vunpack.c.l.s4 1983009808
      %v7802 = vunpack.c.0.s8 %v7801
      %v7803 = vlaneseq
      %v7804 = vshrl.u32 %v7803, 7
      %v7805 = vsub.s32 %v7802, %v7804
      %v7806 = vrot.slane %v7798, %v7805
      %v7808 = vunpack.c.l.s4 1983009808
      %v7809 = vunpack.c.0.s8 %v7808
      %v7810 = vlaneseq
      %v7811 = vshrl.u32 %v7810, 7
      %v7812 = vsub.s32 %v7809, %v7811
      %v7813 = vrot.slane %v7799, %v7812
      %v7814 = vcombine.low %v7806, %v7813
      %v7815 = vcombine.low %v7189, %v7196
      %v7816 = vcombine.low %v7203, %v7210
      %v7818 = vunpack.c.l.s4 1983009808
      %v7819 = vunpack.c.0.s8 %v7818
      %v7820 = vlaneseq
      %v7821 = vshrl.u32 %v7820, 7
      %v7822 = vsub.s32 %v7819, %v7821
      %v7823 = vrot.slane %v7815, %v7822
      %v7825 = vunpack.c.l.s4 1983009808
      %v7826 = vunpack.c.0.s8 %v7825
      %v7827 = vlaneseq
      %v7828 = vshrl.u32 %v7827, 7
      %v7829 = vsub.s32 %v7826, %v7828
      %v7830 = vrot.slane %v7816, %v7829
      %v7831 = vcombine.low %v7823, %v7830
      %v7832 = vcombine.low %v7217, %v7224
      %v7833 = vcombine.low %v7231, %v7238
      %v7835 = vunpack.c.l.s4 1983009808
      %v7836 = vunpack.c.0.s8 %v7835
      %v7837 = vlaneseq
      %v7838 = vshrl.u32 %v7837, 7
      %v7839 = vsub.s32 %v7836, %v7838
      %v7840 = vrot.slane %v7832, %v7839
      %v7842 = vunpack.c.l.s4 1983009808
      %v7843 = vunpack.c.0.s8 %v7842
      %v7844 = vlaneseq
      %v7845 = vshrl.u32 %v7844, 7
      %v7846 = vsub.s32 %v7843, %v7845
      %v7847 = vrot.slane %v7833, %v7846
      %v7848 = vcombine.low %v7840, %v7847
      %v7849 = vcombine.low %v7245, %v7252
      %v7850 = vcombine.low %v7259, %v7266
      %v7852 = vunpack.c.l.s4 1983009808
      %v7853 = vunpack.c.0.s8 %v7852
      %v7854 = vlaneseq
      %v7855 = vshrl.u32 %v7854, 7
      %v7856 = vsub.s32 %v7853, %v7855
      %v7857 = vrot.slane %v7849, %v7856
      %v7859 = vunpack.c.l.s4 1983009808
      %v7860 = vunpack.c.0.s8 %v7859
      %v7861 = vlaneseq
      %v7862 = vshrl.u32 %v7861, 7
      %v7863 = vsub.s32 %v7860, %v7862
      %v7864 = vrot.slane %v7850, %v7863
      %v7865 = vcombine.low %v7857, %v7864
      %v7866 = vcombine.low %v7273, %v7280
      %v7867 = vcombine.low %v7287, %v7294
      %v7869 = vunpack.c.l.s4 1983009808
      %v7870 = vunpack.c.0.s8 %v7869
      %v7871 = vlaneseq
      %v7872 = vshrl.u32 %v7871, 7
      %v7873 = vsub.s32 %v7870, %v7872
      %v7874 = vrot.slane %v7866, %v7873
      %v7876 = vunpack.c.l.s4 1983009808
      %v7877 = vunpack.c.0.s8 %v7876
      %v7878 = vlaneseq
      %v7879 = vshrl.u32 %v7878, 7
      %v7880 = vsub.s32 %v7877, %v7879
      %v7881 = vrot.slane %v7867, %v7880
      %v7882 = vcombine.low %v7874, %v7881
      %v7883 = vcombine.low %v7301, %v7308
      %v7884 = vcombine.low %v7315, %v7322
      %v7886 = vunpack.c.l.s4 1983009808
      %v7887 = vunpack.c.0.s8 %v7886
      %v7888 = vlaneseq
      %v7889 = vshrl.u32 %v7888, 7
      %v7890 = vsub.s32 %v7887, %v7889
      %v7891 = vrot.slane %v7883, %v7890
      %v7893 = vunpack.c.l.s4 1983009808
      %v7894 = vunpack.c.0.s8 %v7893
      %v7895 = vlaneseq
      %v7896 = vshrl.u32 %v7895, 7
      %v7897 = vsub.s32 %v7894, %v7896
      %v7898 = vrot.slane %v7884, %v7897
      %v7899 = vcombine.low %v7891, %v7898
      %v7900 = vcombine.low %v7329, %v7336
      %v7901 = vcombine.low %v7343, %v7350
      %v7903 = vunpack.c.l.s4 1983009808
      %v7904 = vunpack.c.0.s8 %v7903
      %v7905 = vlaneseq
      %v7906 = vshrl.u32 %v7905, 7
      %v7907 = vsub.s32 %v7904, %v7906
      %v7908 = vrot.slane %v7900, %v7907
      %v7910 = vunpack.c.l.s4 1983009808
      %v7911 = vunpack.c.0.s8 %v7910
      %v7912 = vlaneseq
      %v7913 = vshrl.u32 %v7912, 7
      %v7914 = vsub.s32 %v7911, %v7913
      %v7915 = vrot.slane %v7901, %v7914
      %v7916 = vcombine.low %v7908, %v7915
      %v7917 = vcombine.low %v7357, %v7364
      %v7918 = vcombine.low %v7371, %v7378
      %v7920 = vunpack.c.l.s4 1983009808
      %v7921 = vunpack.c.0.s8 %v7920
      %v7922 = vlaneseq
      %v7923 = vshrl.u32 %v7922, 7
      %v7924 = vsub.s32 %v7921, %v7923
      %v7925 = vrot.slane %v7917, %v7924
      %v7927 = vunpack.c.l.s4 1983009808
      %v7928 = vunpack.c.0.s8 %v7927
      %v7929 = vlaneseq
      %v7930 = vshrl.u32 %v7929, 7
      %v7931 = vsub.s32 %v7928, %v7930
      %v7932 = vrot.slane %v7918, %v7931
      %v7933 = vcombine.low %v7925, %v7932
      %v7934 = vcombine.low %v7385, %v7392
      %v7935 = vcombine.low %v7399, %v7406
      %v7937 = vunpack.c.l.s4 1983009808
      %v7938 = vunpack.c.0.s8 %v7937
      %v7939 = vlaneseq
      %v7940 = vshrl.u32 %v7939, 7
      %v7941 = vsub.s32 %v7938, %v7940
      %v7942 = vrot.slane %v7934, %v7941
      %v7944 = vunpack.c.l.s4 1983009808
      %v7945 = vunpack.c.0.s8 %v7944
      %v7946 = vlaneseq
      %v7947 = vshrl.u32 %v7946, 7
      %v7948 = vsub.s32 %v7945, %v7947
      %v7949 = vrot.slane %v7935, %v7948
      %v7950 = vcombine.low %v7942, %v7949
      %7951 = vset.pattern.permute.xlu0 0
      %7952 = vperm.xlu0 %7951, %v7423
      %v7953 = vpop.permute.xlu0 %7952
      %7954 = vset.pattern.permute.xlu0 0
      %7955 = vperm.xlu0 %7954, %v7440
      %v7956 = vpop.permute.xlu0 %7955
      %7957 = vset.pattern.permute.xlu0 0
      %7958 = vperm.xlu0 %7957, %v7457
      %v7959 = vpop.permute.xlu0 %7958
      %7960 = vset.pattern.permute.xlu0 0
      %7961 = vperm.xlu0 %7960, %v7474
      %v7962 = vpop.permute.xlu0 %7961
      %7963 = vset.pattern.permute.xlu0 0
      %7964 = vperm.xlu0 %7963, %v7491
      %v7965 = vpop.permute.xlu0 %7964
      %7966 = vset.pattern.permute.xlu0 0
      %7967 = vperm.xlu0 %7966, %v7508
      %v7968 = vpop.permute.xlu0 %7967
      %7969 = vset.pattern.permute.xlu0 0
      %7970 = vperm.xlu0 %7969, %v7525
      %v7971 = vpop.permute.xlu0 %7970
      %7972 = vset.pattern.permute.xlu0 0
      %7973 = vperm.xlu0 %7972, %v7542
      %v7974 = vpop.permute.xlu0 %7973
      %7975 = vset.pattern.permute.xlu0 0
      %7976 = vperm.xlu0 %7975, %v7559
      %v7977 = vpop.permute.xlu0 %7976
      %7978 = vset.pattern.permute.xlu0 0
      %7979 = vperm.xlu0 %7978, %v7576
      %v7980 = vpop.permute.xlu0 %7979
      %7981 = vset.pattern.permute.xlu0 0
      %7982 = vperm.xlu0 %7981, %v7593
      %v7983 = vpop.permute.xlu0 %7982
      %7984 = vset.pattern.permute.xlu0 0
      %7985 = vperm.xlu0 %7984, %v7610
      %v7986 = vpop.permute.xlu0 %7985
      %7987 = vset.pattern.permute.xlu0 0
      %7988 = vperm.xlu0 %7987, %v7627
      %v7989 = vpop.permute.xlu0 %7988
      %7990 = vset.pattern.permute.xlu0 0
      %7991 = vperm.xlu0 %7990, %v7644
      %v7992 = vpop.permute.xlu0 %7991
      %7993 = vset.pattern.permute.xlu0 0
      %7994 = vperm.xlu0 %7993, %v7661
      %v7995 = vpop.permute.xlu0 %7994
      %7996 = vset.pattern.permute.xlu0 0
      %7997 = vperm.xlu0 %7996, %v7678
      %v7998 = vpop.permute.xlu0 %7997
      %7999 = vset.pattern.permute.xlu0 0
      %8000 = vperm.xlu0 %7999, %v7695
      %v8001 = vpop.permute.xlu0 %8000
      %8002 = vset.pattern.permute.xlu0 0
      %8003 = vperm.xlu0 %8002, %v7712
      %v8004 = vpop.permute.xlu0 %8003
      %8005 = vset.pattern.permute.xlu0 0
      %8006 = vperm.xlu0 %8005, %v7729
      %v8007 = vpop.permute.xlu0 %8006
      %8008 = vset.pattern.permute.xlu0 0
      %8009 = vperm.xlu0 %8008, %v7746
      %v8010 = vpop.permute.xlu0 %8009
      %8011 = vset.pattern.permute.xlu0 0
      %8012 = vperm.xlu0 %8011, %v7763
      %v8013 = vpop.permute.xlu0 %8012
      %8014 = vset.pattern.permute.xlu0 0
      %8015 = vperm.xlu0 %8014, %v7780
      %v8016 = vpop.permute.xlu0 %8015
      %8017 = vset.pattern.permute.xlu0 0
      %8018 = vperm.xlu0 %8017, %v7797
      %v8019 = vpop.permute.xlu0 %8018
      %8020 = vset.pattern.permute.xlu0 0
      %8021 = vperm.xlu0 %8020, %v7814
      %v8022 = vpop.permute.xlu0 %8021
      %8023 = vset.pattern.permute.xlu0 0
      %8024 = vperm.xlu0 %8023, %v7831
      %v8025 = vpop.permute.xlu0 %8024
      %8026 = vset.pattern.permute.xlu0 0
      %8027 = vperm.xlu0 %8026, %v7848
      %v8028 = vpop.permute.xlu0 %8027
      %8029 = vset.pattern.permute.xlu0 0
      %8030 = vperm.xlu0 %8029, %v7865
      %v8031 = vpop.permute.xlu0 %8030
      %8032 = vset.pattern.permute.xlu0 0
      %8033 = vperm.xlu0 %8032, %v7882
      %v8034 = vpop.permute.xlu0 %8033
      %8035 = vset.pattern.permute.xlu0 0
      %8036 = vperm.xlu0 %8035, %v7899
      %v8037 = vpop.permute.xlu0 %8036
      %8038 = vset.pattern.permute.xlu0 0
      %8039 = vperm.xlu0 %8038, %v7916
      %v8040 = vpop.permute.xlu0 %8039
      %8041 = vset.pattern.permute.xlu0 0
      %8042 = vperm.xlu0 %8041, %v7933
      %v8043 = vpop.permute.xlu0 %8042
      %8044 = vset.pattern.permute.xlu0 0
      %8045 = vperm.xlu0 %8044, %v7950
      %v8046 = vpop.permute.xlu0 %8045
      %v8047 = vlaneseq
      %v8048 = vshrl.u32 %v8047, 7
      %v8049 = vsub.s32 %v2735, %v8048
      %v8050 = vrot.slane %v7953, %v8049
      %v8051 = vlaneseq
      %v8052 = vshrl.u32 %v8051, 7
      %v8053 = vsub.s32 %v2740, %v8052
      %v8054 = vrot.slane %v7956, %v8053
      %v8055 = vsel %vm2745, %v8054, %v8050
      %v8056 = vlaneseq
      %v8057 = vshrl.u32 %v8056, 7
      %v8058 = vsub.s32 %v2747, %v8057
      %v8059 = vrot.slane %v7959, %v8058
      %v8060 = vsel %vm2752, %v8059, %v8055
      %v8061 = vlaneseq
      %v8062 = vshrl.u32 %v8061, 7
      %v8063 = vsub.s32 %v2754, %v8062
      %v8064 = vrot.slane %v7962, %v8063
      %v8065 = vsel %vm2759, %v8064, %v8060
      %v8066 = vlaneseq
      %v8067 = vshrl.u32 %v8066, 7
      %v8068 = vsub.s32 %v2761, %v8067
      %v8069 = vrot.slane %v7965, %v8068
      %v8070 = vsel %vm2766, %v8069, %v8065
      %v8071 = vlaneseq
      %v8072 = vshrl.u32 %v8071, 7
      %v8073 = vsub.s32 %v2768, %v8072
      %v8074 = vrot.slane %v7968, %v8073
      %v8075 = vsel %vm2773, %v8074, %v8070
      %v8076 = vlaneseq
      %v8077 = vshrl.u32 %v8076, 7
      %v8078 = vsub.s32 %v2775, %v8077
      %v8079 = vrot.slane %v7971, %v8078
      %v8080 = vsel %vm2780, %v8079, %v8075
      %v8081 = vlaneseq
      %v8082 = vshrl.u32 %v8081, 7
      %v8083 = vsub.s32 %v2782, %v8082
      %v8084 = vrot.slane %v7974, %v8083
      %v8085 = vsel %vm2787, %v8084, %v8080
      %v8086 = vlaneseq
      %v8087 = vshrl.u32 %v8086, 7
      %v8088 = vsub.s32 %v2789, %v8087
      %v8089 = vrot.slane %v7977, %v8088
      %v8090 = vsel %vm2794, %v8089, %v8085
      %v8091 = vlaneseq
      %v8092 = vshrl.u32 %v8091, 7
      %v8093 = vsub.s32 %v2796, %v8092
      %v8094 = vrot.slane %v7980, %v8093
      %v8095 = vsel %vm2801, %v8094, %v8090
      %v8096 = vlaneseq
      %v8097 = vshrl.u32 %v8096, 7
      %v8098 = vsub.s32 %v2803, %v8097
      %v8099 = vrot.slane %v7983, %v8098
      %v8100 = vsel %vm2808, %v8099, %v8095
      %v8101 = vlaneseq
      %v8102 = vshrl.u32 %v8101, 7
      %v8103 = vsub.s32 %v2810, %v8102
      %v8104 = vrot.slane %v7986, %v8103
      %v8105 = vsel %vm2815, %v8104, %v8100
      %v8106 = vlaneseq
      %v8107 = vshrl.u32 %v8106, 7
      %v8108 = vsub.s32 %v2817, %v8107
      %v8109 = vrot.slane %v7989, %v8108
      %v8110 = vsel %vm2822, %v8109, %v8105
      %v8111 = vlaneseq
      %v8112 = vshrl.u32 %v8111, 7
      %v8113 = vsub.s32 %v2824, %v8112
      %v8114 = vrot.slane %v7992, %v8113
      %v8115 = vsel %vm2829, %v8114, %v8110
      %v8116 = vlaneseq
      %v8117 = vshrl.u32 %v8116, 7
      %v8118 = vsub.s32 %v2831, %v8117
      %v8119 = vrot.slane %v7995, %v8118
      %v8120 = vsel %vm2836, %v8119, %v8115
      %v8121 = vlaneseq
      %v8122 = vshrl.u32 %v8121, 7
      %v8123 = vsub.s32 %v2838, %v8122
      %v8124 = vrot.slane %v7998, %v8123
      %v8125 = vsel %vm2843, %v8124, %v8120
      %v8126 = vlaneseq
      %v8127 = vshrl.u32 %v8126, 7
      %v8128 = vsub.s32 %v2735, %v8127
      %v8129 = vrot.slane %v8001, %v8128
      %v8130 = vlaneseq
      %v8131 = vshrl.u32 %v8130, 7
      %v8132 = vsub.s32 %v2740, %v8131
      %v8133 = vrot.slane %v8004, %v8132
      %v8134 = vsel %vm2745, %v8133, %v8129
      %v8135 = vlaneseq
      %v8136 = vshrl.u32 %v8135, 7
      %v8137 = vsub.s32 %v2747, %v8136
      %v8138 = vrot.slane %v8007, %v8137
      %v8139 = vsel %vm2752, %v8138, %v8134
      %v8140 = vlaneseq
      %v8141 = vshrl.u32 %v8140, 7
      %v8142 = vsub.s32 %v2754, %v8141
      %v8143 = vrot.slane %v8010, %v8142
      %v8144 = vsel %vm2759, %v8143, %v8139
      %v8145 = vlaneseq
      %v8146 = vshrl.u32 %v8145, 7
      %v8147 = vsub.s32 %v2761, %v8146
      %v8148 = vrot.slane %v8013, %v8147
      %v8149 = vsel %vm2766, %v8148, %v8144
      %v8150 = vlaneseq
      %v8151 = vshrl.u32 %v8150, 7
      %v8152 = vsub.s32 %v2768, %v8151
      %v8153 = vrot.slane %v8016, %v8152
      %v8154 = vsel %vm2773, %v8153, %v8149
      %v8155 = vlaneseq
      %v8156 = vshrl.u32 %v8155, 7
      %v8157 = vsub.s32 %v2775, %v8156
      %v8158 = vrot.slane %v8019, %v8157
      %v8159 = vsel %vm2780, %v8158, %v8154
      %v8160 = vlaneseq
      %v8161 = vshrl.u32 %v8160, 7
      %v8162 = vsub.s32 %v2782, %v8161
      %v8163 = vrot.slane %v8022, %v8162
      %v8164 = vsel %vm2787, %v8163, %v8159
      %v8165 = vlaneseq
      %v8166 = vshrl.u32 %v8165, 7
      %v8167 = vsub.s32 %v2789, %v8166
      %v8168 = vrot.slane %v8025, %v8167
      %v8169 = vsel %vm2794, %v8168, %v8164
      %v8170 = vlaneseq
      %v8171 = vshrl.u32 %v8170, 7
      %v8172 = vsub.s32 %v2796, %v8171
      %v8173 = vrot.slane %v8028, %v8172
      %v8174 = vsel %vm2801, %v8173, %v8169
      %v8175 = vlaneseq
      %v8176 = vshrl.u32 %v8175, 7
      %v8177 = vsub.s32 %v2803, %v8176
      %v8178 = vrot.slane %v8031, %v8177
      %v8179 = vsel %vm2808, %v8178, %v8174
      %v8180 = vlaneseq
      %v8181 = vshrl.u32 %v8180, 7
      %v8182 = vsub.s32 %v2810, %v8181
      %v8183 = vrot.slane %v8034, %v8182
      %v8184 = vsel %vm2815, %v8183, %v8179
      %v8185 = vlaneseq
      %v8186 = vshrl.u32 %v8185, 7
      %v8187 = vsub.s32 %v2817, %v8186
      %v8188 = vrot.slane %v8037, %v8187
      %v8189 = vsel %vm2822, %v8188, %v8184
      %v8190 = vlaneseq
      %v8191 = vshrl.u32 %v8190, 7
      %v8192 = vsub.s32 %v2824, %v8191
      %v8193 = vrot.slane %v8040, %v8192
      %v8194 = vsel %vm2829, %v8193, %v8189
      %v8195 = vlaneseq
      %v8196 = vshrl.u32 %v8195, 7
      %v8197 = vsub.s32 %v2831, %v8196
      %v8198 = vrot.slane %v8043, %v8197
      %v8199 = vsel %vm2836, %v8198, %v8194
      %v8200 = vlaneseq
      %v8201 = vshrl.u32 %v8200, 7
      %v8202 = vsub.s32 %v2838, %v8201
      %v8203 = vrot.slane %v8046, %v8202
      %v8204 = vsel %vm2843, %v8203, %v8199
      %v8205 = vsel %vm2924, %v8204, %v8125
      %v8207 = vunpack.c.l.s4 1983009808
      %v8208 = vunpack.c.0.s8 %v8207
      %v8209 = vlaneseq
      %v8210 = vshrl.u32 %v8209, 7
      %v8211 = vsub.s32 %v8208, %v8210
      %v8212 = vrot.slane %v8205, %v8211
      %8214 = vst [vmem:[%s189 + $0x4] sm:$0x3] %v8212
      loop: start=0, step=1, limit=32
      $region58: #{kge_forward.1} parent=35 // loop_pre_header
        _
      $region59: #{kge_forward.1} parent=35 // loop_header
        %s8216 = sphi 0, %s8220
        %p8217 = scmp.ge.s32.totalorder %s8216, 32
      $region60: #{kge_forward.1} parent=35 // loop_header_branch
        %8219 = sbr.rel (%p8217) target = $region64
      $region61: #{kge_forward.1} parent=35 // loop_body
        %s8221 = smul.u32 %s8216, 4
        %s8222 = sadd.s32 %s191, 384
        %s8223 = sadd.s32 %s8222, %s8221
        %s8224 = sld [smem:[#allocation5 + %s8223]]
        %s8225 = sld [smem:[#allocation6 + %s8223]]
        %s8226 = scalar_lea.vmem %s5, %s8224
        %v8227 = vld [vmem:[%s8226] sm:$0x1]
        %s8228 = scalar_lea.vmem [#allocation2], %s8221
        %8229 = vst [vmem:[%s8228] sm:$0x1] %v8227
        %s8230 = scalar_lea.vmem %s5, %s8225
        %v8231 = vld [vmem:[%s8230] sm:$0x1]
        %s8232 = scalar_lea.vmem [#allocation3], %s8221
        %8233 = vst [vmem:[%s8232] sm:$0x1] %v8231
        %s8234 = sadd.s32 %s191, 1408
        %s8235 = sadd.s32 %s8234, %s8221
        %s8236 = sld [smem:[#allocation5 + %s8235]]
        %s8237 = sld [smem:[#allocation6 + %s8235]]
        %s8238 = scalar_lea.vmem %s5, %s8236
        %v8239 = vld [vmem:[%s8238] sm:$0x1]
        %s8240 = sadd.s32 %s8221, 128
        %s8241 = scalar_lea.vmem [#allocation2], %s8240
        %8242 = vst [vmem:[%s8241] sm:$0x1] %v8239
        %s8243 = scalar_lea.vmem %s5, %s8237
        %v8244 = vld [vmem:[%s8243] sm:$0x1]
        %s8245 = scalar_lea.vmem [#allocation3], %s8240
        %8246 = vst [vmem:[%s8245] sm:$0x1] %v8244
        %s8247 = sadd.s32 %s8221, 1
        %s8248 = sadd.s32 %s8222, %s8247
        %s8249 = sld [smem:[#allocation5 + %s8248]]
        %s8250 = sld [smem:[#allocation6 + %s8248]]
        %s8251 = scalar_lea.vmem %s5, %s8249
        %v8252 = vld [vmem:[%s8251] sm:$0x1]
        %s8253 = scalar_lea.vmem [#allocation2], %s8247
        %8254 = vst [vmem:[%s8253] sm:$0x1] %v8252
        %s8255 = scalar_lea.vmem %s5, %s8250
        %v8256 = vld [vmem:[%s8255] sm:$0x1]
        %s8257 = scalar_lea.vmem [#allocation3], %s8247
        %8258 = vst [vmem:[%s8257] sm:$0x1] %v8256
        %s8259 = sadd.s32 %s8234, %s8247
        %s8260 = sld [smem:[#allocation5 + %s8259]]
        %s8261 = sld [smem:[#allocation6 + %s8259]]
        %s8262 = scalar_lea.vmem %s5, %s8260
        %v8263 = vld [vmem:[%s8262] sm:$0x1]
        %s8264 = sadd.s32 %s8247, 128
        %s8265 = scalar_lea.vmem [#allocation2], %s8264
        %8266 = vst [vmem:[%s8265] sm:$0x1] %v8263
        %s8267 = scalar_lea.vmem %s5, %s8261
        %v8268 = vld [vmem:[%s8267] sm:$0x1]
        %s8269 = scalar_lea.vmem [#allocation3], %s8264
        %8270 = vst [vmem:[%s8269] sm:$0x1] %v8268
        %s8271 = sadd.s32 %s8221, 2
        %s8272 = sadd.s32 %s8222, %s8271
        %s8273 = sld [smem:[#allocation5 + %s8272]]
        %s8274 = sld [smem:[#allocation6 + %s8272]]
        %s8275 = scalar_lea.vmem %s5, %s8273
        %v8276 = vld [vmem:[%s8275] sm:$0x1]
        %s8277 = scalar_lea.vmem [#allocation2], %s8271
        %8278 = vst [vmem:[%s8277] sm:$0x1] %v8276
        %s8279 = scalar_lea.vmem %s5, %s8274
        %v8280 = vld [vmem:[%s8279] sm:$0x1]
        %s8281 = scalar_lea.vmem [#allocation3], %s8271
        %8282 = vst [vmem:[%s8281] sm:$0x1] %v8280
        %s8283 = sadd.s32 %s8234, %s8271
        %s8284 = sld [smem:[#allocation5 + %s8283]]
        %s8285 = sld [smem:[#allocation6 + %s8283]]
        %s8286 = scalar_lea.vmem %s5, %s8284
        %v8287 = vld [vmem:[%s8286] sm:$0x1]
        %s8288 = sadd.s32 %s8271, 128
        %s8289 = scalar_lea.vmem [#allocation2], %s8288
        %8290 = vst [vmem:[%s8289] sm:$0x1] %v8287
        %s8291 = scalar_lea.vmem %s5, %s8285
        %v8292 = vld [vmem:[%s8291] sm:$0x1]
        %s8293 = scalar_lea.vmem [#allocation3], %s8288
        %8294 = vst [vmem:[%s8293] sm:$0x1] %v8292
        %s8295 = sadd.s32 %s8221, 3
        %s8296 = sadd.s32 %s8222, %s8295
        %s8297 = sld [smem:[#allocation5 + %s8296]]
        %s8298 = sld [smem:[#allocation6 + %s8296]]
        %s8299 = scalar_lea.vmem %s5, %s8297
        %v8300 = vld [vmem:[%s8299] sm:$0x1]
        %s8301 = scalar_lea.vmem [#allocation2], %s8295
        %8302 = vst [vmem:[%s8301] sm:$0x1] %v8300
        %s8303 = scalar_lea.vmem %s5, %s8298
        %v8304 = vld [vmem:[%s8303] sm:$0x1]
        %s8305 = scalar_lea.vmem [#allocation3], %s8295
        %8306 = vst [vmem:[%s8305] sm:$0x1] %v8304
        %s8307 = sadd.s32 %s8234, %s8295
        %s8308 = sld [smem:[#allocation5 + %s8307]]
        %s8309 = sld [smem:[#allocation6 + %s8307]]
        %s8310 = scalar_lea.vmem %s5, %s8308
        %v8311 = vld [vmem:[%s8310] sm:$0x1]
        %s8312 = sadd.s32 %s8295, 128
        %s8313 = scalar_lea.vmem [#allocation2], %s8312
        %8314 = vst [vmem:[%s8313] sm:$0x1] %v8311
        %s8315 = scalar_lea.vmem %s5, %s8309
        %v8316 = vld [vmem:[%s8315] sm:$0x1]
        %s8317 = scalar_lea.vmem [#allocation3], %s8312
        %8318 = vst [vmem:[%s8317] sm:$0x1] %v8316
      $region62: #{kge_forward.1} parent=35 // loop_footer
        %s8220 = sadd.s32 1, %s8216
      $region63: #{kge_forward.1} parent=35 // loop_footer_branch
        %8215 = sbr.rel target = $region59
      $region64: #{kge_forward.1} parent=35 // loop_exit
        _
      %v8319 = vld [vmem:[#allocation2] sm:$0xff]
      %v8320 = vld [vmem:[#allocation2 + $0x8] sm:$0xff]
      %v8321 = vld [vmem:[#allocation2 + $0x10] sm:$0xff]
      %v8322 = vld [vmem:[#allocation2 + $0x18] sm:$0xff]
      %v8323 = vld [vmem:[#allocation2 + $0x20] sm:$0xff]
      %v8324 = vld [vmem:[#allocation2 + $0x28] sm:$0xff]
      %v8325 = vld [vmem:[#allocation2 + $0x30] sm:$0xff]
      %v8326 = vld [vmem:[#allocation2 + $0x38] sm:$0xff]
      %v8327 = vld [vmem:[#allocation2 + $0x40] sm:$0xff]
      %v8328 = vld [vmem:[#allocation2 + $0x48] sm:$0xff]
      %v8329 = vld [vmem:[#allocation2 + $0x50] sm:$0xff]
      %v8330 = vld [vmem:[#allocation2 + $0x58] sm:$0xff]
      %v8331 = vld [vmem:[#allocation2 + $0x60] sm:$0xff]
      %v8332 = vld [vmem:[#allocation2 + $0x68] sm:$0xff]
      %v8333 = vld [vmem:[#allocation2 + $0x70] sm:$0xff]
      %v8334 = vld [vmem:[#allocation2 + $0x78] sm:$0xff]
      %v8335 = vld [vmem:[#allocation2 + $0x80] sm:$0xff]
      %v8336 = vld [vmem:[#allocation2 + $0x88] sm:$0xff]
      %v8337 = vld [vmem:[#allocation2 + $0x90] sm:$0xff]
      %v8338 = vld [vmem:[#allocation2 + $0x98] sm:$0xff]
      %v8339 = vld [vmem:[#allocation2 + $0xa0] sm:$0xff]
      %v8340 = vld [vmem:[#allocation2 + $0xa8] sm:$0xff]
      %v8341 = vld [vmem:[#allocation2 + $0xb0] sm:$0xff]
      %v8342 = vld [vmem:[#allocation2 + $0xb8] sm:$0xff]
      %v8343 = vld [vmem:[#allocation2 + $0xc0] sm:$0xff]
      %v8344 = vld [vmem:[#allocation2 + $0xc8] sm:$0xff]
      %v8345 = vld [vmem:[#allocation2 + $0xd0] sm:$0xff]
      %v8346 = vld [vmem:[#allocation2 + $0xd8] sm:$0xff]
      %v8347 = vld [vmem:[#allocation2 + $0xe0] sm:$0xff]
      %v8348 = vld [vmem:[#allocation2 + $0xe8] sm:$0xff]
      %v8349 = vld [vmem:[#allocation2 + $0xf0] sm:$0xff]
      %v8350 = vld [vmem:[#allocation2 + $0xf8] sm:$0xff]
      %v8351 = vld [vmem:[#allocation3] sm:$0xff]
      %v8352 = vld [vmem:[#allocation3 + $0x8] sm:$0xff]
      %v8353 = vld [vmem:[#allocation3 + $0x10] sm:$0xff]
      %v8354 = vld [vmem:[#allocation3 + $0x18] sm:$0xff]
      %v8355 = vld [vmem:[#allocation3 + $0x20] sm:$0xff]
      %v8356 = vld [vmem:[#allocation3 + $0x28] sm:$0xff]
      %v8357 = vld [vmem:[#allocation3 + $0x30] sm:$0xff]
      %v8358 = vld [vmem:[#allocation3 + $0x38] sm:$0xff]
      %v8359 = vld [vmem:[#allocation3 + $0x40] sm:$0xff]
      %v8360 = vld [vmem:[#allocation3 + $0x48] sm:$0xff]
      %v8361 = vld [vmem:[#allocation3 + $0x50] sm:$0xff]
      %v8362 = vld [vmem:[#allocation3 + $0x58] sm:$0xff]
      %v8363 = vld [vmem:[#allocation3 + $0x60] sm:$0xff]
      %v8364 = vld [vmem:[#allocation3 + $0x68] sm:$0xff]
      %v8365 = vld [vmem:[#allocation3 + $0x70] sm:$0xff]
      %v8366 = vld [vmem:[#allocation3 + $0x78] sm:$0xff]
      %v8367 = vld [vmem:[#allocation3 + $0x80] sm:$0xff]
      %v8368 = vld [vmem:[#allocation3 + $0x88] sm:$0xff]
      %v8369 = vld [vmem:[#allocation3 + $0x90] sm:$0xff]
      %v8370 = vld [vmem:[#allocation3 + $0x98] sm:$0xff]
      %v8371 = vld [vmem:[#allocation3 + $0xa0] sm:$0xff]
      %v8372 = vld [vmem:[#allocation3 + $0xa8] sm:$0xff]
      %v8373 = vld [vmem:[#allocation3 + $0xb0] sm:$0xff]
      %v8374 = vld [vmem:[#allocation3 + $0xb8] sm:$0xff]
      %v8375 = vld [vmem:[#allocation3 + $0xc0] sm:$0xff]
      %v8376 = vld [vmem:[#allocation3 + $0xc8] sm:$0xff]
      %v8377 = vld [vmem:[#allocation3 + $0xd0] sm:$0xff]
      %v8378 = vld [vmem:[#allocation3 + $0xd8] sm:$0xff]
      %v8379 = vld [vmem:[#allocation3 + $0xe0] sm:$0xff]
      %v8380 = vld [vmem:[#allocation3 + $0xe8] sm:$0xff]
      %v8381 = vld [vmem:[#allocation3 + $0xf0] sm:$0xff]
      %v8382 = vld [vmem:[#allocation3 + $0xf8] sm:$0xff]
      %v8383 = vmul.f32 %v8319, %v413
      %v8384 = vmul.f32 %v8320, %v413
      %v8385 = vmul.f32 %v8321, %v413
      %v8386 = vmul.f32 %v8322, %v413
      %v8387 = vmul.f32 %v8323, %v413
      %v8388 = vmul.f32 %v8324, %v413
      %v8389 = vmul.f32 %v8325, %v413
      %v8390 = vmul.f32 %v8326, %v413
      %v8391 = vmul.f32 %v8327, %v413
      %v8392 = vmul.f32 %v8328, %v413
      %v8393 = vmul.f32 %v8329, %v413
      %v8394 = vmul.f32 %v8330, %v413
      %v8395 = vmul.f32 %v8331, %v413
      %v8396 = vmul.f32 %v8332, %v413
      %v8397 = vmul.f32 %v8333, %v413
      %v8398 = vmul.f32 %v8334, %v413
      %v8399 = vmul.f32 %v8335, %v417
      %v8400 = vmul.f32 %v8336, %v417
      %v8401 = vmul.f32 %v8337, %v417
      %v8402 = vmul.f32 %v8338, %v417
      %v8403 = vmul.f32 %v8339, %v417
      %v8404 = vmul.f32 %v8340, %v417
      %v8405 = vmul.f32 %v8341, %v417
      %v8406 = vmul.f32 %v8342, %v417
      %v8407 = vmul.f32 %v8343, %v417
      %v8408 = vmul.f32 %v8344, %v417
      %v8409 = vmul.f32 %v8345, %v417
      %v8410 = vmul.f32 %v8346, %v417
      %v8411 = vmul.f32 %v8347, %v417
      %v8412 = vmul.f32 %v8348, %v417
      %v8413 = vmul.f32 %v8349, %v417
      %v8414 = vmul.f32 %v8350, %v417
      %8415 = vadd.xlane.f32.xlu0 %v8383
      %v8416 = vpop.xlane.xlu0 %8415
      %8417 = vadd.xlane.f32.xlu0 %v8384
      %v8418 = vpop.xlane.xlu0 %8417
      %8419 = vadd.xlane.f32.xlu0 %v8385
      %v8420 = vpop.xlane.xlu0 %8419
      %8421 = vadd.xlane.f32.xlu0 %v8386
      %v8422 = vpop.xlane.xlu0 %8421
      %8423 = vadd.xlane.f32.xlu0 %v8387
      %v8424 = vpop.xlane.xlu0 %8423
      %8425 = vadd.xlane.f32.xlu0 %v8388
      %v8426 = vpop.xlane.xlu0 %8425
      %8427 = vadd.xlane.f32.xlu0 %v8389
      %v8428 = vpop.xlane.xlu0 %8427
      %8429 = vadd.xlane.f32.xlu0 %v8390
      %v8430 = vpop.xlane.xlu0 %8429
      %8431 = vadd.xlane.f32.xlu0 %v8391
      %v8432 = vpop.xlane.xlu0 %8431
      %8433 = vadd.xlane.f32.xlu0 %v8392
      %v8434 = vpop.xlane.xlu0 %8433
      %8435 = vadd.xlane.f32.xlu0 %v8393
      %v8436 = vpop.xlane.xlu0 %8435
      %8437 = vadd.xlane.f32.xlu0 %v8394
      %v8438 = vpop.xlane.xlu0 %8437
      %8439 = vadd.xlane.f32.xlu0 %v8395
      %v8440 = vpop.xlane.xlu0 %8439
      %8441 = vadd.xlane.f32.xlu0 %v8396
      %v8442 = vpop.xlane.xlu0 %8441
      %8443 = vadd.xlane.f32.xlu0 %v8397
      %v8444 = vpop.xlane.xlu0 %8443
      %8445 = vadd.xlane.f32.xlu0 %v8398
      %v8446 = vpop.xlane.xlu0 %8445
      %8447 = vadd.xlane.f32.xlu0 %v8399
      %v8448 = vpop.xlane.xlu0 %8447
      %8449 = vadd.xlane.f32.xlu0 %v8400
      %v8450 = vpop.xlane.xlu0 %8449
      %8451 = vadd.xlane.f32.xlu0 %v8401
      %v8452 = vpop.xlane.xlu0 %8451
      %8453 = vadd.xlane.f32.xlu0 %v8402
      %v8454 = vpop.xlane.xlu0 %8453
      %8455 = vadd.xlane.f32.xlu0 %v8403
      %v8456 = vpop.xlane.xlu0 %8455
      %8457 = vadd.xlane.f32.xlu0 %v8404
      %v8458 = vpop.xlane.xlu0 %8457
      %8459 = vadd.xlane.f32.xlu0 %v8405
      %v8460 = vpop.xlane.xlu0 %8459
      %8461 = vadd.xlane.f32.xlu0 %v8406
      %v8462 = vpop.xlane.xlu0 %8461
      %8463 = vadd.xlane.f32.xlu0 %v8407
      %v8464 = vpop.xlane.xlu0 %8463
      %8465 = vadd.xlane.f32.xlu0 %v8408
      %v8466 = vpop.xlane.xlu0 %8465
      %8467 = vadd.xlane.f32.xlu0 %v8409
      %v8468 = vpop.xlane.xlu0 %8467
      %8469 = vadd.xlane.f32.xlu0 %v8410
      %v8470 = vpop.xlane.xlu0 %8469
      %8471 = vadd.xlane.f32.xlu0 %v8411
      %v8472 = vpop.xlane.xlu0 %8471
      %8473 = vadd.xlane.f32.xlu0 %v8412
      %v8474 = vpop.xlane.xlu0 %8473
      %8475 = vadd.xlane.f32.xlu0 %v8413
      %v8476 = vpop.xlane.xlu0 %8475
      %8477 = vadd.xlane.f32.xlu0 %v8414
      %v8478 = vpop.xlane.xlu0 %8477
      %v8479 = vmul.f32 %v8351, %v519
      %v8480 = vmul.f32 %v8352, %v519
      %v8481 = vmul.f32 %v8353, %v519
      %v8482 = vmul.f32 %v8354, %v519
      %v8483 = vmul.f32 %v8355, %v519
      %v8484 = vmul.f32 %v8356, %v519
      %v8485 = vmul.f32 %v8357, %v519
      %v8486 = vmul.f32 %v8358, %v519
      %v8487 = vmul.f32 %v8359, %v519
      %v8488 = vmul.f32 %v8360, %v519
      %v8489 = vmul.f32 %v8361, %v519
      %v8490 = vmul.f32 %v8362, %v519
      %v8491 = vmul.f32 %v8363, %v519
      %v8492 = vmul.f32 %v8364, %v519
      %v8493 = vmul.f32 %v8365, %v519
      %v8494 = vmul.f32 %v8366, %v519
      %v8495 = vmul.f32 %v8367, %v523
      %v8496 = vmul.f32 %v8368, %v523
      %v8497 = vmul.f32 %v8369, %v523
      %v8498 = vmul.f32 %v8370, %v523
      %v8499 = vmul.f32 %v8371, %v523
      %v8500 = vmul.f32 %v8372, %v523
      %v8501 = vmul.f32 %v8373, %v523
      %v8502 = vmul.f32 %v8374, %v523
      %v8503 = vmul.f32 %v8375, %v523
      %v8504 = vmul.f32 %v8376, %v523
      %v8505 = vmul.f32 %v8377, %v523
      %v8506 = vmul.f32 %v8378, %v523
      %v8507 = vmul.f32 %v8379, %v523
      %v8508 = vmul.f32 %v8380, %v523
      %v8509 = vmul.f32 %v8381, %v523
      %v8510 = vmul.f32 %v8382, %v523
      %8511 = vadd.xlane.f32.xlu0 %v8479
      %v8512 = vpop.xlane.xlu0 %8511
      %8513 = vadd.xlane.f32.xlu0 %v8480
      %v8514 = vpop.xlane.xlu0 %8513
      %8515 = vadd.xlane.f32.xlu0 %v8481
      %v8516 = vpop.xlane.xlu0 %8515
      %8517 = vadd.xlane.f32.xlu0 %v8482
      %v8518 = vpop.xlane.xlu0 %8517
      %8519 = vadd.xlane.f32.xlu0 %v8483
      %v8520 = vpop.xlane.xlu0 %8519
      %8521 = vadd.xlane.f32.xlu0 %v8484
      %v8522 = vpop.xlane.xlu0 %8521
      %8523 = vadd.xlane.f32.xlu0 %v8485
      %v8524 = vpop.xlane.xlu0 %8523
      %8525 = vadd.xlane.f32.xlu0 %v8486
      %v8526 = vpop.xlane.xlu0 %8525
      %8527 = vadd.xlane.f32.xlu0 %v8487
      %v8528 = vpop.xlane.xlu0 %8527
      %8529 = vadd.xlane.f32.xlu0 %v8488
      %v8530 = vpop.xlane.xlu0 %8529
      %8531 = vadd.xlane.f32.xlu0 %v8489
      %v8532 = vpop.xlane.xlu0 %8531
      %8533 = vadd.xlane.f32.xlu0 %v8490
      %v8534 = vpop.xlane.xlu0 %8533
      %8535 = vadd.xlane.f32.xlu0 %v8491
      %v8536 = vpop.xlane.xlu0 %8535
      %8537 = vadd.xlane.f32.xlu0 %v8492
      %v8538 = vpop.xlane.xlu0 %8537
      %8539 = vadd.xlane.f32.xlu0 %v8493
      %v8540 = vpop.xlane.xlu0 %8539
      %8541 = vadd.xlane.f32.xlu0 %v8494
      %v8542 = vpop.xlane.xlu0 %8541
      %8543 = vadd.xlane.f32.xlu0 %v8495
      %v8544 = vpop.xlane.xlu0 %8543
      %8545 = vadd.xlane.f32.xlu0 %v8496
      %v8546 = vpop.xlane.xlu0 %8545
      %8547 = vadd.xlane.f32.xlu0 %v8497
      %v8548 = vpop.xlane.xlu0 %8547
      %8549 = vadd.xlane.f32.xlu0 %v8498
      %v8550 = vpop.xlane.xlu0 %8549
      %8551 = vadd.xlane.f32.xlu0 %v8499
      %v8552 = vpop.xlane.xlu0 %8551
      %8553 = vadd.xlane.f32.xlu0 %v8500
      %v8554 = vpop.xlane.xlu0 %8553
      %8555 = vadd.xlane.f32.xlu0 %v8501
      %v8556 = vpop.xlane.xlu0 %8555
      %8557 = vadd.xlane.f32.xlu0 %v8502
      %v8558 = vpop.xlane.xlu0 %8557
      %8559 = vadd.xlane.f32.xlu0 %v8503
      %v8560 = vpop.xlane.xlu0 %8559
      %8561 = vadd.xlane.f32.xlu0 %v8504
      %v8562 = vpop.xlane.xlu0 %8561
      %8563 = vadd.xlane.f32.xlu0 %v8505
      %v8564 = vpop.xlane.xlu0 %8563
      %8565 = vadd.xlane.f32.xlu0 %v8506
      %v8566 = vpop.xlane.xlu0 %8565
      %8567 = vadd.xlane.f32.xlu0 %v8507
      %v8568 = vpop.xlane.xlu0 %8567
      %8569 = vadd.xlane.f32.xlu0 %v8508
      %v8570 = vpop.xlane.xlu0 %8569
      %8571 = vadd.xlane.f32.xlu0 %v8509
      %v8572 = vpop.xlane.xlu0 %8571
      %8573 = vadd.xlane.f32.xlu0 %v8510
      %v8574 = vpop.xlane.xlu0 %8573
      %v8575 = vadd.f32 %v8416, %v8512
      %v8576 = vadd.f32 %v8418, %v8514
      %v8577 = vadd.f32 %v8420, %v8516
      %v8578 = vadd.f32 %v8422, %v8518
      %v8579 = vadd.f32 %v8424, %v8520
      %v8580 = vadd.f32 %v8426, %v8522
      %v8581 = vadd.f32 %v8428, %v8524
      %v8582 = vadd.f32 %v8430, %v8526
      %v8583 = vadd.f32 %v8432, %v8528
      %v8584 = vadd.f32 %v8434, %v8530
      %v8585 = vadd.f32 %v8436, %v8532
      %v8586 = vadd.f32 %v8438, %v8534
      %v8587 = vadd.f32 %v8440, %v8536
      %v8588 = vadd.f32 %v8442, %v8538
      %v8589 = vadd.f32 %v8444, %v8540
      %v8590 = vadd.f32 %v8446, %v8542
      %v8591 = vadd.f32 %v8448, %v8544
      %v8592 = vadd.f32 %v8450, %v8546
      %v8593 = vadd.f32 %v8452, %v8548
      %v8594 = vadd.f32 %v8454, %v8550
      %v8595 = vadd.f32 %v8456, %v8552
      %v8596 = vadd.f32 %v8458, %v8554
      %v8597 = vadd.f32 %v8460, %v8556
      %v8598 = vadd.f32 %v8462, %v8558
      %v8599 = vadd.f32 %v8464, %v8560
      %v8600 = vadd.f32 %v8466, %v8562
      %v8601 = vadd.f32 %v8468, %v8564
      %v8602 = vadd.f32 %v8470, %v8566
      %v8603 = vadd.f32 %v8472, %v8568
      %v8604 = vadd.f32 %v8474, %v8570
      %v8605 = vadd.f32 %v8476, %v8572
      %v8606 = vadd.f32 %v8478, %v8574
      %v8607 = vsub.f32 0.0, %v8575
      %v8608 = vsub.f32 0.0, %v8576
      %v8609 = vsub.f32 0.0, %v8577
      %v8610 = vsub.f32 0.0, %v8578
      %v8611 = vsub.f32 0.0, %v8579
      %v8612 = vsub.f32 0.0, %v8580
      %v8613 = vsub.f32 0.0, %v8581
      %v8614 = vsub.f32 0.0, %v8582
      %v8615 = vsub.f32 0.0, %v8583
      %v8616 = vsub.f32 0.0, %v8584
      %v8617 = vsub.f32 0.0, %v8585
      %v8618 = vsub.f32 0.0, %v8586
      %v8619 = vsub.f32 0.0, %v8587
      %v8620 = vsub.f32 0.0, %v8588
      %v8621 = vsub.f32 0.0, %v8589
      %v8622 = vsub.f32 0.0, %v8590
      %v8623 = vsub.f32 0.0, %v8591
      %v8624 = vsub.f32 0.0, %v8592
      %v8625 = vsub.f32 0.0, %v8593
      %v8626 = vsub.f32 0.0, %v8594
      %v8627 = vsub.f32 0.0, %v8595
      %v8628 = vsub.f32 0.0, %v8596
      %v8629 = vsub.f32 0.0, %v8597
      %v8630 = vsub.f32 0.0, %v8598
      %v8631 = vsub.f32 0.0, %v8599
      %v8632 = vsub.f32 0.0, %v8600
      %v8633 = vsub.f32 0.0, %v8601
      %v8634 = vsub.f32 0.0, %v8602
      %v8635 = vsub.f32 0.0, %v8603
      %v8636 = vsub.f32 0.0, %v8604
      %v8637 = vsub.f32 0.0, %v8605
      %v8638 = vsub.f32 0.0, %v8606
      %v8639 = vmin.f32 %v8607, 0.0
      %v8640 = vmin.f32 %v8608, 0.0
      %v8641 = vmin.f32 %v8609, 0.0
      %v8642 = vmin.f32 %v8610, 0.0
      %v8643 = vmin.f32 %v8611, 0.0
      %v8644 = vmin.f32 %v8612, 0.0
      %v8645 = vmin.f32 %v8613, 0.0
      %v8646 = vmin.f32 %v8614, 0.0
      %v8647 = vmin.f32 %v8615, 0.0
      %v8648 = vmin.f32 %v8616, 0.0
      %v8649 = vmin.f32 %v8617, 0.0
      %v8650 = vmin.f32 %v8618, 0.0
      %v8651 = vmin.f32 %v8619, 0.0
      %v8652 = vmin.f32 %v8620, 0.0
      %v8653 = vmin.f32 %v8621, 0.0
      %v8654 = vmin.f32 %v8622, 0.0
      %v8655 = vmin.f32 %v8623, 0.0
      %v8656 = vmin.f32 %v8624, 0.0
      %v8657 = vmin.f32 %v8625, 0.0
      %v8658 = vmin.f32 %v8626, 0.0
      %v8659 = vmin.f32 %v8627, 0.0
      %v8660 = vmin.f32 %v8628, 0.0
      %v8661 = vmin.f32 %v8629, 0.0
      %v8662 = vmin.f32 %v8630, 0.0
      %v8663 = vmin.f32 %v8631, 0.0
      %v8664 = vmin.f32 %v8632, 0.0
      %v8665 = vmin.f32 %v8633, 0.0
      %v8666 = vmin.f32 %v8634, 0.0
      %v8667 = vmin.f32 %v8635, 0.0
      %v8668 = vmin.f32 %v8636, 0.0
      %v8669 = vmin.f32 %v8637, 0.0
      %v8670 = vmin.f32 %v8638, 0.0
      %v8671 = vand.u32 2147483647, %v8607
      %v8672 = vand.u32 2147483647, %v8608
      %v8673 = vand.u32 2147483647, %v8609
      %v8674 = vand.u32 2147483647, %v8610
      %v8675 = vand.u32 2147483647, %v8611
      %v8676 = vand.u32 2147483647, %v8612
      %v8677 = vand.u32 2147483647, %v8613
      %v8678 = vand.u32 2147483647, %v8614
      %v8679 = vand.u32 2147483647, %v8615
      %v8680 = vand.u32 2147483647, %v8616
      %v8681 = vand.u32 2147483647, %v8617
      %v8682 = vand.u32 2147483647, %v8618
      %v8683 = vand.u32 2147483647, %v8619
      %v8684 = vand.u32 2147483647, %v8620
      %v8685 = vand.u32 2147483647, %v8621
      %v8686 = vand.u32 2147483647, %v8622
      %v8687 = vand.u32 2147483647, %v8623
      %v8688 = vand.u32 2147483647, %v8624
      %v8689 = vand.u32 2147483647, %v8625
      %v8690 = vand.u32 2147483647, %v8626
      %v8691 = vand.u32 2147483647, %v8627
      %v8692 = vand.u32 2147483647, %v8628
      %v8693 = vand.u32 2147483647, %v8629
      %v8694 = vand.u32 2147483647, %v8630
      %v8695 = vand.u32 2147483647, %v8631
      %v8696 = vand.u32 2147483647, %v8632
      %v8697 = vand.u32 2147483647, %v8633
      %v8698 = vand.u32 2147483647, %v8634
      %v8699 = vand.u32 2147483647, %v8635
      %v8700 = vand.u32 2147483647, %v8636
      %v8701 = vand.u32 2147483647, %v8637
      %v8702 = vand.u32 2147483647, %v8638
      %v8703 = vsub.f32 0.0, %v8671
      %v8704 = vsub.f32 0.0, %v8672
      %v8705 = vsub.f32 0.0, %v8673
      %v8706 = vsub.f32 0.0, %v8674
      %v8707 = vsub.f32 0.0, %v8675
      %v8708 = vsub.f32 0.0, %v8676
      %v8709 = vsub.f32 0.0, %v8677
      %v8710 = vsub.f32 0.0, %v8678
      %v8711 = vsub.f32 0.0, %v8679
      %v8712 = vsub.f32 0.0, %v8680
      %v8713 = vsub.f32 0.0, %v8681
      %v8714 = vsub.f32 0.0, %v8682
      %v8715 = vsub.f32 0.0, %v8683
      %v8716 = vsub.f32 0.0, %v8684
      %v8717 = vsub.f32 0.0, %v8685
      %v8718 = vsub.f32 0.0, %v8686
      %v8719 = vsub.f32 0.0, %v8687
      %v8720 = vsub.f32 0.0, %v8688
      %v8721 = vsub.f32 0.0, %v8689
      %v8722 = vsub.f32 0.0, %v8690
      %v8723 = vsub.f32 0.0, %v8691
      %v8724 = vsub.f32 0.0, %v8692
      %v8725 = vsub.f32 0.0, %v8693
      %v8726 = vsub.f32 0.0, %v8694
      %v8727 = vsub.f32 0.0, %v8695
      %v8728 = vsub.f32 0.0, %v8696
      %v8729 = vsub.f32 0.0, %v8697
      %v8730 = vsub.f32 0.0, %v8698
      %v8731 = vsub.f32 0.0, %v8699
      %v8732 = vsub.f32 0.0, %v8700
      %v8733 = vsub.f32 0.0, %v8701
      %v8734 = vsub.f32 0.0, %v8702
      %v8735 = vmul.f32 %v8703, 1.442695
      %v8736 = vpow.pop %v8735
      %v8737 = vmul.f32 %v8704, 1.442695
      %v8738 = vpow.pop %v8737
      %v8739 = vmul.f32 %v8705, 1.442695
      %v8740 = vpow.pop %v8739
      %v8741 = vmul.f32 %v8706, 1.442695
      %v8742 = vpow.pop %v8741
      %v8743 = vmul.f32 %v8707, 1.442695
      %v8744 = vpow.pop %v8743
      %v8745 = vmul.f32 %v8708, 1.442695
      %v8746 = vpow.pop %v8745
      %v8747 = vmul.f32 %v8709, 1.442695
      %v8748 = vpow.pop %v8747
      %v8749 = vmul.f32 %v8710, 1.442695
      %v8750 = vpow.pop %v8749
      %v8751 = vmul.f32 %v8711, 1.442695
      %v8752 = vpow.pop %v8751
      %v8753 = vmul.f32 %v8712, 1.442695
      %v8754 = vpow.pop %v8753
      %v8755 = vmul.f32 %v8713, 1.442695
      %v8756 = vpow.pop %v8755
      %v8757 = vmul.f32 %v8714, 1.442695
      %v8758 = vpow.pop %v8757
      %v8759 = vmul.f32 %v8715, 1.442695
      %v8760 = vpow.pop %v8759
      %v8761 = vmul.f32 %v8716, 1.442695
      %v8762 = vpow.pop %v8761
      %v8763 = vmul.f32 %v8717, 1.442695
      %v8764 = vpow.pop %v8763
      %v8765 = vmul.f32 %v8718, 1.442695
      %v8766 = vpow.pop %v8765
      %v8767 = vmul.f32 %v8719, 1.442695
      %v8768 = vpow.pop %v8767
      %v8769 = vmul.f32 %v8720, 1.442695
      %v8770 = vpow.pop %v8769
      %v8771 = vmul.f32 %v8721, 1.442695
      %v8772 = vpow.pop %v8771
      %v8773 = vmul.f32 %v8722, 1.442695
      %v8774 = vpow.pop %v8773
      %v8775 = vmul.f32 %v8723, 1.442695
      %v8776 = vpow.pop %v8775
      %v8777 = vmul.f32 %v8724, 1.442695
      %v8778 = vpow.pop %v8777
      %v8779 = vmul.f32 %v8725, 1.442695
      %v8780 = vpow.pop %v8779
      %v8781 = vmul.f32 %v8726, 1.442695
      %v8782 = vpow.pop %v8781
      %v8783 = vmul.f32 %v8727, 1.442695
      %v8784 = vpow.pop %v8783
      %v8785 = vmul.f32 %v8728, 1.442695
      %v8786 = vpow.pop %v8785
      %v8787 = vmul.f32 %v8729, 1.442695
      %v8788 = vpow.pop %v8787
      %v8789 = vmul.f32 %v8730, 1.442695
      %v8790 = vpow.pop %v8789
      %v8791 = vmul.f32 %v8731, 1.442695
      %v8792 = vpow.pop %v8791
      %v8793 = vmul.f32 %v8732, 1.442695
      %v8794 = vpow.pop %v8793
      %v8795 = vmul.f32 %v8733, 1.442695
      %v8796 = vpow.pop %v8795
      %v8797 = vmul.f32 %v8734, 1.442695
      %v8798 = vpow.pop %v8797
      %v8799 = vadd.f32 %v8736, 1.0
      %v8800 = vlog2.pop %v8799
      %v8801 = vmul.f32 %v8800, 0.6931472
      %v8802 = vmul.f32 -0.5, %v8736
      %v8803 = vadd.f32 %v8802, 1.0
      %v8804 = vmul.f32 %v8803, %v8736
      %v8805 = vand.u32 2147483647, %v8736
      %vm8806 = vcmp.lt.f32.partialorder %v8805, 0.0004427343
      %v8807 = vsel %vm8806, %v8804, %v8801
      %v8808 = vadd.f32 %v8738, 1.0
      %v8809 = vlog2.pop %v8808
      %v8810 = vmul.f32 %v8809, 0.6931472
      %v8811 = vmul.f32 -0.5, %v8738
      %v8812 = vadd.f32 %v8811, 1.0
      %v8813 = vmul.f32 %v8812, %v8738
      %v8814 = vand.u32 2147483647, %v8738
      %vm8815 = vcmp.lt.f32.partialorder %v8814, 0.0004427343
      %v8816 = vsel %vm8815, %v8813, %v8810
      %v8817 = vadd.f32 %v8740, 1.0
      %v8818 = vlog2.pop %v8817
      %v8819 = vmul.f32 %v8818, 0.6931472
      %v8820 = vmul.f32 -0.5, %v8740
      %v8821 = vadd.f32 %v8820, 1.0
      %v8822 = vmul.f32 %v8821, %v8740
      %v8823 = vand.u32 2147483647, %v8740
      %vm8824 = vcmp.lt.f32.partialorder %v8823, 0.0004427343
      %v8825 = vsel %vm8824, %v8822, %v8819
      %v8826 = vadd.f32 %v8742, 1.0
      %v8827 = vlog2.pop %v8826
      %v8828 = vmul.f32 %v8827, 0.6931472
      %v8829 = vmul.f32 -0.5, %v8742
      %v8830 = vadd.f32 %v8829, 1.0
      %v8831 = vmul.f32 %v8830, %v8742
      %v8832 = vand.u32 2147483647, %v8742
      %vm8833 = vcmp.lt.f32.partialorder %v8832, 0.0004427343
      %v8834 = vsel %vm8833, %v8831, %v8828
      %v8835 = vadd.f32 %v8744, 1.0
      %v8836 = vlog2.pop %v8835
      %v8837 = vmul.f32 %v8836, 0.6931472
      %v8838 = vmul.f32 -0.5, %v8744
      %v8839 = vadd.f32 %v8838, 1.0
      %v8840 = vmul.f32 %v8839, %v8744
      %v8841 = vand.u32 2147483647, %v8744
      %vm8842 = vcmp.lt.f32.partialorder %v8841, 0.0004427343
      %v8843 = vsel %vm8842, %v8840, %v8837
      %v8844 = vadd.f32 %v8746, 1.0
      %v8845 = vlog2.pop %v8844
      %v8846 = vmul.f32 %v8845, 0.6931472
      %v8847 = vmul.f32 -0.5, %v8746
      %v8848 = vadd.f32 %v8847, 1.0
      %v8849 = vmul.f32 %v8848, %v8746
      %v8850 = vand.u32 2147483647, %v8746
      %vm8851 = vcmp.lt.f32.partialorder %v8850, 0.0004427343
      %v8852 = vsel %vm8851, %v8849, %v8846
      %v8853 = vadd.f32 %v8748, 1.0
      %v8854 = vlog2.pop %v8853
      %v8855 = vmul.f32 %v8854, 0.6931472
      %v8856 = vmul.f32 -0.5, %v8748
      %v8857 = vadd.f32 %v8856, 1.0
      %v8858 = vmul.f32 %v8857, %v8748
      %v8859 = vand.u32 2147483647, %v8748
      %vm8860 = vcmp.lt.f32.partialorder %v8859, 0.0004427343
      %v8861 = vsel %vm8860, %v8858, %v8855
      %v8862 = vadd.f32 %v8750, 1.0
      %v8863 = vlog2.pop %v8862
      %v8864 = vmul.f32 %v8863, 0.6931472
      %v8865 = vmul.f32 -0.5, %v8750
      %v8866 = vadd.f32 %v8865, 1.0
      %v8867 = vmul.f32 %v8866, %v8750
      %v8868 = vand.u32 2147483647, %v8750
      %vm8869 = vcmp.lt.f32.partialorder %v8868, 0.0004427343
      %v8870 = vsel %vm8869, %v8867, %v8864
      %v8871 = vadd.f32 %v8752, 1.0
      %v8872 = vlog2.pop %v8871
      %v8873 = vmul.f32 %v8872, 0.6931472
      %v8874 = vmul.f32 -0.5, %v8752
      %v8875 = vadd.f32 %v8874, 1.0
      %v8876 = vmul.f32 %v8875, %v8752
      %v8877 = vand.u32 2147483647, %v8752
      %vm8878 = vcmp.lt.f32.partialorder %v8877, 0.0004427343
      %v8879 = vsel %vm8878, %v8876, %v8873
      %v8880 = vadd.f32 %v8754, 1.0
      %v8881 = vlog2.pop %v8880
      %v8882 = vmul.f32 %v8881, 0.6931472
      %v8883 = vmul.f32 -0.5, %v8754
      %v8884 = vadd.f32 %v8883, 1.0
      %v8885 = vmul.f32 %v8884, %v8754
      %v8886 = vand.u32 2147483647, %v8754
      %vm8887 = vcmp.lt.f32.partialorder %v8886, 0.0004427343
      %v8888 = vsel %vm8887, %v8885, %v8882
      %v8889 = vadd.f32 %v8756, 1.0
      %v8890 = vlog2.pop %v8889
      %v8891 = vmul.f32 %v8890, 0.6931472
      %v8892 = vmul.f32 -0.5, %v8756
      %v8893 = vadd.f32 %v8892, 1.0
      %v8894 = vmul.f32 %v8893, %v8756
      %v8895 = vand.u32 2147483647, %v8756
      %vm8896 = vcmp.lt.f32.partialorder %v8895, 0.0004427343
      %v8897 = vsel %vm8896, %v8894, %v8891
      %v8898 = vadd.f32 %v8758, 1.0
      %v8899 = vlog2.pop %v8898
      %v8900 = vmul.f32 %v8899, 0.6931472
      %v8901 = vmul.f32 -0.5, %v8758
      %v8902 = vadd.f32 %v8901, 1.0
      %v8903 = vmul.f32 %v8902, %v8758
      %v8904 = vand.u32 2147483647, %v8758
      %vm8905 = vcmp.lt.f32.partialorder %v8904, 0.0004427343
      %v8906 = vsel %vm8905, %v8903, %v8900
      %v8907 = vadd.f32 %v8760, 1.0
      %v8908 = vlog2.pop %v8907
      %v8909 = vmul.f32 %v8908, 0.6931472
      %v8910 = vmul.f32 -0.5, %v8760
      %v8911 = vadd.f32 %v8910, 1.0
      %v8912 = vmul.f32 %v8911, %v8760
      %v8913 = vand.u32 2147483647, %v8760
      %vm8914 = vcmp.lt.f32.partialorder %v8913, 0.0004427343
      %v8915 = vsel %vm8914, %v8912, %v8909
      %v8916 = vadd.f32 %v8762, 1.0
      %v8917 = vlog2.pop %v8916
      %v8918 = vmul.f32 %v8917, 0.6931472
      %v8919 = vmul.f32 -0.5, %v8762
      %v8920 = vadd.f32 %v8919, 1.0
      %v8921 = vmul.f32 %v8920, %v8762
      %v8922 = vand.u32 2147483647, %v8762
      %vm8923 = vcmp.lt.f32.partialorder %v8922, 0.0004427343
      %v8924 = vsel %vm8923, %v8921, %v8918
      %v8925 = vadd.f32 %v8764, 1.0
      %v8926 = vlog2.pop %v8925
      %v8927 = vmul.f32 %v8926, 0.6931472
      %v8928 = vmul.f32 -0.5, %v8764
      %v8929 = vadd.f32 %v8928, 1.0
      %v8930 = vmul.f32 %v8929, %v8764
      %v8931 = vand.u32 2147483647, %v8764
      %vm8932 = vcmp.lt.f32.partialorder %v8931, 0.0004427343
      %v8933 = vsel %vm8932, %v8930, %v8927
      %v8934 = vadd.f32 %v8766, 1.0
      %v8935 = vlog2.pop %v8934
      %v8936 = vmul.f32 %v8935, 0.6931472
      %v8937 = vmul.f32 -0.5, %v8766
      %v8938 = vadd.f32 %v8937, 1.0
      %v8939 = vmul.f32 %v8938, %v8766
      %v8940 = vand.u32 2147483647, %v8766
      %vm8941 = vcmp.lt.f32.partialorder %v8940, 0.0004427343
      %v8942 = vsel %vm8941, %v8939, %v8936
      %v8943 = vadd.f32 %v8768, 1.0
      %v8944 = vlog2.pop %v8943
      %v8945 = vmul.f32 %v8944, 0.6931472
      %v8946 = vmul.f32 -0.5, %v8768
      %v8947 = vadd.f32 %v8946, 1.0
      %v8948 = vmul.f32 %v8947, %v8768
      %v8949 = vand.u32 2147483647, %v8768
      %vm8950 = vcmp.lt.f32.partialorder %v8949, 0.0004427343
      %v8951 = vsel %vm8950, %v8948, %v8945
      %v8952 = vadd.f32 %v8770, 1.0
      %v8953 = vlog2.pop %v8952
      %v8954 = vmul.f32 %v8953, 0.6931472
      %v8955 = vmul.f32 -0.5, %v8770
      %v8956 = vadd.f32 %v8955, 1.0
      %v8957 = vmul.f32 %v8956, %v8770
      %v8958 = vand.u32 2147483647, %v8770
      %vm8959 = vcmp.lt.f32.partialorder %v8958, 0.0004427343
      %v8960 = vsel %vm8959, %v8957, %v8954
      %v8961 = vadd.f32 %v8772, 1.0
      %v8962 = vlog2.pop %v8961
      %v8963 = vmul.f32 %v8962, 0.6931472
      %v8964 = vmul.f32 -0.5, %v8772
      %v8965 = vadd.f32 %v8964, 1.0
      %v8966 = vmul.f32 %v8965, %v8772
      %v8967 = vand.u32 2147483647, %v8772
      %vm8968 = vcmp.lt.f32.partialorder %v8967, 0.0004427343
      %v8969 = vsel %vm8968, %v8966, %v8963
      %v8970 = vadd.f32 %v8774, 1.0
      %v8971 = vlog2.pop %v8970
      %v8972 = vmul.f32 %v8971, 0.6931472
      %v8973 = vmul.f32 -0.5, %v8774
      %v8974 = vadd.f32 %v8973, 1.0
      %v8975 = vmul.f32 %v8974, %v8774
      %v8976 = vand.u32 2147483647, %v8774
      %vm8977 = vcmp.lt.f32.partialorder %v8976, 0.0004427343
      %v8978 = vsel %vm8977, %v8975, %v8972
      %v8979 = vadd.f32 %v8776, 1.0
      %v8980 = vlog2.pop %v8979
      %v8981 = vmul.f32 %v8980, 0.6931472
      %v8982 = vmul.f32 -0.5, %v8776
      %v8983 = vadd.f32 %v8982, 1.0
      %v8984 = vmul.f32 %v8983, %v8776
      %v8985 = vand.u32 2147483647, %v8776
      %vm8986 = vcmp.lt.f32.partialorder %v8985, 0.0004427343
      %v8987 = vsel %vm8986, %v8984, %v8981
      %v8988 = vadd.f32 %v8778, 1.0
      %v8989 = vlog2.pop %v8988
      %v8990 = vmul.f32 %v8989, 0.6931472
      %v8991 = vmul.f32 -0.5, %v8778
      %v8992 = vadd.f32 %v8991, 1.0
      %v8993 = vmul.f32 %v8992, %v8778
      %v8994 = vand.u32 2147483647, %v8778
      %vm8995 = vcmp.lt.f32.partialorder %v8994, 0.0004427343
      %v8996 = vsel %vm8995, %v8993, %v8990
      %v8997 = vadd.f32 %v8780, 1.0
      %v8998 = vlog2.pop %v8997
      %v8999 = vmul.f32 %v8998, 0.6931472
      %v9000 = vmul.f32 -0.5, %v8780
      %v9001 = vadd.f32 %v9000, 1.0
      %v9002 = vmul.f32 %v9001, %v8780
      %v9003 = vand.u32 2147483647, %v8780
      %vm9004 = vcmp.lt.f32.partialorder %v9003, 0.0004427343
      %v9005 = vsel %vm9004, %v9002, %v8999
      %v9006 = vadd.f32 %v8782, 1.0
      %v9007 = vlog2.pop %v9006
      %v9008 = vmul.f32 %v9007, 0.6931472
      %v9009 = vmul.f32 -0.5, %v8782
      %v9010 = vadd.f32 %v9009, 1.0
      %v9011 = vmul.f32 %v9010, %v8782
      %v9012 = vand.u32 2147483647, %v8782
      %vm9013 = vcmp.lt.f32.partialorder %v9012, 0.0004427343
      %v9014 = vsel %vm9013, %v9011, %v9008
      %v9015 = vadd.f32 %v8784, 1.0
      %v9016 = vlog2.pop %v9015
      %v9017 = vmul.f32 %v9016, 0.6931472
      %v9018 = vmul.f32 -0.5, %v8784
      %v9019 = vadd.f32 %v9018, 1.0
      %v9020 = vmul.f32 %v9019, %v8784
      %v9021 = vand.u32 2147483647, %v8784
      %vm9022 = vcmp.lt.f32.partialorder %v9021, 0.0004427343
      %v9023 = vsel %vm9022, %v9020, %v9017
      %v9024 = vadd.f32 %v8786, 1.0
      %v9025 = vlog2.pop %v9024
      %v9026 = vmul.f32 %v9025, 0.6931472
      %v9027 = vmul.f32 -0.5, %v8786
      %v9028 = vadd.f32 %v9027, 1.0
      %v9029 = vmul.f32 %v9028, %v8786
      %v9030 = vand.u32 2147483647, %v8786
      %vm9031 = vcmp.lt.f32.partialorder %v9030, 0.0004427343
      %v9032 = vsel %vm9031, %v9029, %v9026
      %v9033 = vadd.f32 %v8788, 1.0
      %v9034 = vlog2.pop %v9033
      %v9035 = vmul.f32 %v9034, 0.6931472
      %v9036 = vmul.f32 -0.5, %v8788
      %v9037 = vadd.f32 %v9036, 1.0
      %v9038 = vmul.f32 %v9037, %v8788
      %v9039 = vand.u32 2147483647, %v8788
      %vm9040 = vcmp.lt.f32.partialorder %v9039, 0.0004427343
      %v9041 = vsel %vm9040, %v9038, %v9035
      %v9042 = vadd.f32 %v8790, 1.0
      %v9043 = vlog2.pop %v9042
      %v9044 = vmul.f32 %v9043, 0.6931472
      %v9045 = vmul.f32 -0.5, %v8790
      %v9046 = vadd.f32 %v9045, 1.0
      %v9047 = vmul.f32 %v9046, %v8790
      %v9048 = vand.u32 2147483647, %v8790
      %vm9049 = vcmp.lt.f32.partialorder %v9048, 0.0004427343
      %v9050 = vsel %vm9049, %v9047, %v9044
      %v9051 = vadd.f32 %v8792, 1.0
      %v9052 = vlog2.pop %v9051
      %v9053 = vmul.f32 %v9052, 0.6931472
      %v9054 = vmul.f32 -0.5, %v8792
      %v9055 = vadd.f32 %v9054, 1.0
      %v9056 = vmul.f32 %v9055, %v8792
      %v9057 = vand.u32 2147483647, %v8792
      %vm9058 = vcmp.lt.f32.partialorder %v9057, 0.0004427343
      %v9059 = vsel %vm9058, %v9056, %v9053
      %v9060 = vadd.f32 %v8794, 1.0
      %v9061 = vlog2.pop %v9060
      %v9062 = vmul.f32 %v9061, 0.6931472
      %v9063 = vmul.f32 -0.5, %v8794
      %v9064 = vadd.f32 %v9063, 1.0
      %v9065 = vmul.f32 %v9064, %v8794
      %v9066 = vand.u32 2147483647, %v8794
      %vm9067 = vcmp.lt.f32.partialorder %v9066, 0.0004427343
      %v9068 = vsel %vm9067, %v9065, %v9062
      %v9069 = vadd.f32 %v8796, 1.0
      %v9070 = vlog2.pop %v9069
      %v9071 = vmul.f32 %v9070, 0.6931472
      %v9072 = vmul.f32 -0.5, %v8796
      %v9073 = vadd.f32 %v9072, 1.0
      %v9074 = vmul.f32 %v9073, %v8796
      %v9075 = vand.u32 2147483647, %v8796
      %vm9076 = vcmp.lt.f32.partialorder %v9075, 0.0004427343
      %v9077 = vsel %vm9076, %v9074, %v9071
      %v9078 = vadd.f32 %v8798, 1.0
      %v9079 = vlog2.pop %v9078
      %v9080 = vmul.f32 %v9079, 0.6931472
      %v9081 = vmul.f32 -0.5, %v8798
      %v9082 = vadd.f32 %v9081, 1.0
      %v9083 = vmul.f32 %v9082, %v8798
      %v9084 = vand.u32 2147483647, %v8798
      %vm9085 = vcmp.lt.f32.partialorder %v9084, 0.0004427343
      %v9086 = vsel %vm9085, %v9083, %v9080
      %v9087 = vsub.f32 %v8639, %v8807
      %v9088 = vsub.f32 %v8640, %v8816
      %v9089 = vsub.f32 %v8641, %v8825
      %v9090 = vsub.f32 %v8642, %v8834
      %v9091 = vsub.f32 %v8643, %v8843
      %v9092 = vsub.f32 %v8644, %v8852
      %v9093 = vsub.f32 %v8645, %v8861
      %v9094 = vsub.f32 %v8646, %v8870
      %v9095 = vsub.f32 %v8647, %v8879
      %v9096 = vsub.f32 %v8648, %v8888
      %v9097 = vsub.f32 %v8649, %v8897
      %v9098 = vsub.f32 %v8650, %v8906
      %v9099 = vsub.f32 %v8651, %v8915
      %v9100 = vsub.f32 %v8652, %v8924
      %v9101 = vsub.f32 %v8653, %v8933
      %v9102 = vsub.f32 %v8654, %v8942
      %v9103 = vsub.f32 %v8655, %v8951
      %v9104 = vsub.f32 %v8656, %v8960
      %v9105 = vsub.f32 %v8657, %v8969
      %v9106 = vsub.f32 %v8658, %v8978
      %v9107 = vsub.f32 %v8659, %v8987
      %v9108 = vsub.f32 %v8660, %v8996
      %v9109 = vsub.f32 %v8661, %v9005
      %v9110 = vsub.f32 %v8662, %v9014
      %v9111 = vsub.f32 %v8663, %v9023
      %v9112 = vsub.f32 %v8664, %v9032
      %v9113 = vsub.f32 %v8665, %v9041
      %v9114 = vsub.f32 %v8666, %v9050
      %v9115 = vsub.f32 %v8667, %v9059
      %v9116 = vsub.f32 %v8668, %v9068
      %v9117 = vsub.f32 %v8669, %v9077
      %v9118 = vsub.f32 %v8670, %v9086
      %v9152 = vunpack.c.l.s4 269488144
      %v9153 = vunpack.c.0.s8 %v9152
      %v9154 = vlaneseq
      %v9155 = vshrl.u32 %v9154, 7
      %v9156 = vsub.s32 %v9153, %v9155
      %v9157 = vrot.slane %v9087, %v9156
      %v9159 = vunpack.c.l.s4 842150450
      %v9160 = vunpack.c.0.s8 %v9159
      %v9161 = vlaneseq
      %v9162 = vshrl.u32 %v9161, 7
      %v9163 = vsub.s32 %v9160, %v9162
      %v9164 = vrot.slane %v9087, %v9163
      %v9166 = vunpack.c.l.s4 1414812756
      %v9167 = vunpack.c.0.s8 %v9166
      %v9168 = vlaneseq
      %v9169 = vshrl.u32 %v9168, 7
      %v9170 = vsub.s32 %v9167, %v9169
      %v9171 = vrot.slane %v9087, %v9170
      %v9173 = vunpack.c.l.s4 1987475062
      %v9174 = vunpack.c.0.s8 %v9173
      %v9175 = vlaneseq
      %v9176 = vshrl.u32 %v9175, 7
      %v9177 = vsub.s32 %v9174, %v9176
      %v9178 = vrot.slane %v9087, %v9177
      %v9180 = vunpack.c.l.s4 269488144
      %v9181 = vunpack.c.0.s8 %v9180
      %v9182 = vlaneseq
      %v9183 = vshrl.u32 %v9182, 7
      %v9184 = vsub.s32 %v9181, %v9183
      %v9185 = vrot.slane %v9088, %v9184
      %v9187 = vunpack.c.l.s4 842150450
      %v9188 = vunpack.c.0.s8 %v9187
      %v9189 = vlaneseq
      %v9190 = vshrl.u32 %v9189, 7
      %v9191 = vsub.s32 %v9188, %v9190
      %v9192 = vrot.slane %v9088, %v9191
      %v9194 = vunpack.c.l.s4 1414812756
      %v9195 = vunpack.c.0.s8 %v9194
      %v9196 = vlaneseq
      %v9197 = vshrl.u32 %v9196, 7
      %v9198 = vsub.s32 %v9195, %v9197
      %v9199 = vrot.slane %v9088, %v9198
      %v9201 = vunpack.c.l.s4 1987475062
      %v9202 = vunpack.c.0.s8 %v9201
      %v9203 = vlaneseq
      %v9204 = vshrl.u32 %v9203, 7
      %v9205 = vsub.s32 %v9202, %v9204
      %v9206 = vrot.slane %v9088, %v9205
      %v9208 = vunpack.c.l.s4 269488144
      %v9209 = vunpack.c.0.s8 %v9208
      %v9210 = vlaneseq
      %v9211 = vshrl.u32 %v9210, 7
      %v9212 = vsub.s32 %v9209, %v9211
      %v9213 = vrot.slane %v9089, %v9212
      %v9215 = vunpack.c.l.s4 842150450
      %v9216 = vunpack.c.0.s8 %v9215
      %v9217 = vlaneseq
      %v9218 = vshrl.u32 %v9217, 7
      %v9219 = vsub.s32 %v9216, %v9218
      %v9220 = vrot.slane %v9089, %v9219
      %v9222 = vunpack.c.l.s4 1414812756
      %v9223 = vunpack.c.0.s8 %v9222
      %v9224 = vlaneseq
      %v9225 = vshrl.u32 %v9224, 7
      %v9226 = vsub.s32 %v9223, %v9225
      %v9227 = vrot.slane %v9089, %v9226
      %v9229 = vunpack.c.l.s4 1987475062
      %v9230 = vunpack.c.0.s8 %v9229
      %v9231 = vlaneseq
      %v9232 = vshrl.u32 %v9231, 7
      %v9233 = vsub.s32 %v9230, %v9232
      %v9234 = vrot.slane %v9089, %v9233
      %v9236 = vunpack.c.l.s4 269488144
      %v9237 = vunpack.c.0.s8 %v9236
      %v9238 = vlaneseq
      %v9239 = vshrl.u32 %v9238, 7
      %v9240 = vsub.s32 %v9237, %v9239
      %v9241 = vrot.slane %v9090, %v9240
      %v9243 = vunpack.c.l.s4 842150450
      %v9244 = vunpack.c.0.s8 %v9243
      %v9245 = vlaneseq
      %v9246 = vshrl.u32 %v9245, 7
      %v9247 = vsub.s32 %v9244, %v9246
      %v9248 = vrot.slane %v9090, %v9247
      %v9250 = vunpack.c.l.s4 1414812756
      %v9251 = vunpack.c.0.s8 %v9250
      %v9252 = vlaneseq
      %v9253 = vshrl.u32 %v9252, 7
      %v9254 = vsub.s32 %v9251, %v9253
      %v9255 = vrot.slane %v9090, %v9254
      %v9257 = vunpack.c.l.s4 1987475062
      %v9258 = vunpack.c.0.s8 %v9257
      %v9259 = vlaneseq
      %v9260 = vshrl.u32 %v9259, 7
      %v9261 = vsub.s32 %v9258, %v9260
      %v9262 = vrot.slane %v9090, %v9261
      %v9264 = vunpack.c.l.s4 269488144
      %v9265 = vunpack.c.0.s8 %v9264
      %v9266 = vlaneseq
      %v9267 = vshrl.u32 %v9266, 7
      %v9268 = vsub.s32 %v9265, %v9267
      %v9269 = vrot.slane %v9091, %v9268
      %v9271 = vunpack.c.l.s4 842150450
      %v9272 = vunpack.c.0.s8 %v9271
      %v9273 = vlaneseq
      %v9274 = vshrl.u32 %v9273, 7
      %v9275 = vsub.s32 %v9272, %v9274
      %v9276 = vrot.slane %v9091, %v9275
      %v9278 = vunpack.c.l.s4 1414812756
      %v9279 = vunpack.c.0.s8 %v9278
      %v9280 = vlaneseq
      %v9281 = vshrl.u32 %v9280, 7
      %v9282 = vsub.s32 %v9279, %v9281
      %v9283 = vrot.slane %v9091, %v9282
      %v9285 = vunpack.c.l.s4 1987475062
      %v9286 = vunpack.c.0.s8 %v9285
      %v9287 = vlaneseq
      %v9288 = vshrl.u32 %v9287, 7
      %v9289 = vsub.s32 %v9286, %v9288
      %v9290 = vrot.slane %v9091, %v9289
      %v9292 = vunpack.c.l.s4 269488144
      %v9293 = vunpack.c.0.s8 %v9292
      %v9294 = vlaneseq
      %v9295 = vshrl.u32 %v9294, 7
      %v9296 = vsub.s32 %v9293, %v9295
      %v9297 = vrot.slane %v9092, %v9296
      %v9299 = vunpack.c.l.s4 842150450
      %v9300 = vunpack.c.0.s8 %v9299
      %v9301 = vlaneseq
      %v9302 = vshrl.u32 %v9301, 7
      %v9303 = vsub.s32 %v9300, %v9302
      %v9304 = vrot.slane %v9092, %v9303
      %v9306 = vunpack.c.l.s4 1414812756
      %v9307 = vunpack.c.0.s8 %v9306
      %v9308 = vlaneseq
      %v9309 = vshrl.u32 %v9308, 7
      %v9310 = vsub.s32 %v9307, %v9309
      %v9311 = vrot.slane %v9092, %v9310
      %v9313 = vunpack.c.l.s4 1987475062
      %v9314 = vunpack.c.0.s8 %v9313
      %v9315 = vlaneseq
      %v9316 = vshrl.u32 %v9315, 7
      %v9317 = vsub.s32 %v9314, %v9316
      %v9318 = vrot.slane %v9092, %v9317
      %v9320 = vunpack.c.l.s4 269488144
      %v9321 = vunpack.c.0.s8 %v9320
      %v9322 = vlaneseq
      %v9323 = vshrl.u32 %v9322, 7
      %v9324 = vsub.s32 %v9321, %v9323
      %v9325 = vrot.slane %v9093, %v9324
      %v9327 = vunpack.c.l.s4 842150450
      %v9328 = vunpack.c.0.s8 %v9327
      %v9329 = vlaneseq
      %v9330 = vshrl.u32 %v9329, 7
      %v9331 = vsub.s32 %v9328, %v9330
      %v9332 = vrot.slane %v9093, %v9331
      %v9334 = vunpack.c.l.s4 1414812756
      %v9335 = vunpack.c.0.s8 %v9334
      %v9336 = vlaneseq
      %v9337 = vshrl.u32 %v9336, 7
      %v9338 = vsub.s32 %v9335, %v9337
      %v9339 = vrot.slane %v9093, %v9338
      %v9341 = vunpack.c.l.s4 1987475062
      %v9342 = vunpack.c.0.s8 %v9341
      %v9343 = vlaneseq
      %v9344 = vshrl.u32 %v9343, 7
      %v9345 = vsub.s32 %v9342, %v9344
      %v9346 = vrot.slane %v9093, %v9345
      %v9348 = vunpack.c.l.s4 269488144
      %v9349 = vunpack.c.0.s8 %v9348
      %v9350 = vlaneseq
      %v9351 = vshrl.u32 %v9350, 7
      %v9352 = vsub.s32 %v9349, %v9351
      %v9353 = vrot.slane %v9094, %v9352
      %v9355 = vunpack.c.l.s4 842150450
      %v9356 = vunpack.c.0.s8 %v9355
      %v9357 = vlaneseq
      %v9358 = vshrl.u32 %v9357, 7
      %v9359 = vsub.s32 %v9356, %v9358
      %v9360 = vrot.slane %v9094, %v9359
      %v9362 = vunpack.c.l.s4 1414812756
      %v9363 = vunpack.c.0.s8 %v9362
      %v9364 = vlaneseq
      %v9365 = vshrl.u32 %v9364, 7
      %v9366 = vsub.s32 %v9363, %v9365
      %v9367 = vrot.slane %v9094, %v9366
      %v9369 = vunpack.c.l.s4 1987475062
      %v9370 = vunpack.c.0.s8 %v9369
      %v9371 = vlaneseq
      %v9372 = vshrl.u32 %v9371, 7
      %v9373 = vsub.s32 %v9370, %v9372
      %v9374 = vrot.slane %v9094, %v9373
      %v9376 = vunpack.c.l.s4 269488144
      %v9377 = vunpack.c.0.s8 %v9376
      %v9378 = vlaneseq
      %v9379 = vshrl.u32 %v9378, 7
      %v9380 = vsub.s32 %v9377, %v9379
      %v9381 = vrot.slane %v9095, %v9380
      %v9383 = vunpack.c.l.s4 842150450
      %v9384 = vunpack.c.0.s8 %v9383
      %v9385 = vlaneseq
      %v9386 = vshrl.u32 %v9385, 7
      %v9387 = vsub.s32 %v9384, %v9386
      %v9388 = vrot.slane %v9095, %v9387
      %v9390 = vunpack.c.l.s4 1414812756
      %v9391 = vunpack.c.0.s8 %v9390
      %v9392 = vlaneseq
      %v9393 = vshrl.u32 %v9392, 7
      %v9394 = vsub.s32 %v9391, %v9393
      %v9395 = vrot.slane %v9095, %v9394
      %v9397 = vunpack.c.l.s4 1987475062
      %v9398 = vunpack.c.0.s8 %v9397
      %v9399 = vlaneseq
      %v9400 = vshrl.u32 %v9399, 7
      %v9401 = vsub.s32 %v9398, %v9400
      %v9402 = vrot.slane %v9095, %v9401
      %v9404 = vunpack.c.l.s4 269488144
      %v9405 = vunpack.c.0.s8 %v9404
      %v9406 = vlaneseq
      %v9407 = vshrl.u32 %v9406, 7
      %v9408 = vsub.s32 %v9405, %v9407
      %v9409 = vrot.slane %v9096, %v9408
      %v9411 = vunpack.c.l.s4 842150450
      %v9412 = vunpack.c.0.s8 %v9411
      %v9413 = vlaneseq
      %v9414 = vshrl.u32 %v9413, 7
      %v9415 = vsub.s32 %v9412, %v9414
      %v9416 = vrot.slane %v9096, %v9415
      %v9418 = vunpack.c.l.s4 1414812756
      %v9419 = vunpack.c.0.s8 %v9418
      %v9420 = vlaneseq
      %v9421 = vshrl.u32 %v9420, 7
      %v9422 = vsub.s32 %v9419, %v9421
      %v9423 = vrot.slane %v9096, %v9422
      %v9425 = vunpack.c.l.s4 1987475062
      %v9426 = vunpack.c.0.s8 %v9425
      %v9427 = vlaneseq
      %v9428 = vshrl.u32 %v9427, 7
      %v9429 = vsub.s32 %v9426, %v9428
      %v9430 = vrot.slane %v9096, %v9429
      %v9432 = vunpack.c.l.s4 269488144
      %v9433 = vunpack.c.0.s8 %v9432
      %v9434 = vlaneseq
      %v9435 = vshrl.u32 %v9434, 7
      %v9436 = vsub.s32 %v9433, %v9435
      %v9437 = vrot.slane %v9097, %v9436
      %v9439 = vunpack.c.l.s4 842150450
      %v9440 = vunpack.c.0.s8 %v9439
      %v9441 = vlaneseq
      %v9442 = vshrl.u32 %v9441, 7
      %v9443 = vsub.s32 %v9440, %v9442
      %v9444 = vrot.slane %v9097, %v9443
      %v9446 = vunpack.c.l.s4 1414812756
      %v9447 = vunpack.c.0.s8 %v9446
      %v9448 = vlaneseq
      %v9449 = vshrl.u32 %v9448, 7
      %v9450 = vsub.s32 %v9447, %v9449
      %v9451 = vrot.slane %v9097, %v9450
      %v9453 = vunpack.c.l.s4 1987475062
      %v9454 = vunpack.c.0.s8 %v9453
      %v9455 = vlaneseq
      %v9456 = vshrl.u32 %v9455, 7
      %v9457 = vsub.s32 %v9454, %v9456
      %v9458 = vrot.slane %v9097, %v9457
      %v9460 = vunpack.c.l.s4 269488144
      %v9461 = vunpack.c.0.s8 %v9460
      %v9462 = vlaneseq
      %v9463 = vshrl.u32 %v9462, 7
      %v9464 = vsub.s32 %v9461, %v9463
      %v9465 = vrot.slane %v9098, %v9464
      %v9467 = vunpack.c.l.s4 842150450
      %v9468 = vunpack.c.0.s8 %v9467
      %v9469 = vlaneseq
      %v9470 = vshrl.u32 %v9469, 7
      %v9471 = vsub.s32 %v9468, %v9470
      %v9472 = vrot.slane %v9098, %v9471
      %v9474 = vunpack.c.l.s4 1414812756
      %v9475 = vunpack.c.0.s8 %v9474
      %v9476 = vlaneseq
      %v9477 = vshrl.u32 %v9476, 7
      %v9478 = vsub.s32 %v9475, %v9477
      %v9479 = vrot.slane %v9098, %v9478
      %v9481 = vunpack.c.l.s4 1987475062
      %v9482 = vunpack.c.0.s8 %v9481
      %v9483 = vlaneseq
      %v9484 = vshrl.u32 %v9483, 7
      %v9485 = vsub.s32 %v9482, %v9484
      %v9486 = vrot.slane %v9098, %v9485
      %v9488 = vunpack.c.l.s4 269488144
      %v9489 = vunpack.c.0.s8 %v9488
      %v9490 = vlaneseq
      %v9491 = vshrl.u32 %v9490, 7
      %v9492 = vsub.s32 %v9489, %v9491
      %v9493 = vrot.slane %v9099, %v9492
      %v9495 = vunpack.c.l.s4 842150450
      %v9496 = vunpack.c.0.s8 %v9495
      %v9497 = vlaneseq
      %v9498 = vshrl.u32 %v9497, 7
      %v9499 = vsub.s32 %v9496, %v9498
      %v9500 = vrot.slane %v9099, %v9499
      %v9502 = vunpack.c.l.s4 1414812756
      %v9503 = vunpack.c.0.s8 %v9502
      %v9504 = vlaneseq
      %v9505 = vshrl.u32 %v9504, 7
      %v9506 = vsub.s32 %v9503, %v9505
      %v9507 = vrot.slane %v9099, %v9506
      %v9509 = vunpack.c.l.s4 1987475062
      %v9510 = vunpack.c.0.s8 %v9509
      %v9511 = vlaneseq
      %v9512 = vshrl.u32 %v9511, 7
      %v9513 = vsub.s32 %v9510, %v9512
      %v9514 = vrot.slane %v9099, %v9513
      %v9516 = vunpack.c.l.s4 269488144
      %v9517 = vunpack.c.0.s8 %v9516
      %v9518 = vlaneseq
      %v9519 = vshrl.u32 %v9518, 7
      %v9520 = vsub.s32 %v9517, %v9519
      %v9521 = vrot.slane %v9100, %v9520
      %v9523 = vunpack.c.l.s4 842150450
      %v9524 = vunpack.c.0.s8 %v9523
      %v9525 = vlaneseq
      %v9526 = vshrl.u32 %v9525, 7
      %v9527 = vsub.s32 %v9524, %v9526
      %v9528 = vrot.slane %v9100, %v9527
      %v9530 = vunpack.c.l.s4 1414812756
      %v9531 = vunpack.c.0.s8 %v9530
      %v9532 = vlaneseq
      %v9533 = vshrl.u32 %v9532, 7
      %v9534 = vsub.s32 %v9531, %v9533
      %v9535 = vrot.slane %v9100, %v9534
      %v9537 = vunpack.c.l.s4 1987475062
      %v9538 = vunpack.c.0.s8 %v9537
      %v9539 = vlaneseq
      %v9540 = vshrl.u32 %v9539, 7
      %v9541 = vsub.s32 %v9538, %v9540
      %v9542 = vrot.slane %v9100, %v9541
      %v9544 = vunpack.c.l.s4 269488144
      %v9545 = vunpack.c.0.s8 %v9544
      %v9546 = vlaneseq
      %v9547 = vshrl.u32 %v9546, 7
      %v9548 = vsub.s32 %v9545, %v9547
      %v9549 = vrot.slane %v9101, %v9548
      %v9551 = vunpack.c.l.s4 842150450
      %v9552 = vunpack.c.0.s8 %v9551
      %v9553 = vlaneseq
      %v9554 = vshrl.u32 %v9553, 7
      %v9555 = vsub.s32 %v9552, %v9554
      %v9556 = vrot.slane %v9101, %v9555
      %v9558 = vunpack.c.l.s4 1414812756
      %v9559 = vunpack.c.0.s8 %v9558
      %v9560 = vlaneseq
      %v9561 = vshrl.u32 %v9560, 7
      %v9562 = vsub.s32 %v9559, %v9561
      %v9563 = vrot.slane %v9101, %v9562
      %v9565 = vunpack.c.l.s4 1987475062
      %v9566 = vunpack.c.0.s8 %v9565
      %v9567 = vlaneseq
      %v9568 = vshrl.u32 %v9567, 7
      %v9569 = vsub.s32 %v9566, %v9568
      %v9570 = vrot.slane %v9101, %v9569
      %v9572 = vunpack.c.l.s4 269488144
      %v9573 = vunpack.c.0.s8 %v9572
      %v9574 = vlaneseq
      %v9575 = vshrl.u32 %v9574, 7
      %v9576 = vsub.s32 %v9573, %v9575
      %v9577 = vrot.slane %v9102, %v9576
      %v9579 = vunpack.c.l.s4 842150450
      %v9580 = vunpack.c.0.s8 %v9579
      %v9581 = vlaneseq
      %v9582 = vshrl.u32 %v9581, 7
      %v9583 = vsub.s32 %v9580, %v9582
      %v9584 = vrot.slane %v9102, %v9583
      %v9586 = vunpack.c.l.s4 1414812756
      %v9587 = vunpack.c.0.s8 %v9586
      %v9588 = vlaneseq
      %v9589 = vshrl.u32 %v9588, 7
      %v9590 = vsub.s32 %v9587, %v9589
      %v9591 = vrot.slane %v9102, %v9590
      %v9593 = vunpack.c.l.s4 1987475062
      %v9594 = vunpack.c.0.s8 %v9593
      %v9595 = vlaneseq
      %v9596 = vshrl.u32 %v9595, 7
      %v9597 = vsub.s32 %v9594, %v9596
      %v9598 = vrot.slane %v9102, %v9597
      %v9600 = vunpack.c.l.s4 269488144
      %v9601 = vunpack.c.0.s8 %v9600
      %v9602 = vlaneseq
      %v9603 = vshrl.u32 %v9602, 7
      %v9604 = vsub.s32 %v9601, %v9603
      %v9605 = vrot.slane %v9103, %v9604
      %v9607 = vunpack.c.l.s4 842150450
      %v9608 = vunpack.c.0.s8 %v9607
      %v9609 = vlaneseq
      %v9610 = vshrl.u32 %v9609, 7
      %v9611 = vsub.s32 %v9608, %v9610
      %v9612 = vrot.slane %v9103, %v9611
      %v9614 = vunpack.c.l.s4 1414812756
      %v9615 = vunpack.c.0.s8 %v9614
      %v9616 = vlaneseq
      %v9617 = vshrl.u32 %v9616, 7
      %v9618 = vsub.s32 %v9615, %v9617
      %v9619 = vrot.slane %v9103, %v9618
      %v9621 = vunpack.c.l.s4 1987475062
      %v9622 = vunpack.c.0.s8 %v9621
      %v9623 = vlaneseq
      %v9624 = vshrl.u32 %v9623, 7
      %v9625 = vsub.s32 %v9622, %v9624
      %v9626 = vrot.slane %v9103, %v9625
      %v9628 = vunpack.c.l.s4 269488144
      %v9629 = vunpack.c.0.s8 %v9628
      %v9630 = vlaneseq
      %v9631 = vshrl.u32 %v9630, 7
      %v9632 = vsub.s32 %v9629, %v9631
      %v9633 = vrot.slane %v9104, %v9632
      %v9635 = vunpack.c.l.s4 842150450
      %v9636 = vunpack.c.0.s8 %v9635
      %v9637 = vlaneseq
      %v9638 = vshrl.u32 %v9637, 7
      %v9639 = vsub.s32 %v9636, %v9638
      %v9640 = vrot.slane %v9104, %v9639
      %v9642 = vunpack.c.l.s4 1414812756
      %v9643 = vunpack.c.0.s8 %v9642
      %v9644 = vlaneseq
      %v9645 = vshrl.u32 %v9644, 7
      %v9646 = vsub.s32 %v9643, %v9645
      %v9647 = vrot.slane %v9104, %v9646
      %v9649 = vunpack.c.l.s4 1987475062
      %v9650 = vunpack.c.0.s8 %v9649
      %v9651 = vlaneseq
      %v9652 = vshrl.u32 %v9651, 7
      %v9653 = vsub.s32 %v9650, %v9652
      %v9654 = vrot.slane %v9104, %v9653
      %v9656 = vunpack.c.l.s4 269488144
      %v9657 = vunpack.c.0.s8 %v9656
      %v9658 = vlaneseq
      %v9659 = vshrl.u32 %v9658, 7
      %v9660 = vsub.s32 %v9657, %v9659
      %v9661 = vrot.slane %v9105, %v9660
      %v9663 = vunpack.c.l.s4 842150450
      %v9664 = vunpack.c.0.s8 %v9663
      %v9665 = vlaneseq
      %v9666 = vshrl.u32 %v9665, 7
      %v9667 = vsub.s32 %v9664, %v9666
      %v9668 = vrot.slane %v9105, %v9667
      %v9670 = vunpack.c.l.s4 1414812756
      %v9671 = vunpack.c.0.s8 %v9670
      %v9672 = vlaneseq
      %v9673 = vshrl.u32 %v9672, 7
      %v9674 = vsub.s32 %v9671, %v9673
      %v9675 = vrot.slane %v9105, %v9674
      %v9677 = vunpack.c.l.s4 1987475062
      %v9678 = vunpack.c.0.s8 %v9677
      %v9679 = vlaneseq
      %v9680 = vshrl.u32 %v9679, 7
      %v9681 = vsub.s32 %v9678, %v9680
      %v9682 = vrot.slane %v9105, %v9681
      %v9684 = vunpack.c.l.s4 269488144
      %v9685 = vunpack.c.0.s8 %v9684
      %v9686 = vlaneseq
      %v9687 = vshrl.u32 %v9686, 7
      %v9688 = vsub.s32 %v9685, %v9687
      %v9689 = vrot.slane %v9106, %v9688
      %v9691 = vunpack.c.l.s4 842150450
      %v9692 = vunpack.c.0.s8 %v9691
      %v9693 = vlaneseq
      %v9694 = vshrl.u32 %v9693, 7
      %v9695 = vsub.s32 %v9692, %v9694
      %v9696 = vrot.slane %v9106, %v9695
      %v9698 = vunpack.c.l.s4 1414812756
      %v9699 = vunpack.c.0.s8 %v9698
      %v9700 = vlaneseq
      %v9701 = vshrl.u32 %v9700, 7
      %v9702 = vsub.s32 %v9699, %v9701
      %v9703 = vrot.slane %v9106, %v9702
      %v9705 = vunpack.c.l.s4 1987475062
      %v9706 = vunpack.c.0.s8 %v9705
      %v9707 = vlaneseq
      %v9708 = vshrl.u32 %v9707, 7
      %v9709 = vsub.s32 %v9706, %v9708
      %v9710 = vrot.slane %v9106, %v9709
      %v9712 = vunpack.c.l.s4 269488144
      %v9713 = vunpack.c.0.s8 %v9712
      %v9714 = vlaneseq
      %v9715 = vshrl.u32 %v9714, 7
      %v9716 = vsub.s32 %v9713, %v9715
      %v9717 = vrot.slane %v9107, %v9716
      %v9719 = vunpack.c.l.s4 842150450
      %v9720 = vunpack.c.0.s8 %v9719
      %v9721 = vlaneseq
      %v9722 = vshrl.u32 %v9721, 7
      %v9723 = vsub.s32 %v9720, %v9722
      %v9724 = vrot.slane %v9107, %v9723
      %v9726 = vunpack.c.l.s4 1414812756
      %v9727 = vunpack.c.0.s8 %v9726
      %v9728 = vlaneseq
      %v9729 = vshrl.u32 %v9728, 7
      %v9730 = vsub.s32 %v9727, %v9729
      %v9731 = vrot.slane %v9107, %v9730
      %v9733 = vunpack.c.l.s4 1987475062
      %v9734 = vunpack.c.0.s8 %v9733
      %v9735 = vlaneseq
      %v9736 = vshrl.u32 %v9735, 7
      %v9737 = vsub.s32 %v9734, %v9736
      %v9738 = vrot.slane %v9107, %v9737
      %v9740 = vunpack.c.l.s4 269488144
      %v9741 = vunpack.c.0.s8 %v9740
      %v9742 = vlaneseq
      %v9743 = vshrl.u32 %v9742, 7
      %v9744 = vsub.s32 %v9741, %v9743
      %v9745 = vrot.slane %v9108, %v9744
      %v9747 = vunpack.c.l.s4 842150450
      %v9748 = vunpack.c.0.s8 %v9747
      %v9749 = vlaneseq
      %v9750 = vshrl.u32 %v9749, 7
      %v9751 = vsub.s32 %v9748, %v9750
      %v9752 = vrot.slane %v9108, %v9751
      %v9754 = vunpack.c.l.s4 1414812756
      %v9755 = vunpack.c.0.s8 %v9754
      %v9756 = vlaneseq
      %v9757 = vshrl.u32 %v9756, 7
      %v9758 = vsub.s32 %v9755, %v9757
      %v9759 = vrot.slane %v9108, %v9758
      %v9761 = vunpack.c.l.s4 1987475062
      %v9762 = vunpack.c.0.s8 %v9761
      %v9763 = vlaneseq
      %v9764 = vshrl.u32 %v9763, 7
      %v9765 = vsub.s32 %v9762, %v9764
      %v9766 = vrot.slane %v9108, %v9765
      %v9768 = vunpack.c.l.s4 269488144
      %v9769 = vunpack.c.0.s8 %v9768
      %v9770 = vlaneseq
      %v9771 = vshrl.u32 %v9770, 7
      %v9772 = vsub.s32 %v9769, %v9771
      %v9773 = vrot.slane %v9109, %v9772
      %v9775 = vunpack.c.l.s4 842150450
      %v9776 = vunpack.c.0.s8 %v9775
      %v9777 = vlaneseq
      %v9778 = vshrl.u32 %v9777, 7
      %v9779 = vsub.s32 %v9776, %v9778
      %v9780 = vrot.slane %v9109, %v9779
      %v9782 = vunpack.c.l.s4 1414812756
      %v9783 = vunpack.c.0.s8 %v9782
      %v9784 = vlaneseq
      %v9785 = vshrl.u32 %v9784, 7
      %v9786 = vsub.s32 %v9783, %v9785
      %v9787 = vrot.slane %v9109, %v9786
      %v9789 = vunpack.c.l.s4 1987475062
      %v9790 = vunpack.c.0.s8 %v9789
      %v9791 = vlaneseq
      %v9792 = vshrl.u32 %v9791, 7
      %v9793 = vsub.s32 %v9790, %v9792
      %v9794 = vrot.slane %v9109, %v9793
      %v9796 = vunpack.c.l.s4 269488144
      %v9797 = vunpack.c.0.s8 %v9796
      %v9798 = vlaneseq
      %v9799 = vshrl.u32 %v9798, 7
      %v9800 = vsub.s32 %v9797, %v9799
      %v9801 = vrot.slane %v9110, %v9800
      %v9803 = vunpack.c.l.s4 842150450
      %v9804 = vunpack.c.0.s8 %v9803
      %v9805 = vlaneseq
      %v9806 = vshrl.u32 %v9805, 7
      %v9807 = vsub.s32 %v9804, %v9806
      %v9808 = vrot.slane %v9110, %v9807
      %v9810 = vunpack.c.l.s4 1414812756
      %v9811 = vunpack.c.0.s8 %v9810
      %v9812 = vlaneseq
      %v9813 = vshrl.u32 %v9812, 7
      %v9814 = vsub.s32 %v9811, %v9813
      %v9815 = vrot.slane %v9110, %v9814
      %v9817 = vunpack.c.l.s4 1987475062
      %v9818 = vunpack.c.0.s8 %v9817
      %v9819 = vlaneseq
      %v9820 = vshrl.u32 %v9819, 7
      %v9821 = vsub.s32 %v9818, %v9820
      %v9822 = vrot.slane %v9110, %v9821
      %v9824 = vunpack.c.l.s4 269488144
      %v9825 = vunpack.c.0.s8 %v9824
      %v9826 = vlaneseq
      %v9827 = vshrl.u32 %v9826, 7
      %v9828 = vsub.s32 %v9825, %v9827
      %v9829 = vrot.slane %v9111, %v9828
      %v9831 = vunpack.c.l.s4 842150450
      %v9832 = vunpack.c.0.s8 %v9831
      %v9833 = vlaneseq
      %v9834 = vshrl.u32 %v9833, 7
      %v9835 = vsub.s32 %v9832, %v9834
      %v9836 = vrot.slane %v9111, %v9835
      %v9838 = vunpack.c.l.s4 1414812756
      %v9839 = vunpack.c.0.s8 %v9838
      %v9840 = vlaneseq
      %v9841 = vshrl.u32 %v9840, 7
      %v9842 = vsub.s32 %v9839, %v9841
      %v9843 = vrot.slane %v9111, %v9842
      %v9845 = vunpack.c.l.s4 1987475062
      %v9846 = vunpack.c.0.s8 %v9845
      %v9847 = vlaneseq
      %v9848 = vshrl.u32 %v9847, 7
      %v9849 = vsub.s32 %v9846, %v9848
      %v9850 = vrot.slane %v9111, %v9849
      %v9852 = vunpack.c.l.s4 269488144
      %v9853 = vunpack.c.0.s8 %v9852
      %v9854 = vlaneseq
      %v9855 = vshrl.u32 %v9854, 7
      %v9856 = vsub.s32 %v9853, %v9855
      %v9857 = vrot.slane %v9112, %v9856
      %v9859 = vunpack.c.l.s4 842150450
      %v9860 = vunpack.c.0.s8 %v9859
      %v9861 = vlaneseq
      %v9862 = vshrl.u32 %v9861, 7
      %v9863 = vsub.s32 %v9860, %v9862
      %v9864 = vrot.slane %v9112, %v9863
      %v9866 = vunpack.c.l.s4 1414812756
      %v9867 = vunpack.c.0.s8 %v9866
      %v9868 = vlaneseq
      %v9869 = vshrl.u32 %v9868, 7
      %v9870 = vsub.s32 %v9867, %v9869
      %v9871 = vrot.slane %v9112, %v9870
      %v9873 = vunpack.c.l.s4 1987475062
      %v9874 = vunpack.c.0.s8 %v9873
      %v9875 = vlaneseq
      %v9876 = vshrl.u32 %v9875, 7
      %v9877 = vsub.s32 %v9874, %v9876
      %v9878 = vrot.slane %v9112, %v9877
      %v9880 = vunpack.c.l.s4 269488144
      %v9881 = vunpack.c.0.s8 %v9880
      %v9882 = vlaneseq
      %v9883 = vshrl.u32 %v9882, 7
      %v9884 = vsub.s32 %v9881, %v9883
      %v9885 = vrot.slane %v9113, %v9884
      %v9887 = vunpack.c.l.s4 842150450
      %v9888 = vunpack.c.0.s8 %v9887
      %v9889 = vlaneseq
      %v9890 = vshrl.u32 %v9889, 7
      %v9891 = vsub.s32 %v9888, %v9890
      %v9892 = vrot.slane %v9113, %v9891
      %v9894 = vunpack.c.l.s4 1414812756
      %v9895 = vunpack.c.0.s8 %v9894
      %v9896 = vlaneseq
      %v9897 = vshrl.u32 %v9896, 7
      %v9898 = vsub.s32 %v9895, %v9897
      %v9899 = vrot.slane %v9113, %v9898
      %v9901 = vunpack.c.l.s4 1987475062
      %v9902 = vunpack.c.0.s8 %v9901
      %v9903 = vlaneseq
      %v9904 = vshrl.u32 %v9903, 7
      %v9905 = vsub.s32 %v9902, %v9904
      %v9906 = vrot.slane %v9113, %v9905
      %v9908 = vunpack.c.l.s4 269488144
      %v9909 = vunpack.c.0.s8 %v9908
      %v9910 = vlaneseq
      %v9911 = vshrl.u32 %v9910, 7
      %v9912 = vsub.s32 %v9909, %v9911
      %v9913 = vrot.slane %v9114, %v9912
      %v9915 = vunpack.c.l.s4 842150450
      %v9916 = vunpack.c.0.s8 %v9915
      %v9917 = vlaneseq
      %v9918 = vshrl.u32 %v9917, 7
      %v9919 = vsub.s32 %v9916, %v9918
      %v9920 = vrot.slane %v9114, %v9919
      %v9922 = vunpack.c.l.s4 1414812756
      %v9923 = vunpack.c.0.s8 %v9922
      %v9924 = vlaneseq
      %v9925 = vshrl.u32 %v9924, 7
      %v9926 = vsub.s32 %v9923, %v9925
      %v9927 = vrot.slane %v9114, %v9926
      %v9929 = vunpack.c.l.s4 1987475062
      %v9930 = vunpack.c.0.s8 %v9929
      %v9931 = vlaneseq
      %v9932 = vshrl.u32 %v9931, 7
      %v9933 = vsub.s32 %v9930, %v9932
      %v9934 = vrot.slane %v9114, %v9933
      %v9936 = vunpack.c.l.s4 269488144
      %v9937 = vunpack.c.0.s8 %v9936
      %v9938 = vlaneseq
      %v9939 = vshrl.u32 %v9938, 7
      %v9940 = vsub.s32 %v9937, %v9939
      %v9941 = vrot.slane %v9115, %v9940
      %v9943 = vunpack.c.l.s4 842150450
      %v9944 = vunpack.c.0.s8 %v9943
      %v9945 = vlaneseq
      %v9946 = vshrl.u32 %v9945, 7
      %v9947 = vsub.s32 %v9944, %v9946
      %v9948 = vrot.slane %v9115, %v9947
      %v9950 = vunpack.c.l.s4 1414812756
      %v9951 = vunpack.c.0.s8 %v9950
      %v9952 = vlaneseq
      %v9953 = vshrl.u32 %v9952, 7
      %v9954 = vsub.s32 %v9951, %v9953
      %v9955 = vrot.slane %v9115, %v9954
      %v9957 = vunpack.c.l.s4 1987475062
      %v9958 = vunpack.c.0.s8 %v9957
      %v9959 = vlaneseq
      %v9960 = vshrl.u32 %v9959, 7
      %v9961 = vsub.s32 %v9958, %v9960
      %v9962 = vrot.slane %v9115, %v9961
      %v9964 = vunpack.c.l.s4 269488144
      %v9965 = vunpack.c.0.s8 %v9964
      %v9966 = vlaneseq
      %v9967 = vshrl.u32 %v9966, 7
      %v9968 = vsub.s32 %v9965, %v9967
      %v9969 = vrot.slane %v9116, %v9968
      %v9971 = vunpack.c.l.s4 842150450
      %v9972 = vunpack.c.0.s8 %v9971
      %v9973 = vlaneseq
      %v9974 = vshrl.u32 %v9973, 7
      %v9975 = vsub.s32 %v9972, %v9974
      %v9976 = vrot.slane %v9116, %v9975
      %v9978 = vunpack.c.l.s4 1414812756
      %v9979 = vunpack.c.0.s8 %v9978
      %v9980 = vlaneseq
      %v9981 = vshrl.u32 %v9980, 7
      %v9982 = vsub.s32 %v9979, %v9981
      %v9983 = vrot.slane %v9116, %v9982
      %v9985 = vunpack.c.l.s4 1987475062
      %v9986 = vunpack.c.0.s8 %v9985
      %v9987 = vlaneseq
      %v9988 = vshrl.u32 %v9987, 7
      %v9989 = vsub.s32 %v9986, %v9988
      %v9990 = vrot.slane %v9116, %v9989
      %v9992 = vunpack.c.l.s4 269488144
      %v9993 = vunpack.c.0.s8 %v9992
      %v9994 = vlaneseq
      %v9995 = vshrl.u32 %v9994, 7
      %v9996 = vsub.s32 %v9993, %v9995
      %v9997 = vrot.slane %v9117, %v9996
      %v9999 = vunpack.c.l.s4 842150450
      %v10000 = vunpack.c.0.s8 %v9999
      %v10001 = vlaneseq
      %v10002 = vshrl.u32 %v10001, 7
      %v10003 = vsub.s32 %v10000, %v10002
      %v10004 = vrot.slane %v9117, %v10003
      %v10006 = vunpack.c.l.s4 1414812756
      %v10007 = vunpack.c.0.s8 %v10006
      %v10008 = vlaneseq
      %v10009 = vshrl.u32 %v10008, 7
      %v10010 = vsub.s32 %v10007, %v10009
      %v10011 = vrot.slane %v9117, %v10010
      %v10013 = vunpack.c.l.s4 1987475062
      %v10014 = vunpack.c.0.s8 %v10013
      %v10015 = vlaneseq
      %v10016 = vshrl.u32 %v10015, 7
      %v10017 = vsub.s32 %v10014, %v10016
      %v10018 = vrot.slane %v9117, %v10017
      %v10020 = vunpack.c.l.s4 269488144
      %v10021 = vunpack.c.0.s8 %v10020
      %v10022 = vlaneseq
      %v10023 = vshrl.u32 %v10022, 7
      %v10024 = vsub.s32 %v10021, %v10023
      %v10025 = vrot.slane %v9118, %v10024
      %v10027 = vunpack.c.l.s4 842150450
      %v10028 = vunpack.c.0.s8 %v10027
      %v10029 = vlaneseq
      %v10030 = vshrl.u32 %v10029, 7
      %v10031 = vsub.s32 %v10028, %v10030
      %v10032 = vrot.slane %v9118, %v10031
      %v10034 = vunpack.c.l.s4 1414812756
      %v10035 = vunpack.c.0.s8 %v10034
      %v10036 = vlaneseq
      %v10037 = vshrl.u32 %v10036, 7
      %v10038 = vsub.s32 %v10035, %v10037
      %v10039 = vrot.slane %v9118, %v10038
      %v10041 = vunpack.c.l.s4 1987475062
      %v10042 = vunpack.c.0.s8 %v10041
      %v10043 = vlaneseq
      %v10044 = vshrl.u32 %v10043, 7
      %v10045 = vsub.s32 %v10042, %v10044
      %v10046 = vrot.slane %v9118, %v10045
      %v10047 = vcombine.low %v9157, %v9164
      %v10048 = vcombine.low %v9171, %v9178
      %v10050 = vunpack.c.l.s4 1983009808
      %v10051 = vunpack.c.0.s8 %v10050
      %v10052 = vlaneseq
      %v10053 = vshrl.u32 %v10052, 7
      %v10054 = vsub.s32 %v10051, %v10053
      %v10055 = vrot.slane %v10047, %v10054
      %v10057 = vunpack.c.l.s4 1983009808
      %v10058 = vunpack.c.0.s8 %v10057
      %v10059 = vlaneseq
      %v10060 = vshrl.u32 %v10059, 7
      %v10061 = vsub.s32 %v10058, %v10060
      %v10062 = vrot.slane %v10048, %v10061
      %v10063 = vcombine.low %v10055, %v10062
      %v10064 = vcombine.low %v9185, %v9192
      %v10065 = vcombine.low %v9199, %v9206
      %v10067 = vunpack.c.l.s4 1983009808
      %v10068 = vunpack.c.0.s8 %v10067
      %v10069 = vlaneseq
      %v10070 = vshrl.u32 %v10069, 7
      %v10071 = vsub.s32 %v10068, %v10070
      %v10072 = vrot.slane %v10064, %v10071
      %v10074 = vunpack.c.l.s4 1983009808
      %v10075 = vunpack.c.0.s8 %v10074
      %v10076 = vlaneseq
      %v10077 = vshrl.u32 %v10076, 7
      %v10078 = vsub.s32 %v10075, %v10077
      %v10079 = vrot.slane %v10065, %v10078
      %v10080 = vcombine.low %v10072, %v10079
      %v10081 = vcombine.low %v9213, %v9220
      %v10082 = vcombine.low %v9227, %v9234
      %v10084 = vunpack.c.l.s4 1983009808
      %v10085 = vunpack.c.0.s8 %v10084
      %v10086 = vlaneseq
      %v10087 = vshrl.u32 %v10086, 7
      %v10088 = vsub.s32 %v10085, %v10087
      %v10089 = vrot.slane %v10081, %v10088
      %v10091 = vunpack.c.l.s4 1983009808
      %v10092 = vunpack.c.0.s8 %v10091
      %v10093 = vlaneseq
      %v10094 = vshrl.u32 %v10093, 7
      %v10095 = vsub.s32 %v10092, %v10094
      %v10096 = vrot.slane %v10082, %v10095
      %v10097 = vcombine.low %v10089, %v10096
      %v10098 = vcombine.low %v9241, %v9248
      %v10099 = vcombine.low %v9255, %v9262
      %v10101 = vunpack.c.l.s4 1983009808
      %v10102 = vunpack.c.0.s8 %v10101
      %v10103 = vlaneseq
      %v10104 = vshrl.u32 %v10103, 7
      %v10105 = vsub.s32 %v10102, %v10104
      %v10106 = vrot.slane %v10098, %v10105
      %v10108 = vunpack.c.l.s4 1983009808
      %v10109 = vunpack.c.0.s8 %v10108
      %v10110 = vlaneseq
      %v10111 = vshrl.u32 %v10110, 7
      %v10112 = vsub.s32 %v10109, %v10111
      %v10113 = vrot.slane %v10099, %v10112
      %v10114 = vcombine.low %v10106, %v10113
      %v10115 = vcombine.low %v9269, %v9276
      %v10116 = vcombine.low %v9283, %v9290
      %v10118 = vunpack.c.l.s4 1983009808
      %v10119 = vunpack.c.0.s8 %v10118
      %v10120 = vlaneseq
      %v10121 = vshrl.u32 %v10120, 7
      %v10122 = vsub.s32 %v10119, %v10121
      %v10123 = vrot.slane %v10115, %v10122
      %v10125 = vunpack.c.l.s4 1983009808
      %v10126 = vunpack.c.0.s8 %v10125
      %v10127 = vlaneseq
      %v10128 = vshrl.u32 %v10127, 7
      %v10129 = vsub.s32 %v10126, %v10128
      %v10130 = vrot.slane %v10116, %v10129
      %v10131 = vcombine.low %v10123, %v10130
      %v10132 = vcombine.low %v9297, %v9304
      %v10133 = vcombine.low %v9311, %v9318
      %v10135 = vunpack.c.l.s4 1983009808
      %v10136 = vunpack.c.0.s8 %v10135
      %v10137 = vlaneseq
      %v10138 = vshrl.u32 %v10137, 7
      %v10139 = vsub.s32 %v10136, %v10138
      %v10140 = vrot.slane %v10132, %v10139
      %v10142 = vunpack.c.l.s4 1983009808
      %v10143 = vunpack.c.0.s8 %v10142
      %v10144 = vlaneseq
      %v10145 = vshrl.u32 %v10144, 7
      %v10146 = vsub.s32 %v10143, %v10145
      %v10147 = vrot.slane %v10133, %v10146
      %v10148 = vcombine.low %v10140, %v10147
      %v10149 = vcombine.low %v9325, %v9332
      %v10150 = vcombine.low %v9339, %v9346
      %v10152 = vunpack.c.l.s4 1983009808
      %v10153 = vunpack.c.0.s8 %v10152
      %v10154 = vlaneseq
      %v10155 = vshrl.u32 %v10154, 7
      %v10156 = vsub.s32 %v10153, %v10155
      %v10157 = vrot.slane %v10149, %v10156
      %v10159 = vunpack.c.l.s4 1983009808
      %v10160 = vunpack.c.0.s8 %v10159
      %v10161 = vlaneseq
      %v10162 = vshrl.u32 %v10161, 7
      %v10163 = vsub.s32 %v10160, %v10162
      %v10164 = vrot.slane %v10150, %v10163
      %v10165 = vcombine.low %v10157, %v10164
      %v10166 = vcombine.low %v9353, %v9360
      %v10167 = vcombine.low %v9367, %v9374
      %v10169 = vunpack.c.l.s4 1983009808
      %v10170 = vunpack.c.0.s8 %v10169
      %v10171 = vlaneseq
      %v10172 = vshrl.u32 %v10171, 7
      %v10173 = vsub.s32 %v10170, %v10172
      %v10174 = vrot.slane %v10166, %v10173
      %v10176 = vunpack.c.l.s4 1983009808
      %v10177 = vunpack.c.0.s8 %v10176
      %v10178 = vlaneseq
      %v10179 = vshrl.u32 %v10178, 7
      %v10180 = vsub.s32 %v10177, %v10179
      %v10181 = vrot.slane %v10167, %v10180
      %v10182 = vcombine.low %v10174, %v10181
      %v10183 = vcombine.low %v9381, %v9388
      %v10184 = vcombine.low %v9395, %v9402
      %v10186 = vunpack.c.l.s4 1983009808
      %v10187 = vunpack.c.0.s8 %v10186
      %v10188 = vlaneseq
      %v10189 = vshrl.u32 %v10188, 7
      %v10190 = vsub.s32 %v10187, %v10189
      %v10191 = vrot.slane %v10183, %v10190
      %v10193 = vunpack.c.l.s4 1983009808
      %v10194 = vunpack.c.0.s8 %v10193
      %v10195 = vlaneseq
      %v10196 = vshrl.u32 %v10195, 7
      %v10197 = vsub.s32 %v10194, %v10196
      %v10198 = vrot.slane %v10184, %v10197
      %v10199 = vcombine.low %v10191, %v10198
      %v10200 = vcombine.low %v9409, %v9416
      %v10201 = vcombine.low %v9423, %v9430
      %v10203 = vunpack.c.l.s4 1983009808
      %v10204 = vunpack.c.0.s8 %v10203
      %v10205 = vlaneseq
      %v10206 = vshrl.u32 %v10205, 7
      %v10207 = vsub.s32 %v10204, %v10206
      %v10208 = vrot.slane %v10200, %v10207
      %v10210 = vunpack.c.l.s4 1983009808
      %v10211 = vunpack.c.0.s8 %v10210
      %v10212 = vlaneseq
      %v10213 = vshrl.u32 %v10212, 7
      %v10214 = vsub.s32 %v10211, %v10213
      %v10215 = vrot.slane %v10201, %v10214
      %v10216 = vcombine.low %v10208, %v10215
      %v10217 = vcombine.low %v9437, %v9444
      %v10218 = vcombine.low %v9451, %v9458
      %v10220 = vunpack.c.l.s4 1983009808
      %v10221 = vunpack.c.0.s8 %v10220
      %v10222 = vlaneseq
      %v10223 = vshrl.u32 %v10222, 7
      %v10224 = vsub.s32 %v10221, %v10223
      %v10225 = vrot.slane %v10217, %v10224
      %v10227 = vunpack.c.l.s4 1983009808
      %v10228 = vunpack.c.0.s8 %v10227
      %v10229 = vlaneseq
      %v10230 = vshrl.u32 %v10229, 7
      %v10231 = vsub.s32 %v10228, %v10230
      %v10232 = vrot.slane %v10218, %v10231
      %v10233 = vcombine.low %v10225, %v10232
      %v10234 = vcombine.low %v9465, %v9472
      %v10235 = vcombine.low %v9479, %v9486
      %v10237 = vunpack.c.l.s4 1983009808
      %v10238 = vunpack.c.0.s8 %v10237
      %v10239 = vlaneseq
      %v10240 = vshrl.u32 %v10239, 7
      %v10241 = vsub.s32 %v10238, %v10240
      %v10242 = vrot.slane %v10234, %v10241
      %v10244 = vunpack.c.l.s4 1983009808
      %v10245 = vunpack.c.0.s8 %v10244
      %v10246 = vlaneseq
      %v10247 = vshrl.u32 %v10246, 7
      %v10248 = vsub.s32 %v10245, %v10247
      %v10249 = vrot.slane %v10235, %v10248
      %v10250 = vcombine.low %v10242, %v10249
      %v10251 = vcombine.low %v9493, %v9500
      %v10252 = vcombine.low %v9507, %v9514
      %v10254 = vunpack.c.l.s4 1983009808
      %v10255 = vunpack.c.0.s8 %v10254
      %v10256 = vlaneseq
      %v10257 = vshrl.u32 %v10256, 7
      %v10258 = vsub.s32 %v10255, %v10257
      %v10259 = vrot.slane %v10251, %v10258
      %v10261 = vunpack.c.l.s4 1983009808
      %v10262 = vunpack.c.0.s8 %v10261
      %v10263 = vlaneseq
      %v10264 = vshrl.u32 %v10263, 7
      %v10265 = vsub.s32 %v10262, %v10264
      %v10266 = vrot.slane %v10252, %v10265
      %v10267 = vcombine.low %v10259, %v10266
      %v10268 = vcombine.low %v9521, %v9528
      %v10269 = vcombine.low %v9535, %v9542
      %v10271 = vunpack.c.l.s4 1983009808
      %v10272 = vunpack.c.0.s8 %v10271
      %v10273 = vlaneseq
      %v10274 = vshrl.u32 %v10273, 7
      %v10275 = vsub.s32 %v10272, %v10274
      %v10276 = vrot.slane %v10268, %v10275
      %v10278 = vunpack.c.l.s4 1983009808
      %v10279 = vunpack.c.0.s8 %v10278
      %v10280 = vlaneseq
      %v10281 = vshrl.u32 %v10280, 7
      %v10282 = vsub.s32 %v10279, %v10281
      %v10283 = vrot.slane %v10269, %v10282
      %v10284 = vcombine.low %v10276, %v10283
      %v10285 = vcombine.low %v9549, %v9556
      %v10286 = vcombine.low %v9563, %v9570
      %v10288 = vunpack.c.l.s4 1983009808
      %v10289 = vunpack.c.0.s8 %v10288
      %v10290 = vlaneseq
      %v10291 = vshrl.u32 %v10290, 7
      %v10292 = vsub.s32 %v10289, %v10291
      %v10293 = vrot.slane %v10285, %v10292
      %v10295 = vunpack.c.l.s4 1983009808
      %v10296 = vunpack.c.0.s8 %v10295
      %v10297 = vlaneseq
      %v10298 = vshrl.u32 %v10297, 7
      %v10299 = vsub.s32 %v10296, %v10298
      %v10300 = vrot.slane %v10286, %v10299
      %v10301 = vcombine.low %v10293, %v10300
      %v10302 = vcombine.low %v9577, %v9584
      %v10303 = vcombine.low %v9591, %v9598
      %v10305 = vunpack.c.l.s4 1983009808
      %v10306 = vunpack.c.0.s8 %v10305
      %v10307 = vlaneseq
      %v10308 = vshrl.u32 %v10307, 7
      %v10309 = vsub.s32 %v10306, %v10308
      %v10310 = vrot.slane %v10302, %v10309
      %v10312 = vunpack.c.l.s4 1983009808
      %v10313 = vunpack.c.0.s8 %v10312
      %v10314 = vlaneseq
      %v10315 = vshrl.u32 %v10314, 7
      %v10316 = vsub.s32 %v10313, %v10315
      %v10317 = vrot.slane %v10303, %v10316
      %v10318 = vcombine.low %v10310, %v10317
      %v10319 = vcombine.low %v9605, %v9612
      %v10320 = vcombine.low %v9619, %v9626
      %v10322 = vunpack.c.l.s4 1983009808
      %v10323 = vunpack.c.0.s8 %v10322
      %v10324 = vlaneseq
      %v10325 = vshrl.u32 %v10324, 7
      %v10326 = vsub.s32 %v10323, %v10325
      %v10327 = vrot.slane %v10319, %v10326
      %v10329 = vunpack.c.l.s4 1983009808
      %v10330 = vunpack.c.0.s8 %v10329
      %v10331 = vlaneseq
      %v10332 = vshrl.u32 %v10331, 7
      %v10333 = vsub.s32 %v10330, %v10332
      %v10334 = vrot.slane %v10320, %v10333
      %v10335 = vcombine.low %v10327, %v10334
      %v10336 = vcombine.low %v9633, %v9640
      %v10337 = vcombine.low %v9647, %v9654
      %v10339 = vunpack.c.l.s4 1983009808
      %v10340 = vunpack.c.0.s8 %v10339
      %v10341 = vlaneseq
      %v10342 = vshrl.u32 %v10341, 7
      %v10343 = vsub.s32 %v10340, %v10342
      %v10344 = vrot.slane %v10336, %v10343
      %v10346 = vunpack.c.l.s4 1983009808
      %v10347 = vunpack.c.0.s8 %v10346
      %v10348 = vlaneseq
      %v10349 = vshrl.u32 %v10348, 7
      %v10350 = vsub.s32 %v10347, %v10349
      %v10351 = vrot.slane %v10337, %v10350
      %v10352 = vcombine.low %v10344, %v10351
      %v10353 = vcombine.low %v9661, %v9668
      %v10354 = vcombine.low %v9675, %v9682
      %v10356 = vunpack.c.l.s4 1983009808
      %v10357 = vunpack.c.0.s8 %v10356
      %v10358 = vlaneseq
      %v10359 = vshrl.u32 %v10358, 7
      %v10360 = vsub.s32 %v10357, %v10359
      %v10361 = vrot.slane %v10353, %v10360
      %v10363 = vunpack.c.l.s4 1983009808
      %v10364 = vunpack.c.0.s8 %v10363
      %v10365 = vlaneseq
      %v10366 = vshrl.u32 %v10365, 7
      %v10367 = vsub.s32 %v10364, %v10366
      %v10368 = vrot.slane %v10354, %v10367
      %v10369 = vcombine.low %v10361, %v10368
      %v10370 = vcombine.low %v9689, %v9696
      %v10371 = vcombine.low %v9703, %v9710
      %v10373 = vunpack.c.l.s4 1983009808
      %v10374 = vunpack.c.0.s8 %v10373
      %v10375 = vlaneseq
      %v10376 = vshrl.u32 %v10375, 7
      %v10377 = vsub.s32 %v10374, %v10376
      %v10378 = vrot.slane %v10370, %v10377
      %v10380 = vunpack.c.l.s4 1983009808
      %v10381 = vunpack.c.0.s8 %v10380
      %v10382 = vlaneseq
      %v10383 = vshrl.u32 %v10382, 7
      %v10384 = vsub.s32 %v10381, %v10383
      %v10385 = vrot.slane %v10371, %v10384
      %v10386 = vcombine.low %v10378, %v10385
      %v10387 = vcombine.low %v9717, %v9724
      %v10388 = vcombine.low %v9731, %v9738
      %v10390 = vunpack.c.l.s4 1983009808
      %v10391 = vunpack.c.0.s8 %v10390
      %v10392 = vlaneseq
      %v10393 = vshrl.u32 %v10392, 7
      %v10394 = vsub.s32 %v10391, %v10393
      %v10395 = vrot.slane %v10387, %v10394
      %v10397 = vunpack.c.l.s4 1983009808
      %v10398 = vunpack.c.0.s8 %v10397
      %v10399 = vlaneseq
      %v10400 = vshrl.u32 %v10399, 7
      %v10401 = vsub.s32 %v10398, %v10400
      %v10402 = vrot.slane %v10388, %v10401
      %v10403 = vcombine.low %v10395, %v10402
      %v10404 = vcombine.low %v9745, %v9752
      %v10405 = vcombine.low %v9759, %v9766
      %v10407 = vunpack.c.l.s4 1983009808
      %v10408 = vunpack.c.0.s8 %v10407
      %v10409 = vlaneseq
      %v10410 = vshrl.u32 %v10409, 7
      %v10411 = vsub.s32 %v10408, %v10410
      %v10412 = vrot.slane %v10404, %v10411
      %v10414 = vunpack.c.l.s4 1983009808
      %v10415 = vunpack.c.0.s8 %v10414
      %v10416 = vlaneseq
      %v10417 = vshrl.u32 %v10416, 7
      %v10418 = vsub.s32 %v10415, %v10417
      %v10419 = vrot.slane %v10405, %v10418
      %v10420 = vcombine.low %v10412, %v10419
      %v10421 = vcombine.low %v9773, %v9780
      %v10422 = vcombine.low %v9787, %v9794
      %v10424 = vunpack.c.l.s4 1983009808
      %v10425 = vunpack.c.0.s8 %v10424
      %v10426 = vlaneseq
      %v10427 = vshrl.u32 %v10426, 7
      %v10428 = vsub.s32 %v10425, %v10427
      %v10429 = vrot.slane %v10421, %v10428
      %v10431 = vunpack.c.l.s4 1983009808
      %v10432 = vunpack.c.0.s8 %v10431
      %v10433 = vlaneseq
      %v10434 = vshrl.u32 %v10433, 7
      %v10435 = vsub.s32 %v10432, %v10434
      %v10436 = vrot.slane %v10422, %v10435
      %v10437 = vcombine.low %v10429, %v10436
      %v10438 = vcombine.low %v9801, %v9808
      %v10439 = vcombine.low %v9815, %v9822
      %v10441 = vunpack.c.l.s4 1983009808
      %v10442 = vunpack.c.0.s8 %v10441
      %v10443 = vlaneseq
      %v10444 = vshrl.u32 %v10443, 7
      %v10445 = vsub.s32 %v10442, %v10444
      %v10446 = vrot.slane %v10438, %v10445
      %v10448 = vunpack.c.l.s4 1983009808
      %v10449 = vunpack.c.0.s8 %v10448
      %v10450 = vlaneseq
      %v10451 = vshrl.u32 %v10450, 7
      %v10452 = vsub.s32 %v10449, %v10451
      %v10453 = vrot.slane %v10439, %v10452
      %v10454 = vcombine.low %v10446, %v10453
      %v10455 = vcombine.low %v9829, %v9836
      %v10456 = vcombine.low %v9843, %v9850
      %v10458 = vunpack.c.l.s4 1983009808
      %v10459 = vunpack.c.0.s8 %v10458
      %v10460 = vlaneseq
      %v10461 = vshrl.u32 %v10460, 7
      %v10462 = vsub.s32 %v10459, %v10461
      %v10463 = vrot.slane %v10455, %v10462
      %v10465 = vunpack.c.l.s4 1983009808
      %v10466 = vunpack.c.0.s8 %v10465
      %v10467 = vlaneseq
      %v10468 = vshrl.u32 %v10467, 7
      %v10469 = vsub.s32 %v10466, %v10468
      %v10470 = vrot.slane %v10456, %v10469
      %v10471 = vcombine.low %v10463, %v10470
      %v10472 = vcombine.low %v9857, %v9864
      %v10473 = vcombine.low %v9871, %v9878
      %v10475 = vunpack.c.l.s4 1983009808
      %v10476 = vunpack.c.0.s8 %v10475
      %v10477 = vlaneseq
      %v10478 = vshrl.u32 %v10477, 7
      %v10479 = vsub.s32 %v10476, %v10478
      %v10480 = vrot.slane %v10472, %v10479
      %v10482 = vunpack.c.l.s4 1983009808
      %v10483 = vunpack.c.0.s8 %v10482
      %v10484 = vlaneseq
      %v10485 = vshrl.u32 %v10484, 7
      %v10486 = vsub.s32 %v10483, %v10485
      %v10487 = vrot.slane %v10473, %v10486
      %v10488 = vcombine.low %v10480, %v10487
      %v10489 = vcombine.low %v9885, %v9892
      %v10490 = vcombine.low %v9899, %v9906
      %v10492 = vunpack.c.l.s4 1983009808
      %v10493 = vunpack.c.0.s8 %v10492
      %v10494 = vlaneseq
      %v10495 = vshrl.u32 %v10494, 7
      %v10496 = vsub.s32 %v10493, %v10495
      %v10497 = vrot.slane %v10489, %v10496
      %v10499 = vunpack.c.l.s4 1983009808
      %v10500 = vunpack.c.0.s8 %v10499
      %v10501 = vlaneseq
      %v10502 = vshrl.u32 %v10501, 7
      %v10503 = vsub.s32 %v10500, %v10502
      %v10504 = vrot.slane %v10490, %v10503
      %v10505 = vcombine.low %v10497, %v10504
      %v10506 = vcombine.low %v9913, %v9920
      %v10507 = vcombine.low %v9927, %v9934
      %v10509 = vunpack.c.l.s4 1983009808
      %v10510 = vunpack.c.0.s8 %v10509
      %v10511 = vlaneseq
      %v10512 = vshrl.u32 %v10511, 7
      %v10513 = vsub.s32 %v10510, %v10512
      %v10514 = vrot.slane %v10506, %v10513
      %v10516 = vunpack.c.l.s4 1983009808
      %v10517 = vunpack.c.0.s8 %v10516
      %v10518 = vlaneseq
      %v10519 = vshrl.u32 %v10518, 7
      %v10520 = vsub.s32 %v10517, %v10519
      %v10521 = vrot.slane %v10507, %v10520
      %v10522 = vcombine.low %v10514, %v10521
      %v10523 = vcombine.low %v9941, %v9948
      %v10524 = vcombine.low %v9955, %v9962
      %v10526 = vunpack.c.l.s4 1983009808
      %v10527 = vunpack.c.0.s8 %v10526
      %v10528 = vlaneseq
      %v10529 = vshrl.u32 %v10528, 7
      %v10530 = vsub.s32 %v10527, %v10529
      %v10531 = vrot.slane %v10523, %v10530
      %v10533 = vunpack.c.l.s4 1983009808
      %v10534 = vunpack.c.0.s8 %v10533
      %v10535 = vlaneseq
      %v10536 = vshrl.u32 %v10535, 7
      %v10537 = vsub.s32 %v10534, %v10536
      %v10538 = vrot.slane %v10524, %v10537
      %v10539 = vcombine.low %v10531, %v10538
      %v10540 = vcombine.low %v9969, %v9976
      %v10541 = vcombine.low %v9983, %v9990
      %v10543 = vunpack.c.l.s4 1983009808
      %v10544 = vunpack.c.0.s8 %v10543
      %v10545 = vlaneseq
      %v10546 = vshrl.u32 %v10545, 7
      %v10547 = vsub.s32 %v10544, %v10546
      %v10548 = vrot.slane %v10540, %v10547
      %v10550 = vunpack.c.l.s4 1983009808
      %v10551 = vunpack.c.0.s8 %v10550
      %v10552 = vlaneseq
      %v10553 = vshrl.u32 %v10552, 7
      %v10554 = vsub.s32 %v10551, %v10553
      %v10555 = vrot.slane %v10541, %v10554
      %v10556 = vcombine.low %v10548, %v10555
      %v10557 = vcombine.low %v9997, %v10004
      %v10558 = vcombine.low %v10011, %v10018
      %v10560 = vunpack.c.l.s4 1983009808
      %v10561 = vunpack.c.0.s8 %v10560
      %v10562 = vlaneseq
      %v10563 = vshrl.u32 %v10562, 7
      %v10564 = vsub.s32 %v10561, %v10563
      %v10565 = vrot.slane %v10557, %v10564
      %v10567 = vunpack.c.l.s4 1983009808
      %v10568 = vunpack.c.0.s8 %v10567
      %v10569 = vlaneseq
      %v10570 = vshrl.u32 %v10569, 7
      %v10571 = vsub.s32 %v10568, %v10570
      %v10572 = vrot.slane %v10558, %v10571
      %v10573 = vcombine.low %v10565, %v10572
      %v10574 = vcombine.low %v10025, %v10032
      %v10575 = vcombine.low %v10039, %v10046
      %v10577 = vunpack.c.l.s4 1983009808
      %v10578 = vunpack.c.0.s8 %v10577
      %v10579 = vlaneseq
      %v10580 = vshrl.u32 %v10579, 7
      %v10581 = vsub.s32 %v10578, %v10580
      %v10582 = vrot.slane %v10574, %v10581
      %v10584 = vunpack.c.l.s4 1983009808
      %v10585 = vunpack.c.0.s8 %v10584
      %v10586 = vlaneseq
      %v10587 = vshrl.u32 %v10586, 7
      %v10588 = vsub.s32 %v10585, %v10587
      %v10589 = vrot.slane %v10575, %v10588
      %v10590 = vcombine.low %v10582, %v10589
      %10591 = vset.pattern.permute.xlu0 0
      %10592 = vperm.xlu0 %10591, %v10063
      %v10593 = vpop.permute.xlu0 %10592
      %10594 = vset.pattern.permute.xlu0 0
      %10595 = vperm.xlu0 %10594, %v10080
      %v10596 = vpop.permute.xlu0 %10595
      %10597 = vset.pattern.permute.xlu0 0
      %10598 = vperm.xlu0 %10597, %v10097
      %v10599 = vpop.permute.xlu0 %10598
      %10600 = vset.pattern.permute.xlu0 0
      %10601 = vperm.xlu0 %10600, %v10114
      %v10602 = vpop.permute.xlu0 %10601
      %10603 = vset.pattern.permute.xlu0 0
      %10604 = vperm.xlu0 %10603, %v10131
      %v10605 = vpop.permute.xlu0 %10604
      %10606 = vset.pattern.permute.xlu0 0
      %10607 = vperm.xlu0 %10606, %v10148
      %v10608 = vpop.permute.xlu0 %10607
      %10609 = vset.pattern.permute.xlu0 0
      %10610 = vperm.xlu0 %10609, %v10165
      %v10611 = vpop.permute.xlu0 %10610
      %10612 = vset.pattern.permute.xlu0 0
      %10613 = vperm.xlu0 %10612, %v10182
      %v10614 = vpop.permute.xlu0 %10613
      %10615 = vset.pattern.permute.xlu0 0
      %10616 = vperm.xlu0 %10615, %v10199
      %v10617 = vpop.permute.xlu0 %10616
      %10618 = vset.pattern.permute.xlu0 0
      %10619 = vperm.xlu0 %10618, %v10216
      %v10620 = vpop.permute.xlu0 %10619
      %10621 = vset.pattern.permute.xlu0 0
      %10622 = vperm.xlu0 %10621, %v10233
      %v10623 = vpop.permute.xlu0 %10622
      %10624 = vset.pattern.permute.xlu0 0
      %10625 = vperm.xlu0 %10624, %v10250
      %v10626 = vpop.permute.xlu0 %10625
      %10627 = vset.pattern.permute.xlu0 0
      %10628 = vperm.xlu0 %10627, %v10267
      %v10629 = vpop.permute.xlu0 %10628
      %10630 = vset.pattern.permute.xlu0 0
      %10631 = vperm.xlu0 %10630, %v10284
      %v10632 = vpop.permute.xlu0 %10631
      %10633 = vset.pattern.permute.xlu0 0
      %10634 = vperm.xlu0 %10633, %v10301
      %v10635 = vpop.permute.xlu0 %10634
      %10636 = vset.pattern.permute.xlu0 0
      %10637 = vperm.xlu0 %10636, %v10318
      %v10638 = vpop.permute.xlu0 %10637
      %10639 = vset.pattern.permute.xlu0 0
      %10640 = vperm.xlu0 %10639, %v10335
      %v10641 = vpop.permute.xlu0 %10640
      %10642 = vset.pattern.permute.xlu0 0
      %10643 = vperm.xlu0 %10642, %v10352
      %v10644 = vpop.permute.xlu0 %10643
      %10645 = vset.pattern.permute.xlu0 0
      %10646 = vperm.xlu0 %10645, %v10369
      %v10647 = vpop.permute.xlu0 %10646
      %10648 = vset.pattern.permute.xlu0 0
      %10649 = vperm.xlu0 %10648, %v10386
      %v10650 = vpop.permute.xlu0 %10649
      %10651 = vset.pattern.permute.xlu0 0
      %10652 = vperm.xlu0 %10651, %v10403
      %v10653 = vpop.permute.xlu0 %10652
      %10654 = vset.pattern.permute.xlu0 0
      %10655 = vperm.xlu0 %10654, %v10420
      %v10656 = vpop.permute.xlu0 %10655
      %10657 = vset.pattern.permute.xlu0 0
      %10658 = vperm.xlu0 %10657, %v10437
      %v10659 = vpop.permute.xlu0 %10658
      %10660 = vset.pattern.permute.xlu0 0
      %10661 = vperm.xlu0 %10660, %v10454
      %v10662 = vpop.permute.xlu0 %10661
      %10663 = vset.pattern.permute.xlu0 0
      %10664 = vperm.xlu0 %10663, %v10471
      %v10665 = vpop.permute.xlu0 %10664
      %10666 = vset.pattern.permute.xlu0 0
      %10667 = vperm.xlu0 %10666, %v10488
      %v10668 = vpop.permute.xlu0 %10667
      %10669 = vset.pattern.permute.xlu0 0
      %10670 = vperm.xlu0 %10669, %v10505
      %v10671 = vpop.permute.xlu0 %10670
      %10672 = vset.pattern.permute.xlu0 0
      %10673 = vperm.xlu0 %10672, %v10522
      %v10674 = vpop.permute.xlu0 %10673
      %10675 = vset.pattern.permute.xlu0 0
      %10676 = vperm.xlu0 %10675, %v10539
      %v10677 = vpop.permute.xlu0 %10676
      %10678 = vset.pattern.permute.xlu0 0
      %10679 = vperm.xlu0 %10678, %v10556
      %v10680 = vpop.permute.xlu0 %10679
      %10681 = vset.pattern.permute.xlu0 0
      %10682 = vperm.xlu0 %10681, %v10573
      %v10683 = vpop.permute.xlu0 %10682
      %10684 = vset.pattern.permute.xlu0 0
      %10685 = vperm.xlu0 %10684, %v10590
      %v10686 = vpop.permute.xlu0 %10685
      %v10687 = vlaneseq
      %v10688 = vshrl.u32 %v10687, 7
      %v10689 = vsub.s32 %v2735, %v10688
      %v10690 = vrot.slane %v10593, %v10689
      %v10691 = vlaneseq
      %v10692 = vshrl.u32 %v10691, 7
      %v10693 = vsub.s32 %v2740, %v10692
      %v10694 = vrot.slane %v10596, %v10693
      %v10695 = vsel %vm2745, %v10694, %v10690
      %v10696 = vlaneseq
      %v10697 = vshrl.u32 %v10696, 7
      %v10698 = vsub.s32 %v2747, %v10697
      %v10699 = vrot.slane %v10599, %v10698
      %v10700 = vsel %vm2752, %v10699, %v10695
      %v10701 = vlaneseq
      %v10702 = vshrl.u32 %v10701, 7
      %v10703 = vsub.s32 %v2754, %v10702
      %v10704 = vrot.slane %v10602, %v10703
      %v10705 = vsel %vm2759, %v10704, %v10700
      %v10706 = vlaneseq
      %v10707 = vshrl.u32 %v10706, 7
      %v10708 = vsub.s32 %v2761, %v10707
      %v10709 = vrot.slane %v10605, %v10708
      %v10710 = vsel %vm2766, %v10709, %v10705
      %v10711 = vlaneseq
      %v10712 = vshrl.u32 %v10711, 7
      %v10713 = vsub.s32 %v2768, %v10712
      %v10714 = vrot.slane %v10608, %v10713
      %v10715 = vsel %vm2773, %v10714, %v10710
      %v10716 = vlaneseq
      %v10717 = vshrl.u32 %v10716, 7
      %v10718 = vsub.s32 %v2775, %v10717
      %v10719 = vrot.slane %v10611, %v10718
      %v10720 = vsel %vm2780, %v10719, %v10715
      %v10721 = vlaneseq
      %v10722 = vshrl.u32 %v10721, 7
      %v10723 = vsub.s32 %v2782, %v10722
      %v10724 = vrot.slane %v10614, %v10723
      %v10725 = vsel %vm2787, %v10724, %v10720
      %v10726 = vlaneseq
      %v10727 = vshrl.u32 %v10726, 7
      %v10728 = vsub.s32 %v2789, %v10727
      %v10729 = vrot.slane %v10617, %v10728
      %v10730 = vsel %vm2794, %v10729, %v10725
      %v10731 = vlaneseq
      %v10732 = vshrl.u32 %v10731, 7
      %v10733 = vsub.s32 %v2796, %v10732
      %v10734 = vrot.slane %v10620, %v10733
      %v10735 = vsel %vm2801, %v10734, %v10730
      %v10736 = vlaneseq
      %v10737 = vshrl.u32 %v10736, 7
      %v10738 = vsub.s32 %v2803, %v10737
      %v10739 = vrot.slane %v10623, %v10738
      %v10740 = vsel %vm2808, %v10739, %v10735
      %v10741 = vlaneseq
      %v10742 = vshrl.u32 %v10741, 7
      %v10743 = vsub.s32 %v2810, %v10742
      %v10744 = vrot.slane %v10626, %v10743
      %v10745 = vsel %vm2815, %v10744, %v10740
      %v10746 = vlaneseq
      %v10747 = vshrl.u32 %v10746, 7
      %v10748 = vsub.s32 %v2817, %v10747
      %v10749 = vrot.slane %v10629, %v10748
      %v10750 = vsel %vm2822, %v10749, %v10745
      %v10751 = vlaneseq
      %v10752 = vshrl.u32 %v10751, 7
      %v10753 = vsub.s32 %v2824, %v10752
      %v10754 = vrot.slane %v10632, %v10753
      %v10755 = vsel %vm2829, %v10754, %v10750
      %v10756 = vlaneseq
      %v10757 = vshrl.u32 %v10756, 7
      %v10758 = vsub.s32 %v2831, %v10757
      %v10759 = vrot.slane %v10635, %v10758
      %v10760 = vsel %vm2836, %v10759, %v10755
      %v10761 = vlaneseq
      %v10762 = vshrl.u32 %v10761, 7
      %v10763 = vsub.s32 %v2838, %v10762
      %v10764 = vrot.slane %v10638, %v10763
      %v10765 = vsel %vm2843, %v10764, %v10760
      %v10766 = vlaneseq
      %v10767 = vshrl.u32 %v10766, 7
      %v10768 = vsub.s32 %v2735, %v10767
      %v10769 = vrot.slane %v10641, %v10768
      %v10770 = vlaneseq
      %v10771 = vshrl.u32 %v10770, 7
      %v10772 = vsub.s32 %v2740, %v10771
      %v10773 = vrot.slane %v10644, %v10772
      %v10774 = vsel %vm2745, %v10773, %v10769
      %v10775 = vlaneseq
      %v10776 = vshrl.u32 %v10775, 7
      %v10777 = vsub.s32 %v2747, %v10776
      %v10778 = vrot.slane %v10647, %v10777
      %v10779 = vsel %vm2752, %v10778, %v10774
      %v10780 = vlaneseq
      %v10781 = vshrl.u32 %v10780, 7
      %v10782 = vsub.s32 %v2754, %v10781
      %v10783 = vrot.slane %v10650, %v10782
      %v10784 = vsel %vm2759, %v10783, %v10779
      %v10785 = vlaneseq
      %v10786 = vshrl.u32 %v10785, 7
      %v10787 = vsub.s32 %v2761, %v10786
      %v10788 = vrot.slane %v10653, %v10787
      %v10789 = vsel %vm2766, %v10788, %v10784
      %v10790 = vlaneseq
      %v10791 = vshrl.u32 %v10790, 7
      %v10792 = vsub.s32 %v2768, %v10791
      %v10793 = vrot.slane %v10656, %v10792
      %v10794 = vsel %vm2773, %v10793, %v10789
      %v10795 = vlaneseq
      %v10796 = vshrl.u32 %v10795, 7
      %v10797 = vsub.s32 %v2775, %v10796
      %v10798 = vrot.slane %v10659, %v10797
      %v10799 = vsel %vm2780, %v10798, %v10794
      %v10800 = vlaneseq
      %v10801 = vshrl.u32 %v10800, 7
      %v10802 = vsub.s32 %v2782, %v10801
      %v10803 = vrot.slane %v10662, %v10802
      %v10804 = vsel %vm2787, %v10803, %v10799
      %v10805 = vlaneseq
      %v10806 = vshrl.u32 %v10805, 7
      %v10807 = vsub.s32 %v2789, %v10806
      %v10808 = vrot.slane %v10665, %v10807
      %v10809 = vsel %vm2794, %v10808, %v10804
      %v10810 = vlaneseq
      %v10811 = vshrl.u32 %v10810, 7
      %v10812 = vsub.s32 %v2796, %v10811
      %v10813 = vrot.slane %v10668, %v10812
      %v10814 = vsel %vm2801, %v10813, %v10809
      %v10815 = vlaneseq
      %v10816 = vshrl.u32 %v10815, 7
      %v10817 = vsub.s32 %v2803, %v10816
      %v10818 = vrot.slane %v10671, %v10817
      %v10819 = vsel %vm2808, %v10818, %v10814
      %v10820 = vlaneseq
      %v10821 = vshrl.u32 %v10820, 7
      %v10822 = vsub.s32 %v2810, %v10821
      %v10823 = vrot.slane %v10674, %v10822
      %v10824 = vsel %vm2815, %v10823, %v10819
      %v10825 = vlaneseq
      %v10826 = vshrl.u32 %v10825, 7
      %v10827 = vsub.s32 %v2817, %v10826
      %v10828 = vrot.slane %v10677, %v10827
      %v10829 = vsel %vm2822, %v10828, %v10824
      %v10830 = vlaneseq
      %v10831 = vshrl.u32 %v10830, 7
      %v10832 = vsub.s32 %v2824, %v10831
      %v10833 = vrot.slane %v10680, %v10832
      %v10834 = vsel %vm2829, %v10833, %v10829
      %v10835 = vlaneseq
      %v10836 = vshrl.u32 %v10835, 7
      %v10837 = vsub.s32 %v2831, %v10836
      %v10838 = vrot.slane %v10683, %v10837
      %v10839 = vsel %vm2836, %v10838, %v10834
      %v10840 = vlaneseq
      %v10841 = vshrl.u32 %v10840, 7
      %v10842 = vsub.s32 %v2838, %v10841
      %v10843 = vrot.slane %v10686, %v10842
      %v10844 = vsel %vm2843, %v10843, %v10839
      %v10845 = vsel %vm2924, %v10844, %v10765
      %v10847 = vunpack.c.l.s4 1983009808
      %v10848 = vunpack.c.0.s8 %v10847
      %v10849 = vlaneseq
      %v10850 = vshrl.u32 %v10849, 7
      %v10851 = vsub.s32 %v10848, %v10850
      %v10852 = vrot.slane %v10845, %v10851
      %10854 = vst [vmem:[%s189 + $0x6] sm:$0x3] %v10852
      %s10855 = smul.u32 4, %s27
      %p10856 = scmp.lt.s32.totalorder %s10855, 7
      %s10857 = scalar_select %p10856, %s10855, 7
      %s10858 = smul.addr %s10857, 2
      %s10859 = scalar_lea.vmem %s6, %s10858
      // Predicated region
      $region65: #{kge_forward.1} parent=35 // pred_check
        %p10860 = pneg %p129
      $region66: #{kge_forward.1} parent=35 // pred_check_branch
        %10862 = sbr.rel (%p10860) target = $region68
      $region67: #{kge_forward.1} parent=35 // pred_region
        %s10863 = smul.u32 4, %s27
      $region68: #{kge_forward.1} parent=35 // pred_fallthru
        _
    $region36: #{kge_forward.1} parent=5 // pred_fallthru
      _
    %p10864 = scmp.le.s32.totalorder 2, %s22
    // Predicated region
    $region69: #{kge_forward.1} parent=5 // pred_check
      %p10865 = pneg %p10864
    $region70: #{kge_forward.1} parent=5 // pred_check_branch
      %10867 = sbr.rel (%p10865) target = $region72
    $region71: #{kge_forward.1} parent=5 // pred_region
      %s10868 = ssub.s32 %s22, 2
      // Predicated region
      $region73: #{kge_forward.1} parent=71 // pred_check
        %p10869 = pneg %p135
      $region74: #{kge_forward.1} parent=71 // pred_check_branch
        %10871 = sbr.rel (%p10869) target = $region76
      $region75: #{kge_forward.1} parent=71 // pred_region
        %s10872 = smul.u32 4, %s28
        %p10873 = scmp.lt.s32.totalorder %s10872, 7
        %s10874 = scalar_select %p10873, %s10872, 7
        %s10875 = smul.addr %s10874, 2
        %s10876 = scalar_lea.vmem %s6, %s10875
      $region76: #{kge_forward.1} parent=71 // pred_fallthru
        _
    $region72: #{kge_forward.1} parent=5 // pred_fallthru
      _
  $region6: #{kge_forward.1} parent=0 // loop_footer
    %s26 = sadd.s32 1, %s22
  $region7: #{kge_forward.1} parent=0 // loop_footer_branch
    %21 = sbr.rel target = $region3
  $region8: #{kge_forward.1} parent=0 // loop_exit
    _

</llo_original>
